<compile_context>
chip_gen: v7x
topology: tpu7x:2x2x1
jax: 0.10.0
libtpu: 0.0.40
codegen_flags: <defaults>
</compile_context>

<pallas_src>
import functools

import jax
import jax.numpy as jnp
import numpy as np
from jax import lax
from jax.experimental import pallas as pl
from jax.experimental.pallas import tpu as pltpu

# `CompilerParams` on current JAX; `TPUCompilerParams` on slightly older ones.
_CompilerParams = getattr(pltpu, "CompilerParams", None) or getattr(
    pltpu, "TPUCompilerParams")


@functools.lru_cache(maxsize=None)
def _vmem_limit_bytes():
    """Generation-aware scoped-VMEM budget: ~3/4 of physical, capped at 96 MiB.
    -> ~48 MiB on v7x (64 MiB physical), 96 MiB on v5e/v6e (128 MiB)."""
    phys = 64 * 1024 * 1024
    try:
        info = pltpu.get_tpu_info()
        phys = int(getattr(info, "vmem_capacity_bytes", phys))
    except Exception:
        pass
    return int(max(32 * 1024 * 1024, min(phys * 3 // 4, 96 * 1024 * 1024)))


def _cparams(dims):
    return _CompilerParams(dimension_semantics=dims,
                           vmem_limit_bytes=_vmem_limit_bytes())


def _pick_tile(dim, pref, floor=128):
    """Largest tile <= pref that divides dim (else the full dim)."""
    if dim <= pref:
        return dim
    t = pref
    while t >= floor:
        if dim % t == 0:
            return t
        t //= 2
    return dim


def _act(x, kind):
    if kind == "relu":
        return jnp.maximum(x, 0.0)
    if kind == "leakyrelu":
        return jnp.where(x >= 0.0, x, 0.2 * x)
    if kind == "sigmoid":
        return 1.0 / (1.0 + jnp.exp(-x))          # exact (review concern)
    if kind == "tanh":
        return jnp.tanh(x)
    if kind in (None, "none", "linear"):
        return x
    raise ValueError(f"unknown activation {kind!r}")


def _phase_taps(K, s, p):
    """Per output phase r: taps [(k, d)] with input index = q + d."""
    return [[(k, (r + p - k) // s) for k in range(K) if (r + p - k) % s == 0]
            for r in range(s)]


# ----------------------------- fc1: dense GEMM ----------------------------- #

def _gemm_bias_act_kernel(x_ref, w_ref, b_ref, o_ref, *, act):
    y = jnp.dot(x_ref[...], w_ref[...], preferred_element_type=jnp.float32)
    o_ref[...] = _act(y + b_ref[...], act).astype(o_ref.dtype)


def gemm_bias_act(x, w, b, act, out_dtype=jnp.bfloat16, tm_pref=512,
                  tn_pref=512):
    """act(x @ w + b): bf16 operands on the MXU, f32 accumulate/epilogue.
    K is not tiled (fc1's reduction dim is the tiny latent size)."""
    M, K = x.shape
    K2, N = w.shape
    assert K == K2 and b.shape == (N,)
    tm = M if M <= tm_pref else _pick_tile(M, tm_pref, floor=8)
    tn = _pick_tile(N, tn_pref)
    grid = (M // tm, N // tn)
    return pl.pallas_call(
        functools.partial(_gemm_bias_act_kernel, act=act),
        out_shape=jax.ShapeDtypeStruct((M, N), out_dtype),
        grid=grid,
        in_specs=[
            pl.BlockSpec((tm, K), lambda i, j: (i, 0)),
            pl.BlockSpec((K, tn), lambda i, j: (0, j)),
            pl.BlockSpec((1, tn), lambda i, j: (0, j)),
        ],
        out_specs=pl.BlockSpec((tm, tn), lambda i, j: (i, j)),
        compiler_params=_cparams(("parallel", "parallel")),
    )(x.astype(jnp.bfloat16), w.astype(jnp.bfloat16),
      b.reshape(1, N).astype(jnp.float32))


# --------------- conv1: stride-2 deconv, in-kernel tap gather --------------- #

def _deconv_s2_kernel(x_ref, w_ref, b_ref, o_ref, *, phases, Q, act):
    """One output phase of a stride-2 ConvTranspose per grid step.

    x_ref: (bt, Hp, Wp, Cin) f32   padded input tile (resident across phases)
    w_ref: (K, K, Cin, tn)   bf16  per-tap weight slabs
    b_ref: (1, tn)           f32
    o_ref: (bt*Q*Q, tn)            phase-major output rows (b, qh, qw)
    """
    rh = pl.program_id(2)
    rw = pl.program_id(3)
    bt = x_ref.shape[0]
    cin = x_ref.shape[3]
    tn = o_ref.shape[1]
    m = bt * Q * Q
    for ih, taps_h in enumerate(phases):
        for iw, taps_w in enumerate(phases):
            @pl.when((rh == ih) & (rw == iw))
            def _(taps_h=taps_h, taps_w=taps_w):
                acc = jnp.zeros((m, tn), jnp.float32)
                for kh, dh in taps_h:
                    for kw, dw in taps_w:
                        # Gather the tap window straight out of VMEM (no HBM
                        # im2col).  f32 + Q==8 keep the leading-dim collapse
                        # reshape sublane-exact.
                        xs = x_ref[:, pl.ds(dh, Q), pl.ds(dw, Q), :]
                        xs = xs.reshape(m, cin).astype(jnp.bfloat16)
                        acc = acc + jnp.dot(xs, w_ref[kh, kw],
                                            preferred_element_type=jnp.float32)
                o_ref[...] = _act(acc + b_ref[...], act).astype(o_ref.dtype)


def deconv_s2_phasewise(x, w_kk, b, act, *, stride, padding, tn_pref=512):
    """nn.ConvTranspose2d (stride 2) on NHWC activations, phase-decomposed
    (no structural zeros reach the MXU), taps gathered inside the kernel.

    x: (B, H, W, Cin) f32;  w_kk: (K, K, Cin, Cout) bf16;  b: (Cout,) f32.
    Returns (B, OH, OW, Cout) bf16.
    """
    B, H, W, cin = x.shape
    K = w_kk.shape[0]
    cout = w_kk.shape[3]
    s, p = stride, padding
    OH = (H - 1) * s - 2 * p + K
    OW = (W - 1) * s - 2 * p + K
    assert H == W and OH == OW, "square activations only"
    Q = -(-OH // s)                                   # padded per-phase extent
    assert Q % 8 == 0, "kernel is specialised to sublane-aligned phase tiles"
    phases = _phase_taps(K, s, p)
    assert all(phases), "every output phase needs at least one tap (K >= s)"
    assert all(d >= 0 for taps in phases for _, d in taps), \
        "this model's deconvs never need low-side input padding"
    max_d = max(d for taps in phases for _, d in taps)
    Hp = max(H, Q + max_d)
    x = x.astype(jnp.float32)
    if Hp > H:
        x = jnp.pad(x, ((0, 0), (0, Hp - H), (0, Hp - W), (0, 0)))

    bt = 2 if B % 2 == 0 else 1
    tn = _pick_tile(cout, tn_pref)
    # keep the double-buffered weight slab within ~half the VMEM budget
    while tn > 128 and 2 * K * K * cin * tn * 2 > _vmem_limit_bytes() // 2:
        tn //= 2
    # weights are the slowest grid axis -> the (K,K,Cin,tn) slab is DMA'd once
    # per channel tile; phase axes are fastest and fully input-resident.
    grid = (cout // tn, B // bt, s, s)

    ph_out = pl.pallas_call(
        functools.partial(_deconv_s2_kernel, phases=phases, Q=Q, act=act),
        out_shape=jax.ShapeDtypeStruct((s, s, B * Q * Q, cout), jnp.bfloat16),
        grid=grid,
        in_specs=[
            pl.BlockSpec((bt, Hp, Hp, cin), lambda n, b, rh, rw: (b, 0, 0, 0)),
            pl.BlockSpec((K, K, cin, tn), lambda n, b, rh, rw: (0, 0, 0, n)),
            pl.BlockSpec((1, tn), lambda n, b, rh, rw: (0, n)),
        ],
        out_specs=pl.BlockSpec((None, None, bt * Q * Q, tn),
                               lambda n, b, rh, rw: (rh, rw, b, n)),
        compiler_params=_cparams(("parallel",) * 4),
    )(x, w_kk, b.reshape(1, cout).astype(jnp.float32))

    # Interleave the s*s phases with ONE transpose (no strided scatters).
    y = ph_out.reshape(s, s, B, Q, Q, cout).transpose(2, 3, 0, 4, 1, 5)
    y = y.reshape(B, s * Q, s * Q, cout)[:, :OH, :OW, :]
    return y


# -------------- conv2 + conv3 + out_activation, fused, flat 2D -------------- #

def _deconv_s2_proj_kernel(x_ref, w_ref, b_ref, pw_ref, pb_ref, o_ref, *,
                           phase_taps, act, out_act, oc):
    """Fused stride-2 k=2 ConvTranspose (one tap per phase) + bias + act
    + 1x1 ConvTranspose projection + out_act, evaluated at every input pixel.

    x_ref : (M, Cin)  bf16   flat NHWC pixels of the *input* feature map
    w_ref : (K, K, Cin, Ch) bf16
    b_ref : (1, Ch)   f32
    pw_ref: (oc, Ch)  f32    conv3 weight, pre-transposed
    pb_ref: (1, oc)   f32
    o_ref : (M, s*s*oc) f32  phase-packed output columns
    """
    xs = x_ref[...]
    for p_idx, (kh, kw) in enumerate(phase_taps):
        h = jnp.dot(xs, w_ref[kh, kw], preferred_element_type=jnp.float32)
        h = _act(h + b_ref[...], act)
        if oc == 1:
            # out_chan == 1: VPU multiply + lane reduction instead of a
            # degenerate N=1 MXU matmul.
            y = jnp.sum(h * pw_ref[...], axis=-1, keepdims=True)
        else:
            y = lax.dot_general(h, pw_ref[...],
                                dimension_numbers=(((1,), (1,)), ((), ())),
                                preferred_element_type=jnp.float32)
        y = _act(y + pb_ref[...], out_act)
        o_ref[:, p_idx * oc:(p_idx + 1) * oc] = y.astype(o_ref.dtype)


def deconv_s2_proj(x, w_kk, b, pw, pb, act, out_act, *, stride, padding):
    """conv2 (k==stride) with conv3 (1x1) and out_act fused into the epilogue.
    x: (B, H, W, Cin) bf16; w_kk: (K, K, Cin, Ch) bf16; b: (Ch,) f32;
    pw: (out_chan, Ch) f32; pb: (out_chan,) f32.  Returns (B, OH, OW, oc) f32.
    """
    B, H, W, cin = x.shape
    K = w_kk.shape[0]
    ch = w_kk.shape[3]
    oc = pw.shape[0]
    s, p = stride, padding
    OH = (H - 1) * s - 2 * p + K
    assert H == W and OH % s == 0
    Q = OH // s
    phases = _phase_taps(K, s, p)
    assert all(len(t) == 1 for t in phases), "K == stride: one tap per phase"
    assert all(t[0][1] >= 0 for t in phases)
    assert Q - 1 + max(t[0][1] for t in phases) <= H - 1
    phase_taps = [(phases[sh][0][0], phases[sw][0][0])
                  for sh in range(s) for sw in range(s)]

    xf = x.reshape(B * H * W, cin).astype(jnp.bfloat16)
    bt = B if B % 8 else 8          # block rows must be 8-aligned or full
    grid = (B // bt,)
    mpix = H * W
    out = pl.pallas_call(
        functools.partial(_deconv_s2_proj_kernel, phase_taps=phase_taps,
                          act=act, out_act=out_act, oc=oc),
        out_shape=jax.ShapeDtypeStruct((B * mpix, s * s * oc), jnp.float32),
        grid=grid,
        in_specs=[
            pl.BlockSpec((bt * mpix, cin), lambda i: (i, 0)),
            pl.BlockSpec((K, K, cin, ch), lambda i: (0, 0, 0, 0)),
            pl.BlockSpec((1, ch), lambda i: (0, 0)),
            pl.BlockSpec((oc, ch), lambda i: (0, 0)),
            pl.BlockSpec((1, oc), lambda i: (0, 0)),
        ],
        out_specs=pl.BlockSpec((bt * mpix, s * s * oc), lambda i: (i, 0)),
        compiler_params=_cparams(("parallel",)),
    )(xf, w_kk, b.reshape(1, ch).astype(jnp.float32),
      pw.astype(jnp.float32), pb.reshape(1, oc).astype(jnp.float32))

    # Select each phase's Q x Q window and interleave -> (B, OH, OH, oc).
    val = out.reshape(B, H, W, s, s, oc)
    rows = []
    for sh in range(s):
        dh = phases[sh][0][1]
        cols = []
        for sw in range(s):
            dw = phases[sw][0][1]
            cols.append(val[:, dh:dh + Q, dw:dw + Q, sh, sw, :])
        rows.append(jnp.stack(cols, axis=3))          # (B, Q, Q, s, oc)
    v = jnp.stack(rows, axis=3)                       # (B, Q, Q, sh, sw, oc)
    return v.transpose(0, 1, 3, 2, 4, 5).reshape(B, OH, OH, oc)


# --------------------------------- model ----------------------------------- #

def init_deconvnet28_params(key, in_chan=1, out_chan=1, nh=32):
    def tconv(k, cin, cout, ksz):
        kw, kb = jax.random.split(k)
        bound = 1.0 / np.sqrt(cin * ksz * ksz)
        w = jax.random.uniform(kw, (cin, cout, ksz, ksz), jnp.float32,
                               -bound, bound)
        b = jax.random.uniform(kb, (cout,), jnp.float32, -bound, bound)
        return w, b

    k1, k2, k3, k4 = jax.random.split(key, 4)
    return {
        "fc1": tconv(k1, in_chan, nh * 32, 8),
        "conv1": tconv(k2, nh * 32, nh * 16, 3),
        "conv2": tconv(k3, nh * 16, nh * 8, 2),
        "conv3": tconv(k4, nh * 8, out_chan, 1),
    }


def prepare_params(params):
    """Pre-pack weights once (outside the per-step forward): contiguous
    per-tap slabs in bf16, biases in f32."""
    w1, b1 = params["fc1"]                            # (Cin, C1, 8, 8)
    cin, c1, k1, _ = w1.shape
    fc1_w = jnp.transpose(w1, (0, 2, 3, 1)).reshape(cin, k1 * k1 * c1)
    fc1_b = jnp.tile(b1, k1 * k1)
    w2, b2 = params["conv1"]                          # (C1, C2, 3, 3)
    w3, b3 = params["conv2"]                          # (C2, C3, 2, 2)
    w4, b4 = params["conv3"]                          # (C3, oc, 1, 1)
    return {
        "fc1_w": fc1_w.astype(jnp.bfloat16),
        "fc1_b": fc1_b.astype(jnp.float32),
        "conv1_w": jnp.transpose(w2, (2, 3, 0, 1)).astype(jnp.bfloat16),
        "conv1_b": b2.astype(jnp.float32),
        "conv2_w": jnp.transpose(w3, (2, 3, 0, 1)).astype(jnp.bfloat16),
        "conv2_b": b3.astype(jnp.float32),
        "proj_w": jnp.transpose(w4[:, :, 0, 0], (1, 0)).astype(jnp.float32),
        "proj_b": b4.astype(jnp.float32),
    }


def deconvnet28_forward(prepared, x, activation="relu",
                        out_activation="sigmoid"):
    """Matches DeConvNet28.forward: fc1-act-conv1-act-conv2-act-conv3-out_act."""
    if x.ndim == 2:
        x2 = x
    else:
        if x.ndim != 4:
            x = x[:, :, None, None]
        assert x.shape[2] == 1 and x.shape[3] == 1, \
            "DeConvNet28 decodes a (B, in_chan, 1, 1) latent"
        x2 = x.reshape(x.shape[0], x.shape[1])
    B = x2.shape[0]

    c1 = prepared["conv1_w"].shape[2]
    n1 = prepared["fc1_w"].shape[1]
    k1 = int(round((n1 // c1) ** 0.5))

    # fc1 (8x8 ConvTranspose on a 1x1 input) == one dense GEMM.
    h = gemm_bias_act(x2, prepared["fc1_w"], prepared["fc1_b"], activation,
                      out_dtype=jnp.float32, tn_pref=8192)
    h = h.reshape(B, k1, k1, c1)                              # (B, 8, 8, nh*32)

    # conv1: k=3, s=2, p=1 -> (B, 15, 15, nh*16)
    h = deconv_s2_phasewise(h, prepared["conv1_w"], prepared["conv1_b"],
                            activation, stride=2, padding=1)

    # conv2 (k=2, s=2, p=1) fused with conv3 (1x1) and the output activation.
    y = deconv_s2_proj(h, prepared["conv2_w"], prepared["conv2_b"],
                       prepared["proj_w"], prepared["proj_b"],
                       activation, out_activation, stride=2, padding=1)
    return jnp.transpose(y, (0, 3, 1, 2))                     # NHWC -> NCHW


# --------------------------- pure-JAX reference ----------------------------- #

def _ref_act(x, act):
    if act == "relu":
        return jnp.maximum(x, 0.0)
    if act == "leakyrelu":
        return jnp.where(x >= 0.0, x, 0.2 * x)
    if act == "sigmoid":
        return jax.nn.sigmoid(x)
    if act == "tanh":
        return jnp.tanh(x)
    return x


def _ref_conv_transpose2d(x, weight, bias, stride, padding, act):
    K = weight.shape[2]
    w_conv = jnp.flip(weight, axis=(2, 3)).transpose(1, 0, 2, 3)
    pe = K - 1 - padding
    y = lax.conv_general_dilated(
        x, w_conv, window_strides=(1, 1), padding=[(pe, pe), (pe, pe)],
        lhs_dilation=(stride, stride),
        dimension_numbers=("NCHW", "OIHW", "NCHW"))
    return _ref_act(y + bias[None, :, None, None], act)


def _ref_forward(params, x, activation="relu", out_activation="sigmoid"):
    if x.ndim != 4:
        x = x[:, :, None, None]
    w, b = params["fc1"];   x = _ref_conv_transpose2d(x, w, b, 1, 0, activation)
    w, b = params["conv1"]; x = _ref_conv_transpose2d(x, w, b, 2, 1, activation)
    w, b = params["conv2"]; x = _ref_conv_transpose2d(x, w, b, 2, 1, activation)
    w, b = params["conv3"]; x = _ref_conv_transpose2d(x, w, b, 1, 0, out_activation)
    return x


if __name__ == "__main__":
    key = jax.random.PRNGKey(0)
    kp, kx = jax.random.split(key)

    # small, module-consistent sizes: nh=2 -> channels 64/32/16, in_chan=4
    in_chan, out_chan, nh, batch = 4, 1, 2, 2
    params = init_deconvnet28_params(kp, in_chan=in_chan, out_chan=out_chan,
                                     nh=nh)
    prepared = prepare_params(params)
    x = jax.random.normal(kx, (batch, in_chan, 1, 1), dtype=jnp.float32)

    fwd = jax.jit(functools.partial(deconvnet28_forward,
                                    activation="relu",
                                    out_activation="sigmoid"))
    out = jax.block_until_ready(fwd(prepared, x))

    assert out.shape == (batch, out_chan, 28, 28), out.shape
    assert bool(jnp.all(jnp.isfinite(out)))

    ref = jax.block_until_ready(_ref_forward(params, x))
    err = float(np.max(np.abs(np.asarray(out, np.float32) - np.asarray(ref))))
    assert np.allclose(np.asarray(out, np.float32), np.asarray(ref),
                       atol=2e-2, rtol=2e-2), f"max abs err {err}"

    print("KERNEL_OK")
</pallas_src>

<mosaic_0001>
module attributes {stable_mosaic.version = 11 : i64} {
  func.func @_gemm_bias_act_kernel(%arg0: i32, %arg1: i32, %arg2: memref<2x4xbf16, #tpu.memory_space<vmem>>, %arg3: memref<4x4096xbf16, #tpu.memory_space<vmem>>, %arg4: memref<1x4096xf32, #tpu.memory_space<vmem>>, %arg5: memref<2x4096xf32, #tpu.memory_space<vmem>>) attributes {dimension_semantics = [#tpu.dimension_semantics<parallel>, #tpu.dimension_semantics<parallel>], iteration_bounds = array<i64: 1, 1>, scalar_prefetch = 0 : i64, scratch_operands = 0 : i64, tpu.core_type = #tpu.core_type<tc>, window_params = [{transform_indices = @transform_0, window_bounds = array<i64: 2, 4>}, {transform_indices = @transform_1, window_bounds = array<i64: 4, 4096>}, {transform_indices = @transform_2, window_bounds = array<i64: 1, 4096>}, {transform_indices = @transform_3, window_bounds = array<i64: 2, 4096>}]} {
    %c0 = arith.constant 0 : index
    %c0_0 = arith.constant 0 : index
    %0 = vector.load %arg2[%c0, %c0_0] : memref<2x4xbf16, #tpu.memory_space<vmem>>, vector<2x4xbf16>
    %c0_1 = arith.constant 0 : index
    %c0_2 = arith.constant 0 : index
    %1 = vector.load %arg3[%c0_1, %c0_2] : memref<4x4096xbf16, #tpu.memory_space<vmem>>, vector<4x4096xbf16>
    %cst = arith.constant dense<0.000000e+00> : vector<2x4096xf32>
    %2 = tpu.matmul %0, %1, %cst {dimension_numbers = #tpu.dot_dimension_numbers<[1], [0], [0], [1], [0, 0, 1, 1], [], []>} : vector<2x4xbf16>, vector<4x4096xbf16>, vector<2x4096xf32> -> vector<2x4096xf32>
    %c0_3 = arith.constant 0 : index
    %c0_4 = arith.constant 0 : index
    %3 = vector.load %arg4[%c0_3, %c0_4] : memref<1x4096xf32, #tpu.memory_space<vmem>>, vector<1x4096xf32>
    %4 = vector.broadcast %3 : vector<1x4096xf32> to vector<2x4096xf32>
    %5 = arith.addf %2, %4 : vector<2x4096xf32>
    %cst_5 = arith.constant 0.000000e+00 : f32
    %6 = vector.broadcast %cst_5 : f32 to vector<2x4096xf32>
    %7 = arith.maximumf %5, %6 : vector<2x4096xf32>
    %c0_6 = arith.constant 0 : index
    %c0_7 = arith.constant 0 : index
    %8 = vector.load %arg5[%c0_6, %c0_7] : memref<2x4096xf32, #tpu.memory_space<vmem>>, vector<2x4096xf32>
    tpu.vector_store %arg5[%c0_6, %c0_7], %7 {strides = array<i32>} : memref<2x4096xf32, #tpu.memory_space<vmem>>, vector<2x4096xf32>,
    return
  }
  func.func @transform_0(%arg0: i32, %arg1: i32) -> (i32, i32) {
    %c0_i32 = arith.constant 0 : i32
    %c0_i32_0 = arith.constant 0 : i32
    return %arg0, %c0_i32 : i32, i32
  }
  func.func @transform_1(%arg0: i32, %arg1: i32) -> (i32, i32) {
    %c0_i32 = arith.constant 0 : i32
    %c0_i32_0 = arith.constant 0 : i32
    return %c0_i32, %arg1 : i32, i32
  }
  func.func @transform_2(%arg0: i32, %arg1: i32) -> (i32, i32) {
    %c0_i32 = arith.constant 0 : i32
    %c0_i32_0 = arith.constant 0 : i32
    return %c0_i32, %arg1 : i32, i32
  }
  func.func @transform_3(%arg0: i32, %arg1: i32) -> (i32, i32) {
    %c0_i32 = arith.constant 0 : i32
    return %arg0, %arg1 : i32, i32
  }
}

module attributes {stable_mosaic.version = 11 : i64} {
  func.func @_deconv_s2_kernel(%arg0: i32, %arg1: i32, %arg2: i32, %arg3: i32, %arg4: memref<2x9x9x64xf32, #tpu.memory_space<vmem>>, %arg5: memref<3x3x64x32xbf16, #tpu.memory_space<vmem>>, %arg6: memref<1x32xf32, #tpu.memory_space<vmem>>, %arg7: memref<1x1x128x32xbf16, #tpu.memory_space<vmem>>) attributes {dimension_semantics = [#tpu.dimension_semantics<parallel>, #tpu.dimension_semantics<parallel>, #tpu.dimension_semantics<parallel>, #tpu.dimension_semantics<parallel>], iteration_bounds = array<i64: 1, 1, 2, 2>, scalar_prefetch = 0 : i64, scratch_operands = 0 : i64, tpu.core_type = #tpu.core_type<tc>, window_params = [{transform_indices = @transform_0, window_bounds = array<i64: 2, 9, 9, 64>}, {transform_indices = @transform_1, window_bounds = array<i64: 3, 3, 64, 32>}, {transform_indices = @transform_2, window_bounds = array<i64: 1, 32>}, {transform_indices = @transform_3, window_bounds = array<i64: 1, 1, 128, 32>}]} {
    %c0_i32 = arith.constant 0 : i32
    %0 = arith.cmpi eq, %arg2, %c0_i32 : i32
    %c0_i32_0 = arith.constant 0 : i32
    %1 = arith.cmpi eq, %arg3, %c0_i32_0 : i32
    %2 = arith.andi %0, %1 : i1
    %3 = arith.extui %2 : i1 to i32
    %c0_i32_1 = arith.constant 0 : i32
    %4 = arith.cmpi ne, %3, %c0_i32_1 : i32
    scf.if %4 {
      %cst = arith.constant 0.000000e+00 : f32
      %20 = vector.broadcast %cst : f32 to vector<128x32xf32>
      %c0 = arith.constant 0 : index
      %c0_10 = arith.constant 0 : index
      %c0_11 = arith.constant 0 : index
      %c0_12 = arith.constant 0 : index
      %21 = vector.load %arg4[%c0, %c0_10, %c0_11, %c0_12] : memref<2x9x9x64xf32, #tpu.memory_space<vmem>>, vector<2x8x8x64xf32>
      %22 = vector.shape_cast %21 : vector<2x8x8x64xf32> to vector<128x64xf32>
      %23 = arith.truncf %22 : vector<128x64xf32> to vector<128x64xbf16>
      %c1 = arith.constant 1 : index
      %c1_13 = arith.constant 1 : index
      %c0_14 = arith.constant 0 : index
      %c0_15 = arith.constant 0 : index
      %24 = vector.load %arg5[%c1, %c1_13, %c0_14, %c0_15] : memref<3x3x64x32xbf16, #tpu.memory_space<vmem>>, vector<1x1x64x32xbf16>
      %25 = vector.shape_cast %24 : vector<1x1x64x32xbf16> to vector<64x32xbf16>
      %cst_16 = arith.constant dense<0.000000e+00> : vector<128x32xf32>
      %26 = tpu.matmul %23, %25, %cst_16 {dimension_numbers = #tpu.dot_dimension_numbers<[1], [0], [0], [1], [0, 0, 1, 1], [], []>} : vector<128x64xbf16>, vector<64x32xbf16>, vector<128x32xf32> -> vector<128x32xf32>
      %27 = arith.addf %20, %26 : vector<128x32xf32>
      %c0_17 = arith.constant 0 : index
      %c0_18 = arith.constant 0 : index
      %28 = vector.load %arg6[%c0_17, %c0_18] : memref<1x32xf32, #tpu.memory_space<vmem>>, vector<1x32xf32>
      %29 = vector.broadcast %28 : vector<1x32xf32> to vector<128x32xf32>
      %30 = arith.addf %27, %29 : vector<128x32xf32>
      %cst_19 = arith.constant 0.000000e+00 : f32
      %31 = vector.broadcast %cst_19 : f32 to vector<128x32xf32>
      %32 = arith.maximumf %30, %31 : vector<128x32xf32>
      %33 = arith.truncf %32 : vector<128x32xf32> to vector<128x32xbf16>
      %c0_20 = arith.constant 0 : index
      %c0_21 = arith.constant 0 : index
      %c0_22 = arith.constant 0 : index
      %c0_23 = arith.constant 0 : index
      %34 = vector.load %arg7[%c0_20, %c0_21, %c0_22, %c0_23] : memref<1x1x128x32xbf16, #tpu.memory_space<vmem>>, vector<1x1x128x32xbf16>
      %35 = vector.shape_cast %34 : vector<1x1x128x32xbf16> to vector<128x32xbf16>
      %36 = vector.shape_cast %33 : vector<128x32xbf16> to vector<1x1x128x32xbf16>
      tpu.vector_store %arg7[%c0_20, %c0_21, %c0_22, %c0_23], %36 {strides = array<i32>} : memref<1x1x128x32xbf16, #tpu.memory_space<vmem>>, vector<1x1x128x32xbf16>,
    } else {
    }
    %c0_i32_2 = arith.constant 0 : i32
    %5 = arith.cmpi eq, %arg2, %c0_i32_2 : i32
    %c1_i32 = arith.constant 1 : i32
    %6 = arith.cmpi eq, %arg3, %c1_i32 : i32
    %7 = arith.andi %5, %6 : i1
    %8 = arith.extui %7 : i1 to i32
    %c0_i32_3 = arith.constant 0 : i32
    %9 = arith.cmpi ne, %8, %c0_i32_3 : i32
    scf.if %9 {
      %cst = arith.constant 0.000000e+00 : f32
      %20 = vector.broadcast %cst : f32 to vector<128x32xf32>
      %c0 = arith.constant 0 : index
      %c0_10 = arith.constant 0 : index
      %c1 = arith.constant 1 : index
      %c0_11 = arith.constant 0 : index
      %21 = vector.load %arg4[%c0, %c0_10, %c1, %c0_11] : memref<2x9x9x64xf32, #tpu.memory_space<vmem>>, vector<2x8x8x64xf32>
      %22 = vector.shape_cast %21 : vector<2x8x8x64xf32> to vector<128x64xf32>
      %23 = arith.truncf %22 : vector<128x64xf32> to vector<128x64xbf16>
      %c1_12 = arith.constant 1 : index
      %c0_13 = arith.constant 0 : index
      %c0_14 = arith.constant 0 : index
      %c0_15 = arith.constant 0 : index
      %24 = vector.load %arg5[%c1_12, %c0_13, %c0_14, %c0_15] : memref<3x3x64x32xbf16, #tpu.memory_space<vmem>>, vector<1x1x64x32xbf16>
      %25 = vector.shape_cast %24 : vector<1x1x64x32xbf16> to vector<64x32xbf16>
      %cst_16 = arith.constant dense<0.000000e+00> : vector<128x32xf32>
      %26 = tpu.matmul %23, %25, %cst_16 {dimension_numbers = #tpu.dot_dimension_numbers<[1], [0], [0], [1], [0, 0, 1, 1], [], []>} : vector<128x64xbf16>, vector<64x32xbf16>, vector<128x32xf32> -> vector<128x32xf32>
      %27 = arith.addf %20, %26 : vector<128x32xf32>
      %c0_17 = arith.constant 0 : index
      %c0_18 = arith.constant 0 : index
      %c0_19 = arith.constant 0 : index
      %c0_20 = arith.constant 0 : index
      %28 = vector.load %arg4[%c0_17, %c0_18, %c0_19, %c0_20] : memref<2x9x9x64xf32, #tpu.memory_space<vmem>>, vector<2x8x8x64xf32>
      %29 = vector.shape_cast %28 : vector<2x8x8x64xf32> to vector<128x64xf32>
      %30 = arith.truncf %29 : vector<128x64xf32> to vector<128x64xbf16>
      %c1_21 = arith.constant 1 : index
      %c2 = arith.constant 2 : index
      %c0_22 = arith.constant 0 : index
      %c0_23 = arith.constant 0 : index
      %31 = vector.load %arg5[%c1_21, %c2, %c0_22, %c0_23] : memref<3x3x64x32xbf16, #tpu.memory_space<vmem>>, vector<1x1x64x32xbf16>
      %32 = vector.shape_cast %31 : vector<1x1x64x32xbf16> to vector<64x32xbf16>
      %cst_24 = arith.constant dense<0.000000e+00> : vector<128x32xf32>
      %33 = tpu.matmul %30, %32, %cst_24 {dimension_numbers = #tpu.dot_dimension_numbers<[1], [0], [0], [1], [0, 0, 1, 1], [], []>} : vector<128x64xbf16>, vector<64x32xbf16>, vector<128x32xf32> -> vector<128x32xf32>
      %34 = arith.addf %27, %33 : vector<128x32xf32>
      %c0_25 = arith.constant 0 : index
      %c0_26 = arith.constant 0 : index
      %35 = vector.load %arg6[%c0_25, %c0_26] : memref<1x32xf32, #tpu.memory_space<vmem>>, vector<1x32xf32>
      %36 = vector.broadcast %35 : vector<1x32xf32> to vector<128x32xf32>
      %37 = arith.addf %34, %36 : vector<128x32xf32>
      %cst_27 = arith.constant 0.000000e+00 : f32
      %38 = vector.broadcast %cst_27 : f32 to vector<128x32xf32>
      %39 = arith.maximumf %37, %38 : vector<128x32xf32>
      %40 = arith.truncf %39 : vector<128x32xf32> to vector<128x32xbf16>
      %c0_28 = arith.constant 0 : index
      %c0_29 = arith.constant 0 : index
      %c0_30 = arith.constant 0 : index
      %c0_31 = arith.constant 0 : index
      %41 = vector.load %arg7[%c0_28, %c0_29, %c0_30, %c0_31] : memref<1x1x128x32xbf16, #tpu.memory_space<vmem>>, vector<1x1x128x32xbf16>
      %42 = vector.shape_cast %41 : vector<1x1x128x32xbf16> to vector<128x32xbf16>
      %43 = vector.shape_cast %40 : vector<128x32xbf16> to vector<1x1x128x32xbf16>
      tpu.vector_store %arg7[%c0_28, %c0_29, %c0_30, %c0_31], %43 {strides = array<i32>} : memref<1x1x128x32xbf16, #tpu.memory_space<vmem>>, vector<1x1x128x32xbf16>,
    } else {
    }
    %c1_i32_4 = arith.constant 1 : i32
    %10 = arith.cmpi eq, %arg2, %c1_i32_4 : i32
    %c0_i32_5 = arith.constant 0 : i32
    %11 = arith.cmpi eq, %arg3, %c0_i32_5 : i32
    %12 = arith.andi %10, %11 : i1
    %13 = arith.extui %12 : i1 to i32
    %c0_i32_6 = arith.constant 0 : i32
    %14 = arith.cmpi ne, %13, %c0_i32_6 : i32
    scf.if %14 {
      %cst = arith.constant 0.000000e+00 : f32
      %20 = vector.broadcast %cst : f32 to vector<128x32xf32>
      %c0 = arith.constant 0 : index
      %c1 = arith.constant 1 : index
      %c0_10 = arith.constant 0 : index
      %c0_11 = arith.constant 0 : index
      %21 = vector.load %arg4[%c0, %c1, %c0_10, %c0_11] : memref<2x9x9x64xf32, #tpu.memory_space<vmem>>, vector<2x8x8x64xf32>
      %22 = vector.shape_cast %21 : vector<2x8x8x64xf32> to vector<128x64xf32>
      %23 = arith.truncf %22 : vector<128x64xf32> to vector<128x64xbf16>
      %c0_12 = arith.constant 0 : index
      %c1_13 = arith.constant 1 : index
      %c0_14 = arith.constant 0 : index
      %c0_15 = arith.constant 0 : index
      %24 = vector.load %arg5[%c0_12, %c1_13, %c0_14, %c0_15] : memref<3x3x64x32xbf16, #tpu.memory_space<vmem>>, vector<1x1x64x32xbf16>
      %25 = vector.shape_cast %24 : vector<1x1x64x32xbf16> to vector<64x32xbf16>
      %cst_16 = arith.constant dense<0.000000e+00> : vector<128x32xf32>
      %26 = tpu.matmul %23, %25, %cst_16 {dimension_numbers = #tpu.dot_dimension_numbers<[1], [0], [0], [1], [0, 0, 1, 1], [], []>} : vector<128x64xbf16>, vector<64x32xbf16>, vector<128x32xf32> -> vector<128x32xf32>
      %27 = arith.addf %20, %26 : vector<128x32xf32>
      %c0_17 = arith.constant 0 : index
      %c0_18 = arith.constant 0 : index
      %c0_19 = arith.constant 0 : index
      %c0_20 = arith.constant 0 : index
      %28 = vector.load %arg4[%c0_17, %c0_18, %c0_19, %c0_20] : memref<2x9x9x64xf32, #tpu.memory_space<vmem>>, vector<2x8x8x64xf32>
      %29 = vector.shape_cast %28 : vector<2x8x8x64xf32> to vector<128x64xf32>
      %30 = arith.truncf %29 : vector<128x64xf32> to vector<128x64xbf16>
      %c2 = arith.constant 2 : index
      %c1_21 = arith.constant 1 : index
      %c0_22 = arith.constant 0 : index
      %c0_23 = arith.constant 0 : index
      %31 = vector.load %arg5[%c2, %c1_21, %c0_22, %c0_23] : memref<3x3x64x32xbf16, #tpu.memory_space<vmem>>, vector<1x1x64x32xbf16>
      %32 = vector.shape_cast %31 : vector<1x1x64x32xbf16> to vector<64x32xbf16>
      %cst_24 = arith.constant dense<0.000000e+00> : vector<128x32xf32>
      %33 = tpu.matmul %30, %32, %cst_24 {dimension_numbers = #tpu.dot_dimension_numbers<[1], [0], [0], [1], [0, 0, 1, 1], [], []>} : vector<128x64xbf16>, vector<64x32xbf16>, vector<128x32xf32> -> vector<128x32xf32>
      %34 = arith.addf %27, %33 : vector<128x32xf32>
      %c0_25 = arith.constant 0 : index
      %c0_26 = arith.constant 0 : index
      %35 = vector.load %arg6[%c0_25, %c0_26] : memref<1x32xf32, #tpu.memory_space<vmem>>, vector<1x32xf32>
      %36 = vector.broadcast %35 : vector<1x32xf32> to vector<128x32xf32>
      %37 = arith.addf %34, %36 : vector<128x32xf32>
      %cst_27 = arith.constant 0.000000e+00 : f32
      %38 = vector.broadcast %cst_27 : f32 to vector<128x32xf32>
      %39 = arith.maximumf %37, %38 : vector<128x32xf32>
      %40 = arith.truncf %39 : vector<128x32xf32> to vector<128x32xbf16>
      %c0_28 = arith.constant 0 : index
      %c0_29 = arith.constant 0 : index
      %c0_30 = arith.constant 0 : index
      %c0_31 = arith.constant 0 : index
      %41 = vector.load %arg7[%c0_28, %c0_29, %c0_30, %c0_31] : memref<1x1x128x32xbf16, #tpu.memory_space<vmem>>, vector<1x1x128x32xbf16>
      %42 = vector.shape_cast %41 : vector<1x1x128x32xbf16> to vector<128x32xbf16>
      %43 = vector.shape_cast %40 : vector<128x32xbf16> to vector<1x1x128x32xbf16>
      tpu.vector_store %arg7[%c0_28, %c0_29, %c0_30, %c0_31], %43 {strides = array<i32>} : memref<1x1x128x32xbf16, #tpu.memory_space<vmem>>, vector<1x1x128x32xbf16>,
    } else {
    }
    %c1_i32_7 = arith.constant 1 : i32
    %15 = arith.cmpi eq, %arg2, %c1_i32_7 : i32
    %c1_i32_8 = arith.constant 1 : i32
    %16 = arith.cmpi eq, %arg3, %c1_i32_8 : i32
    %17 = arith.andi %15, %16 : i1
    %18 = arith.extui %17 : i1 to i32
    %c0_i32_9 = arith.constant 0 : i32
    %19 = arith.cmpi ne, %18, %c0_i32_9 : i32
    scf.if %19 {
      %cst = arith.constant 0.000000e+00 : f32
      %20 = vector.broadcast %cst : f32 to vector<128x32xf32>
      %c0 = arith.constant 0 : index
      %c1 = arith.constant 1 : index
      %c1_10 = arith.constant 1 : index
      %c0_11 = arith.constant 0 : index
      %21 = vector.load %arg4[%c0, %c1, %c1_10, %c0_11] : memref<2x9x9x64xf32, #tpu.memory_space<vmem>>, vector<2x8x8x64xf32>
      %22 = vector.shape_cast %21 : vector<2x8x8x64xf32> to vector<128x64xf32>
      %23 = arith.truncf %22 : vector<128x64xf32> to vector<128x64xbf16>
      %c0_12 = arith.constant 0 : index
      %c0_13 = arith.constant 0 : index
      %c0_14 = arith.constant 0 : index
      %c0_15 = arith.constant 0 : index
      %24 = vector.load %arg5[%c0_12, %c0_13, %c0_14, %c0_15] : memref<3x3x64x32xbf16, #tpu.memory_space<vmem>>, vector<1x1x64x32xbf16>
      %25 = vector.shape_cast %24 : vector<1x1x64x32xbf16> to vector<64x32xbf16>
      %cst_16 = arith.constant dense<0.000000e+00> : vector<128x32xf32>
      %26 = tpu.matmul %23, %25, %cst_16 {dimension_numbers = #tpu.dot_dimension_numbers<[1], [0], [0], [1], [0, 0, 1, 1], [], []>} : vector<128x64xbf16>, vector<64x32xbf16>, vector<128x32xf32> -> vector<128x32xf32>
      %27 = arith.addf %20, %26 : vector<128x32xf32>
      %c0_17 = arith.constant 0 : index
      %c1_18 = arith.constant 1 : index
      %c0_19 = arith.constant 0 : index
      %c0_20 = arith.constant 0 : index
      %28 = vector.load %arg4[%c0_17, %c1_18, %c0_19, %c0_20] : memref<2x9x9x64xf32, #tpu.memory_space<vmem>>, vector<2x8x8x64xf32>
      %29 = vector.shape_cast %28 : vector<2x8x8x64xf32> to vector<128x64xf32>
      %30 = arith.truncf %29 : vector<128x64xf32> to vector<128x64xbf16>
      %c0_21 = arith.constant 0 : index
      %c2 = arith.constant 2 : index
      %c0_22 = arith.constant 0 : index
      %c0_23 = arith.constant 0 : index
      %31 = vector.load %arg5[%c0_21, %c2, %c0_22, %c0_23] : memref<3x3x64x32xbf16, #tpu.memory_space<vmem>>, vector<1x1x64x32xbf16>
      %32 = vector.shape_cast %31 : vector<1x1x64x32xbf16> to vector<64x32xbf16>
      %cst_24 = arith.constant dense<0.000000e+00> : vector<128x32xf32>
      %33 = tpu.matmul %30, %32, %cst_24 {dimension_numbers = #tpu.dot_dimension_numbers<[1], [0], [0], [1], [0, 0, 1, 1], [], []>} : vector<128x64xbf16>, vector<64x32xbf16>, vector<128x32xf32> -> vector<128x32xf32>
      %34 = arith.addf %27, %33 : vector<128x32xf32>
      %c0_25 = arith.constant 0 : index
      %c0_26 = arith.constant 0 : index
      %c1_27 = arith.constant 1 : index
      %c0_28 = arith.constant 0 : index
      %35 = vector.load %arg4[%c0_25, %c0_26, %c1_27, %c0_28] : memref<2x9x9x64xf32, #tpu.memory_space<vmem>>, vector<2x8x8x64xf32>
      %36 = vector.shape_cast %35 : vector<2x8x8x64xf32> to vector<128x64xf32>
      %37 = arith.truncf %36 : vector<128x64xf32> to vector<128x64xbf16>
      %c2_29 = arith.constant 2 : index
      %c0_30 = arith.constant 0 : index
      %c0_31 = arith.constant 0 : index
      %c0_32 = arith.constant 0 : index
      %38 = vector.load %arg5[%c2_29, %c0_30, %c0_31, %c0_32] : memref<3x3x64x32xbf16, #tpu.memory_space<vmem>>, vector<1x1x64x32xbf16>
      %39 = vector.shape_cast %38 : vector<1x1x64x32xbf16> to vector<64x32xbf16>
      %cst_33 = arith.constant dense<0.000000e+00> : vector<128x32xf32>
      %40 = tpu.matmul %37, %39, %cst_33 {dimension_numbers = #tpu.dot_dimension_numbers<[1], [0], [0], [1], [0, 0, 1, 1], [], []>} : vector<128x64xbf16>, vector<64x32xbf16>, vector<128x32xf32> -> vector<128x32xf32>
      %41 = arith.addf %34, %40 : vector<128x32xf32>
      %c0_34 = arith.constant 0 : index
      %c0_35 = arith.constant 0 : index
      %c0_36 = arith.constant 0 : index
      %c0_37 = arith.constant 0 : index
      %42 = vector.load %arg4[%c0_34, %c0_35, %c0_36, %c0_37] : memref<2x9x9x64xf32, #tpu.memory_space<vmem>>, vector<2x8x8x64xf32>
      %43 = vector.shape_cast %42 : vector<2x8x8x64xf32> to vector<128x64xf32>
      %44 = arith.truncf %43 : vector<128x64xf32> to vector<128x64xbf16>
      %c2_38 = arith.constant 2 : index
      %c2_39 = arith.constant 2 : index
      %c0_40 = arith.constant 0 : index
      %c0_41 = arith.constant 0 : index
      %45 = vector.load %arg5[%c2_38, %c2_39, %c0_40, %c0_41] : memref<3x3x64x32xbf16, #tpu.memory_space<vmem>>, vector<1x1x64x32xbf16>
      %46 = vector.shape_cast %45 : vector<1x1x64x32xbf16> to vector<64x32xbf16>
      %cst_42 = arith.constant dense<0.000000e+00> : vector<128x32xf32>
      %47 = tpu.matmul %44, %46, %cst_42 {dimension_numbers = #tpu.dot_dimension_numbers<[1], [0], [0], [1], [0, 0, 1, 1], [], []>} : vector<128x64xbf16>, vector<64x32xbf16>, vector<128x32xf32> -> vector<128x32xf32>
      %48 = arith.addf %41, %47 : vector<128x32xf32>
      %c0_43 = arith.constant 0 : index
      %c0_44 = arith.constant 0 : index
      %49 = vector.load %arg6[%c0_43, %c0_44] : memref<1x32xf32, #tpu.memory_space<vmem>>, vector<1x32xf32>
      %50 = vector.broadcast %49 : vector<1x32xf32> to vector<128x32xf32>
      %51 = arith.addf %48, %50 : vector<128x32xf32>
      %cst_45 = arith.constant 0.000000e+00 : f32
      %52 = vector.broadcast %cst_45 : f32 to vector<128x32xf32>
      %53 = arith.maximumf %51, %52 : vector<128x32xf32>
      %54 = arith.truncf %53 : vector<128x32xf32> to vector<128x32xbf16>
      %c0_46 = arith.constant 0 : index
      %c0_47 = arith.constant 0 : index
      %c0_48 = arith.constant 0 : index
      %c0_49 = arith.constant 0 : index
      %55 = vector.load %arg7[%c0_46, %c0_47, %c0_48, %c0_49] : memref<1x1x128x32xbf16, #tpu.memory_space<vmem>>, vector<1x1x128x32xbf16>
      %56 = vector.shape_cast %55 : vector<1x1x128x32xbf16> to vector<128x32xbf16>
      %57 = vector.shape_cast %54 : vector<128x32xbf16> to vector<1x1x128x32xbf16>
      tpu.vector_store %arg7[%c0_46, %c0_47, %c0_48, %c0_49], %57 {strides = array<i32>} : memref<1x1x128x32xbf16, #tpu.memory_space<vmem>>, vector<1x1x128x32xbf16>,
    } else {
    }
    return
  }
  func.func @transform_0(%arg0: i32, %arg1: i32, %arg2: i32, %arg3: i32) -> (i32, i32, i32, i32) {
    %c0_i32 = arith.constant 0 : i32
    %c0_i32_0 = arith.constant 0 : i32
    %c0_i32_1 = arith.constant 0 : i32
    %c0_i32_2 = arith.constant 0 : i32
    return %arg1, %c0_i32, %c0_i32_0, %c0_i32_1 : i32, i32, i32, i32
  }
  func.func @transform_1(%arg0: i32, %arg1: i32, %arg2: i32, %arg3: i32) -> (i32, i32, i32, i32) {
    %c0_i32 = arith.constant 0 : i32
    %c0_i32_0 = arith.constant 0 : i32
    %c0_i32_1 = arith.constant 0 : i32
    %c0_i32_2 = arith.constant 0 : i32
    return %c0_i32, %c0_i32_0, %c0_i32_1, %arg0 : i32, i32, i32, i32
  }
  func.func @transform_2(%arg0: i32, %arg1: i32, %arg2: i32, %arg3: i32) -> (i32, i32) {
    %c0_i32 = arith.constant 0 : i32
    %c0_i32_0 = arith.constant 0 : i32
    return %c0_i32, %arg0 : i32, i32
  }
  func.func @transform_3(%arg0: i32, %arg1: i32, %arg2: i32, %arg3: i32) -> (i32, i32, i32, i32) {
    %c0_i32 = arith.constant 0 : i32
    return %arg2, %arg3, %arg1, %arg0 : i32, i32, i32, i32
  }
}

module attributes {stable_mosaic.version = 11 : i64} {
  func.func @_deconv_s2_proj_kernel(%arg0: i32, %arg1: memref<450x32xbf16, #tpu.memory_space<vmem>>, %arg2: memref<2x2x32x16xbf16, #tpu.memory_space<vmem>>, %arg3: memref<1x16xf32, #tpu.memory_space<vmem>>, %arg4: memref<1x16xf32, #tpu.memory_space<vmem>>, %arg5: memref<1x1xf32, #tpu.memory_space<vmem>>, %arg6: memref<450x4xf32, #tpu.memory_space<vmem>>) attributes {dimension_semantics = [#tpu.dimension_semantics<parallel>], iteration_bounds = array<i64: 1>, scalar_prefetch = 0 : i64, scratch_operands = 0 : i64, tpu.core_type = #tpu.core_type<tc>, window_params = [{transform_indices = @transform_0, window_bounds = array<i64: 450, 32>}, {pipeline_mode = #tpu.pipeline_mode<synchronous>, transform_indices = @transform_1, window_bounds = array<i64: 2, 2, 32, 16>}, {pipeline_mode = #tpu.pipeline_mode<synchronous>, transform_indices = @transform_2, window_bounds = array<i64: 1, 16>}, {pipeline_mode = #tpu.pipeline_mode<synchronous>, transform_indices = @transform_3, window_bounds = array<i64: 1, 16>}, {pipeline_mode = #tpu.pipeline_mode<synchronous>, transform_indices = @transform_4, window_bounds = array<i64: 1, 1>}, {transform_indices = @transform_5, window_bounds = array<i64: 450, 4>}]} {
    %c0 = arith.constant 0 : index
    %c0_0 = arith.constant 0 : index
    %0 = vector.load %arg1[%c0, %c0_0] : memref<450x32xbf16, #tpu.memory_space<vmem>>, vector<450x32xbf16>
    %c1 = arith.constant 1 : index
    %c1_1 = arith.constant 1 : index
    %c0_2 = arith.constant 0 : index
    %c0_3 = arith.constant 0 : index
    %1 = vector.load %arg2[%c1, %c1_1, %c0_2, %c0_3] : memref<2x2x32x16xbf16, #tpu.memory_space<vmem>>, vector<1x1x32x16xbf16>
    %2 = vector.shape_cast %1 : vector<1x1x32x16xbf16> to vector<32x16xbf16>
    %cst = arith.constant dense<0.000000e+00> : vector<450x16xf32>
    %3 = tpu.matmul %0, %2, %cst {dimension_numbers = #tpu.dot_dimension_numbers<[1], [0], [0], [1], [0, 0, 1, 1], [], []>} : vector<450x32xbf16>, vector<32x16xbf16>, vector<450x16xf32> -> vector<450x16xf32>
    %c0_4 = arith.constant 0 : index
    %c0_5 = arith.constant 0 : index
    %4 = vector.load %arg3[%c0_4, %c0_5] : memref<1x16xf32, #tpu.memory_space<vmem>>, vector<1x16xf32>
    %5 = vector.broadcast %4 : vector<1x16xf32> to vector<450x16xf32>
    %6 = arith.addf %3, %5 : vector<450x16xf32>
    %cst_6 = arith.constant 0.000000e+00 : f32
    %7 = vector.broadcast %cst_6 : f32 to vector<450x16xf32>
    %8 = arith.maximumf %6, %7 : vector<450x16xf32>
    %c0_7 = arith.constant 0 : index
    %c0_8 = arith.constant 0 : index
    %9 = vector.load %arg4[%c0_7, %c0_8] : memref<1x16xf32, #tpu.memory_space<vmem>>, vector<1x16xf32>
    %10 = vector.broadcast %9 : vector<1x16xf32> to vector<450x16xf32>
    %11 = arith.mulf %8, %10 : vector<450x16xf32>
    %cst_9 = arith.constant dense<0.000000e+00> : vector<450xf32>
    %12 = vector.multi_reduction <add>, %11, %cst_9 [1] : vector<450x16xf32> to vector<450xf32>
    %13 = vector.shape_cast %12 : vector<450xf32> to vector<450x1xf32>
    %c0_10 = arith.constant 0 : index
    %c0_11 = arith.constant 0 : index
    %14 = vector.load %arg5[%c0_10, %c0_11] : memref<1x1xf32, #tpu.memory_space<vmem>>, vector<1x1xf32>
    %15 = vector.broadcast %14 : vector<1x1xf32> to vector<450x1xf32>
    %16 = arith.addf %13, %15 : vector<450x1xf32>
    %cst_12 = arith.constant 0.000000e+00 : f32
    %17 = vector.broadcast %cst_12 : f32 to vector<450x1xf32>
    %18 = arith.subf %17, %16 : vector<450x1xf32>
    %19 = math.exp %18 : vector<450x1xf32>
    %cst_13 = arith.constant 1.000000e+00 : f32
    %20 = vector.broadcast %cst_13 : f32 to vector<450x1xf32>
    %21 = arith.addf %20, %19 : vector<450x1xf32>
    %cst_14 = arith.constant 1.000000e+00 : f32
    %22 = vector.broadcast %cst_14 : f32 to vector<450x1xf32>
    %23 = arith.divf %22, %21 : vector<450x1xf32>
    %c0_15 = arith.constant 0 : index
    %c0_16 = arith.constant 0 : index
    %24 = vector.load %arg6[%c0_15, %c0_16] : memref<450x4xf32, #tpu.memory_space<vmem>>, vector<450x1xf32>
    tpu.vector_store %arg6[%c0_15, %c0_16], %23 {strides = array<i32>} : memref<450x4xf32, #tpu.memory_space<vmem>>, vector<450x1xf32>,
    %c1_17 = arith.constant 1 : index
    %c0_18 = arith.constant 0 : index
    %c0_19 = arith.constant 0 : index
    %c0_20 = arith.constant 0 : index
    %25 = vector.load %arg2[%c1_17, %c0_18, %c0_19, %c0_20] : memref<2x2x32x16xbf16, #tpu.memory_space<vmem>>, vector<1x1x32x16xbf16>
    %26 = vector.shape_cast %25 : vector<1x1x32x16xbf16> to vector<32x16xbf16>
    %cst_21 = arith.constant dense<0.000000e+00> : vector<450x16xf32>
    %27 = tpu.matmul %0, %26, %cst_21 {dimension_numbers = #tpu.dot_dimension_numbers<[1], [0], [0], [1], [0, 0, 1, 1], [], []>} : vector<450x32xbf16>, vector<32x16xbf16>, vector<450x16xf32> -> vector<450x16xf32>
    %c0_22 = arith.constant 0 : index
    %c0_23 = arith.constant 0 : index
    %28 = vector.load %arg3[%c0_22, %c0_23] : memref<1x16xf32, #tpu.memory_space<vmem>>, vector<1x16xf32>
    %29 = vector.broadcast %28 : vector<1x16xf32> to vector<450x16xf32>
    %30 = arith.addf %27, %29 : vector<450x16xf32>
    %cst_24 = arith.constant 0.000000e+00 : f32
    %31 = vector.broadcast %cst_24 : f32 to vector<450x16xf32>
    %32 = arith.maximumf %30, %31 : vector<450x16xf32>
    %c0_25 = arith.constant 0 : index
    %c0_26 = arith.constant 0 : index
    %33 = vector.load %arg4[%c0_25, %c0_26] : memref<1x16xf32, #tpu.memory_space<vmem>>, vector<1x16xf32>
    %34 = vector.broadcast %33 : vector<1x16xf32> to vector<450x16xf32>
    %35 = arith.mulf %32, %34 : vector<450x16xf32>
    %cst_27 = arith.constant dense<0.000000e+00> : vector<450xf32>
    %36 = vector.multi_reduction <add>, %35, %cst_27 [1] : vector<450x16xf32> to vector<450xf32>
    %37 = vector.shape_cast %36 : vector<450xf32> to vector<450x1xf32>
    %c0_28 = arith.constant 0 : index
    %c0_29 = arith.constant 0 : index
    %38 = vector.load %arg5[%c0_28, %c0_29] : memref<1x1xf32, #tpu.memory_space<vmem>>, vector<1x1xf32>
    %39 = vector.broadcast %38 : vector<1x1xf32> to vector<450x1xf32>
    %40 = arith.addf %37, %39 : vector<450x1xf32>
    %cst_30 = arith.constant 0.000000e+00 : f32
    %41 = vector.broadcast %cst_30 : f32 to vector<450x1xf32>
    %42 = arith.subf %41, %40 : vector<450x1xf32>
    %43 = math.exp %42 : vector<450x1xf32>
    %cst_31 = arith.constant 1.000000e+00 : f32
    %44 = vector.broadcast %cst_31 : f32 to vector<450x1xf32>
    %45 = arith.addf %44, %43 : vector<450x1xf32>
    %cst_32 = arith.constant 1.000000e+00 : f32
    %46 = vector.broadcast %cst_32 : f32 to vector<450x1xf32>
    %47 = arith.divf %46, %45 : vector<450x1xf32>
    %c0_33 = arith.constant 0 : index
    %c1_34 = arith.constant 1 : index
    %48 = vector.load %arg6[%c0_33, %c1_34] : memref<450x4xf32, #tpu.memory_space<vmem>>, vector<450x1xf32>
    tpu.vector_store %arg6[%c0_33, %c1_34], %47 {strides = array<i32>} : memref<450x4xf32, #tpu.memory_space<vmem>>, vector<450x1xf32>,
    %c0_35 = arith.constant 0 : index
    %c1_36 = arith.constant 1 : index
    %c0_37 = arith.constant 0 : index
    %c0_38 = arith.constant 0 : index
    %49 = vector.load %arg2[%c0_35, %c1_36, %c0_37, %c0_38] : memref<2x2x32x16xbf16, #tpu.memory_space<vmem>>, vector<1x1x32x16xbf16>
    %50 = vector.shape_cast %49 : vector<1x1x32x16xbf16> to vector<32x16xbf16>
    %cst_39 = arith.constant dense<0.000000e+00> : vector<450x16xf32>
    %51 = tpu.matmul %0, %50, %cst_39 {dimension_numbers = #tpu.dot_dimension_numbers<[1], [0], [0], [1], [0, 0, 1, 1], [], []>} : vector<450x32xbf16>, vector<32x16xbf16>, vector<450x16xf32> -> vector<450x16xf32>
    %c0_40 = arith.constant 0 : index
    %c0_41 = arith.constant 0 : index
    %52 = vector.load %arg3[%c0_40, %c0_41] : memref<1x16xf32, #tpu.memory_space<vmem>>, vector<1x16xf32>
    %53 = vector.broadcast %52 : vector<1x16xf32> to vector<450x16xf32>
    %54 = arith.addf %51, %53 : vector<450x16xf32>
    %cst_42 = arith.constant 0.000000e+00 : f32
    %55 = vector.broadcast %cst_42 : f32 to vector<450x16xf32>
    %56 = arith.maximumf %54, %55 : vector<450x16xf32>
    %c0_43 = arith.constant 0 : index
    %c0_44 = arith.constant 0 : index
    %57 = vector.load %arg4[%c0_43, %c0_44] : memref<1x16xf32, #tpu.memory_space<vmem>>, vector<1x16xf32>
    %58 = vector.broadcast %57 : vector<1x16xf32> to vector<450x16xf32>
    %59 = arith.mulf %56, %58 : vector<450x16xf32>
    %cst_45 = arith.constant dense<0.000000e+00> : vector<450xf32>
    %60 = vector.multi_reduction <add>, %59, %cst_45 [1] : vector<450x16xf32> to vector<450xf32>
    %61 = vector.shape_cast %60 : vector<450xf32> to vector<450x1xf32>
    %c0_46 = arith.constant 0 : index
    %c0_47 = arith.constant 0 : index
    %62 = vector.load %arg5[%c0_46, %c0_47] : memref<1x1xf32, #tpu.memory_space<vmem>>, vector<1x1xf32>
    %63 = vector.broadcast %62 : vector<1x1xf32> to vector<450x1xf32>
    %64 = arith.addf %61, %63 : vector<450x1xf32>
    %cst_48 = arith.constant 0.000000e+00 : f32
    %65 = vector.broadcast %cst_48 : f32 to vector<450x1xf32>
    %66 = arith.subf %65, %64 : vector<450x1xf32>
    %67 = math.exp %66 : vector<450x1xf32>
    %cst_49 = arith.constant 1.000000e+00 : f32
    %68 = vector.broadcast %cst_49 : f32 to vector<450x1xf32>
    %69 = arith.addf %68, %67 : vector<450x1xf32>
    %cst_50 = arith.constant 1.000000e+00 : f32
    %70 = vector.broadcast %cst_50 : f32 to vector<450x1xf32>
    %71 = arith.divf %70, %69 : vector<450x1xf32>
    %c0_51 = arith.constant 0 : index
    %c2 = arith.constant 2 : index
    %72 = vector.load %arg6[%c0_51, %c2] : memref<450x4xf32, #tpu.memory_space<vmem>>, vector<450x1xf32>
    tpu.vector_store %arg6[%c0_51, %c2], %71 {strides = array<i32>} : memref<450x4xf32, #tpu.memory_space<vmem>>, vector<450x1xf32>,
    %c0_52 = arith.constant 0 : index
    %c0_53 = arith.constant 0 : index
    %c0_54 = arith.constant 0 : index
    %c0_55 = arith.constant 0 : index
    %73 = vector.load %arg2[%c0_52, %c0_53, %c0_54, %c0_55] : memref<2x2x32x16xbf16, #tpu.memory_space<vmem>>, vector<1x1x32x16xbf16>
    %74 = vector.shape_cast %73 : vector<1x1x32x16xbf16> to vector<32x16xbf16>
    %cst_56 = arith.constant dense<0.000000e+00> : vector<450x16xf32>
    %75 = tpu.matmul %0, %74, %cst_56 {dimension_numbers = #tpu.dot_dimension_numbers<[1], [0], [0], [1], [0, 0, 1, 1], [], []>} : vector<450x32xbf16>, vector<32x16xbf16>, vector<450x16xf32> -> vector<450x16xf32>
    %c0_57 = arith.constant 0 : index
    %c0_58 = arith.constant 0 : index
    %76 = vector.load %arg3[%c0_57, %c0_58] : memref<1x16xf32, #tpu.memory_space<vmem>>, vector<1x16xf32>
    %77 = vector.broadcast %76 : vector<1x16xf32> to vector<450x16xf32>
    %78 = arith.addf %75, %77 : vector<450x16xf32>
    %cst_59 = arith.constant 0.000000e+00 : f32
    %79 = vector.broadcast %cst_59 : f32 to vector<450x16xf32>
    %80 = arith.maximumf %78, %79 : vector<450x16xf32>
    %c0_60 = arith.constant 0 : index
    %c0_61 = arith.constant 0 : index
    %81 = vector.load %arg4[%c0_60, %c0_61] : memref<1x16xf32, #tpu.memory_space<vmem>>, vector<1x16xf32>
    %82 = vector.broadcast %81 : vector<1x16xf32> to vector<450x16xf32>
    %83 = arith.mulf %80, %82 : vector<450x16xf32>
    %cst_62 = arith.constant dense<0.000000e+00> : vector<450xf32>
    %84 = vector.multi_reduction <add>, %83, %cst_62 [1] : vector<450x16xf32> to vector<450xf32>
    %85 = vector.shape_cast %84 : vector<450xf32> to vector<450x1xf32>
    %c0_63 = arith.constant 0 : index
    %c0_64 = arith.constant 0 : index
    %86 = vector.load %arg5[%c0_63, %c0_64] : memref<1x1xf32, #tpu.memory_space<vmem>>, vector<1x1xf32>
    %87 = vector.broadcast %86 : vector<1x1xf32> to vector<450x1xf32>
    %88 = arith.addf %85, %87 : vector<450x1xf32>
    %cst_65 = arith.constant 0.000000e+00 : f32
    %89 = vector.broadcast %cst_65 : f32 to vector<450x1xf32>
    %90 = arith.subf %89, %88 : vector<450x1xf32>
    %91 = math.exp %90 : vector<450x1xf32>
    %cst_66 = arith.constant 1.000000e+00 : f32
    %92 = vector.broadcast %cst_66 : f32 to vector<450x1xf32>
    %93 = arith.addf %92, %91 : vector<450x1xf32>
    %cst_67 = arith.constant 1.000000e+00 : f32
    %94 = vector.broadcast %cst_67 : f32 to vector<450x1xf32>
    %95 = arith.divf %94, %93 : vector<450x1xf32>
    %c0_68 = arith.constant 0 : index
    %c3 = arith.constant 3 : index
    %96 = vector.load %arg6[%c0_68, %c3] : memref<450x4xf32, #tpu.memory_space<vmem>>, vector<450x1xf32>
    tpu.vector_store %arg6[%c0_68, %c3], %95 {strides = array<i32>} : memref<450x4xf32, #tpu.memory_space<vmem>>, vector<450x1xf32>,
    return
  }
  func.func @transform_0(%arg0: i32) -> (i32, i32) {
    %c0_i32 = arith.constant 0 : i32
    %c0_i32_0 = arith.constant 0 : i32
    return %arg0, %c0_i32 : i32, i32
  }
  func.func @transform_1(%arg0: i32) -> (i32, i32, i32, i32) {
    %c0_i32 = arith.constant 0 : i32
    %c0_i32_0 = arith.constant 0 : i32
    %c0_i32_1 = arith.constant 0 : i32
    %c0_i32_2 = arith.constant 0 : i32
    %c0_i32_3 = arith.constant 0 : i32
    return %c0_i32, %c0_i32_0, %c0_i32_1, %c0_i32_2 : i32, i32, i32, i32
  }
  func.func @transform_2(%arg0: i32) -> (i32, i32) {
    %c0_i32 = arith.constant 0 : i32
    %c0_i32_0 = arith.constant 0 : i32
    %c0_i32_1 = arith.constant 0 : i32
    return %c0_i32, %c0_i32_0 : i32, i32
  }
  func.func @transform_3(%arg0: i32) -> (i32, i32) {
    %c0_i32 = arith.constant 0 : i32
    %c0_i32_0 = arith.constant 0 : i32
    %c0_i32_1 = arith.constant 0 : i32
    return %c0_i32, %c0_i32_0 : i32, i32
  }
  func.func @transform_4(%arg0: i32) -> (i32, i32) {
    %c0_i32 = arith.constant 0 : i32
    %c0_i32_0 = arith.constant 0 : i32
    %c0_i32_1 = arith.constant 0 : i32
    return %c0_i32, %c0_i32_0 : i32, i32
  }
  func.func @transform_5(%arg0: i32) -> (i32, i32) {
    %c0_i32 = arith.constant 0 : i32
    %c0_i32_0 = arith.constant 0 : i32
    return %arg0, %c0_i32 : i32, i32
  }
}

</mosaic_0001>

<llo_original>
// kernel: deconvnet28_forward.3
$region0: #{deconvnet28_forward.3}
  #allocation0 [shape = 'u32[]', space=smem, size = 0x4, offset = 0x4, fixed_abs, tag = 'smem constant byte address 0x4 - core index']
  #allocation1 [shape = 'u32[144,128]{1,0:T(1,128)}', space=vmem, size = 0x12000, scoped, tag = 'internal scratch']
  %s0 = inlined_call_operand.vmem [shape: bf16[2,4], index: 0, kind: input, shape index: {}]
  %s1 = inlined_call_operand.hbm [shape: bf16[4,4096], index: 1, kind: input, shape index: {}]
  %s2 = inlined_call_operand.vmem [shape: f32[1,4096], index: 2, kind: input, shape index: {}]
  %s3 = inlined_call_operand.vmem [shape: f32[2,4096], index: 3, kind: output, shape index: {}]
  %s4 = sld [smem:[#allocation0]]
  $region26: #{deconvnet28_forward.3} parent=0
    _
  %s6 = ssub.s32 1, %s4
  %s7 = scalar_select 0, %s6, %s4
  $region1: #{deconvnet28_forward.3} parent=0
    #allocation2 [shape = 'u8[32768]{0}', space=vmem, size = 0x8000, scoped, tag = 'input window, operand 1, single buffered']
    #allocation3 [shape = 's32[1]{0}', space=sflag, size = 0x4, scoped, tag = 'scoped memory for deconvnet28_forward.3']
    %8 = vsyncpa [#allocation3], 0
    // Predicated region
    $region2: #{deconvnet28_forward.3} parent=1 // pred_check
      _
    $region3: #{deconvnet28_forward.3} parent=1 // pred_check_branch
      %10 = sbr.rel (0) target = $region5
    $region4: #{deconvnet28_forward.3} parent=1 // pred_region
      _
    $region5: #{deconvnet28_forward.3} parent=1 // pred_fallthru
      _
    // Predicated region
    $region6: #{deconvnet28_forward.3} parent=1 // pred_check
      _
    $region7: #{deconvnet28_forward.3} parent=1 // pred_check_branch
      %12 = sbr.rel (0) target = $region9
    $region8: #{deconvnet28_forward.3} parent=1 // pred_region
      %s14 = ssub.s32 1024, 1024
      %15 = vsyncadd [#allocation3], %s14
      %s17 = sshll.u32 [#allocation2], 4
      %s18 = int_to_ptr.vmem [resolvable:$true] %s17
      %20 = dma.hbm_to_vmem [thread:$0]  %s1, 1024, %s18, [#allocation3]
    $region9: #{deconvnet28_forward.3} parent=1 // pred_fallthru
      _
    // Predicated region
    $region10: #{deconvnet28_forward.3} parent=1 // pred_check
      _
    $region11: #{deconvnet28_forward.3} parent=1 // pred_check_branch
      %22 = sbr.rel (0) target = $region13
    $region12: #{deconvnet28_forward.3} parent=1 // pred_region
      _
    $region13: #{deconvnet28_forward.3} parent=1 // pred_fallthru
      _
    // Predicated region
    $region14: #{deconvnet28_forward.3} parent=1 // pred_check
      _
    $region15: #{deconvnet28_forward.3} parent=1 // pred_check_branch
      %24 = sbr.rel (0) target = $region17
    $region16: #{deconvnet28_forward.3} parent=1 // pred_region
      %25 = dma.done [#allocation3], 1024
    $region17: #{deconvnet28_forward.3} parent=1 // pred_fallthru
      _
    %v27 = vld [vmem:[%s0] sm:$0x1]
    %v28 = vld [vmem:[#allocation2] sm:$0xff]
    %v29 = vld [vmem:[#allocation2 + $0x8] sm:$0xff]
    %v30 = vld [vmem:[#allocation2 + $0x10] sm:$0xff]
    %v31 = vld [vmem:[#allocation2 + $0x18] sm:$0xff]
    %v32 = vld [vmem:[#allocation2 + $0x20] sm:$0xff]
    %v33 = vld [vmem:[#allocation2 + $0x28] sm:$0xff]
    %v34 = vld [vmem:[#allocation2 + $0x30] sm:$0xff]
    %v35 = vld [vmem:[#allocation2 + $0x38] sm:$0xff]
    %v36 = vld [vmem:[%s2] sm:$0xff]
    %v37 = vld [vmem:[%s2 + $0x8] sm:$0xff]
    %v38 = vld [vmem:[%s2 + $0x10] sm:$0xff]
    %v39 = vld [vmem:[%s2 + $0x18] sm:$0xff]
    %v44 = vlaneseq
    %v45 = vshrl.u32 %v44, 7
    %v46 = vsub.s32 0, %v45
    %v47 = vrot.slane %v36, %v46
    %v48 = vlaneseq
    %v49 = vshrl.u32 %v48, 7
    %v50 = vsub.s32 1, %v49
    %v51 = vrot.slane %v36, %v50
    %v52 = vlaneseq
    %v53 = vshrl.u32 %v52, 7
    %v54 = vsub.s32 2, %v53
    %v55 = vrot.slane %v36, %v54
    %v56 = vlaneseq
    %v57 = vshrl.u32 %v56, 7
    %v58 = vsub.s32 3, %v57
    %v59 = vrot.slane %v36, %v58
    %v60 = vlaneseq
    %v61 = vshrl.u32 %v60, 7
    %v62 = vsub.s32 4, %v61
    %v63 = vrot.slane %v36, %v62
    %v64 = vlaneseq
    %v65 = vshrl.u32 %v64, 7
    %v66 = vsub.s32 5, %v65
    %v67 = vrot.slane %v36, %v66
    %v68 = vlaneseq
    %v69 = vshrl.u32 %v68, 7
    %v70 = vsub.s32 6, %v69
    %v71 = vrot.slane %v36, %v70
    %v72 = vlaneseq
    %v73 = vshrl.u32 %v72, 7
    %v74 = vsub.s32 7, %v73
    %v75 = vrot.slane %v36, %v74
    %v76 = vlaneseq
    %v77 = vshrl.u32 %v76, 7
    %v78 = vsub.s32 0, %v77
    %v79 = vrot.slane %v37, %v78
    %v80 = vlaneseq
    %v81 = vshrl.u32 %v80, 7
    %v82 = vsub.s32 1, %v81
    %v83 = vrot.slane %v37, %v82
    %v84 = vlaneseq
    %v85 = vshrl.u32 %v84, 7
    %v86 = vsub.s32 2, %v85
    %v87 = vrot.slane %v37, %v86
    %v88 = vlaneseq
    %v89 = vshrl.u32 %v88, 7
    %v90 = vsub.s32 3, %v89
    %v91 = vrot.slane %v37, %v90
    %v92 = vlaneseq
    %v93 = vshrl.u32 %v92, 7
    %v94 = vsub.s32 4, %v93
    %v95 = vrot.slane %v37, %v94
    %v96 = vlaneseq
    %v97 = vshrl.u32 %v96, 7
    %v98 = vsub.s32 5, %v97
    %v99 = vrot.slane %v37, %v98
    %v100 = vlaneseq
    %v101 = vshrl.u32 %v100, 7
    %v102 = vsub.s32 6, %v101
    %v103 = vrot.slane %v37, %v102
    %v104 = vlaneseq
    %v105 = vshrl.u32 %v104, 7
    %v106 = vsub.s32 7, %v105
    %v107 = vrot.slane %v37, %v106
    %v108 = vlaneseq
    %v109 = vshrl.u32 %v108, 7
    %v110 = vsub.s32 0, %v109
    %v111 = vrot.slane %v38, %v110
    %v112 = vlaneseq
    %v113 = vshrl.u32 %v112, 7
    %v114 = vsub.s32 1, %v113
    %v115 = vrot.slane %v38, %v114
    %v116 = vlaneseq
    %v117 = vshrl.u32 %v116, 7
    %v118 = vsub.s32 2, %v117
    %v119 = vrot.slane %v38, %v118
    %v120 = vlaneseq
    %v121 = vshrl.u32 %v120, 7
    %v122 = vsub.s32 3, %v121
    %v123 = vrot.slane %v38, %v122
    %v124 = vlaneseq
    %v125 = vshrl.u32 %v124, 7
    %v126 = vsub.s32 4, %v125
    %v127 = vrot.slane %v38, %v126
    %v128 = vlaneseq
    %v129 = vshrl.u32 %v128, 7
    %v130 = vsub.s32 5, %v129
    %v131 = vrot.slane %v38, %v130
    %v132 = vlaneseq
    %v133 = vshrl.u32 %v132, 7
    %v134 = vsub.s32 6, %v133
    %v135 = vrot.slane %v38, %v134
    %v136 = vlaneseq
    %v137 = vshrl.u32 %v136, 7
    %v138 = vsub.s32 7, %v137
    %v139 = vrot.slane %v38, %v138
    %v140 = vlaneseq
    %v141 = vshrl.u32 %v140, 7
    %v142 = vsub.s32 0, %v141
    %v143 = vrot.slane %v39, %v142
    %v144 = vlaneseq
    %v145 = vshrl.u32 %v144, 7
    %v146 = vsub.s32 1, %v145
    %v147 = vrot.slane %v39, %v146
    %v148 = vlaneseq
    %v149 = vshrl.u32 %v148, 7
    %v150 = vsub.s32 2, %v149
    %v151 = vrot.slane %v39, %v150
    %v152 = vlaneseq
    %v153 = vshrl.u32 %v152, 7
    %v154 = vsub.s32 3, %v153
    %v155 = vrot.slane %v39, %v154
    %v156 = vlaneseq
    %v157 = vshrl.u32 %v156, 7
    %v158 = vsub.s32 4, %v157
    %v159 = vrot.slane %v39, %v158
    %v160 = vlaneseq
    %v161 = vshrl.u32 %v160, 7
    %v162 = vsub.s32 5, %v161
    %v163 = vrot.slane %v39, %v162
    %v164 = vlaneseq
    %v165 = vshrl.u32 %v164, 7
    %v166 = vsub.s32 6, %v165
    %v167 = vrot.slane %v39, %v166
    %v168 = vlaneseq
    %v169 = vshrl.u32 %v168, 7
    %v170 = vsub.s32 7, %v169
    %v171 = vrot.slane %v39, %v170
    %v212 = vcombine.high %v28, %v28
    %v214 = vunpack.c.l.s4 1983009808
    %v215 = vunpack.c.0.s8 %v214
    %v216 = vlaneseq
    %v217 = vshrl.u32 %v216, 7
    %v218 = vsub.s32 %v215, %v217
    %v219 = vrot.slane %v28, %v218
    %v221 = vunpack.c.l.s4 1983009808
    %v222 = vunpack.c.0.s8 %v221
    %v223 = vlaneseq
    %v224 = vshrl.u32 %v223, 7
    %v225 = vsub.s32 %v222, %v224
    %v226 = vrot.slane %v212, %v225
    %v227 = vcombine.high %v219, %v219
    %v228 = vcombine.high %v226, %v226
    %v229 = vcombine.high %v29, %v29
    %v231 = vunpack.c.l.s4 1983009808
    %v232 = vunpack.c.0.s8 %v231
    %v233 = vlaneseq
    %v234 = vshrl.u32 %v233, 7
    %v235 = vsub.s32 %v232, %v234
    %v236 = vrot.slane %v29, %v235
    %v238 = vunpack.c.l.s4 1983009808
    %v239 = vunpack.c.0.s8 %v238
    %v240 = vlaneseq
    %v241 = vshrl.u32 %v240, 7
    %v242 = vsub.s32 %v239, %v241
    %v243 = vrot.slane %v229, %v242
    %v244 = vcombine.high %v236, %v236
    %v245 = vcombine.high %v243, %v243
    %v246 = vcombine.high %v30, %v30
    %v248 = vunpack.c.l.s4 1983009808
    %v249 = vunpack.c.0.s8 %v248
    %v250 = vlaneseq
    %v251 = vshrl.u32 %v250, 7
    %v252 = vsub.s32 %v249, %v251
    %v253 = vrot.slane %v30, %v252
    %v255 = vunpack.c.l.s4 1983009808
    %v256 = vunpack.c.0.s8 %v255
    %v257 = vlaneseq
    %v258 = vshrl.u32 %v257, 7
    %v259 = vsub.s32 %v256, %v258
    %v260 = vrot.slane %v246, %v259
    %v261 = vcombine.high %v253, %v253
    %v262 = vcombine.high %v260, %v260
    %v263 = vcombine.high %v31, %v31
    %v265 = vunpack.c.l.s4 1983009808
    %v266 = vunpack.c.0.s8 %v265
    %v267 = vlaneseq
    %v268 = vshrl.u32 %v267, 7
    %v269 = vsub.s32 %v266, %v268
    %v270 = vrot.slane %v31, %v269
    %v272 = vunpack.c.l.s4 1983009808
    %v273 = vunpack.c.0.s8 %v272
    %v274 = vlaneseq
    %v275 = vshrl.u32 %v274, 7
    %v276 = vsub.s32 %v273, %v275
    %v277 = vrot.slane %v263, %v276
    %v278 = vcombine.high %v270, %v270
    %v279 = vcombine.high %v277, %v277
    %v280 = vcombine.high %v32, %v32
    %v282 = vunpack.c.l.s4 1983009808
    %v283 = vunpack.c.0.s8 %v282
    %v284 = vlaneseq
    %v285 = vshrl.u32 %v284, 7
    %v286 = vsub.s32 %v283, %v285
    %v287 = vrot.slane %v32, %v286
    %v289 = vunpack.c.l.s4 1983009808
    %v290 = vunpack.c.0.s8 %v289
    %v291 = vlaneseq
    %v292 = vshrl.u32 %v291, 7
    %v293 = vsub.s32 %v290, %v292
    %v294 = vrot.slane %v280, %v293
    %v295 = vcombine.high %v287, %v287
    %v296 = vcombine.high %v294, %v294
    %v297 = vcombine.high %v33, %v33
    %v299 = vunpack.c.l.s4 1983009808
    %v300 = vunpack.c.0.s8 %v299
    %v301 = vlaneseq
    %v302 = vshrl.u32 %v301, 7
    %v303 = vsub.s32 %v300, %v302
    %v304 = vrot.slane %v33, %v303
    %v306 = vunpack.c.l.s4 1983009808
    %v307 = vunpack.c.0.s8 %v306
    %v308 = vlaneseq
    %v309 = vshrl.u32 %v308, 7
    %v310 = vsub.s32 %v307, %v309
    %v311 = vrot.slane %v297, %v310
    %v312 = vcombine.high %v304, %v304
    %v313 = vcombine.high %v311, %v311
    %v314 = vcombine.high %v34, %v34
    %v316 = vunpack.c.l.s4 1983009808
    %v317 = vunpack.c.0.s8 %v316
    %v318 = vlaneseq
    %v319 = vshrl.u32 %v318, 7
    %v320 = vsub.s32 %v317, %v319
    %v321 = vrot.slane %v34, %v320
    %v323 = vunpack.c.l.s4 1983009808
    %v324 = vunpack.c.0.s8 %v323
    %v325 = vlaneseq
    %v326 = vshrl.u32 %v325, 7
    %v327 = vsub.s32 %v324, %v326
    %v328 = vrot.slane %v314, %v327
    %v329 = vcombine.high %v321, %v321
    %v330 = vcombine.high %v328, %v328
    %v331 = vcombine.high %v35, %v35
    %v333 = vunpack.c.l.s4 1983009808
    %v334 = vunpack.c.0.s8 %v333
    %v335 = vlaneseq
    %v336 = vshrl.u32 %v335, 7
    %v337 = vsub.s32 %v334, %v336
    %v338 = vrot.slane %v35, %v337
    %v340 = vunpack.c.l.s4 1983009808
    %v341 = vunpack.c.0.s8 %v340
    %v342 = vlaneseq
    %v343 = vshrl.u32 %v342, 7
    %v344 = vsub.s32 %v341, %v343
    %v345 = vrot.slane %v331, %v344
    %v346 = vcombine.high %v338, %v338
    %v347 = vcombine.high %v345, %v345
    %vm348 = vcmask 31744
    %v350 = vsel %vm348, %v27, 0
    %vm352 = vcmask 1041408
    %v354 = vsel %vm352, %v219, 0
    %v357 = vsel %vm352, %v227, 0
    %v360 = vsel %vm352, %v226, 0
    %v363 = vsel %vm352, %v228, 0
    %v366 = vsel %vm352, %v236, 0
    %v369 = vsel %vm352, %v244, 0
    %v372 = vsel %vm352, %v243, 0
    %v375 = vsel %vm352, %v245, 0
    %v378 = vsel %vm352, %v253, 0
    %v381 = vsel %vm352, %v261, 0
    %v384 = vsel %vm352, %v260, 0
    %v387 = vsel %vm352, %v262, 0
    %v390 = vsel %vm352, %v270, 0
    %v393 = vsel %vm352, %v278, 0
    %v396 = vsel %vm352, %v277, 0
    %v399 = vsel %vm352, %v279, 0
    %v402 = vsel %vm352, %v287, 0
    %v405 = vsel %vm352, %v295, 0
    %v408 = vsel %vm352, %v294, 0
    %v411 = vsel %vm352, %v296, 0
    %v414 = vsel %vm352, %v304, 0
    %v417 = vsel %vm352, %v312, 0
    %v420 = vsel %vm352, %v311, 0
    %v423 = vsel %vm352, %v313, 0
    %v426 = vsel %vm352, %v321, 0
    %v429 = vsel %vm352, %v329, 0
    %v432 = vsel %vm352, %v328, 0
    %v435 = vsel %vm352, %v330, 0
    %v438 = vsel %vm352, %v338, 0
    %v441 = vsel %vm352, %v346, 0
    %v444 = vsel %vm352, %v345, 0
    %v447 = vsel %vm352, %v347, 0
    %449 = vmatprep.subr.bf16.mxu0 %v357
    %450 = vmatpush1.bf16.msra.mxu0 %v354
    %451 = vmatprep.subr.bf16.mxu0 0
    %452 = vmatpush1.bf16.msra.mxu0 0
    %453 = vmatprep.subr.bf16.mxu0 0
    %454 = vmatpush1.bf16.msra.mxu0 0
    %455 = vmatprep.subr.bf16.mxu0 0
    %456 = vmatpush1.bf16.msra.mxu0 0
    %457 = vmatprep.subr.bf16.mxu0 0
    %458 = vmatpush1.bf16.msra.mxu0 0
    %459 = vmatprep.subr.bf16.mxu0 0
    %460 = vmatpush1.bf16.msra.mxu0 0
    %461 = vmatprep.subr.bf16.mxu0 0
    %462 = vmatpush1.bf16.msra.mxu0 0
    %463 = vmatprep.subr.bf16.mxu0 0
    %464 = vmatpush1.bf16.msra.mxu0 0
    %465 = vmatprep.subr.bf16.mxu0 0
    %466 = vmatpush1.bf16.msra.mxu0 0
    %467 = vmatprep.subr.bf16.mxu0 0
    %468 = vmatpush1.bf16.msra.mxu0 0
    %469 = vmatprep.subr.bf16.mxu0 0
    %470 = vmatpush1.bf16.msra.mxu0 0
    %471 = vmatprep.subr.bf16.mxu0 0
    %472 = vmatpush1.bf16.msra.mxu0 0
    %473 = vmatprep.subr.bf16.mxu0 0
    %474 = vmatpush1.bf16.msra.mxu0 0
    %475 = vmatprep.subr.bf16.mxu0 0
    %476 = vmatpush1.bf16.msra.mxu0 0
    %477 = vmatprep.subr.bf16.mxu0 0
    %478 = vmatpush1.bf16.msra.mxu0 0
    %479 = vmatprep.subr.bf16.mxu0 0
    %480 = vmatpush1.bf16.msra.mxu0 0
    %481 = vmatprep.mubr.bf16.mxu0 0
    %482 = vmatmul.mubr.bf16.gmra.mrb[0].mxu0 %v350
    %v483 = vpop.f32.mrb[0].mxu0
    %v484 = vadd.f32 %v47, %v483
    %v485 = vpop.f32.mrb[0].mxu0
    %v486 = vadd.f32 %v51, %v485
    %v487 = vpop.f32.mrb[0].mxu0
    %v488 = vpop.f32.mrb[0].mxu0
    %489 = vdwg.mxu0
    %490 = vmatprep.subr.bf16.mxu0 %v363
    %491 = vmatpush1.bf16.msra.mxu0 %v360
    %492 = vmatprep.subr.bf16.mxu0 0
    %493 = vmatpush1.bf16.msra.mxu0 0
    %494 = vmatprep.subr.bf16.mxu0 0
    %495 = vmatpush1.bf16.msra.mxu0 0
    %496 = vmatprep.subr.bf16.mxu0 0
    %497 = vmatpush1.bf16.msra.mxu0 0
    %498 = vmatprep.subr.bf16.mxu0 0
    %499 = vmatpush1.bf16.msra.mxu0 0
    %500 = vmatprep.subr.bf16.mxu0 0
    %501 = vmatpush1.bf16.msra.mxu0 0
    %502 = vmatprep.subr.bf16.mxu0 0
    %503 = vmatpush1.bf16.msra.mxu0 0
    %504 = vmatprep.subr.bf16.mxu0 0
    %505 = vmatpush1.bf16.msra.mxu0 0
    %506 = vmatprep.subr.bf16.mxu0 0
    %507 = vmatpush1.bf16.msra.mxu0 0
    %508 = vmatprep.subr.bf16.mxu0 0
    %509 = vmatpush1.bf16.msra.mxu0 0
    %510 = vmatprep.subr.bf16.mxu0 0
    %511 = vmatpush1.bf16.msra.mxu0 0
    %512 = vmatprep.subr.bf16.mxu0 0
    %513 = vmatpush1.bf16.msra.mxu0 0
    %514 = vmatprep.subr.bf16.mxu0 0
    %515 = vmatpush1.bf16.msra.mxu0 0
    %516 = vmatprep.subr.bf16.mxu0 0
    %517 = vmatpush1.bf16.msra.mxu0 0
    %518 = vmatprep.subr.bf16.mxu0 0
    %519 = vmatpush1.bf16.msra.mxu0 0
    %520 = vmatprep.subr.bf16.mxu0 0
    %521 = vmatpush1.bf16.msra.mxu0 0
    %522 = vmatprep.mubr.bf16.mxu0 0
    %523 = vmatmul.mubr.bf16.gmra.mrb[0].mxu0 %v350
    %v524 = vpop.f32.mrb[0].mxu0
    %v525 = vadd.f32 %v55, %v524
    %v526 = vpop.f32.mrb[0].mxu0
    %v527 = vadd.f32 %v59, %v526
    %v528 = vpop.f32.mrb[0].mxu0
    %v529 = vpop.f32.mrb[0].mxu0
    %530 = vdwg.mxu0
    %531 = vmatprep.subr.bf16.mxu0 %v369
    %532 = vmatpush1.bf16.msra.mxu0 %v366
    %533 = vmatprep.subr.bf16.mxu0 0
    %534 = vmatpush1.bf16.msra.mxu0 0
    %535 = vmatprep.subr.bf16.mxu0 0
    %536 = vmatpush1.bf16.msra.mxu0 0
    %537 = vmatprep.subr.bf16.mxu0 0
    %538 = vmatpush1.bf16.msra.mxu0 0
    %539 = vmatprep.subr.bf16.mxu0 0
    %540 = vmatpush1.bf16.msra.mxu0 0
    %541 = vmatprep.subr.bf16.mxu0 0
    %542 = vmatpush1.bf16.msra.mxu0 0
    %543 = vmatprep.subr.bf16.mxu0 0
    %544 = vmatpush1.bf16.msra.mxu0 0
    %545 = vmatprep.subr.bf16.mxu0 0
    %546 = vmatpush1.bf16.msra.mxu0 0
    %547 = vmatprep.subr.bf16.mxu0 0
    %548 = vmatpush1.bf16.msra.mxu0 0
    %549 = vmatprep.subr.bf16.mxu0 0
    %550 = vmatpush1.bf16.msra.mxu0 0
    %551 = vmatprep.subr.bf16.mxu0 0
    %552 = vmatpush1.bf16.msra.mxu0 0
    %553 = vmatprep.subr.bf16.mxu0 0
    %554 = vmatpush1.bf16.msra.mxu0 0
    %555 = vmatprep.subr.bf16.mxu0 0
    %556 = vmatpush1.bf16.msra.mxu0 0
    %557 = vmatprep.subr.bf16.mxu0 0
    %558 = vmatpush1.bf16.msra.mxu0 0
    %559 = vmatprep.subr.bf16.mxu0 0
    %560 = vmatpush1.bf16.msra.mxu0 0
    %561 = vmatprep.subr.bf16.mxu0 0
    %562 = vmatpush1.bf16.msra.mxu0 0
    %563 = vmatprep.mubr.bf16.mxu0 0
    %564 = vmatmul.mubr.bf16.gmra.mrb[0].mxu0 %v350
    %v565 = vpop.f32.mrb[0].mxu0
    %v566 = vadd.f32 %v63, %v565
    %v567 = vpop.f32.mrb[0].mxu0
    %v568 = vadd.f32 %v67, %v567
    %v569 = vpop.f32.mrb[0].mxu0
    %v570 = vpop.f32.mrb[0].mxu0
    %571 = vdwg.mxu0
    %572 = vmatprep.subr.bf16.mxu0 %v375
    %573 = vmatpush1.bf16.msra.mxu0 %v372
    %574 = vmatprep.subr.bf16.mxu0 0
    %575 = vmatpush1.bf16.msra.mxu0 0
    %576 = vmatprep.subr.bf16.mxu0 0
    %577 = vmatpush1.bf16.msra.mxu0 0
    %578 = vmatprep.subr.bf16.mxu0 0
    %579 = vmatpush1.bf16.msra.mxu0 0
    %580 = vmatprep.subr.bf16.mxu0 0
    %581 = vmatpush1.bf16.msra.mxu0 0
    %582 = vmatprep.subr.bf16.mxu0 0
    %583 = vmatpush1.bf16.msra.mxu0 0
    %584 = vmatprep.subr.bf16.mxu0 0
    %585 = vmatpush1.bf16.msra.mxu0 0
    %586 = vmatprep.subr.bf16.mxu0 0
    %587 = vmatpush1.bf16.msra.mxu0 0
    %588 = vmatprep.subr.bf16.mxu0 0
    %589 = vmatpush1.bf16.msra.mxu0 0
    %590 = vmatprep.subr.bf16.mxu0 0
    %591 = vmatpush1.bf16.msra.mxu0 0
    %592 = vmatprep.subr.bf16.mxu0 0
    %593 = vmatpush1.bf16.msra.mxu0 0
    %594 = vmatprep.subr.bf16.mxu0 0
    %595 = vmatpush1.bf16.msra.mxu0 0
    %596 = vmatprep.subr.bf16.mxu0 0
    %597 = vmatpush1.bf16.msra.mxu0 0
    %598 = vmatprep.subr.bf16.mxu0 0
    %599 = vmatpush1.bf16.msra.mxu0 0
    %600 = vmatprep.subr.bf16.mxu0 0
    %601 = vmatpush1.bf16.msra.mxu0 0
    %602 = vmatprep.subr.bf16.mxu0 0
    %603 = vmatpush1.bf16.msra.mxu0 0
    %604 = vmatprep.mubr.bf16.mxu0 0
    %605 = vmatmul.mubr.bf16.gmra.mrb[0].mxu0 %v350
    %v606 = vpop.f32.mrb[0].mxu0
    %v607 = vadd.f32 %v71, %v606
    %v608 = vpop.f32.mrb[0].mxu0
    %v609 = vadd.f32 %v75, %v608
    %v610 = vpop.f32.mrb[0].mxu0
    %v611 = vpop.f32.mrb[0].mxu0
    %612 = vdwg.mxu0
    %613 = vmatprep.subr.bf16.mxu0 %v381
    %614 = vmatpush1.bf16.msra.mxu0 %v378
    %615 = vmatprep.subr.bf16.mxu0 0
    %616 = vmatpush1.bf16.msra.mxu0 0
    %617 = vmatprep.subr.bf16.mxu0 0
    %618 = vmatpush1.bf16.msra.mxu0 0
    %619 = vmatprep.subr.bf16.mxu0 0
    %620 = vmatpush1.bf16.msra.mxu0 0
    %621 = vmatprep.subr.bf16.mxu0 0
    %622 = vmatpush1.bf16.msra.mxu0 0
    %623 = vmatprep.subr.bf16.mxu0 0
    %624 = vmatpush1.bf16.msra.mxu0 0
    %625 = vmatprep.subr.bf16.mxu0 0
    %626 = vmatpush1.bf16.msra.mxu0 0
    %627 = vmatprep.subr.bf16.mxu0 0
    %628 = vmatpush1.bf16.msra.mxu0 0
    %629 = vmatprep.subr.bf16.mxu0 0
    %630 = vmatpush1.bf16.msra.mxu0 0
    %631 = vmatprep.subr.bf16.mxu0 0
    %632 = vmatpush1.bf16.msra.mxu0 0
    %633 = vmatprep.subr.bf16.mxu0 0
    %634 = vmatpush1.bf16.msra.mxu0 0
    %635 = vmatprep.subr.bf16.mxu0 0
    %636 = vmatpush1.bf16.msra.mxu0 0
    %637 = vmatprep.subr.bf16.mxu0 0
    %638 = vmatpush1.bf16.msra.mxu0 0
    %639 = vmatprep.subr.bf16.mxu0 0
    %640 = vmatpush1.bf16.msra.mxu0 0
    %641 = vmatprep.subr.bf16.mxu0 0
    %642 = vmatpush1.bf16.msra.mxu0 0
    %643 = vmatprep.subr.bf16.mxu0 0
    %644 = vmatpush1.bf16.msra.mxu0 0
    %645 = vmatprep.mubr.bf16.mxu0 0
    %646 = vmatmul.mubr.bf16.gmra.mrb[0].mxu0 %v350
    %v647 = vpop.f32.mrb[0].mxu0
    %v648 = vadd.f32 %v79, %v647
    %v649 = vpop.f32.mrb[0].mxu0
    %v650 = vadd.f32 %v83, %v649
    %v651 = vpop.f32.mrb[0].mxu0
    %v652 = vpop.f32.mrb[0].mxu0
    %653 = vdwg.mxu0
    %654 = vmatprep.subr.bf16.mxu0 %v387
    %655 = vmatpush1.bf16.msra.mxu0 %v384
    %656 = vmatprep.subr.bf16.mxu0 0
    %657 = vmatpush1.bf16.msra.mxu0 0
    %658 = vmatprep.subr.bf16.mxu0 0
    %659 = vmatpush1.bf16.msra.mxu0 0
    %660 = vmatprep.subr.bf16.mxu0 0
    %661 = vmatpush1.bf16.msra.mxu0 0
    %662 = vmatprep.subr.bf16.mxu0 0
    %663 = vmatpush1.bf16.msra.mxu0 0
    %664 = vmatprep.subr.bf16.mxu0 0
    %665 = vmatpush1.bf16.msra.mxu0 0
    %666 = vmatprep.subr.bf16.mxu0 0
    %667 = vmatpush1.bf16.msra.mxu0 0
    %668 = vmatprep.subr.bf16.mxu0 0
    %669 = vmatpush1.bf16.msra.mxu0 0
    %670 = vmatprep.subr.bf16.mxu0 0
    %671 = vmatpush1.bf16.msra.mxu0 0
    %672 = vmatprep.subr.bf16.mxu0 0
    %673 = vmatpush1.bf16.msra.mxu0 0
    %674 = vmatprep.subr.bf16.mxu0 0
    %675 = vmatpush1.bf16.msra.mxu0 0
    %676 = vmatprep.subr.bf16.mxu0 0
    %677 = vmatpush1.bf16.msra.mxu0 0
    %678 = vmatprep.subr.bf16.mxu0 0
    %679 = vmatpush1.bf16.msra.mxu0 0
    %680 = vmatprep.subr.bf16.mxu0 0
    %681 = vmatpush1.bf16.msra.mxu0 0
    %682 = vmatprep.subr.bf16.mxu0 0
    %683 = vmatpush1.bf16.msra.mxu0 0
    %684 = vmatprep.subr.bf16.mxu0 0
    %685 = vmatpush1.bf16.msra.mxu0 0
    %686 = vmatprep.mubr.bf16.mxu0 0
    %687 = vmatmul.mubr.bf16.gmra.mrb[0].mxu0 %v350
    %v688 = vpop.f32.mrb[0].mxu0
    %v689 = vadd.f32 %v87, %v688
    %v690 = vpop.f32.mrb[0].mxu0
    %v691 = vadd.f32 %v91, %v690
    %v692 = vpop.f32.mrb[0].mxu0
    %v693 = vpop.f32.mrb[0].mxu0
    %694 = vdwg.mxu0
    %695 = vmatprep.subr.bf16.mxu0 %v393
    %696 = vmatpush1.bf16.msra.mxu0 %v390
    %697 = vmatprep.subr.bf16.mxu0 0
    %698 = vmatpush1.bf16.msra.mxu0 0
    %699 = vmatprep.subr.bf16.mxu0 0
    %700 = vmatpush1.bf16.msra.mxu0 0
    %701 = vmatprep.subr.bf16.mxu0 0
    %702 = vmatpush1.bf16.msra.mxu0 0
    %703 = vmatprep.subr.bf16.mxu0 0
    %704 = vmatpush1.bf16.msra.mxu0 0
    %705 = vmatprep.subr.bf16.mxu0 0
    %706 = vmatpush1.bf16.msra.mxu0 0
    %707 = vmatprep.subr.bf16.mxu0 0
    %708 = vmatpush1.bf16.msra.mxu0 0
    %709 = vmatprep.subr.bf16.mxu0 0
    %710 = vmatpush1.bf16.msra.mxu0 0
    %711 = vmatprep.subr.bf16.mxu0 0
    %712 = vmatpush1.bf16.msra.mxu0 0
    %713 = vmatprep.subr.bf16.mxu0 0
    %714 = vmatpush1.bf16.msra.mxu0 0
    %715 = vmatprep.subr.bf16.mxu0 0
    %716 = vmatpush1.bf16.msra.mxu0 0
    %717 = vmatprep.subr.bf16.mxu0 0
    %718 = vmatpush1.bf16.msra.mxu0 0
    %719 = vmatprep.subr.bf16.mxu0 0
    %720 = vmatpush1.bf16.msra.mxu0 0
    %721 = vmatprep.subr.bf16.mxu0 0
    %722 = vmatpush1.bf16.msra.mxu0 0
    %723 = vmatprep.subr.bf16.mxu0 0
    %724 = vmatpush1.bf16.msra.mxu0 0
    %725 = vmatprep.subr.bf16.mxu0 0
    %726 = vmatpush1.bf16.msra.mxu0 0
    %727 = vmatprep.mubr.bf16.mxu0 0
    %728 = vmatmul.mubr.bf16.gmra.mrb[0].mxu0 %v350
    %v729 = vpop.f32.mrb[0].mxu0
    %v730 = vadd.f32 %v95, %v729
    %v731 = vpop.f32.mrb[0].mxu0
    %v732 = vadd.f32 %v99, %v731
    %v733 = vpop.f32.mrb[0].mxu0
    %v734 = vpop.f32.mrb[0].mxu0
    %735 = vdwg.mxu0
    %736 = vmatprep.subr.bf16.mxu0 %v399
    %737 = vmatpush1.bf16.msra.mxu0 %v396
    %738 = vmatprep.subr.bf16.mxu0 0
    %739 = vmatpush1.bf16.msra.mxu0 0
    %740 = vmatprep.subr.bf16.mxu0 0
    %741 = vmatpush1.bf16.msra.mxu0 0
    %742 = vmatprep.subr.bf16.mxu0 0
    %743 = vmatpush1.bf16.msra.mxu0 0
    %744 = vmatprep.subr.bf16.mxu0 0
    %745 = vmatpush1.bf16.msra.mxu0 0
    %746 = vmatprep.subr.bf16.mxu0 0
    %747 = vmatpush1.bf16.msra.mxu0 0
    %748 = vmatprep.subr.bf16.mxu0 0
    %749 = vmatpush1.bf16.msra.mxu0 0
    %750 = vmatprep.subr.bf16.mxu0 0
    %751 = vmatpush1.bf16.msra.mxu0 0
    %752 = vmatprep.subr.bf16.mxu0 0
    %753 = vmatpush1.bf16.msra.mxu0 0
    %754 = vmatprep.subr.bf16.mxu0 0
    %755 = vmatpush1.bf16.msra.mxu0 0
    %756 = vmatprep.subr.bf16.mxu0 0
    %757 = vmatpush1.bf16.msra.mxu0 0
    %758 = vmatprep.subr.bf16.mxu0 0
    %759 = vmatpush1.bf16.msra.mxu0 0
    %760 = vmatprep.subr.bf16.mxu0 0
    %761 = vmatpush1.bf16.msra.mxu0 0
    %762 = vmatprep.subr.bf16.mxu0 0
    %763 = vmatpush1.bf16.msra.mxu0 0
    %764 = vmatprep.subr.bf16.mxu0 0
    %765 = vmatpush1.bf16.msra.mxu0 0
    %766 = vmatprep.subr.bf16.mxu0 0
    %767 = vmatpush1.bf16.msra.mxu0 0
    %768 = vmatprep.mubr.bf16.mxu0 0
    %769 = vmatmul.mubr.bf16.gmra.mrb[0].mxu0 %v350
    %v770 = vpop.f32.mrb[0].mxu0
    %v771 = vadd.f32 %v103, %v770
    %v772 = vpop.f32.mrb[0].mxu0
    %v773 = vadd.f32 %v107, %v772
    %v774 = vpop.f32.mrb[0].mxu0
    %v775 = vpop.f32.mrb[0].mxu0
    %776 = vdwg.mxu0
    %777 = vmatprep.subr.bf16.mxu0 %v405
    %778 = vmatpush1.bf16.msra.mxu0 %v402
    %779 = vmatprep.subr.bf16.mxu0 0
    %780 = vmatpush1.bf16.msra.mxu0 0
    %781 = vmatprep.subr.bf16.mxu0 0
    %782 = vmatpush1.bf16.msra.mxu0 0
    %783 = vmatprep.subr.bf16.mxu0 0
    %784 = vmatpush1.bf16.msra.mxu0 0
    %785 = vmatprep.subr.bf16.mxu0 0
    %786 = vmatpush1.bf16.msra.mxu0 0
    %787 = vmatprep.subr.bf16.mxu0 0
    %788 = vmatpush1.bf16.msra.mxu0 0
    %789 = vmatprep.subr.bf16.mxu0 0
    %790 = vmatpush1.bf16.msra.mxu0 0
    %791 = vmatprep.subr.bf16.mxu0 0
    %792 = vmatpush1.bf16.msra.mxu0 0
    %793 = vmatprep.subr.bf16.mxu0 0
    %794 = vmatpush1.bf16.msra.mxu0 0
    %795 = vmatprep.subr.bf16.mxu0 0
    %796 = vmatpush1.bf16.msra.mxu0 0
    %797 = vmatprep.subr.bf16.mxu0 0
    %798 = vmatpush1.bf16.msra.mxu0 0
    %799 = vmatprep.subr.bf16.mxu0 0
    %800 = vmatpush1.bf16.msra.mxu0 0
    %801 = vmatprep.subr.bf16.mxu0 0
    %802 = vmatpush1.bf16.msra.mxu0 0
    %803 = vmatprep.subr.bf16.mxu0 0
    %804 = vmatpush1.bf16.msra.mxu0 0
    %805 = vmatprep.subr.bf16.mxu0 0
    %806 = vmatpush1.bf16.msra.mxu0 0
    %807 = vmatprep.subr.bf16.mxu0 0
    %808 = vmatpush1.bf16.msra.mxu0 0
    %809 = vmatprep.mubr.bf16.mxu0 0
    %810 = vmatmul.mubr.bf16.gmra.mrb[0].mxu0 %v350
    %v811 = vpop.f32.mrb[0].mxu0
    %v812 = vadd.f32 %v111, %v811
    %v813 = vpop.f32.mrb[0].mxu0
    %v814 = vadd.f32 %v115, %v813
    %v815 = vpop.f32.mrb[0].mxu0
    %v816 = vpop.f32.mrb[0].mxu0
    %817 = vdwg.mxu0
    %818 = vmatprep.subr.bf16.mxu0 %v411
    %819 = vmatpush1.bf16.msra.mxu0 %v408
    %820 = vmatprep.subr.bf16.mxu0 0
    %821 = vmatpush1.bf16.msra.mxu0 0
    %822 = vmatprep.subr.bf16.mxu0 0
    %823 = vmatpush1.bf16.msra.mxu0 0
    %824 = vmatprep.subr.bf16.mxu0 0
    %825 = vmatpush1.bf16.msra.mxu0 0
    %826 = vmatprep.subr.bf16.mxu0 0
    %827 = vmatpush1.bf16.msra.mxu0 0
    %828 = vmatprep.subr.bf16.mxu0 0
    %829 = vmatpush1.bf16.msra.mxu0 0
    %830 = vmatprep.subr.bf16.mxu0 0
    %831 = vmatpush1.bf16.msra.mxu0 0
    %832 = vmatprep.subr.bf16.mxu0 0
    %833 = vmatpush1.bf16.msra.mxu0 0
    %834 = vmatprep.subr.bf16.mxu0 0
    %835 = vmatpush1.bf16.msra.mxu0 0
    %836 = vmatprep.subr.bf16.mxu0 0
    %837 = vmatpush1.bf16.msra.mxu0 0
    %838 = vmatprep.subr.bf16.mxu0 0
    %839 = vmatpush1.bf16.msra.mxu0 0
    %840 = vmatprep.subr.bf16.mxu0 0
    %841 = vmatpush1.bf16.msra.mxu0 0
    %842 = vmatprep.subr.bf16.mxu0 0
    %843 = vmatpush1.bf16.msra.mxu0 0
    %844 = vmatprep.subr.bf16.mxu0 0
    %845 = vmatpush1.bf16.msra.mxu0 0
    %846 = vmatprep.subr.bf16.mxu0 0
    %847 = vmatpush1.bf16.msra.mxu0 0
    %848 = vmatprep.subr.bf16.mxu0 0
    %849 = vmatpush1.bf16.msra.mxu0 0
    %850 = vmatprep.mubr.bf16.mxu0 0
    %851 = vmatmul.mubr.bf16.gmra.mrb[0].mxu0 %v350
    %v852 = vpop.f32.mrb[0].mxu0
    %v853 = vadd.f32 %v119, %v852
    %v854 = vpop.f32.mrb[0].mxu0
    %v855 = vadd.f32 %v123, %v854
    %v856 = vpop.f32.mrb[0].mxu0
    %v857 = vpop.f32.mrb[0].mxu0
    %858 = vdwg.mxu0
    %859 = vmatprep.subr.bf16.mxu0 %v417
    %860 = vmatpush1.bf16.msra.mxu0 %v414
    %861 = vmatprep.subr.bf16.mxu0 0
    %862 = vmatpush1.bf16.msra.mxu0 0
    %863 = vmatprep.subr.bf16.mxu0 0
    %864 = vmatpush1.bf16.msra.mxu0 0
    %865 = vmatprep.subr.bf16.mxu0 0
    %866 = vmatpush1.bf16.msra.mxu0 0
    %867 = vmatprep.subr.bf16.mxu0 0
    %868 = vmatpush1.bf16.msra.mxu0 0
    %869 = vmatprep.subr.bf16.mxu0 0
    %870 = vmatpush1.bf16.msra.mxu0 0
    %871 = vmatprep.subr.bf16.mxu0 0
    %872 = vmatpush1.bf16.msra.mxu0 0
    %873 = vmatprep.subr.bf16.mxu0 0
    %874 = vmatpush1.bf16.msra.mxu0 0
    %875 = vmatprep.subr.bf16.mxu0 0
    %876 = vmatpush1.bf16.msra.mxu0 0
    %877 = vmatprep.subr.bf16.mxu0 0
    %878 = vmatpush1.bf16.msra.mxu0 0
    %879 = vmatprep.subr.bf16.mxu0 0
    %880 = vmatpush1.bf16.msra.mxu0 0
    %881 = vmatprep.subr.bf16.mxu0 0
    %882 = vmatpush1.bf16.msra.mxu0 0
    %883 = vmatprep.subr.bf16.mxu0 0
    %884 = vmatpush1.bf16.msra.mxu0 0
    %885 = vmatprep.subr.bf16.mxu0 0
    %886 = vmatpush1.bf16.msra.mxu0 0
    %887 = vmatprep.subr.bf16.mxu0 0
    %888 = vmatpush1.bf16.msra.mxu0 0
    %889 = vmatprep.subr.bf16.mxu0 0
    %890 = vmatpush1.bf16.msra.mxu0 0
    %891 = vmatprep.mubr.bf16.mxu0 0
    %892 = vmatmul.mubr.bf16.gmra.mrb[0].mxu0 %v350
    %v893 = vpop.f32.mrb[0].mxu0
    %v894 = vadd.f32 %v127, %v893
    %v895 = vpop.f32.mrb[0].mxu0
    %v896 = vadd.f32 %v131, %v895
    %v897 = vpop.f32.mrb[0].mxu0
    %v898 = vpop.f32.mrb[0].mxu0
    %899 = vdwg.mxu0
    %900 = vmatprep.subr.bf16.mxu0 %v423
    %901 = vmatpush1.bf16.msra.mxu0 %v420
    %902 = vmatprep.subr.bf16.mxu0 0
    %903 = vmatpush1.bf16.msra.mxu0 0
    %904 = vmatprep.subr.bf16.mxu0 0
    %905 = vmatpush1.bf16.msra.mxu0 0
    %906 = vmatprep.subr.bf16.mxu0 0
    %907 = vmatpush1.bf16.msra.mxu0 0
    %908 = vmatprep.subr.bf16.mxu0 0
    %909 = vmatpush1.bf16.msra.mxu0 0
    %910 = vmatprep.subr.bf16.mxu0 0
    %911 = vmatpush1.bf16.msra.mxu0 0
    %912 = vmatprep.subr.bf16.mxu0 0
    %913 = vmatpush1.bf16.msra.mxu0 0
    %914 = vmatprep.subr.bf16.mxu0 0
    %915 = vmatpush1.bf16.msra.mxu0 0
    %916 = vmatprep.subr.bf16.mxu0 0
    %917 = vmatpush1.bf16.msra.mxu0 0
    %918 = vmatprep.subr.bf16.mxu0 0
    %919 = vmatpush1.bf16.msra.mxu0 0
    %920 = vmatprep.subr.bf16.mxu0 0
    %921 = vmatpush1.bf16.msra.mxu0 0
    %922 = vmatprep.subr.bf16.mxu0 0
    %923 = vmatpush1.bf16.msra.mxu0 0
    %924 = vmatprep.subr.bf16.mxu0 0
    %925 = vmatpush1.bf16.msra.mxu0 0
    %926 = vmatprep.subr.bf16.mxu0 0
    %927 = vmatpush1.bf16.msra.mxu0 0
    %928 = vmatprep.subr.bf16.mxu0 0
    %929 = vmatpush1.bf16.msra.mxu0 0
    %930 = vmatprep.subr.bf16.mxu0 0
    %931 = vmatpush1.bf16.msra.mxu0 0
    %932 = vmatprep.mubr.bf16.mxu0 0
    %933 = vmatmul.mubr.bf16.gmra.mrb[0].mxu0 %v350
    %v934 = vpop.f32.mrb[0].mxu0
    %v935 = vadd.f32 %v135, %v934
    %v936 = vpop.f32.mrb[0].mxu0
    %v937 = vadd.f32 %v139, %v936
    %v938 = vpop.f32.mrb[0].mxu0
    %v939 = vpop.f32.mrb[0].mxu0
    %940 = vdwg.mxu0
    %941 = vmatprep.subr.bf16.mxu0 %v429
    %942 = vmatpush1.bf16.msra.mxu0 %v426
    %943 = vmatprep.subr.bf16.mxu0 0
    %944 = vmatpush1.bf16.msra.mxu0 0
    %945 = vmatprep.subr.bf16.mxu0 0
    %946 = vmatpush1.bf16.msra.mxu0 0
    %947 = vmatprep.subr.bf16.mxu0 0
    %948 = vmatpush1.bf16.msra.mxu0 0
    %949 = vmatprep.subr.bf16.mxu0 0
    %950 = vmatpush1.bf16.msra.mxu0 0
    %951 = vmatprep.subr.bf16.mxu0 0
    %952 = vmatpush1.bf16.msra.mxu0 0
    %953 = vmatprep.subr.bf16.mxu0 0
    %954 = vmatpush1.bf16.msra.mxu0 0
    %955 = vmatprep.subr.bf16.mxu0 0
    %956 = vmatpush1.bf16.msra.mxu0 0
    %957 = vmatprep.subr.bf16.mxu0 0
    %958 = vmatpush1.bf16.msra.mxu0 0
    %959 = vmatprep.subr.bf16.mxu0 0
    %960 = vmatpush1.bf16.msra.mxu0 0
    %961 = vmatprep.subr.bf16.mxu0 0
    %962 = vmatpush1.bf16.msra.mxu0 0
    %963 = vmatprep.subr.bf16.mxu0 0
    %964 = vmatpush1.bf16.msra.mxu0 0
    %965 = vmatprep.subr.bf16.mxu0 0
    %966 = vmatpush1.bf16.msra.mxu0 0
    %967 = vmatprep.subr.bf16.mxu0 0
    %968 = vmatpush1.bf16.msra.mxu0 0
    %969 = vmatprep.subr.bf16.mxu0 0
    %970 = vmatpush1.bf16.msra.mxu0 0
    %971 = vmatprep.subr.bf16.mxu0 0
    %972 = vmatpush1.bf16.msra.mxu0 0
    %973 = vmatprep.mubr.bf16.mxu0 0
    %974 = vmatmul.mubr.bf16.gmra.mrb[0].mxu0 %v350
    %v975 = vpop.f32.mrb[0].mxu0
    %v976 = vadd.f32 %v143, %v975
    %v977 = vpop.f32.mrb[0].mxu0
    %v978 = vadd.f32 %v147, %v977
    %v979 = vpop.f32.mrb[0].mxu0
    %v980 = vpop.f32.mrb[0].mxu0
    %981 = vdwg.mxu0
    %982 = vmatprep.subr.bf16.mxu0 %v435
    %983 = vmatpush1.bf16.msra.mxu0 %v432
    %984 = vmatprep.subr.bf16.mxu0 0
    %985 = vmatpush1.bf16.msra.mxu0 0
    %986 = vmatprep.subr.bf16.mxu0 0
    %987 = vmatpush1.bf16.msra.mxu0 0
    %988 = vmatprep.subr.bf16.mxu0 0
    %989 = vmatpush1.bf16.msra.mxu0 0
    %990 = vmatprep.subr.bf16.mxu0 0
    %991 = vmatpush1.bf16.msra.mxu0 0
    %992 = vmatprep.subr.bf16.mxu0 0
    %993 = vmatpush1.bf16.msra.mxu0 0
    %994 = vmatprep.subr.bf16.mxu0 0
    %995 = vmatpush1.bf16.msra.mxu0 0
    %996 = vmatprep.subr.bf16.mxu0 0
    %997 = vmatpush1.bf16.msra.mxu0 0
    %998 = vmatprep.subr.bf16.mxu0 0
    %999 = vmatpush1.bf16.msra.mxu0 0
    %1000 = vmatprep.subr.bf16.mxu0 0
    %1001 = vmatpush1.bf16.msra.mxu0 0
    %1002 = vmatprep.subr.bf16.mxu0 0
    %1003 = vmatpush1.bf16.msra.mxu0 0
    %1004 = vmatprep.subr.bf16.mxu0 0
    %1005 = vmatpush1.bf16.msra.mxu0 0
    %1006 = vmatprep.subr.bf16.mxu0 0
    %1007 = vmatpush1.bf16.msra.mxu0 0
    %1008 = vmatprep.subr.bf16.mxu0 0
    %1009 = vmatpush1.bf16.msra.mxu0 0
    %1010 = vmatprep.subr.bf16.mxu0 0
    %1011 = vmatpush1.bf16.msra.mxu0 0
    %1012 = vmatprep.subr.bf16.mxu0 0
    %1013 = vmatpush1.bf16.msra.mxu0 0
    %1014 = vmatprep.mubr.bf16.mxu0 0
    %1015 = vmatmul.mubr.bf16.gmra.mrb[0].mxu0 %v350
    %v1016 = vpop.f32.mrb[0].mxu0
    %v1017 = vadd.f32 %v151, %v1016
    %v1018 = vpop.f32.mrb[0].mxu0
    %v1019 = vadd.f32 %v155, %v1018
    %v1020 = vpop.f32.mrb[0].mxu0
    %v1021 = vpop.f32.mrb[0].mxu0
    %1022 = vdwg.mxu0
    %1023 = vmatprep.subr.bf16.mxu0 %v441
    %1024 = vmatpush1.bf16.msra.mxu0 %v438
    %1025 = vmatprep.subr.bf16.mxu0 0
    %1026 = vmatpush1.bf16.msra.mxu0 0
    %1027 = vmatprep.subr.bf16.mxu0 0
    %1028 = vmatpush1.bf16.msra.mxu0 0
    %1029 = vmatprep.subr.bf16.mxu0 0
    %1030 = vmatpush1.bf16.msra.mxu0 0
    %1031 = vmatprep.subr.bf16.mxu0 0
    %1032 = vmatpush1.bf16.msra.mxu0 0
    %1033 = vmatprep.subr.bf16.mxu0 0
    %1034 = vmatpush1.bf16.msra.mxu0 0
    %1035 = vmatprep.subr.bf16.mxu0 0
    %1036 = vmatpush1.bf16.msra.mxu0 0
    %1037 = vmatprep.subr.bf16.mxu0 0
    %1038 = vmatpush1.bf16.msra.mxu0 0
    %1039 = vmatprep.subr.bf16.mxu0 0
    %1040 = vmatpush1.bf16.msra.mxu0 0
    %1041 = vmatprep.subr.bf16.mxu0 0
    %1042 = vmatpush1.bf16.msra.mxu0 0
    %1043 = vmatprep.subr.bf16.mxu0 0
    %1044 = vmatpush1.bf16.msra.mxu0 0
    %1045 = vmatprep.subr.bf16.mxu0 0
    %1046 = vmatpush1.bf16.msra.mxu0 0
    %1047 = vmatprep.subr.bf16.mxu0 0
    %1048 = vmatpush1.bf16.msra.mxu0 0
    %1049 = vmatprep.subr.bf16.mxu0 0
    %1050 = vmatpush1.bf16.msra.mxu0 0
    %1051 = vmatprep.subr.bf16.mxu0 0
    %1052 = vmatpush1.bf16.msra.mxu0 0
    %1053 = vmatprep.subr.bf16.mxu0 0
    %1054 = vmatpush1.bf16.msra.mxu0 0
    %1055 = vmatprep.mubr.bf16.mxu0 0
    %1056 = vmatmul.mubr.bf16.gmra.mrb[0].mxu0 %v350
    %v1057 = vpop.f32.mrb[0].mxu0
    %v1058 = vadd.f32 %v159, %v1057
    %v1059 = vpop.f32.mrb[0].mxu0
    %v1060 = vadd.f32 %v163, %v1059
    %v1061 = vpop.f32.mrb[0].mxu0
    %v1062 = vpop.f32.mrb[0].mxu0
    %1063 = vdwg.mxu0
    %1064 = vmatprep.subr.bf16.mxu0 %v447
    %1065 = vmatpush1.bf16.msra.mxu0 %v444
    %1066 = vmatprep.subr.bf16.mxu0 0
    %1067 = vmatpush1.bf16.msra.mxu0 0
    %1068 = vmatprep.subr.bf16.mxu0 0
    %1069 = vmatpush1.bf16.msra.mxu0 0
    %1070 = vmatprep.subr.bf16.mxu0 0
    %1071 = vmatpush1.bf16.msra.mxu0 0
    %1072 = vmatprep.subr.bf16.mxu0 0
    %1073 = vmatpush1.bf16.msra.mxu0 0
    %1074 = vmatprep.subr.bf16.mxu0 0
    %1075 = vmatpush1.bf16.msra.mxu0 0
    %1076 = vmatprep.subr.bf16.mxu0 0
    %1077 = vmatpush1.bf16.msra.mxu0 0
    %1078 = vmatprep.subr.bf16.mxu0 0
    %1079 = vmatpush1.bf16.msra.mxu0 0
    %1080 = vmatprep.subr.bf16.mxu0 0
    %1081 = vmatpush1.bf16.msra.mxu0 0
    %1082 = vmatprep.subr.bf16.mxu0 0
    %1083 = vmatpush1.bf16.msra.mxu0 0
    %1084 = vmatprep.subr.bf16.mxu0 0
    %1085 = vmatpush1.bf16.msra.mxu0 0
    %1086 = vmatprep.subr.bf16.mxu0 0
    %1087 = vmatpush1.bf16.msra.mxu0 0
    %1088 = vmatprep.subr.bf16.mxu0 0
    %1089 = vmatpush1.bf16.msra.mxu0 0
    %1090 = vmatprep.subr.bf16.mxu0 0
    %1091 = vmatpush1.bf16.msra.mxu0 0
    %1092 = vmatprep.subr.bf16.mxu0 0
    %1093 = vmatpush1.bf16.msra.mxu0 0
    %1094 = vmatprep.subr.bf16.mxu0 0
    %1095 = vmatpush1.bf16.msra.mxu0 0
    %1096 = vmatprep.mubr.bf16.mxu0 0
    %1097 = vmatmul.mubr.bf16.gmra.mrb[0].mxu0 %v350
    %v1098 = vpop.f32.mrb[0].mxu0
    %v1099 = vadd.f32 %v167, %v1098
    %v1100 = vpop.f32.mrb[0].mxu0
    %v1101 = vadd.f32 %v171, %v1100
    %v1102 = vpop.f32.mrb[0].mxu0
    %v1103 = vpop.f32.mrb[0].mxu0
    %1104 = vdwg.mxu0
    %v1105 = vmax.f32 %v484, 0.0
    %v1106 = vmax.f32 %v486, 0.0
    %v1107 = vmax.f32 %v525, 0.0
    %v1108 = vmax.f32 %v527, 0.0
    %v1109 = vmax.f32 %v566, 0.0
    %v1110 = vmax.f32 %v568, 0.0
    %v1111 = vmax.f32 %v607, 0.0
    %v1112 = vmax.f32 %v609, 0.0
    %v1113 = vmax.f32 %v648, 0.0
    %v1114 = vmax.f32 %v650, 0.0
    %v1115 = vmax.f32 %v689, 0.0
    %v1116 = vmax.f32 %v691, 0.0
    %v1117 = vmax.f32 %v730, 0.0
    %v1118 = vmax.f32 %v732, 0.0
    %v1119 = vmax.f32 %v771, 0.0
    %v1120 = vmax.f32 %v773, 0.0
    %v1121 = vmax.f32 %v812, 0.0
    %v1122 = vmax.f32 %v814, 0.0
    %v1123 = vmax.f32 %v853, 0.0
    %v1124 = vmax.f32 %v855, 0.0
    %v1125 = vmax.f32 %v894, 0.0
    %v1126 = vmax.f32 %v896, 0.0
    %v1127 = vmax.f32 %v935, 0.0
    %v1128 = vmax.f32 %v937, 0.0
    %v1129 = vmax.f32 %v976, 0.0
    %v1130 = vmax.f32 %v978, 0.0
    %v1131 = vmax.f32 %v1017, 0.0
    %v1132 = vmax.f32 %v1019, 0.0
    %v1133 = vmax.f32 %v1058, 0.0
    %v1134 = vmax.f32 %v1060, 0.0
    %v1135 = vmax.f32 %v1099, 0.0
    %v1136 = vmax.f32 %v1101, 0.0
    %v1169 = vcombine.low %v1105, %v1106
    %v1170 = vcombine.low %v1107, %v1108
    %v1172 = vunpack.c.l.s4 1983009808
    %v1173 = vunpack.c.0.s8 %v1172
    %v1174 = vlaneseq
    %v1175 = vshrl.u32 %v1174, 7
    %v1176 = vsub.s32 %v1173, %v1175
    %v1177 = vrot.slane %v1169, %v1176
    %v1179 = vunpack.c.l.s4 1983009808
    %v1180 = vunpack.c.0.s8 %v1179
    %v1181 = vlaneseq
    %v1182 = vshrl.u32 %v1181, 7
    %v1183 = vsub.s32 %v1180, %v1182
    %v1184 = vrot.slane %v1170, %v1183
    %v1185 = vcombine.low %v1177, %v1184
    %v1186 = vcombine.low %v1109, %v1110
    %v1187 = vcombine.low %v1111, %v1112
    %v1189 = vunpack.c.l.s4 1983009808
    %v1190 = vunpack.c.0.s8 %v1189
    %v1191 = vlaneseq
    %v1192 = vshrl.u32 %v1191, 7
    %v1193 = vsub.s32 %v1190, %v1192
    %v1194 = vrot.slane %v1186, %v1193
    %v1196 = vunpack.c.l.s4 1983009808
    %v1197 = vunpack.c.0.s8 %v1196
    %v1198 = vlaneseq
    %v1199 = vshrl.u32 %v1198, 7
    %v1200 = vsub.s32 %v1197, %v1199
    %v1201 = vrot.slane %v1187, %v1200
    %v1202 = vcombine.low %v1194, %v1201
    %v1203 = vcombine.low %v1113, %v1114
    %v1204 = vcombine.low %v1115, %v1116
    %v1206 = vunpack.c.l.s4 1983009808
    %v1207 = vunpack.c.0.s8 %v1206
    %v1208 = vlaneseq
    %v1209 = vshrl.u32 %v1208, 7
    %v1210 = vsub.s32 %v1207, %v1209
    %v1211 = vrot.slane %v1203, %v1210
    %v1213 = vunpack.c.l.s4 1983009808
    %v1214 = vunpack.c.0.s8 %v1213
    %v1215 = vlaneseq
    %v1216 = vshrl.u32 %v1215, 7
    %v1217 = vsub.s32 %v1214, %v1216
    %v1218 = vrot.slane %v1204, %v1217
    %v1219 = vcombine.low %v1211, %v1218
    %v1220 = vcombine.low %v1117, %v1118
    %v1221 = vcombine.low %v1119, %v1120
    %v1223 = vunpack.c.l.s4 1983009808
    %v1224 = vunpack.c.0.s8 %v1223
    %v1225 = vlaneseq
    %v1226 = vshrl.u32 %v1225, 7
    %v1227 = vsub.s32 %v1224, %v1226
    %v1228 = vrot.slane %v1220, %v1227
    %v1230 = vunpack.c.l.s4 1983009808
    %v1231 = vunpack.c.0.s8 %v1230
    %v1232 = vlaneseq
    %v1233 = vshrl.u32 %v1232, 7
    %v1234 = vsub.s32 %v1231, %v1233
    %v1235 = vrot.slane %v1221, %v1234
    %v1236 = vcombine.low %v1228, %v1235
    %v1237 = vcombine.low %v1121, %v1122
    %v1238 = vcombine.low %v1123, %v1124
    %v1240 = vunpack.c.l.s4 1983009808
    %v1241 = vunpack.c.0.s8 %v1240
    %v1242 = vlaneseq
    %v1243 = vshrl.u32 %v1242, 7
    %v1244 = vsub.s32 %v1241, %v1243
    %v1245 = vrot.slane %v1237, %v1244
    %v1247 = vunpack.c.l.s4 1983009808
    %v1248 = vunpack.c.0.s8 %v1247
    %v1249 = vlaneseq
    %v1250 = vshrl.u32 %v1249, 7
    %v1251 = vsub.s32 %v1248, %v1250
    %v1252 = vrot.slane %v1238, %v1251
    %v1253 = vcombine.low %v1245, %v1252
    %v1254 = vcombine.low %v1125, %v1126
    %v1255 = vcombine.low %v1127, %v1128
    %v1257 = vunpack.c.l.s4 1983009808
    %v1258 = vunpack.c.0.s8 %v1257
    %v1259 = vlaneseq
    %v1260 = vshrl.u32 %v1259, 7
    %v1261 = vsub.s32 %v1258, %v1260
    %v1262 = vrot.slane %v1254, %v1261
    %v1264 = vunpack.c.l.s4 1983009808
    %v1265 = vunpack.c.0.s8 %v1264
    %v1266 = vlaneseq
    %v1267 = vshrl.u32 %v1266, 7
    %v1268 = vsub.s32 %v1265, %v1267
    %v1269 = vrot.slane %v1255, %v1268
    %v1270 = vcombine.low %v1262, %v1269
    %v1271 = vcombine.low %v1129, %v1130
    %v1272 = vcombine.low %v1131, %v1132
    %v1274 = vunpack.c.l.s4 1983009808
    %v1275 = vunpack.c.0.s8 %v1274
    %v1276 = vlaneseq
    %v1277 = vshrl.u32 %v1276, 7
    %v1278 = vsub.s32 %v1275, %v1277
    %v1279 = vrot.slane %v1271, %v1278
    %v1281 = vunpack.c.l.s4 1983009808
    %v1282 = vunpack.c.0.s8 %v1281
    %v1283 = vlaneseq
    %v1284 = vshrl.u32 %v1283, 7
    %v1285 = vsub.s32 %v1282, %v1284
    %v1286 = vrot.slane %v1272, %v1285
    %v1287 = vcombine.low %v1279, %v1286
    %v1288 = vcombine.low %v1133, %v1134
    %v1289 = vcombine.low %v1135, %v1136
    %v1291 = vunpack.c.l.s4 1983009808
    %v1292 = vunpack.c.0.s8 %v1291
    %v1293 = vlaneseq
    %v1294 = vshrl.u32 %v1293, 7
    %v1295 = vsub.s32 %v1292, %v1294
    %v1296 = vrot.slane %v1288, %v1295
    %v1298 = vunpack.c.l.s4 1983009808
    %v1299 = vunpack.c.0.s8 %v1298
    %v1300 = vlaneseq
    %v1301 = vshrl.u32 %v1300, 7
    %v1302 = vsub.s32 %v1299, %v1301
    %v1303 = vrot.slane %v1289, %v1302
    %v1304 = vcombine.low %v1296, %v1303
    %1313 = vst [vmem:[%s3] sm:$0xff] %v1185
    %1314 = vst [vmem:[%s3 + $0x8] sm:$0xff] %v1202
    %1315 = vst [vmem:[%s3 + $0x10] sm:$0xff] %v1219
    %1316 = vst [vmem:[%s3 + $0x18] sm:$0xff] %v1236
    %1317 = vst [vmem:[%s3 + $0x20] sm:$0xff] %v1253
    %1318 = vst [vmem:[%s3 + $0x28] sm:$0xff] %v1270
    %1319 = vst [vmem:[%s3 + $0x30] sm:$0xff] %v1287
    %1320 = vst [vmem:[%s3 + $0x38] sm:$0xff] %v1304
    // Predicated region
    $region18: #{deconvnet28_forward.3} parent=1 // pred_check
      _
    $region19: #{deconvnet28_forward.3} parent=1 // pred_check_branch
      %1322 = sbr.rel (0) target = $region21
    $region20: #{deconvnet28_forward.3} parent=1 // pred_region
      _
    $region21: #{deconvnet28_forward.3} parent=1 // pred_fallthru
      _
    // Predicated region
    $region22: #{deconvnet28_forward.3} parent=1 // pred_check
      _
    $region23: #{deconvnet28_forward.3} parent=1 // pred_check_branch
      %1324 = sbr.rel (0) target = $region25
    $region24: #{deconvnet28_forward.3} parent=1 // pred_region
      _
    $region25: #{deconvnet28_forward.3} parent=1 // pred_fallthru
      _
    %1325 = vsyncpa [#allocation3], 1

// kernel: deconvnet28_forward.4
$region0: #{deconvnet28_forward.4}
  #allocation0 [shape = 'u32[]', space=smem, size = 0x4, offset = 0x4, fixed_abs, tag = 'smem constant byte address 0x4 - core index']
  #allocation1 [shape = 'u32[144,128]{1,0:T(1,128)}', space=vmem, size = 0x12000, scoped, tag = 'internal scratch']
  %s0 = inlined_call_operand.vmem [shape: f32[2,9,9,64], index: 0, kind: input, shape index: {}]
  %s1 = inlined_call_operand.vmem [shape: bf16[3,3,64,32], index: 1, kind: input, shape index: {}]
  %s2 = inlined_call_operand.vmem [shape: f32[1,32], index: 2, kind: input, shape index: {}]
  %s3 = inlined_call_operand.vmem [shape: bf16[2,2,128,32], index: 3, kind: output, shape index: {}]
  %s4 = sld [smem:[#allocation0]]
  $region61: #{deconvnet28_forward.4} parent=0
    _
  %s6 = ssub.s32 1, %s4
  %s7 = scalar_select 0, %s6, %s4
  loop: start=0, step=1, limit=6
  $region2: #{deconvnet28_forward.4} parent=0 // loop_pre_header
    _
  $region3: #{deconvnet28_forward.4} parent=0 // loop_header
    %s9 = sphi 0, %s13
    %p10 = scmp.ge.s32.totalorder %s9, 6
    %s16 = sphi 0, %s42
    %s17 = sphi 0, %s38
    %s18 = sphi 0, %s34
    %s19 = sphi 0, %s30
    %s20 = sphi 0, %s16
    %s21 = sphi 0, %s17
    %s22 = sphi 0, %s18
    %s23 = sphi 0, %s19
    %s24 = sphi 0, %s20
    %s25 = sphi 0, %s21
    %s26 = sphi 0, %s22
    %s27 = sphi 0, %s23
    %s45 = sphi 0, %s47
    %s48 = sphi 0, %s45
    %s49 = sphi 0, %s48
    %s65 = sphi 0, %s49
    %s71 = sphi 0, %s73
    %s74 = sphi 0, %s71
    %s75 = sphi 0, %s74
    %s91 = sphi 0, %s75
    %s97 = sphi 0, %s99
    %s100 = sphi 0, %s97
    %s101 = sphi 0, %s100
    %s117 = sphi 0, %s101
    %s129 = sphi 0, %s131
    %s132 = sphi 0, %s129
    %s133 = sphi 0, %s132
    %s149 = sphi 0, %s133
  $region4: #{deconvnet28_forward.4} parent=0 // loop_header_branch
    %12 = sbr.rel (%p10) target = $region8
  $region5: #{deconvnet28_forward.4} parent=0 // loop_body
    %s14 = ssub.s32 %s9, 1
    %s15 = ssub.s32 %s9, 2
    %s28 = sadd.s32 1, %s19
    %p29 = scmp.ge.s32.totalorder %s28, 2
    %s30 = scalar_select %p29, 0, %s28
    %s31 = sadd.s32 1, %s18
    %s32 = scalar_select %p29, %s31, %s18
    %p33 = scmp.ge.s32.totalorder %s32, 2
    %s34 = scalar_select %p33, 0, %s32
    %s35 = sadd.s32 1, %s17
    %s36 = scalar_select %p33, %s35, %s17
    %p37 = scmp.ge.s32.totalorder %s36, 1
    %s38 = scalar_select %p37, 0, %s36
    %s39 = sadd.s32 1, %s16
    %s40 = scalar_select %p37, %s39, %s16
    %p41 = scmp.ge.s32.totalorder %s40, 1
    %s42 = scalar_select %p41, 0, %s40
    %s43 = ssub.s32 %s17, %s38
    %p44 = scmp.eq.s32.totalorder %s43, 0
    %s46 = sadd.s32 %s45, 1
    %s47 = scalar_select %p44, %s45, %s46
    %p50 = pneg %p44
    %p51 = scmp.eq.s32.totalorder %s9, 3
    %p52 = por %p50, %p51
    %p53 = scmp.ne.s32.totalorder %s45, %s48
    %p54 = scmp.eq.s32.totalorder %s9, 0
    %p55 = por %p53, %p54
    %p56 = scmp.ne.s32.totalorder %s45, %s48
    %p57 = scmp.eq.s32.totalorder %s14, 3
    %p58 = por %p56, %p57
    %p59 = scmp.ne.s32.totalorder %s48, %s49
    %p60 = scmp.eq.s32.totalorder %s14, 0
    %p61 = por %p59, %p60
    %p62 = scmp.ne.s32.totalorder %s48, %s49
    %p63 = scmp.eq.s32.totalorder %s15, 3
    %p64 = por %p62, %p63
    %p66 = scmp.ne.s32.totalorder %s49, %s65
    %p67 = scmp.eq.s32.totalorder %s15, 0
    %p68 = por %p66, %p67
    %s69 = ssub.s32 %s16, %s42
    %p70 = scmp.eq.s32.totalorder %s69, 0
    %s72 = sadd.s32 %s71, 1
    %s73 = scalar_select %p70, %s71, %s72
    %p76 = pneg %p70
    %p77 = scmp.eq.s32.totalorder %s9, 3
    %p78 = por %p76, %p77
    %p79 = scmp.ne.s32.totalorder %s71, %s74
    %p80 = scmp.eq.s32.totalorder %s9, 0
    %p81 = por %p79, %p80
    %p82 = scmp.ne.s32.totalorder %s71, %s74
    %p83 = scmp.eq.s32.totalorder %s14, 3
    %p84 = por %p82, %p83
    %p85 = scmp.ne.s32.totalorder %s74, %s75
    %p86 = scmp.eq.s32.totalorder %s14, 0
    %p87 = por %p85, %p86
    %p88 = scmp.ne.s32.totalorder %s74, %s75
    %p89 = scmp.eq.s32.totalorder %s15, 3
    %p90 = por %p88, %p89
    %p92 = scmp.ne.s32.totalorder %s75, %s91
    %p93 = scmp.eq.s32.totalorder %s15, 0
    %p94 = por %p92, %p93
    %s95 = ssub.s32 %s16, %s42
    %p96 = scmp.eq.s32.totalorder %s95, 0
    %s98 = sadd.s32 %s97, 1
    %s99 = scalar_select %p96, %s97, %s98
    %p102 = pneg %p96
    %p103 = scmp.eq.s32.totalorder %s9, 3
    %p104 = por %p102, %p103
    %p105 = scmp.ne.s32.totalorder %s97, %s100
    %p106 = scmp.eq.s32.totalorder %s9, 0
    %p107 = por %p105, %p106
    %p108 = scmp.ne.s32.totalorder %s97, %s100
    %p109 = scmp.eq.s32.totalorder %s14, 3
    %p110 = por %p108, %p109
    %p111 = scmp.ne.s32.totalorder %s100, %s101
    %p112 = scmp.eq.s32.totalorder %s14, 0
    %p113 = por %p111, %p112
    %p114 = scmp.ne.s32.totalorder %s100, %s101
    %p115 = scmp.eq.s32.totalorder %s15, 3
    %p116 = por %p114, %p115
    %p118 = scmp.ne.s32.totalorder %s101, %s117
    %p119 = scmp.eq.s32.totalorder %s15, 0
    %p120 = por %p118, %p119
    %s121 = ssub.s32 %s18, %s34
    %s122 = ssub.s32 %s19, %s30
    %s123 = sor.u32 %s121, %s122
    %s124 = ssub.s32 %s17, %s38
    %s125 = sor.u32 %s123, %s124
    %s126 = ssub.s32 %s16, %s42
    %s127 = sor.u32 %s125, %s126
    %p128 = scmp.eq.s32.totalorder %s127, 0
    %s130 = sadd.s32 %s129, 1
    %s131 = scalar_select %p128, %s129, %s130
    %p134 = pneg %p128
    %p135 = scmp.eq.s32.totalorder %s9, 3
    %p136 = por %p134, %p135
    %p137 = scmp.ne.s32.totalorder %s129, %s132
    %p138 = scmp.eq.s32.totalorder %s9, 0
    %p139 = por %p137, %p138
    %p140 = scmp.ne.s32.totalorder %s129, %s132
    %p141 = scmp.eq.s32.totalorder %s14, 3
    %p142 = por %p140, %p141
    %p143 = scmp.ne.s32.totalorder %s132, %s133
    %p144 = scmp.eq.s32.totalorder %s14, 0
    %p145 = por %p143, %p144
    %p146 = scmp.ne.s32.totalorder %s132, %s133
    %p147 = scmp.eq.s32.totalorder %s15, 3
    %p148 = por %p146, %p147
    %p150 = scmp.ne.s32.totalorder %s133, %s149
    %p151 = scmp.eq.s32.totalorder %s15, 0
    %p152 = por %p150, %p151
    %p153 = scmp.le.s32.totalorder 1, %s9
    %p154 = scmp.lt.s32.totalorder %s9, 5
    %p155 = pnand %p153, %p154
    %p156 = pneg %p155
    // Predicated region
    $region9: #{deconvnet28_forward.4} parent=5 // pred_check
      _
    $region10: #{deconvnet28_forward.4} parent=5 // pred_check_branch
      %158 = sbr.rel (%p155) target = $region12
    $region11: #{deconvnet28_forward.4} parent=5 // pred_region
      %s159 = ssub.s32 %s9, 1
      // Predicated region
      $region13: #{deconvnet28_forward.4} parent=11 // pred_check
        %p160 = pneg %p61
      $region14: #{deconvnet28_forward.4} parent=11 // pred_check_branch
        %162 = sbr.rel (%p160) target = $region16
      $region15: #{deconvnet28_forward.4} parent=11 // pred_region
        %s163 = smul.u32 2, %s21
        %p164 = scmp.lt.s32.totalorder %s163, 1
        %s165 = scalar_select %p164, %s163, 1
        %s166 = smul.addr %s165, 18
        %s167 = smul.addr %s166, 8
        %s168 = scalar_lea.vmem %s0, %s167
        %s169 = smul.u32 2, %s21
      $region16: #{deconvnet28_forward.4} parent=11 // pred_fallthru
        _
      // Predicated region
      $region17: #{deconvnet28_forward.4} parent=11 // pred_check
        %p170 = pneg %p87
      $region18: #{deconvnet28_forward.4} parent=11 // pred_check_branch
        %172 = sbr.rel (%p170) target = $region20
      $region19: #{deconvnet28_forward.4} parent=11 // pred_region
        %p173 = scmp.lt.s32.totalorder %s20, 0
        %s174 = scalar_select %p173, %s20, 0
        %s175 = smul.addr %s174, 4
        %s176 = scalar_lea.vmem %s1, %s175
      $region20: #{deconvnet28_forward.4} parent=11 // pred_fallthru
        _
      // Predicated region
      $region21: #{deconvnet28_forward.4} parent=11 // pred_check
        %p177 = pneg %p113
      $region22: #{deconvnet28_forward.4} parent=11 // pred_check_branch
        %179 = sbr.rel (%p177) target = $region24
      $region23: #{deconvnet28_forward.4} parent=11 // pred_region
        %p180 = scmp.lt.s32.totalorder %s20, 0
        %s181 = scalar_select %p180, %s20, 0
        %s182 = scalar_lea.vmem %s2, %s181
      $region24: #{deconvnet28_forward.4} parent=11 // pred_fallthru
        _
    $region12: #{deconvnet28_forward.4} parent=5 // pred_fallthru
      _
    %p183 = scmp.lt.s32.totalorder %s9, 4
    // Predicated region
    $region25: #{deconvnet28_forward.4} parent=5 // pred_check
      %p184 = pneg %p183
    $region26: #{deconvnet28_forward.4} parent=5 // pred_check_branch
      %186 = sbr.rel (%p184) target = $region28
    $region27: #{deconvnet28_forward.4} parent=5 // pred_region
      _
    $region28: #{deconvnet28_forward.4} parent=5 // pred_fallthru
      _
    %p187 = scmp.le.s32.totalorder 1, %s9
    %p188 = scmp.lt.s32.totalorder %s9, 5
    %p189 = pnand %p187, %p188
    %p190 = pneg %p189
    // Predicated region
    $region29: #{deconvnet28_forward.4} parent=5 // pred_check
      _
    $region30: #{deconvnet28_forward.4} parent=5 // pred_check_branch
      %192 = sbr.rel (%p189) target = $region32
    $region31: #{deconvnet28_forward.4} parent=5 // pred_region
      %s193 = ssub.s32 %s9, 1
      %s194 = smul.u32 2, %s21
      %p195 = scmp.lt.s32.totalorder %s194, 1
      %s196 = scalar_select %p195, %s194, 1
      %s197 = smul.addr %s196, 18
      %s198 = smul.addr %s197, 8
      %s199 = scalar_lea.vmem %s0, %s198
      %p200 = pneg %p61
      %p201 = pneg %p58
      %p202 = scmp.lt.s32.totalorder %s20, 0
      %s203 = scalar_select %p202, %s20, 0
      %s204 = smul.addr %s203, 4
      %s205 = scalar_lea.vmem %s1, %s204
      %p206 = pneg %p87
      %p207 = pneg %p84
      %p208 = scmp.lt.s32.totalorder %s20, 0
      %s209 = scalar_select %p208, %s20, 0
      %s210 = scalar_lea.vmem %s2, %s209
      %p211 = pneg %p113
      %p212 = pneg %p110
      %p213 = pneg %p145
      %p214 = pneg %p142
      %s215 = smul.u32 16, %s21
      %p216 = scmp.lt.s32.totalorder %s22, 1
      %s217 = scalar_select %p216, %s22, 1
      %p218 = scmp.lt.s32.totalorder %s23, 1
      %s219 = scalar_select %p218, %s23, 1
      %p220 = scmp.lt.s32.totalorder %s215, 15
      %s221 = scalar_select %p220, %s215, 15
      %p222 = scmp.lt.s32.totalorder %s20, 0
      %s223 = scalar_select %p222, %s20, 0
      %s224 = sadd.s32 %s223, %s221
      %s225 = smul.addr %s219, 16
      %s226 = sadd.s32 %s224, %s225
      %s227 = smul.addr %s217, 32
      %s228 = sadd.s32 %s226, %s227
      %s229 = smul.addr %s228, 4
      %s230 = scalar_lea.vmem %s3, %s229
      %s231 = smul.u32 2, %s21
      %p232 = scmp.lt.s32.totalorder %s231, 1
      %s233 = scalar_select %p232, %s231, 1
      %s234 = smul.addr %s233, 18
      %s235 = smul.addr %s234, 8
      %s236 = scalar_lea.vmem %s0, %s235
      %s237 = smul.u32 2, %s21
      %p238 = scmp.lt.s32.totalorder %s20, 0
      %s239 = scalar_select %p238, %s20, 0
      %s240 = smul.addr %s239, 4
      %s241 = scalar_lea.vmem %s1, %s240
      %p242 = scmp.lt.s32.totalorder %s20, 0
      %s243 = scalar_select %p242, %s20, 0
      %s244 = scalar_lea.vmem %s2, %s243
      %s245 = smul.u32 16, %s21
      %p246 = scmp.lt.s32.totalorder %s22, 1
      %s247 = scalar_select %p246, %s22, 1
      %p248 = scmp.lt.s32.totalorder %s23, 1
      %s249 = scalar_select %p248, %s23, 1
      %p250 = scmp.lt.s32.totalorder %s245, 15
      %s251 = scalar_select %p250, %s245, 15
      %p252 = scmp.lt.s32.totalorder %s20, 0
      %s253 = scalar_select %p252, %s20, 0
      %s254 = sadd.s32 %s253, %s251
      %s255 = smul.addr %s249, 16
      %s256 = sadd.s32 %s254, %s255
      %s257 = smul.addr %s247, 32
      %s258 = sadd.s32 %s256, %s257
      %s259 = smul.addr %s258, 4
      %s260 = scalar_lea.vmem %s3, %s259
      %s261 = smul.u32 16, %s21
      %p263 = scmp.eq.s32.totalorder %s22, 0
      %p264 = scmp.eq.s32.totalorder %s23, 0
      %p265 = pnand %p263, %p264
      %p266 = pneg %p265
      // Predicated region
      $region33: #{deconvnet28_forward.4} parent=31 // pred_check
        _
      $region34: #{deconvnet28_forward.4} parent=31 // pred_check_branch
        %268 = sbr.rel (%p265) target = $region36
      $region35: #{deconvnet28_forward.4} parent=31 // pred_region
        %v269 = vld [vmem:[%s236] sm:$0xff]
        %v270 = vld [vmem:[%s236 + $0x10] sm:$0xff]
        %v271 = vld [vmem:[%s236 + $0x20] sm:$0xff]
        %v272 = vld [vmem:[%s236 + $0x30] sm:$0xff]
        %v273 = vld [vmem:[%s236 + $0x40] sm:$0xff]
        %v274 = vld [vmem:[%s236 + $0x50] sm:$0xff]
        %v275 = vld [vmem:[%s236 + $0x60] sm:$0xff]
        %v276 = vld [vmem:[%s236 + $0x70] sm:$0xff]
        %v277 = vld [vmem:[%s236 + $0x90] sm:$0xff]
        %v278 = vld [vmem:[%s236 + $0xa0] sm:$0xff]
        %v279 = vld [vmem:[%s236 + $0xb0] sm:$0xff]
        %v280 = vld [vmem:[%s236 + $0xc0] sm:$0xff]
        %v281 = vld [vmem:[%s236 + $0xd0] sm:$0xff]
        %v282 = vld [vmem:[%s236 + $0xe0] sm:$0xff]
        %v283 = vld [vmem:[%s236 + $0xf0] sm:$0xff]
        %v284 = vld [vmem:[%s236 + $0x100] sm:$0xff]
        %v285 = vpack.c.bf16 %v270, %v269
        %v286 = vpack.c.bf16 %v272, %v271
        %v287 = vpack.c.bf16 %v274, %v273
        %v288 = vpack.c.bf16 %v276, %v275
        %v289 = vpack.c.bf16 %v278, %v277
        %v290 = vpack.c.bf16 %v280, %v279
        %v291 = vpack.c.bf16 %v282, %v281
        %v292 = vpack.c.bf16 %v284, %v283
        %s293 = scalar_lea.vmem %s241, 128
        %v294 = vld [vmem:[%s293] sm:$0xf]
        %v295 = vld [vmem:[%s293 + $0x4] sm:$0xf]
        %v296 = vld [vmem:[%s293 + $0x8] sm:$0xf]
        %v297 = vld [vmem:[%s293 + $0xc] sm:$0xf]
        %v298 = vld [vmem:[%s293 + $0x10] sm:$0xf]
        %v299 = vld [vmem:[%s293 + $0x14] sm:$0xf]
        %v300 = vld [vmem:[%s293 + $0x18] sm:$0xf]
        %v301 = vld [vmem:[%s293 + $0x1c] sm:$0xf]
        %v302 = vld [vmem:[%s244] sm:$0x1]
        %v304 = vlaneseq
        %v305 = vshrl.u32 %v304, 7
        %v306 = vsub.s32 0, %v305
        %v307 = vrot.slane %v302, %v306
        %v317 = vunpack.c.l.b16 %v294
        %v318 = vunpack.c.l.b16 %v295
        %v319 = vunpack.c.l.b16 %v296
        %v320 = vunpack.c.l.b16 %v297
        %v321 = vunpack.c.l.b16 %v298
        %v322 = vunpack.c.l.b16 %v299
        %v323 = vunpack.c.l.b16 %v300
        %v324 = vunpack.c.l.b16 %v301
        %v325 = vpack.c.b16 %v318, %v317
        %v326 = vpack.c.b16 %v320, %v319
        %v327 = vpack.c.b16 %v322, %v321
        %v328 = vpack.c.b16 %v324, %v323
        %vm333 = vcmask 523264
        %v335 = vsel %vm333, %v285, 0
        %v338 = vsel %vm333, %v286, 0
        %v341 = vsel %vm333, %v287, 0
        %v344 = vsel %vm333, %v288, 0
        %v347 = vsel %vm333, %v289, 0
        %v350 = vsel %vm333, %v290, 0
        %v353 = vsel %vm333, %v291, 0
        %v356 = vsel %vm333, %v292, 0
        %358 = vmatprep.subr.bf16.mxu0 0
        %359 = vmatpush1.bf16.msra.mxu0 %v325
        %360 = vmatprep.subr.bf16.mxu0 0
        %361 = vmatpush1.bf16.msra.mxu0 %v326
        %362 = vmatprep.subr.bf16.mxu0 0
        %363 = vmatpush1.bf16.msra.mxu0 %v327
        %364 = vmatprep.subr.bf16.mxu0 0
        %365 = vmatpush1.bf16.msra.mxu0 %v328
        %366 = vmatprep.subr.bf16.mxu0 0
        %367 = vmatpush1.bf16.msra.mxu0 0
        %368 = vmatprep.subr.bf16.mxu0 0
        %369 = vmatpush1.bf16.msra.mxu0 0
        %370 = vmatprep.subr.bf16.mxu0 0
        %371 = vmatpush1.bf16.msra.mxu0 0
        %372 = vmatprep.subr.bf16.mxu0 0
        %373 = vmatpush1.bf16.msra.mxu0 0
        %374 = vmatprep.subr.bf16.mxu0 0
        %375 = vmatpush1.bf16.msra.mxu0 0
        %376 = vmatprep.subr.bf16.mxu0 0
        %377 = vmatpush1.bf16.msra.mxu0 0
        %378 = vmatprep.subr.bf16.mxu0 0
        %379 = vmatpush1.bf16.msra.mxu0 0
        %380 = vmatprep.subr.bf16.mxu0 0
        %381 = vmatpush1.bf16.msra.mxu0 0
        %382 = vmatprep.subr.bf16.mxu0 0
        %383 = vmatpush1.bf16.msra.mxu0 0
        %384 = vmatprep.subr.bf16.mxu0 0
        %385 = vmatpush1.bf16.msra.mxu0 0
        %386 = vmatprep.subr.bf16.mxu0 0
        %387 = vmatpush1.bf16.msra.mxu0 0
        %388 = vmatprep.subr.bf16.mxu0 0
        %389 = vmatpush1.bf16.msra.mxu0 0
        %390 = vmatprep.mubr.bf16.mxu0 0
        %391 = vmatmul.mubr.bf16.gmra.mrb[0].mxu0 %v335
        %v392 = vpop.f32.mrb[0].mxu0
        %v393 = vadd.f32 %v307, %v392
        %v394 = vpop.f32.mrb[0].mxu0
        %v395 = vpop.f32.mrb[0].mxu0
        %v396 = vadd.f32 %v307, %v395
        %v397 = vpop.f32.mrb[0].mxu0
        %398 = vmatprep.mubr.bf16.mxu0 0
        %399 = vmatmul.mubr.bf16.gmra.mrb[0].mxu0 %v338
        %v400 = vpop.f32.mrb[0].mxu0
        %v401 = vadd.f32 %v307, %v400
        %v402 = vpop.f32.mrb[0].mxu0
        %v403 = vpop.f32.mrb[0].mxu0
        %v404 = vadd.f32 %v307, %v403
        %v405 = vpop.f32.mrb[0].mxu0
        %406 = vmatprep.mubr.bf16.mxu0 0
        %407 = vmatmul.mubr.bf16.gmra.mrb[0].mxu0 %v341
        %v408 = vpop.f32.mrb[0].mxu0
        %v409 = vadd.f32 %v307, %v408
        %v410 = vpop.f32.mrb[0].mxu0
        %v411 = vpop.f32.mrb[0].mxu0
        %v412 = vadd.f32 %v307, %v411
        %v413 = vpop.f32.mrb[0].mxu0
        %414 = vmatprep.mubr.bf16.mxu0 0
        %415 = vmatmul.mubr.bf16.gmra.mrb[0].mxu0 %v344
        %v416 = vpop.f32.mrb[0].mxu0
        %v417 = vadd.f32 %v307, %v416
        %v418 = vpop.f32.mrb[0].mxu0
        %v419 = vpop.f32.mrb[0].mxu0
        %v420 = vadd.f32 %v307, %v419
        %v421 = vpop.f32.mrb[0].mxu0
        %422 = vmatprep.mubr.bf16.mxu0 0
        %423 = vmatmul.mubr.bf16.gmra.mrb[0].mxu0 %v347
        %v424 = vpop.f32.mrb[0].mxu0
        %v425 = vadd.f32 %v307, %v424
        %v426 = vpop.f32.mrb[0].mxu0
        %v427 = vpop.f32.mrb[0].mxu0
        %v428 = vadd.f32 %v307, %v427
        %v429 = vpop.f32.mrb[0].mxu0
        %430 = vmatprep.mubr.bf16.mxu0 0
        %431 = vmatmul.mubr.bf16.gmra.mrb[0].mxu0 %v350
        %v432 = vpop.f32.mrb[0].mxu0
        %v433 = vadd.f32 %v307, %v432
        %v434 = vpop.f32.mrb[0].mxu0
        %v435 = vpop.f32.mrb[0].mxu0
        %v436 = vadd.f32 %v307, %v435
        %v437 = vpop.f32.mrb[0].mxu0
        %438 = vmatprep.mubr.bf16.mxu0 0
        %439 = vmatmul.mubr.bf16.gmra.mrb[0].mxu0 %v353
        %v440 = vpop.f32.mrb[0].mxu0
        %v441 = vadd.f32 %v307, %v440
        %v442 = vpop.f32.mrb[0].mxu0
        %v443 = vpop.f32.mrb[0].mxu0
        %v444 = vadd.f32 %v307, %v443
        %v445 = vpop.f32.mrb[0].mxu0
        %446 = vmatprep.mubr.bf16.mxu0 0
        %447 = vmatmul.mubr.bf16.gmra.mrb[0].mxu0 %v356
        %v448 = vpop.f32.mrb[0].mxu0
        %v449 = vadd.f32 %v307, %v448
        %v450 = vpop.f32.mrb[0].mxu0
        %v451 = vpop.f32.mrb[0].mxu0
        %v452 = vadd.f32 %v307, %v451
        %v453 = vpop.f32.mrb[0].mxu0
        %454 = vdwg.mxu0
        %v455 = vmax.f32 %v393, 0.0
        %v456 = vmax.f32 %v396, 0.0
        %v457 = vmax.f32 %v401, 0.0
        %v458 = vmax.f32 %v404, 0.0
        %v459 = vmax.f32 %v409, 0.0
        %v460 = vmax.f32 %v412, 0.0
        %v461 = vmax.f32 %v417, 0.0
        %v462 = vmax.f32 %v420, 0.0
        %v463 = vmax.f32 %v425, 0.0
        %v464 = vmax.f32 %v428, 0.0
        %v465 = vmax.f32 %v433, 0.0
        %v466 = vmax.f32 %v436, 0.0
        %v467 = vmax.f32 %v441, 0.0
        %v468 = vmax.f32 %v444, 0.0
        %v469 = vmax.f32 %v449, 0.0
        %v470 = vmax.f32 %v452, 0.0
        %v471 = vpack.c.bf16 %v456, %v455
        %v472 = vpack.c.bf16 %v458, %v457
        %v473 = vpack.c.bf16 %v460, %v459
        %v474 = vpack.c.bf16 %v462, %v461
        %v475 = vpack.c.bf16 %v464, %v463
        %v476 = vpack.c.bf16 %v466, %v465
        %v477 = vpack.c.bf16 %v468, %v467
        %v478 = vpack.c.bf16 %v470, %v469
        %v487 = vunpack.c.l.b16 %v471
        %v488 = vunpack.c.h.b16 %v471
        %v489 = vunpack.c.l.b16 %v472
        %v490 = vunpack.c.h.b16 %v472
        %v491 = vunpack.c.l.b16 %v473
        %v492 = vunpack.c.h.b16 %v473
        %v493 = vunpack.c.l.b16 %v474
        %v494 = vunpack.c.h.b16 %v474
        %v495 = vunpack.c.l.b16 %v475
        %v496 = vunpack.c.h.b16 %v475
        %v497 = vunpack.c.l.b16 %v476
        %v498 = vunpack.c.h.b16 %v476
        %v499 = vunpack.c.l.b16 %v477
        %v500 = vunpack.c.h.b16 %v477
        %v501 = vunpack.c.l.b16 %v478
        %v502 = vunpack.c.h.b16 %v478
        %v503 = vpack.c.b16 %v487, %v487
        %v504 = vpack.c.b16 %v488, %v488
        %v505 = vpack.c.b16 %v489, %v489
        %v506 = vpack.c.b16 %v490, %v490
        %v507 = vpack.c.b16 %v491, %v491
        %v508 = vpack.c.b16 %v492, %v492
        %v509 = vpack.c.b16 %v493, %v493
        %v510 = vpack.c.b16 %v494, %v494
        %v511 = vpack.c.b16 %v495, %v495
        %v512 = vpack.c.b16 %v496, %v496
        %v513 = vpack.c.b16 %v497, %v497
        %v514 = vpack.c.b16 %v498, %v498
        %v515 = vpack.c.b16 %v499, %v499
        %v516 = vpack.c.b16 %v500, %v500
        %v517 = vpack.c.b16 %v501, %v501
        %v518 = vpack.c.b16 %v502, %v502
        %vm535 = vcmask 257024
        %536 = vst.msk [vmem:[%s260] sm:$0xf] %vm535, %v503
        %537 = vst.msk [vmem:[%s260 + $0x4] sm:$0xf] %vm535, %v504
        %538 = vst.msk [vmem:[%s260 + $0x8] sm:$0xf] %vm535, %v505
        %539 = vst.msk [vmem:[%s260 + $0xc] sm:$0xf] %vm535, %v506
        %540 = vst.msk [vmem:[%s260 + $0x10] sm:$0xf] %vm535, %v507
        %541 = vst.msk [vmem:[%s260 + $0x14] sm:$0xf] %vm535, %v508
        %542 = vst.msk [vmem:[%s260 + $0x18] sm:$0xf] %vm535, %v509
        %543 = vst.msk [vmem:[%s260 + $0x1c] sm:$0xf] %vm535, %v510
        %544 = vst.msk [vmem:[%s260 + $0x20] sm:$0xf] %vm535, %v511
        %545 = vst.msk [vmem:[%s260 + $0x24] sm:$0xf] %vm535, %v512
        %546 = vst.msk [vmem:[%s260 + $0x28] sm:$0xf] %vm535, %v513
        %547 = vst.msk [vmem:[%s260 + $0x2c] sm:$0xf] %vm535, %v514
        %548 = vst.msk [vmem:[%s260 + $0x30] sm:$0xf] %vm535, %v515
        %549 = vst.msk [vmem:[%s260 + $0x34] sm:$0xf] %vm535, %v516
        %550 = vst.msk [vmem:[%s260 + $0x38] sm:$0xf] %vm535, %v517
        %551 = vst.msk [vmem:[%s260 + $0x3c] sm:$0xf] %vm535, %v518
      $region36: #{deconvnet28_forward.4} parent=31 // pred_fallthru
        _
      %p552 = scmp.eq.s32.totalorder %s23, 1
      %p553 = pnand %p263, %p552
      %p554 = pneg %p553
      // Predicated region
      $region37: #{deconvnet28_forward.4} parent=31 // pred_check
        _
      $region38: #{deconvnet28_forward.4} parent=31 // pred_check_branch
        %556 = sbr.rel (%p553) target = $region40
      $region39: #{deconvnet28_forward.4} parent=31 // pred_region
        %v557 = vld [vmem:[%s236 + $0x1] sm:$0xff]
        %v558 = vld [vmem:[%s236 + $0x11] sm:$0xff]
        %v559 = vld [vmem:[%s236 + $0x21] sm:$0xff]
        %v560 = vld [vmem:[%s236 + $0x31] sm:$0xff]
        %v561 = vld [vmem:[%s236 + $0x41] sm:$0xff]
        %v562 = vld [vmem:[%s236 + $0x51] sm:$0xff]
        %v563 = vld [vmem:[%s236 + $0x61] sm:$0xff]
        %v564 = vld [vmem:[%s236 + $0x71] sm:$0xff]
        %v565 = vld [vmem:[%s236 + $0x91] sm:$0xff]
        %v566 = vld [vmem:[%s236 + $0xa1] sm:$0xff]
        %v567 = vld [vmem:[%s236 + $0xb1] sm:$0xff]
        %v568 = vld [vmem:[%s236 + $0xc1] sm:$0xff]
        %v569 = vld [vmem:[%s236 + $0xd1] sm:$0xff]
        %v570 = vld [vmem:[%s236 + $0xe1] sm:$0xff]
        %v571 = vld [vmem:[%s236 + $0xf1] sm:$0xff]
        %v572 = vld [vmem:[%s236 + $0x101] sm:$0xff]
        %v573 = vpack.c.bf16 %v558, %v557
        %v574 = vpack.c.bf16 %v560, %v559
        %v575 = vpack.c.bf16 %v562, %v561
        %v576 = vpack.c.bf16 %v564, %v563
        %v577 = vpack.c.bf16 %v566, %v565
        %v578 = vpack.c.bf16 %v568, %v567
        %v579 = vpack.c.bf16 %v570, %v569
        %v580 = vpack.c.bf16 %v572, %v571
        %s581 = scalar_lea.vmem %s241, 96
        %v582 = vld [vmem:[%s581] sm:$0xf]
        %v583 = vld [vmem:[%s581 + $0x4] sm:$0xf]
        %v584 = vld [vmem:[%s581 + $0x8] sm:$0xf]
        %v585 = vld [vmem:[%s581 + $0xc] sm:$0xf]
        %v586 = vld [vmem:[%s581 + $0x10] sm:$0xf]
        %v587 = vld [vmem:[%s581 + $0x14] sm:$0xf]
        %v588 = vld [vmem:[%s581 + $0x18] sm:$0xf]
        %v589 = vld [vmem:[%s581 + $0x1c] sm:$0xf]
        %v590 = vld [vmem:[%s236] sm:$0xff]
        %v591 = vld [vmem:[%s236 + $0x10] sm:$0xff]
        %v592 = vld [vmem:[%s236 + $0x20] sm:$0xff]
        %v593 = vld [vmem:[%s236 + $0x30] sm:$0xff]
        %v594 = vld [vmem:[%s236 + $0x40] sm:$0xff]
        %v595 = vld [vmem:[%s236 + $0x50] sm:$0xff]
        %v596 = vld [vmem:[%s236 + $0x60] sm:$0xff]
        %v597 = vld [vmem:[%s236 + $0x70] sm:$0xff]
        %v598 = vld [vmem:[%s236 + $0x90] sm:$0xff]
        %v599 = vld [vmem:[%s236 + $0xa0] sm:$0xff]
        %v600 = vld [vmem:[%s236 + $0xb0] sm:$0xff]
        %v601 = vld [vmem:[%s236 + $0xc0] sm:$0xff]
        %v602 = vld [vmem:[%s236 + $0xd0] sm:$0xff]
        %v603 = vld [vmem:[%s236 + $0xe0] sm:$0xff]
        %v604 = vld [vmem:[%s236 + $0xf0] sm:$0xff]
        %v605 = vld [vmem:[%s236 + $0x100] sm:$0xff]
        %v606 = vpack.c.bf16 %v591, %v590
        %v607 = vpack.c.bf16 %v593, %v592
        %v608 = vpack.c.bf16 %v595, %v594
        %v609 = vpack.c.bf16 %v597, %v596
        %v610 = vpack.c.bf16 %v599, %v598
        %v611 = vpack.c.bf16 %v601, %v600
        %v612 = vpack.c.bf16 %v603, %v602
        %v613 = vpack.c.bf16 %v605, %v604
        %s614 = scalar_lea.vmem %s241, 160
        %v615 = vld [vmem:[%s614] sm:$0xf]
        %v616 = vld [vmem:[%s614 + $0x4] sm:$0xf]
        %v617 = vld [vmem:[%s614 + $0x8] sm:$0xf]
        %v618 = vld [vmem:[%s614 + $0xc] sm:$0xf]
        %v619 = vld [vmem:[%s614 + $0x10] sm:$0xf]
        %v620 = vld [vmem:[%s614 + $0x14] sm:$0xf]
        %v621 = vld [vmem:[%s614 + $0x18] sm:$0xf]
        %v622 = vld [vmem:[%s614 + $0x1c] sm:$0xf]
        %v631 = vunpack.c.l.b16 %v615
        %v632 = vunpack.c.l.b16 %v616
        %v633 = vunpack.c.l.b16 %v617
        %v634 = vunpack.c.l.b16 %v618
        %v635 = vunpack.c.l.b16 %v619
        %v636 = vunpack.c.l.b16 %v620
        %v637 = vunpack.c.l.b16 %v621
        %v638 = vunpack.c.l.b16 %v622
        %v639 = vpack.c.b16 %v632, %v631
        %v640 = vpack.c.b16 %v634, %v633
        %v641 = vpack.c.b16 %v636, %v635
        %v642 = vpack.c.b16 %v638, %v637
        %vm647 = vcmask 523264
        %v649 = vsel %vm647, %v606, 0
        %v652 = vsel %vm647, %v607, 0
        %v655 = vsel %vm647, %v608, 0
        %v658 = vsel %vm647, %v609, 0
        %v661 = vsel %vm647, %v610, 0
        %v664 = vsel %vm647, %v611, 0
        %v667 = vsel %vm647, %v612, 0
        %v670 = vsel %vm647, %v613, 0
        %672 = vmatprep.subr.bf16.mxu0 0
        %673 = vmatpush1.bf16.msra.mxu0 %v639
        %674 = vmatprep.subr.bf16.mxu0 0
        %675 = vmatpush1.bf16.msra.mxu0 %v640
        %676 = vmatprep.subr.bf16.mxu0 0
        %677 = vmatpush1.bf16.msra.mxu0 %v641
        %678 = vmatprep.subr.bf16.mxu0 0
        %679 = vmatpush1.bf16.msra.mxu0 %v642
        %680 = vmatprep.subr.bf16.mxu0 0
        %681 = vmatpush1.bf16.msra.mxu0 0
        %682 = vmatprep.subr.bf16.mxu0 0
        %683 = vmatpush1.bf16.msra.mxu0 0
        %684 = vmatprep.subr.bf16.mxu0 0
        %685 = vmatpush1.bf16.msra.mxu0 0
        %686 = vmatprep.subr.bf16.mxu0 0
        %687 = vmatpush1.bf16.msra.mxu0 0
        %688 = vmatprep.subr.bf16.mxu0 0
        %689 = vmatpush1.bf16.msra.mxu0 0
        %690 = vmatprep.subr.bf16.mxu0 0
        %691 = vmatpush1.bf16.msra.mxu0 0
        %692 = vmatprep.subr.bf16.mxu0 0
        %693 = vmatpush1.bf16.msra.mxu0 0
        %694 = vmatprep.subr.bf16.mxu0 0
        %695 = vmatpush1.bf16.msra.mxu0 0
        %696 = vmatprep.subr.bf16.mxu0 0
        %697 = vmatpush1.bf16.msra.mxu0 0
        %698 = vmatprep.subr.bf16.mxu0 0
        %699 = vmatpush1.bf16.msra.mxu0 0
        %700 = vmatprep.subr.bf16.mxu0 0
        %701 = vmatpush1.bf16.msra.mxu0 0
        %702 = vmatprep.subr.bf16.mxu0 0
        %703 = vmatpush1.bf16.msra.mxu0 0
        %704 = vmatprep.mubr.bf16.mxu0 0
        %705 = vmatmul.mubr.bf16.gmra.mrb[0].mxu0 %v649
        %v706 = vpop.f32.mrb[0].mxu0
        %v707 = vadd.f32 0.0, %v706
        %v708 = vpop.f32.mrb[0].mxu0
        %v709 = vpop.f32.mrb[0].mxu0
        %v710 = vadd.f32 0.0, %v709
        %v711 = vpop.f32.mrb[0].mxu0
        %712 = vmatprep.mubr.bf16.mxu0 0
        %713 = vmatmul.mubr.bf16.gmra.mrb[0].mxu0 %v652
        %v714 = vpop.f32.mrb[0].mxu0
        %v715 = vadd.f32 0.0, %v714
        %v716 = vpop.f32.mrb[0].mxu0
        %v717 = vpop.f32.mrb[0].mxu0
        %v718 = vadd.f32 0.0, %v717
        %v719 = vpop.f32.mrb[0].mxu0
        %720 = vmatprep.mubr.bf16.mxu0 0
        %721 = vmatmul.mubr.bf16.gmra.mrb[0].mxu0 %v655
        %v722 = vpop.f32.mrb[0].mxu0
        %v723 = vadd.f32 0.0, %v722
        %v724 = vpop.f32.mrb[0].mxu0
        %v725 = vpop.f32.mrb[0].mxu0
        %v726 = vadd.f32 0.0, %v725
        %v727 = vpop.f32.mrb[0].mxu0
        %728 = vmatprep.mubr.bf16.mxu0 0
        %729 = vmatmul.mubr.bf16.gmra.mrb[0].mxu0 %v658
        %v730 = vpop.f32.mrb[0].mxu0
        %v731 = vadd.f32 0.0, %v730
        %v732 = vpop.f32.mrb[0].mxu0
        %v733 = vpop.f32.mrb[0].mxu0
        %v734 = vadd.f32 0.0, %v733
        %v735 = vpop.f32.mrb[0].mxu0
        %736 = vmatprep.mubr.bf16.mxu0 0
        %737 = vmatmul.mubr.bf16.gmra.mrb[0].mxu0 %v661
        %v738 = vpop.f32.mrb[0].mxu0
        %v739 = vadd.f32 0.0, %v738
        %v740 = vpop.f32.mrb[0].mxu0
        %v741 = vpop.f32.mrb[0].mxu0
        %v742 = vadd.f32 0.0, %v741
        %v743 = vpop.f32.mrb[0].mxu0
        %744 = vmatprep.mubr.bf16.mxu0 0
        %745 = vmatmul.mubr.bf16.gmra.mrb[0].mxu0 %v664
        %v746 = vpop.f32.mrb[0].mxu0
        %v747 = vadd.f32 0.0, %v746
        %v748 = vpop.f32.mrb[0].mxu0
        %v749 = vpop.f32.mrb[0].mxu0
        %v750 = vadd.f32 0.0, %v749
        %v751 = vpop.f32.mrb[0].mxu0
        %752 = vmatprep.mubr.bf16.mxu0 0
        %753 = vmatmul.mubr.bf16.gmra.mrb[0].mxu0 %v667
        %v754 = vpop.f32.mrb[0].mxu0
        %v755 = vadd.f32 0.0, %v754
        %v756 = vpop.f32.mrb[0].mxu0
        %v757 = vpop.f32.mrb[0].mxu0
        %v758 = vadd.f32 0.0, %v757
        %v759 = vpop.f32.mrb[0].mxu0
        %760 = vmatprep.mubr.bf16.mxu0 0
        %761 = vmatmul.mubr.bf16.gmra.mrb[0].mxu0 %v670
        %v762 = vpop.f32.mrb[0].mxu0
        %v763 = vadd.f32 0.0, %v762
        %v764 = vpop.f32.mrb[0].mxu0
        %v765 = vpop.f32.mrb[0].mxu0
        %v766 = vadd.f32 0.0, %v765
        %v767 = vpop.f32.mrb[0].mxu0
        %768 = vdwg.mxu0
        %v777 = vunpack.c.l.b16 %v582
        %v778 = vunpack.c.l.b16 %v583
        %v779 = vunpack.c.l.b16 %v584
        %v780 = vunpack.c.l.b16 %v585
        %v781 = vunpack.c.l.b16 %v586
        %v782 = vunpack.c.l.b16 %v587
        %v783 = vunpack.c.l.b16 %v588
        %v784 = vunpack.c.l.b16 %v589
        %v785 = vpack.c.b16 %v778, %v777
        %v786 = vpack.c.b16 %v780, %v779
        %v787 = vpack.c.b16 %v782, %v781
        %v788 = vpack.c.b16 %v784, %v783
        %v794 = vsel %vm647, %v573, 0
        %v797 = vsel %vm647, %v574, 0
        %v800 = vsel %vm647, %v575, 0
        %v803 = vsel %vm647, %v576, 0
        %v806 = vsel %vm647, %v577, 0
        %v809 = vsel %vm647, %v578, 0
        %v812 = vsel %vm647, %v579, 0
        %v815 = vsel %vm647, %v580, 0
        %817 = vmatprep.subr.bf16.mxu0 0
        %818 = vmatpush1.bf16.msra.mxu0 %v785
        %819 = vmatprep.subr.bf16.mxu0 0
        %820 = vmatpush1.bf16.msra.mxu0 %v786
        %821 = vmatprep.subr.bf16.mxu0 0
        %822 = vmatpush1.bf16.msra.mxu0 %v787
        %823 = vmatprep.subr.bf16.mxu0 0
        %824 = vmatpush1.bf16.msra.mxu0 %v788
        %825 = vmatprep.subr.bf16.mxu0 0
        %826 = vmatpush1.bf16.msra.mxu0 0
        %827 = vmatprep.subr.bf16.mxu0 0
        %828 = vmatpush1.bf16.msra.mxu0 0
        %829 = vmatprep.subr.bf16.mxu0 0
        %830 = vmatpush1.bf16.msra.mxu0 0
        %831 = vmatprep.subr.bf16.mxu0 0
        %832 = vmatpush1.bf16.msra.mxu0 0
        %833 = vmatprep.subr.bf16.mxu0 0
        %834 = vmatpush1.bf16.msra.mxu0 0
        %835 = vmatprep.subr.bf16.mxu0 0
        %836 = vmatpush1.bf16.msra.mxu0 0
        %837 = vmatprep.subr.bf16.mxu0 0
        %838 = vmatpush1.bf16.msra.mxu0 0
        %839 = vmatprep.subr.bf16.mxu0 0
        %840 = vmatpush1.bf16.msra.mxu0 0
        %841 = vmatprep.subr.bf16.mxu0 0
        %842 = vmatpush1.bf16.msra.mxu0 0
        %843 = vmatprep.subr.bf16.mxu0 0
        %844 = vmatpush1.bf16.msra.mxu0 0
        %845 = vmatprep.subr.bf16.mxu0 0
        %846 = vmatpush1.bf16.msra.mxu0 0
        %847 = vmatprep.subr.bf16.mxu0 0
        %848 = vmatpush1.bf16.msra.mxu0 0
        %849 = vmatprep.mubr.bf16.mxu0 0
        %850 = vmatmul.mubr.bf16.gmra.mrb[0].mxu0 %v794
        %v851 = vpop.f32.mrb[0].mxu0
        %v852 = vadd.f32 %v707, %v851
        %v853 = vpop.f32.mrb[0].mxu0
        %v854 = vpop.f32.mrb[0].mxu0
        %v855 = vadd.f32 %v710, %v854
        %v856 = vpop.f32.mrb[0].mxu0
        %857 = vmatprep.mubr.bf16.mxu0 0
        %858 = vmatmul.mubr.bf16.gmra.mrb[0].mxu0 %v797
        %v859 = vpop.f32.mrb[0].mxu0
        %v860 = vadd.f32 %v715, %v859
        %v861 = vpop.f32.mrb[0].mxu0
        %v862 = vpop.f32.mrb[0].mxu0
        %v863 = vadd.f32 %v718, %v862
        %v864 = vpop.f32.mrb[0].mxu0
        %865 = vmatprep.mubr.bf16.mxu0 0
        %866 = vmatmul.mubr.bf16.gmra.mrb[0].mxu0 %v800
        %v867 = vpop.f32.mrb[0].mxu0
        %v868 = vadd.f32 %v723, %v867
        %v869 = vpop.f32.mrb[0].mxu0
        %v870 = vpop.f32.mrb[0].mxu0
        %v871 = vadd.f32 %v726, %v870
        %v872 = vpop.f32.mrb[0].mxu0
        %873 = vmatprep.mubr.bf16.mxu0 0
        %874 = vmatmul.mubr.bf16.gmra.mrb[0].mxu0 %v803
        %v875 = vpop.f32.mrb[0].mxu0
        %v876 = vadd.f32 %v731, %v875
        %v877 = vpop.f32.mrb[0].mxu0
        %v878 = vpop.f32.mrb[0].mxu0
        %v879 = vadd.f32 %v734, %v878
        %v880 = vpop.f32.mrb[0].mxu0
        %881 = vmatprep.mubr.bf16.mxu0 0
        %882 = vmatmul.mubr.bf16.gmra.mrb[0].mxu0 %v806
        %v883 = vpop.f32.mrb[0].mxu0
        %v884 = vadd.f32 %v739, %v883
        %v885 = vpop.f32.mrb[0].mxu0
        %v886 = vpop.f32.mrb[0].mxu0
        %v887 = vadd.f32 %v742, %v886
        %v888 = vpop.f32.mrb[0].mxu0
        %889 = vmatprep.mubr.bf16.mxu0 0
        %890 = vmatmul.mubr.bf16.gmra.mrb[0].mxu0 %v809
        %v891 = vpop.f32.mrb[0].mxu0
        %v892 = vadd.f32 %v747, %v891
        %v893 = vpop.f32.mrb[0].mxu0
        %v894 = vpop.f32.mrb[0].mxu0
        %v895 = vadd.f32 %v750, %v894
        %v896 = vpop.f32.mrb[0].mxu0
        %897 = vmatprep.mubr.bf16.mxu0 0
        %898 = vmatmul.mubr.bf16.gmra.mrb[0].mxu0 %v812
        %v899 = vpop.f32.mrb[0].mxu0
        %v900 = vadd.f32 %v755, %v899
        %v901 = vpop.f32.mrb[0].mxu0
        %v902 = vpop.f32.mrb[0].mxu0
        %v903 = vadd.f32 %v758, %v902
        %v904 = vpop.f32.mrb[0].mxu0
        %905 = vmatprep.mubr.bf16.mxu0 0
        %906 = vmatmul.mubr.bf16.gmra.mrb[0].mxu0 %v815
        %v907 = vpop.f32.mrb[0].mxu0
        %v908 = vadd.f32 %v763, %v907
        %v909 = vpop.f32.mrb[0].mxu0
        %v910 = vpop.f32.mrb[0].mxu0
        %v911 = vadd.f32 %v766, %v910
        %v912 = vpop.f32.mrb[0].mxu0
        %913 = vdwg.mxu0
        %v914 = vld [vmem:[%s244] sm:$0x1]
        %v916 = vlaneseq
        %v917 = vshrl.u32 %v916, 7
        %v918 = vsub.s32 0, %v917
        %v919 = vrot.slane %v914, %v918
        %v921 = vadd.f32 %v852, %v919
        %v922 = vadd.f32 %v855, %v919
        %v923 = vadd.f32 %v860, %v919
        %v924 = vadd.f32 %v863, %v919
        %v925 = vadd.f32 %v868, %v919
        %v926 = vadd.f32 %v871, %v919
        %v927 = vadd.f32 %v876, %v919
        %v928 = vadd.f32 %v879, %v919
        %v929 = vadd.f32 %v884, %v919
        %v930 = vadd.f32 %v887, %v919
        %v931 = vadd.f32 %v892, %v919
        %v932 = vadd.f32 %v895, %v919
        %v933 = vadd.f32 %v900, %v919
        %v934 = vadd.f32 %v903, %v919
        %v935 = vadd.f32 %v908, %v919
        %v936 = vadd.f32 %v911, %v919
        %v937 = vmax.f32 %v921, 0.0
        %v938 = vmax.f32 %v922, 0.0
        %v939 = vmax.f32 %v923, 0.0
        %v940 = vmax.f32 %v924, 0.0
        %v941 = vmax.f32 %v925, 0.0
        %v942 = vmax.f32 %v926, 0.0
        %v943 = vmax.f32 %v927, 0.0
        %v944 = vmax.f32 %v928, 0.0
        %v945 = vmax.f32 %v929, 0.0
        %v946 = vmax.f32 %v930, 0.0
        %v947 = vmax.f32 %v931, 0.0
        %v948 = vmax.f32 %v932, 0.0
        %v949 = vmax.f32 %v933, 0.0
        %v950 = vmax.f32 %v934, 0.0
        %v951 = vmax.f32 %v935, 0.0
        %v952 = vmax.f32 %v936, 0.0
        %v953 = vpack.c.bf16 %v938, %v937
        %v954 = vpack.c.bf16 %v940, %v939
        %v955 = vpack.c.bf16 %v942, %v941
        %v956 = vpack.c.bf16 %v944, %v943
        %v957 = vpack.c.bf16 %v946, %v945
        %v958 = vpack.c.bf16 %v948, %v947
        %v959 = vpack.c.bf16 %v950, %v949
        %v960 = vpack.c.bf16 %v952, %v951
        %v969 = vunpack.c.l.b16 %v953
        %v970 = vunpack.c.h.b16 %v953
        %v971 = vunpack.c.l.b16 %v954
        %v972 = vunpack.c.h.b16 %v954
        %v973 = vunpack.c.l.b16 %v955
        %v974 = vunpack.c.h.b16 %v955
        %v975 = vunpack.c.l.b16 %v956
        %v976 = vunpack.c.h.b16 %v956
        %v977 = vunpack.c.l.b16 %v957
        %v978 = vunpack.c.h.b16 %v957
        %v979 = vunpack.c.l.b16 %v958
        %v980 = vunpack.c.h.b16 %v958
        %v981 = vunpack.c.l.b16 %v959
        %v982 = vunpack.c.h.b16 %v959
        %v983 = vunpack.c.l.b16 %v960
        %v984 = vunpack.c.h.b16 %v960
        %v985 = vpack.c.b16 %v969, %v969
        %v986 = vpack.c.b16 %v970, %v970
        %v987 = vpack.c.b16 %v971, %v971
        %v988 = vpack.c.b16 %v972, %v972
        %v989 = vpack.c.b16 %v973, %v973
        %v990 = vpack.c.b16 %v974, %v974
        %v991 = vpack.c.b16 %v975, %v975
        %v992 = vpack.c.b16 %v976, %v976
        %v993 = vpack.c.b16 %v977, %v977
        %v994 = vpack.c.b16 %v978, %v978
        %v995 = vpack.c.b16 %v979, %v979
        %v996 = vpack.c.b16 %v980, %v980
        %v997 = vpack.c.b16 %v981, %v981
        %v998 = vpack.c.b16 %v982, %v982
        %v999 = vpack.c.b16 %v983, %v983
        %v1000 = vpack.c.b16 %v984, %v984
        %vm1017 = vcmask 257024
        %1018 = vst.msk [vmem:[%s260] sm:$0xf] %vm1017, %v985
        %1019 = vst.msk [vmem:[%s260 + $0x4] sm:$0xf] %vm1017, %v986
        %1020 = vst.msk [vmem:[%s260 + $0x8] sm:$0xf] %vm1017, %v987
        %1021 = vst.msk [vmem:[%s260 + $0xc] sm:$0xf] %vm1017, %v988
        %1022 = vst.msk [vmem:[%s260 + $0x10] sm:$0xf] %vm1017, %v989
        %1023 = vst.msk [vmem:[%s260 + $0x14] sm:$0xf] %vm1017, %v990
        %1024 = vst.msk [vmem:[%s260 + $0x18] sm:$0xf] %vm1017, %v991
        %1025 = vst.msk [vmem:[%s260 + $0x1c] sm:$0xf] %vm1017, %v992
        %1026 = vst.msk [vmem:[%s260 + $0x20] sm:$0xf] %vm1017, %v993
        %1027 = vst.msk [vmem:[%s260 + $0x24] sm:$0xf] %vm1017, %v994
        %1028 = vst.msk [vmem:[%s260 + $0x28] sm:$0xf] %vm1017, %v995
        %1029 = vst.msk [vmem:[%s260 + $0x2c] sm:$0xf] %vm1017, %v996
        %1030 = vst.msk [vmem:[%s260 + $0x30] sm:$0xf] %vm1017, %v997
        %1031 = vst.msk [vmem:[%s260 + $0x34] sm:$0xf] %vm1017, %v998
        %1032 = vst.msk [vmem:[%s260 + $0x38] sm:$0xf] %vm1017, %v999
        %1033 = vst.msk [vmem:[%s260 + $0x3c] sm:$0xf] %vm1017, %v1000
      $region40: #{deconvnet28_forward.4} parent=31 // pred_fallthru
        _
      %p1034 = scmp.eq.s32.totalorder %s22, 1
      %p1035 = pnand %p1034, %p264
      %p1036 = pneg %p1035
      // Predicated region
      $region41: #{deconvnet28_forward.4} parent=31 // pred_check
        _
      $region42: #{deconvnet28_forward.4} parent=31 // pred_check_branch
        %1038 = sbr.rel (%p1035) target = $region44
      $region43: #{deconvnet28_forward.4} parent=31 // pred_region
        %s1039 = scalar_lea.vmem %s236, 16
        %v1040 = vld [vmem:[%s1039] sm:$0xff]
        %v1041 = vld [vmem:[%s1039 + $0x10] sm:$0xff]
        %v1042 = vld [vmem:[%s1039 + $0x20] sm:$0xff]
        %v1043 = vld [vmem:[%s1039 + $0x30] sm:$0xff]
        %v1044 = vld [vmem:[%s1039 + $0x40] sm:$0xff]
        %v1045 = vld [vmem:[%s1039 + $0x50] sm:$0xff]
        %v1046 = vld [vmem:[%s1039 + $0x60] sm:$0xff]
        %v1047 = vld [vmem:[%s1039 + $0x70] sm:$0xff]
        %v1048 = vld [vmem:[%s1039 + $0x90] sm:$0xff]
        %v1049 = vld [vmem:[%s1039 + $0xa0] sm:$0xff]
        %v1050 = vld [vmem:[%s1039 + $0xb0] sm:$0xff]
        %v1051 = vld [vmem:[%s1039 + $0xc0] sm:$0xff]
        %v1052 = vld [vmem:[%s1039 + $0xd0] sm:$0xff]
        %v1053 = vld [vmem:[%s1039 + $0xe0] sm:$0xff]
        %v1054 = vld [vmem:[%s1039 + $0xf0] sm:$0xff]
        %v1055 = vld [vmem:[%s1039 + $0x100] sm:$0xff]
        %v1056 = vpack.c.bf16 %v1041, %v1040
        %v1057 = vpack.c.bf16 %v1043, %v1042
        %v1058 = vpack.c.bf16 %v1045, %v1044
        %v1059 = vpack.c.bf16 %v1047, %v1046
        %v1060 = vpack.c.bf16 %v1049, %v1048
        %v1061 = vpack.c.bf16 %v1051, %v1050
        %v1062 = vpack.c.bf16 %v1053, %v1052
        %v1063 = vpack.c.bf16 %v1055, %v1054
        %s1064 = scalar_lea.vmem %s241, 32
        %v1065 = vld [vmem:[%s1064] sm:$0xf]
        %v1066 = vld [vmem:[%s1064 + $0x4] sm:$0xf]
        %v1067 = vld [vmem:[%s1064 + $0x8] sm:$0xf]
        %v1068 = vld [vmem:[%s1064 + $0xc] sm:$0xf]
        %v1069 = vld [vmem:[%s1064 + $0x10] sm:$0xf]
        %v1070 = vld [vmem:[%s1064 + $0x14] sm:$0xf]
        %v1071 = vld [vmem:[%s1064 + $0x18] sm:$0xf]
        %v1072 = vld [vmem:[%s1064 + $0x1c] sm:$0xf]
        %v1073 = vld [vmem:[%s236] sm:$0xff]
        %v1074 = vld [vmem:[%s236 + $0x10] sm:$0xff]
        %v1075 = vld [vmem:[%s236 + $0x20] sm:$0xff]
        %v1076 = vld [vmem:[%s236 + $0x30] sm:$0xff]
        %v1077 = vld [vmem:[%s236 + $0x40] sm:$0xff]
        %v1078 = vld [vmem:[%s236 + $0x50] sm:$0xff]
        %v1079 = vld [vmem:[%s236 + $0x60] sm:$0xff]
        %v1080 = vld [vmem:[%s236 + $0x70] sm:$0xff]
        %v1081 = vld [vmem:[%s236 + $0x90] sm:$0xff]
        %v1082 = vld [vmem:[%s236 + $0xa0] sm:$0xff]
        %v1083 = vld [vmem:[%s236 + $0xb0] sm:$0xff]
        %v1084 = vld [vmem:[%s236 + $0xc0] sm:$0xff]
        %v1085 = vld [vmem:[%s236 + $0xd0] sm:$0xff]
        %v1086 = vld [vmem:[%s236 + $0xe0] sm:$0xff]
        %v1087 = vld [vmem:[%s236 + $0xf0] sm:$0xff]
        %v1088 = vld [vmem:[%s236 + $0x100] sm:$0xff]
        %v1089 = vpack.c.bf16 %v1074, %v1073
        %v1090 = vpack.c.bf16 %v1076, %v1075
        %v1091 = vpack.c.bf16 %v1078, %v1077
        %v1092 = vpack.c.bf16 %v1080, %v1079
        %v1093 = vpack.c.bf16 %v1082, %v1081
        %v1094 = vpack.c.bf16 %v1084, %v1083
        %v1095 = vpack.c.bf16 %v1086, %v1085
        %v1096 = vpack.c.bf16 %v1088, %v1087
        %s1097 = scalar_lea.vmem %s241, 224
        %v1098 = vld [vmem:[%s1097] sm:$0xf]
        %v1099 = vld [vmem:[%s1097 + $0x4] sm:$0xf]
        %v1100 = vld [vmem:[%s1097 + $0x8] sm:$0xf]
        %v1101 = vld [vmem:[%s1097 + $0xc] sm:$0xf]
        %v1102 = vld [vmem:[%s1097 + $0x10] sm:$0xf]
        %v1103 = vld [vmem:[%s1097 + $0x14] sm:$0xf]
        %v1104 = vld [vmem:[%s1097 + $0x18] sm:$0xf]
        %v1105 = vld [vmem:[%s1097 + $0x1c] sm:$0xf]
        %v1114 = vunpack.c.l.b16 %v1098
        %v1115 = vunpack.c.l.b16 %v1099
        %v1116 = vunpack.c.l.b16 %v1100
        %v1117 = vunpack.c.l.b16 %v1101
        %v1118 = vunpack.c.l.b16 %v1102
        %v1119 = vunpack.c.l.b16 %v1103
        %v1120 = vunpack.c.l.b16 %v1104
        %v1121 = vunpack.c.l.b16 %v1105
        %v1122 = vpack.c.b16 %v1115, %v1114
        %v1123 = vpack.c.b16 %v1117, %v1116
        %v1124 = vpack.c.b16 %v1119, %v1118
        %v1125 = vpack.c.b16 %v1121, %v1120
        %vm1130 = vcmask 523264
        %v1132 = vsel %vm1130, %v1089, 0
        %v1135 = vsel %vm1130, %v1090, 0
        %v1138 = vsel %vm1130, %v1091, 0
        %v1141 = vsel %vm1130, %v1092, 0
        %v1144 = vsel %vm1130, %v1093, 0
        %v1147 = vsel %vm1130, %v1094, 0
        %v1150 = vsel %vm1130, %v1095, 0
        %v1153 = vsel %vm1130, %v1096, 0
        %1155 = vmatprep.subr.bf16.mxu0 0
        %1156 = vmatpush1.bf16.msra.mxu0 %v1122
        %1157 = vmatprep.subr.bf16.mxu0 0
        %1158 = vmatpush1.bf16.msra.mxu0 %v1123
        %1159 = vmatprep.subr.bf16.mxu0 0
        %1160 = vmatpush1.bf16.msra.mxu0 %v1124
        %1161 = vmatprep.subr.bf16.mxu0 0
        %1162 = vmatpush1.bf16.msra.mxu0 %v1125
        %1163 = vmatprep.subr.bf16.mxu0 0
        %1164 = vmatpush1.bf16.msra.mxu0 0
        %1165 = vmatprep.subr.bf16.mxu0 0
        %1166 = vmatpush1.bf16.msra.mxu0 0
        %1167 = vmatprep.subr.bf16.mxu0 0
        %1168 = vmatpush1.bf16.msra.mxu0 0
        %1169 = vmatprep.subr.bf16.mxu0 0
        %1170 = vmatpush1.bf16.msra.mxu0 0
        %1171 = vmatprep.subr.bf16.mxu0 0
        %1172 = vmatpush1.bf16.msra.mxu0 0
        %1173 = vmatprep.subr.bf16.mxu0 0
        %1174 = vmatpush1.bf16.msra.mxu0 0
        %1175 = vmatprep.subr.bf16.mxu0 0
        %1176 = vmatpush1.bf16.msra.mxu0 0
        %1177 = vmatprep.subr.bf16.mxu0 0
        %1178 = vmatpush1.bf16.msra.mxu0 0
        %1179 = vmatprep.subr.bf16.mxu0 0
        %1180 = vmatpush1.bf16.msra.mxu0 0
        %1181 = vmatprep.subr.bf16.mxu0 0
        %1182 = vmatpush1.bf16.msra.mxu0 0
        %1183 = vmatprep.subr.bf16.mxu0 0
        %1184 = vmatpush1.bf16.msra.mxu0 0
        %1185 = vmatprep.subr.bf16.mxu0 0
        %1186 = vmatpush1.bf16.msra.mxu0 0
        %1187 = vmatprep.mubr.bf16.mxu0 0
        %1188 = vmatmul.mubr.bf16.gmra.mrb[0].mxu0 %v1132
        %v1189 = vpop.f32.mrb[0].mxu0
        %v1190 = vadd.f32 0.0, %v1189
        %v1191 = vpop.f32.mrb[0].mxu0
        %v1192 = vpop.f32.mrb[0].mxu0
        %v1193 = vadd.f32 0.0, %v1192
        %v1194 = vpop.f32.mrb[0].mxu0
        %1195 = vmatprep.mubr.bf16.mxu0 0
        %1196 = vmatmul.mubr.bf16.gmra.mrb[0].mxu0 %v1135
        %v1197 = vpop.f32.mrb[0].mxu0
        %v1198 = vadd.f32 0.0, %v1197
        %v1199 = vpop.f32.mrb[0].mxu0
        %v1200 = vpop.f32.mrb[0].mxu0
        %v1201 = vadd.f32 0.0, %v1200
        %v1202 = vpop.f32.mrb[0].mxu0
        %1203 = vmatprep.mubr.bf16.mxu0 0
        %1204 = vmatmul.mubr.bf16.gmra.mrb[0].mxu0 %v1138
        %v1205 = vpop.f32.mrb[0].mxu0
        %v1206 = vadd.f32 0.0, %v1205
        %v1207 = vpop.f32.mrb[0].mxu0
        %v1208 = vpop.f32.mrb[0].mxu0
        %v1209 = vadd.f32 0.0, %v1208
        %v1210 = vpop.f32.mrb[0].mxu0
        %1211 = vmatprep.mubr.bf16.mxu0 0
        %1212 = vmatmul.mubr.bf16.gmra.mrb[0].mxu0 %v1141
        %v1213 = vpop.f32.mrb[0].mxu0
        %v1214 = vadd.f32 0.0, %v1213
        %v1215 = vpop.f32.mrb[0].mxu0
        %v1216 = vpop.f32.mrb[0].mxu0
        %v1217 = vadd.f32 0.0, %v1216
        %v1218 = vpop.f32.mrb[0].mxu0
        %1219 = vmatprep.mubr.bf16.mxu0 0
        %1220 = vmatmul.mubr.bf16.gmra.mrb[0].mxu0 %v1144
        %v1221 = vpop.f32.mrb[0].mxu0
        %v1222 = vadd.f32 0.0, %v1221
        %v1223 = vpop.f32.mrb[0].mxu0
        %v1224 = vpop.f32.mrb[0].mxu0
        %v1225 = vadd.f32 0.0, %v1224
        %v1226 = vpop.f32.mrb[0].mxu0
        %1227 = vmatprep.mubr.bf16.mxu0 0
        %1228 = vmatmul.mubr.bf16.gmra.mrb[0].mxu0 %v1147
        %v1229 = vpop.f32.mrb[0].mxu0
        %v1230 = vadd.f32 0.0, %v1229
        %v1231 = vpop.f32.mrb[0].mxu0
        %v1232 = vpop.f32.mrb[0].mxu0
        %v1233 = vadd.f32 0.0, %v1232
        %v1234 = vpop.f32.mrb[0].mxu0
        %1235 = vmatprep.mubr.bf16.mxu0 0
        %1236 = vmatmul.mubr.bf16.gmra.mrb[0].mxu0 %v1150
        %v1237 = vpop.f32.mrb[0].mxu0
        %v1238 = vadd.f32 0.0, %v1237
        %v1239 = vpop.f32.mrb[0].mxu0
        %v1240 = vpop.f32.mrb[0].mxu0
        %v1241 = vadd.f32 0.0, %v1240
        %v1242 = vpop.f32.mrb[0].mxu0
        %1243 = vmatprep.mubr.bf16.mxu0 0
        %1244 = vmatmul.mubr.bf16.gmra.mrb[0].mxu0 %v1153
        %v1245 = vpop.f32.mrb[0].mxu0
        %v1246 = vadd.f32 0.0, %v1245
        %v1247 = vpop.f32.mrb[0].mxu0
        %v1248 = vpop.f32.mrb[0].mxu0
        %v1249 = vadd.f32 0.0, %v1248
        %v1250 = vpop.f32.mrb[0].mxu0
        %1251 = vdwg.mxu0
        %v1260 = vunpack.c.l.b16 %v1065
        %v1261 = vunpack.c.l.b16 %v1066
        %v1262 = vunpack.c.l.b16 %v1067
        %v1263 = vunpack.c.l.b16 %v1068
        %v1264 = vunpack.c.l.b16 %v1069
        %v1265 = vunpack.c.l.b16 %v1070
        %v1266 = vunpack.c.l.b16 %v1071
        %v1267 = vunpack.c.l.b16 %v1072
        %v1268 = vpack.c.b16 %v1261, %v1260
        %v1269 = vpack.c.b16 %v1263, %v1262
        %v1270 = vpack.c.b16 %v1265, %v1264
        %v1271 = vpack.c.b16 %v1267, %v1266
        %v1277 = vsel %vm1130, %v1056, 0
        %v1280 = vsel %vm1130, %v1057, 0
        %v1283 = vsel %vm1130, %v1058, 0
        %v1286 = vsel %vm1130, %v1059, 0
        %v1289 = vsel %vm1130, %v1060, 0
        %v1292 = vsel %vm1130, %v1061, 0
        %v1295 = vsel %vm1130, %v1062, 0
        %v1298 = vsel %vm1130, %v1063, 0
        %1300 = vmatprep.subr.bf16.mxu0 0
        %1301 = vmatpush1.bf16.msra.mxu0 %v1268
        %1302 = vmatprep.subr.bf16.mxu0 0
        %1303 = vmatpush1.bf16.msra.mxu0 %v1269
        %1304 = vmatprep.subr.bf16.mxu0 0
        %1305 = vmatpush1.bf16.msra.mxu0 %v1270
        %1306 = vmatprep.subr.bf16.mxu0 0
        %1307 = vmatpush1.bf16.msra.mxu0 %v1271
        %1308 = vmatprep.subr.bf16.mxu0 0
        %1309 = vmatpush1.bf16.msra.mxu0 0
        %1310 = vmatprep.subr.bf16.mxu0 0
        %1311 = vmatpush1.bf16.msra.mxu0 0
        %1312 = vmatprep.subr.bf16.mxu0 0
        %1313 = vmatpush1.bf16.msra.mxu0 0
        %1314 = vmatprep.subr.bf16.mxu0 0
        %1315 = vmatpush1.bf16.msra.mxu0 0
        %1316 = vmatprep.subr.bf16.mxu0 0
        %1317 = vmatpush1.bf16.msra.mxu0 0
        %1318 = vmatprep.subr.bf16.mxu0 0
        %1319 = vmatpush1.bf16.msra.mxu0 0
        %1320 = vmatprep.subr.bf16.mxu0 0
        %1321 = vmatpush1.bf16.msra.mxu0 0
        %1322 = vmatprep.subr.bf16.mxu0 0
        %1323 = vmatpush1.bf16.msra.mxu0 0
        %1324 = vmatprep.subr.bf16.mxu0 0
        %1325 = vmatpush1.bf16.msra.mxu0 0
        %1326 = vmatprep.subr.bf16.mxu0 0
        %1327 = vmatpush1.bf16.msra.mxu0 0
        %1328 = vmatprep.subr.bf16.mxu0 0
        %1329 = vmatpush1.bf16.msra.mxu0 0
        %1330 = vmatprep.subr.bf16.mxu0 0
        %1331 = vmatpush1.bf16.msra.mxu0 0
        %1332 = vmatprep.mubr.bf16.mxu0 0
        %1333 = vmatmul.mubr.bf16.gmra.mrb[0].mxu0 %v1277
        %v1334 = vpop.f32.mrb[0].mxu0
        %v1335 = vadd.f32 %v1190, %v1334
        %v1336 = vpop.f32.mrb[0].mxu0
        %v1337 = vpop.f32.mrb[0].mxu0
        %v1338 = vadd.f32 %v1193, %v1337
        %v1339 = vpop.f32.mrb[0].mxu0
        %1340 = vmatprep.mubr.bf16.mxu0 0
        %1341 = vmatmul.mubr.bf16.gmra.mrb[0].mxu0 %v1280
        %v1342 = vpop.f32.mrb[0].mxu0
        %v1343 = vadd.f32 %v1198, %v1342
        %v1344 = vpop.f32.mrb[0].mxu0
        %v1345 = vpop.f32.mrb[0].mxu0
        %v1346 = vadd.f32 %v1201, %v1345
        %v1347 = vpop.f32.mrb[0].mxu0
        %1348 = vmatprep.mubr.bf16.mxu0 0
        %1349 = vmatmul.mubr.bf16.gmra.mrb[0].mxu0 %v1283
        %v1350 = vpop.f32.mrb[0].mxu0
        %v1351 = vadd.f32 %v1206, %v1350
        %v1352 = vpop.f32.mrb[0].mxu0
        %v1353 = vpop.f32.mrb[0].mxu0
        %v1354 = vadd.f32 %v1209, %v1353
        %v1355 = vpop.f32.mrb[0].mxu0
        %1356 = vmatprep.mubr.bf16.mxu0 0
        %1357 = vmatmul.mubr.bf16.gmra.mrb[0].mxu0 %v1286
        %v1358 = vpop.f32.mrb[0].mxu0
        %v1359 = vadd.f32 %v1214, %v1358
        %v1360 = vpop.f32.mrb[0].mxu0
        %v1361 = vpop.f32.mrb[0].mxu0
        %v1362 = vadd.f32 %v1217, %v1361
        %v1363 = vpop.f32.mrb[0].mxu0
        %1364 = vmatprep.mubr.bf16.mxu0 0
        %1365 = vmatmul.mubr.bf16.gmra.mrb[0].mxu0 %v1289
        %v1366 = vpop.f32.mrb[0].mxu0
        %v1367 = vadd.f32 %v1222, %v1366
        %v1368 = vpop.f32.mrb[0].mxu0
        %v1369 = vpop.f32.mrb[0].mxu0
        %v1370 = vadd.f32 %v1225, %v1369
        %v1371 = vpop.f32.mrb[0].mxu0
        %1372 = vmatprep.mubr.bf16.mxu0 0
        %1373 = vmatmul.mubr.bf16.gmra.mrb[0].mxu0 %v1292
        %v1374 = vpop.f32.mrb[0].mxu0
        %v1375 = vadd.f32 %v1230, %v1374
        %v1376 = vpop.f32.mrb[0].mxu0
        %v1377 = vpop.f32.mrb[0].mxu0
        %v1378 = vadd.f32 %v1233, %v1377
        %v1379 = vpop.f32.mrb[0].mxu0
        %1380 = vmatprep.mubr.bf16.mxu0 0
        %1381 = vmatmul.mubr.bf16.gmra.mrb[0].mxu0 %v1295
        %v1382 = vpop.f32.mrb[0].mxu0
        %v1383 = vadd.f32 %v1238, %v1382
        %v1384 = vpop.f32.mrb[0].mxu0
        %v1385 = vpop.f32.mrb[0].mxu0
        %v1386 = vadd.f32 %v1241, %v1385
        %v1387 = vpop.f32.mrb[0].mxu0
        %1388 = vmatprep.mubr.bf16.mxu0 0
        %1389 = vmatmul.mubr.bf16.gmra.mrb[0].mxu0 %v1298
        %v1390 = vpop.f32.mrb[0].mxu0
        %v1391 = vadd.f32 %v1246, %v1390
        %v1392 = vpop.f32.mrb[0].mxu0
        %v1393 = vpop.f32.mrb[0].mxu0
        %v1394 = vadd.f32 %v1249, %v1393
        %v1395 = vpop.f32.mrb[0].mxu0
        %1396 = vdwg.mxu0
        %v1397 = vld [vmem:[%s244] sm:$0x1]
        %v1399 = vlaneseq
        %v1400 = vshrl.u32 %v1399, 7
        %v1401 = vsub.s32 0, %v1400
        %v1402 = vrot.slane %v1397, %v1401
        %v1404 = vadd.f32 %v1335, %v1402
        %v1405 = vadd.f32 %v1338, %v1402
        %v1406 = vadd.f32 %v1343, %v1402
        %v1407 = vadd.f32 %v1346, %v1402
        %v1408 = vadd.f32 %v1351, %v1402
        %v1409 = vadd.f32 %v1354, %v1402
        %v1410 = vadd.f32 %v1359, %v1402
        %v1411 = vadd.f32 %v1362, %v1402
        %v1412 = vadd.f32 %v1367, %v1402
        %v1413 = vadd.f32 %v1370, %v1402
        %v1414 = vadd.f32 %v1375, %v1402
        %v1415 = vadd.f32 %v1378, %v1402
        %v1416 = vadd.f32 %v1383, %v1402
        %v1417 = vadd.f32 %v1386, %v1402
        %v1418 = vadd.f32 %v1391, %v1402
        %v1419 = vadd.f32 %v1394, %v1402
        %v1420 = vmax.f32 %v1404, 0.0
        %v1421 = vmax.f32 %v1405, 0.0
        %v1422 = vmax.f32 %v1406, 0.0
        %v1423 = vmax.f32 %v1407, 0.0
        %v1424 = vmax.f32 %v1408, 0.0
        %v1425 = vmax.f32 %v1409, 0.0
        %v1426 = vmax.f32 %v1410, 0.0
        %v1427 = vmax.f32 %v1411, 0.0
        %v1428 = vmax.f32 %v1412, 0.0
        %v1429 = vmax.f32 %v1413, 0.0
        %v1430 = vmax.f32 %v1414, 0.0
        %v1431 = vmax.f32 %v1415, 0.0
        %v1432 = vmax.f32 %v1416, 0.0
        %v1433 = vmax.f32 %v1417, 0.0
        %v1434 = vmax.f32 %v1418, 0.0
        %v1435 = vmax.f32 %v1419, 0.0
        %v1436 = vpack.c.bf16 %v1421, %v1420
        %v1437 = vpack.c.bf16 %v1423, %v1422
        %v1438 = vpack.c.bf16 %v1425, %v1424
        %v1439 = vpack.c.bf16 %v1427, %v1426
        %v1440 = vpack.c.bf16 %v1429, %v1428
        %v1441 = vpack.c.bf16 %v1431, %v1430
        %v1442 = vpack.c.bf16 %v1433, %v1432
        %v1443 = vpack.c.bf16 %v1435, %v1434
        %v1452 = vunpack.c.l.b16 %v1436
        %v1453 = vunpack.c.h.b16 %v1436
        %v1454 = vunpack.c.l.b16 %v1437
        %v1455 = vunpack.c.h.b16 %v1437
        %v1456 = vunpack.c.l.b16 %v1438
        %v1457 = vunpack.c.h.b16 %v1438
        %v1458 = vunpack.c.l.b16 %v1439
        %v1459 = vunpack.c.h.b16 %v1439
        %v1460 = vunpack.c.l.b16 %v1440
        %v1461 = vunpack.c.h.b16 %v1440
        %v1462 = vunpack.c.l.b16 %v1441
        %v1463 = vunpack.c.h.b16 %v1441
        %v1464 = vunpack.c.l.b16 %v1442
        %v1465 = vunpack.c.h.b16 %v1442
        %v1466 = vunpack.c.l.b16 %v1443
        %v1467 = vunpack.c.h.b16 %v1443
        %v1468 = vpack.c.b16 %v1452, %v1452
        %v1469 = vpack.c.b16 %v1453, %v1453
        %v1470 = vpack.c.b16 %v1454, %v1454
        %v1471 = vpack.c.b16 %v1455, %v1455
        %v1472 = vpack.c.b16 %v1456, %v1456
        %v1473 = vpack.c.b16 %v1457, %v1457
        %v1474 = vpack.c.b16 %v1458, %v1458
        %v1475 = vpack.c.b16 %v1459, %v1459
        %v1476 = vpack.c.b16 %v1460, %v1460
        %v1477 = vpack.c.b16 %v1461, %v1461
        %v1478 = vpack.c.b16 %v1462, %v1462
        %v1479 = vpack.c.b16 %v1463, %v1463
        %v1480 = vpack.c.b16 %v1464, %v1464
        %v1481 = vpack.c.b16 %v1465, %v1465
        %v1482 = vpack.c.b16 %v1466, %v1466
        %v1483 = vpack.c.b16 %v1467, %v1467
        %vm1500 = vcmask 257024
        %1501 = vst.msk [vmem:[%s260] sm:$0xf] %vm1500, %v1468
        %1502 = vst.msk [vmem:[%s260 + $0x4] sm:$0xf] %vm1500, %v1469
        %1503 = vst.msk [vmem:[%s260 + $0x8] sm:$0xf] %vm1500, %v1470
        %1504 = vst.msk [vmem:[%s260 + $0xc] sm:$0xf] %vm1500, %v1471
        %1505 = vst.msk [vmem:[%s260 + $0x10] sm:$0xf] %vm1500, %v1472
        %1506 = vst.msk [vmem:[%s260 + $0x14] sm:$0xf] %vm1500, %v1473
        %1507 = vst.msk [vmem:[%s260 + $0x18] sm:$0xf] %vm1500, %v1474
        %1508 = vst.msk [vmem:[%s260 + $0x1c] sm:$0xf] %vm1500, %v1475
        %1509 = vst.msk [vmem:[%s260 + $0x20] sm:$0xf] %vm1500, %v1476
        %1510 = vst.msk [vmem:[%s260 + $0x24] sm:$0xf] %vm1500, %v1477
        %1511 = vst.msk [vmem:[%s260 + $0x28] sm:$0xf] %vm1500, %v1478
        %1512 = vst.msk [vmem:[%s260 + $0x2c] sm:$0xf] %vm1500, %v1479
        %1513 = vst.msk [vmem:[%s260 + $0x30] sm:$0xf] %vm1500, %v1480
        %1514 = vst.msk [vmem:[%s260 + $0x34] sm:$0xf] %vm1500, %v1481
        %1515 = vst.msk [vmem:[%s260 + $0x38] sm:$0xf] %vm1500, %v1482
        %1516 = vst.msk [vmem:[%s260 + $0x3c] sm:$0xf] %vm1500, %v1483
      $region44: #{deconvnet28_forward.4} parent=31 // pred_fallthru
        _
      %p1517 = pnand %p1034, %p552
      %p1518 = pneg %p1517
      // Predicated region
      $region45: #{deconvnet28_forward.4} parent=31 // pred_check
        _
      $region46: #{deconvnet28_forward.4} parent=31 // pred_check_branch
        %1520 = sbr.rel (%p1517) target = $region48
      $region47: #{deconvnet28_forward.4} parent=31 // pred_region
        %s1521 = scalar_lea.vmem %s236, 16
        %v1522 = vld [vmem:[%s1521 + $0x1] sm:$0xff]
        %v1523 = vld [vmem:[%s1521 + $0x11] sm:$0xff]
        %v1524 = vld [vmem:[%s1521 + $0x21] sm:$0xff]
        %v1525 = vld [vmem:[%s1521 + $0x31] sm:$0xff]
        %v1526 = vld [vmem:[%s1521 + $0x41] sm:$0xff]
        %v1527 = vld [vmem:[%s1521 + $0x51] sm:$0xff]
        %v1528 = vld [vmem:[%s1521 + $0x61] sm:$0xff]
        %v1529 = vld [vmem:[%s1521 + $0x71] sm:$0xff]
        %v1530 = vld [vmem:[%s1521 + $0x91] sm:$0xff]
        %v1531 = vld [vmem:[%s1521 + $0xa1] sm:$0xff]
        %v1532 = vld [vmem:[%s1521 + $0xb1] sm:$0xff]
        %v1533 = vld [vmem:[%s1521 + $0xc1] sm:$0xff]
        %v1534 = vld [vmem:[%s1521 + $0xd1] sm:$0xff]
        %v1535 = vld [vmem:[%s1521 + $0xe1] sm:$0xff]
        %v1536 = vld [vmem:[%s1521 + $0xf1] sm:$0xff]
        %v1537 = vld [vmem:[%s1521 + $0x101] sm:$0xff]
        %v1538 = vpack.c.bf16 %v1523, %v1522
        %v1539 = vpack.c.bf16 %v1525, %v1524
        %v1540 = vpack.c.bf16 %v1527, %v1526
        %v1541 = vpack.c.bf16 %v1529, %v1528
        %v1542 = vpack.c.bf16 %v1531, %v1530
        %v1543 = vpack.c.bf16 %v1533, %v1532
        %v1544 = vpack.c.bf16 %v1535, %v1534
        %v1545 = vpack.c.bf16 %v1537, %v1536
        %v1546 = vld [vmem:[%s241] sm:$0xf]
        %v1547 = vld [vmem:[%s241 + $0x4] sm:$0xf]
        %v1548 = vld [vmem:[%s241 + $0x8] sm:$0xf]
        %v1549 = vld [vmem:[%s241 + $0xc] sm:$0xf]
        %v1550 = vld [vmem:[%s241 + $0x10] sm:$0xf]
        %v1551 = vld [vmem:[%s241 + $0x14] sm:$0xf]
        %v1552 = vld [vmem:[%s241 + $0x18] sm:$0xf]
        %v1553 = vld [vmem:[%s241 + $0x1c] sm:$0xf]
        %v1554 = vld [vmem:[%s1521] sm:$0xff]
        %v1555 = vld [vmem:[%s1521 + $0x10] sm:$0xff]
        %v1556 = vld [vmem:[%s1521 + $0x20] sm:$0xff]
        %v1557 = vld [vmem:[%s1521 + $0x30] sm:$0xff]
        %v1558 = vld [vmem:[%s1521 + $0x40] sm:$0xff]
        %v1559 = vld [vmem:[%s1521 + $0x50] sm:$0xff]
        %v1560 = vld [vmem:[%s1521 + $0x60] sm:$0xff]
        %v1561 = vld [vmem:[%s1521 + $0x70] sm:$0xff]
        %v1562 = vld [vmem:[%s1521 + $0x90] sm:$0xff]
        %v1563 = vld [vmem:[%s1521 + $0xa0] sm:$0xff]
        %v1564 = vld [vmem:[%s1521 + $0xb0] sm:$0xff]
        %v1565 = vld [vmem:[%s1521 + $0xc0] sm:$0xff]
        %v1566 = vld [vmem:[%s1521 + $0xd0] sm:$0xff]
        %v1567 = vld [vmem:[%s1521 + $0xe0] sm:$0xff]
        %v1568 = vld [vmem:[%s1521 + $0xf0] sm:$0xff]
        %v1569 = vld [vmem:[%s1521 + $0x100] sm:$0xff]
        %v1570 = vpack.c.bf16 %v1555, %v1554
        %v1571 = vpack.c.bf16 %v1557, %v1556
        %v1572 = vpack.c.bf16 %v1559, %v1558
        %v1573 = vpack.c.bf16 %v1561, %v1560
        %v1574 = vpack.c.bf16 %v1563, %v1562
        %v1575 = vpack.c.bf16 %v1565, %v1564
        %v1576 = vpack.c.bf16 %v1567, %v1566
        %v1577 = vpack.c.bf16 %v1569, %v1568
        %s1578 = scalar_lea.vmem %s241, 64
        %v1579 = vld [vmem:[%s1578] sm:$0xf]
        %v1580 = vld [vmem:[%s1578 + $0x4] sm:$0xf]
        %v1581 = vld [vmem:[%s1578 + $0x8] sm:$0xf]
        %v1582 = vld [vmem:[%s1578 + $0xc] sm:$0xf]
        %v1583 = vld [vmem:[%s1578 + $0x10] sm:$0xf]
        %v1584 = vld [vmem:[%s1578 + $0x14] sm:$0xf]
        %v1585 = vld [vmem:[%s1578 + $0x18] sm:$0xf]
        %v1586 = vld [vmem:[%s1578 + $0x1c] sm:$0xf]
        %v1595 = vunpack.c.l.b16 %v1579
        %v1596 = vunpack.c.l.b16 %v1580
        %v1597 = vunpack.c.l.b16 %v1581
        %v1598 = vunpack.c.l.b16 %v1582
        %v1599 = vunpack.c.l.b16 %v1583
        %v1600 = vunpack.c.l.b16 %v1584
        %v1601 = vunpack.c.l.b16 %v1585
        %v1602 = vunpack.c.l.b16 %v1586
        %v1603 = vpack.c.b16 %v1596, %v1595
        %v1604 = vpack.c.b16 %v1598, %v1597
        %v1605 = vpack.c.b16 %v1600, %v1599
        %v1606 = vpack.c.b16 %v1602, %v1601
        %vm1611 = vcmask 523264
        %v1613 = vsel %vm1611, %v1570, 0
        %v1616 = vsel %vm1611, %v1571, 0
        %v1619 = vsel %vm1611, %v1572, 0
        %v1622 = vsel %vm1611, %v1573, 0
        %v1625 = vsel %vm1611, %v1574, 0
        %v1628 = vsel %vm1611, %v1575, 0
        %v1631 = vsel %vm1611, %v1576, 0
        %v1634 = vsel %vm1611, %v1577, 0
        %1636 = vmatprep.subr.bf16.mxu0 0
        %1637 = vmatpush1.bf16.msra.mxu0 %v1603
        %1638 = vmatprep.subr.bf16.mxu0 0
        %1639 = vmatpush1.bf16.msra.mxu0 %v1604
        %1640 = vmatprep.subr.bf16.mxu0 0
        %1641 = vmatpush1.bf16.msra.mxu0 %v1605
        %1642 = vmatprep.subr.bf16.mxu0 0
        %1643 = vmatpush1.bf16.msra.mxu0 %v1606
        %1644 = vmatprep.subr.bf16.mxu0 0
        %1645 = vmatpush1.bf16.msra.mxu0 0
        %1646 = vmatprep.subr.bf16.mxu0 0
        %1647 = vmatpush1.bf16.msra.mxu0 0
        %1648 = vmatprep.subr.bf16.mxu0 0
        %1649 = vmatpush1.bf16.msra.mxu0 0
        %1650 = vmatprep.subr.bf16.mxu0 0
        %1651 = vmatpush1.bf16.msra.mxu0 0
        %1652 = vmatprep.subr.bf16.mxu0 0
        %1653 = vmatpush1.bf16.msra.mxu0 0
        %1654 = vmatprep.subr.bf16.mxu0 0
        %1655 = vmatpush1.bf16.msra.mxu0 0
        %1656 = vmatprep.subr.bf16.mxu0 0
        %1657 = vmatpush1.bf16.msra.mxu0 0
        %1658 = vmatprep.subr.bf16.mxu0 0
        %1659 = vmatpush1.bf16.msra.mxu0 0
        %1660 = vmatprep.subr.bf16.mxu0 0
        %1661 = vmatpush1.bf16.msra.mxu0 0
        %1662 = vmatprep.subr.bf16.mxu0 0
        %1663 = vmatpush1.bf16.msra.mxu0 0
        %1664 = vmatprep.subr.bf16.mxu0 0
        %1665 = vmatpush1.bf16.msra.mxu0 0
        %1666 = vmatprep.subr.bf16.mxu0 0
        %1667 = vmatpush1.bf16.msra.mxu0 0
        %1668 = vmatprep.mubr.bf16.mxu0 0
        %1669 = vmatmul.mubr.bf16.gmra.mrb[0].mxu0 %v1613
        %v1670 = vpop.f32.mrb[0].mxu0
        %v1671 = vadd.f32 0.0, %v1670
        %v1672 = vpop.f32.mrb[0].mxu0
        %v1673 = vpop.f32.mrb[0].mxu0
        %v1674 = vadd.f32 0.0, %v1673
        %v1675 = vpop.f32.mrb[0].mxu0
        %1676 = vmatprep.mubr.bf16.mxu0 0
        %1677 = vmatmul.mubr.bf16.gmra.mrb[0].mxu0 %v1616
        %v1678 = vpop.f32.mrb[0].mxu0
        %v1679 = vadd.f32 0.0, %v1678
        %v1680 = vpop.f32.mrb[0].mxu0
        %v1681 = vpop.f32.mrb[0].mxu0
        %v1682 = vadd.f32 0.0, %v1681
        %v1683 = vpop.f32.mrb[0].mxu0
        %1684 = vmatprep.mubr.bf16.mxu0 0
        %1685 = vmatmul.mubr.bf16.gmra.mrb[0].mxu0 %v1619
        %v1686 = vpop.f32.mrb[0].mxu0
        %v1687 = vadd.f32 0.0, %v1686
        %v1688 = vpop.f32.mrb[0].mxu0
        %v1689 = vpop.f32.mrb[0].mxu0
        %v1690 = vadd.f32 0.0, %v1689
        %v1691 = vpop.f32.mrb[0].mxu0
        %1692 = vmatprep.mubr.bf16.mxu0 0
        %1693 = vmatmul.mubr.bf16.gmra.mrb[0].mxu0 %v1622
        %v1694 = vpop.f32.mrb[0].mxu0
        %v1695 = vadd.f32 0.0, %v1694
        %v1696 = vpop.f32.mrb[0].mxu0
        %v1697 = vpop.f32.mrb[0].mxu0
        %v1698 = vadd.f32 0.0, %v1697
        %v1699 = vpop.f32.mrb[0].mxu0
        %1700 = vmatprep.mubr.bf16.mxu0 0
        %1701 = vmatmul.mubr.bf16.gmra.mrb[0].mxu0 %v1625
        %v1702 = vpop.f32.mrb[0].mxu0
        %v1703 = vadd.f32 0.0, %v1702
        %v1704 = vpop.f32.mrb[0].mxu0
        %v1705 = vpop.f32.mrb[0].mxu0
        %v1706 = vadd.f32 0.0, %v1705
        %v1707 = vpop.f32.mrb[0].mxu0
        %1708 = vmatprep.mubr.bf16.mxu0 0
        %1709 = vmatmul.mubr.bf16.gmra.mrb[0].mxu0 %v1628
        %v1710 = vpop.f32.mrb[0].mxu0
        %v1711 = vadd.f32 0.0, %v1710
        %v1712 = vpop.f32.mrb[0].mxu0
        %v1713 = vpop.f32.mrb[0].mxu0
        %v1714 = vadd.f32 0.0, %v1713
        %v1715 = vpop.f32.mrb[0].mxu0
        %1716 = vmatprep.mubr.bf16.mxu0 0
        %1717 = vmatmul.mubr.bf16.gmra.mrb[0].mxu0 %v1631
        %v1718 = vpop.f32.mrb[0].mxu0
        %v1719 = vadd.f32 0.0, %v1718
        %v1720 = vpop.f32.mrb[0].mxu0
        %v1721 = vpop.f32.mrb[0].mxu0
        %v1722 = vadd.f32 0.0, %v1721
        %v1723 = vpop.f32.mrb[0].mxu0
        %1724 = vmatprep.mubr.bf16.mxu0 0
        %1725 = vmatmul.mubr.bf16.gmra.mrb[0].mxu0 %v1634
        %v1726 = vpop.f32.mrb[0].mxu0
        %v1727 = vadd.f32 0.0, %v1726
        %v1728 = vpop.f32.mrb[0].mxu0
        %v1729 = vpop.f32.mrb[0].mxu0
        %v1730 = vadd.f32 0.0, %v1729
        %v1731 = vpop.f32.mrb[0].mxu0
        %1732 = vdwg.mxu0
        %v1741 = vunpack.c.l.b16 %v1546
        %v1742 = vunpack.c.l.b16 %v1547
        %v1743 = vunpack.c.l.b16 %v1548
        %v1744 = vunpack.c.l.b16 %v1549
        %v1745 = vunpack.c.l.b16 %v1550
        %v1746 = vunpack.c.l.b16 %v1551
        %v1747 = vunpack.c.l.b16 %v1552
        %v1748 = vunpack.c.l.b16 %v1553
        %v1749 = vpack.c.b16 %v1742, %v1741
        %v1750 = vpack.c.b16 %v1744, %v1743
        %v1751 = vpack.c.b16 %v1746, %v1745
        %v1752 = vpack.c.b16 %v1748, %v1747
        %v1758 = vsel %vm1611, %v1538, 0
        %v1761 = vsel %vm1611, %v1539, 0
        %v1764 = vsel %vm1611, %v1540, 0
        %v1767 = vsel %vm1611, %v1541, 0
        %v1770 = vsel %vm1611, %v1542, 0
        %v1773 = vsel %vm1611, %v1543, 0
        %v1776 = vsel %vm1611, %v1544, 0
        %v1779 = vsel %vm1611, %v1545, 0
        %1781 = vmatprep.subr.bf16.mxu0 0
        %1782 = vmatpush1.bf16.msra.mxu0 %v1749
        %1783 = vmatprep.subr.bf16.mxu0 0
        %1784 = vmatpush1.bf16.msra.mxu0 %v1750
        %1785 = vmatprep.subr.bf16.mxu0 0
        %1786 = vmatpush1.bf16.msra.mxu0 %v1751
        %1787 = vmatprep.subr.bf16.mxu0 0
        %1788 = vmatpush1.bf16.msra.mxu0 %v1752
        %1789 = vmatprep.subr.bf16.mxu0 0
        %1790 = vmatpush1.bf16.msra.mxu0 0
        %1791 = vmatprep.subr.bf16.mxu0 0
        %1792 = vmatpush1.bf16.msra.mxu0 0
        %1793 = vmatprep.subr.bf16.mxu0 0
        %1794 = vmatpush1.bf16.msra.mxu0 0
        %1795 = vmatprep.subr.bf16.mxu0 0
        %1796 = vmatpush1.bf16.msra.mxu0 0
        %1797 = vmatprep.subr.bf16.mxu0 0
        %1798 = vmatpush1.bf16.msra.mxu0 0
        %1799 = vmatprep.subr.bf16.mxu0 0
        %1800 = vmatpush1.bf16.msra.mxu0 0
        %1801 = vmatprep.subr.bf16.mxu0 0
        %1802 = vmatpush1.bf16.msra.mxu0 0
        %1803 = vmatprep.subr.bf16.mxu0 0
        %1804 = vmatpush1.bf16.msra.mxu0 0
        %1805 = vmatprep.subr.bf16.mxu0 0
        %1806 = vmatpush1.bf16.msra.mxu0 0
        %1807 = vmatprep.subr.bf16.mxu0 0
        %1808 = vmatpush1.bf16.msra.mxu0 0
        %1809 = vmatprep.subr.bf16.mxu0 0
        %1810 = vmatpush1.bf16.msra.mxu0 0
        %1811 = vmatprep.subr.bf16.mxu0 0
        %1812 = vmatpush1.bf16.msra.mxu0 0
        %1813 = vmatprep.mubr.bf16.mxu0 0
        %1814 = vmatmul.mubr.bf16.gmra.mrb[0].mxu0 %v1758
        %v1815 = vpop.f32.mrb[0].mxu0
        %v1816 = vadd.f32 %v1671, %v1815
        %v1817 = vpop.f32.mrb[0].mxu0
        %v1818 = vpop.f32.mrb[0].mxu0
        %v1819 = vadd.f32 %v1674, %v1818
        %v1820 = vpop.f32.mrb[0].mxu0
        %1821 = vmatprep.mubr.bf16.mxu0 0
        %1822 = vmatmul.mubr.bf16.gmra.mrb[0].mxu0 %v1761
        %v1823 = vpop.f32.mrb[0].mxu0
        %v1824 = vadd.f32 %v1679, %v1823
        %v1825 = vpop.f32.mrb[0].mxu0
        %v1826 = vpop.f32.mrb[0].mxu0
        %v1827 = vadd.f32 %v1682, %v1826
        %v1828 = vpop.f32.mrb[0].mxu0
        %1829 = vmatprep.mubr.bf16.mxu0 0
        %1830 = vmatmul.mubr.bf16.gmra.mrb[0].mxu0 %v1764
        %v1831 = vpop.f32.mrb[0].mxu0
        %v1832 = vadd.f32 %v1687, %v1831
        %v1833 = vpop.f32.mrb[0].mxu0
        %v1834 = vpop.f32.mrb[0].mxu0
        %v1835 = vadd.f32 %v1690, %v1834
        %v1836 = vpop.f32.mrb[0].mxu0
        %1837 = vmatprep.mubr.bf16.mxu0 0
        %1838 = vmatmul.mubr.bf16.gmra.mrb[0].mxu0 %v1767
        %v1839 = vpop.f32.mrb[0].mxu0
        %v1840 = vadd.f32 %v1695, %v1839
        %v1841 = vpop.f32.mrb[0].mxu0
        %v1842 = vpop.f32.mrb[0].mxu0
        %v1843 = vadd.f32 %v1698, %v1842
        %v1844 = vpop.f32.mrb[0].mxu0
        %1845 = vmatprep.mubr.bf16.mxu0 0
        %1846 = vmatmul.mubr.bf16.gmra.mrb[0].mxu0 %v1770
        %v1847 = vpop.f32.mrb[0].mxu0
        %v1848 = vadd.f32 %v1703, %v1847
        %v1849 = vpop.f32.mrb[0].mxu0
        %v1850 = vpop.f32.mrb[0].mxu0
        %v1851 = vadd.f32 %v1706, %v1850
        %v1852 = vpop.f32.mrb[0].mxu0
        %1853 = vmatprep.mubr.bf16.mxu0 0
        %1854 = vmatmul.mubr.bf16.gmra.mrb[0].mxu0 %v1773
        %v1855 = vpop.f32.mrb[0].mxu0
        %v1856 = vadd.f32 %v1711, %v1855
        %v1857 = vpop.f32.mrb[0].mxu0
        %v1858 = vpop.f32.mrb[0].mxu0
        %v1859 = vadd.f32 %v1714, %v1858
        %v1860 = vpop.f32.mrb[0].mxu0
        %1861 = vmatprep.mubr.bf16.mxu0 0
        %1862 = vmatmul.mubr.bf16.gmra.mrb[0].mxu0 %v1776
        %v1863 = vpop.f32.mrb[0].mxu0
        %v1864 = vadd.f32 %v1719, %v1863
        %v1865 = vpop.f32.mrb[0].mxu0
        %v1866 = vpop.f32.mrb[0].mxu0
        %v1867 = vadd.f32 %v1722, %v1866
        %v1868 = vpop.f32.mrb[0].mxu0
        %1869 = vmatprep.mubr.bf16.mxu0 0
        %1870 = vmatmul.mubr.bf16.gmra.mrb[0].mxu0 %v1779
        %v1871 = vpop.f32.mrb[0].mxu0
        %v1872 = vadd.f32 %v1727, %v1871
        %v1873 = vpop.f32.mrb[0].mxu0
        %v1874 = vpop.f32.mrb[0].mxu0
        %v1875 = vadd.f32 %v1730, %v1874
        %v1876 = vpop.f32.mrb[0].mxu0
        %1877 = vdwg.mxu0
        %v1878 = vld [vmem:[%s236 + $0x1] sm:$0xff]
        %v1879 = vld [vmem:[%s236 + $0x11] sm:$0xff]
        %v1880 = vld [vmem:[%s236 + $0x21] sm:$0xff]
        %v1881 = vld [vmem:[%s236 + $0x31] sm:$0xff]
        %v1882 = vld [vmem:[%s236 + $0x41] sm:$0xff]
        %v1883 = vld [vmem:[%s236 + $0x51] sm:$0xff]
        %v1884 = vld [vmem:[%s236 + $0x61] sm:$0xff]
        %v1885 = vld [vmem:[%s236 + $0x71] sm:$0xff]
        %v1886 = vld [vmem:[%s236 + $0x91] sm:$0xff]
        %v1887 = vld [vmem:[%s236 + $0xa1] sm:$0xff]
        %v1888 = vld [vmem:[%s236 + $0xb1] sm:$0xff]
        %v1889 = vld [vmem:[%s236 + $0xc1] sm:$0xff]
        %v1890 = vld [vmem:[%s236 + $0xd1] sm:$0xff]
        %v1891 = vld [vmem:[%s236 + $0xe1] sm:$0xff]
        %v1892 = vld [vmem:[%s236 + $0xf1] sm:$0xff]
        %v1893 = vld [vmem:[%s236 + $0x101] sm:$0xff]
        %v1894 = vpack.c.bf16 %v1879, %v1878
        %v1895 = vpack.c.bf16 %v1881, %v1880
        %v1896 = vpack.c.bf16 %v1883, %v1882
        %v1897 = vpack.c.bf16 %v1885, %v1884
        %v1898 = vpack.c.bf16 %v1887, %v1886
        %v1899 = vpack.c.bf16 %v1889, %v1888
        %v1900 = vpack.c.bf16 %v1891, %v1890
        %v1901 = vpack.c.bf16 %v1893, %v1892
        %s1902 = scalar_lea.vmem %s241, 192
        %v1903 = vld [vmem:[%s1902] sm:$0xf]
        %v1904 = vld [vmem:[%s1902 + $0x4] sm:$0xf]
        %v1905 = vld [vmem:[%s1902 + $0x8] sm:$0xf]
        %v1906 = vld [vmem:[%s1902 + $0xc] sm:$0xf]
        %v1907 = vld [vmem:[%s1902 + $0x10] sm:$0xf]
        %v1908 = vld [vmem:[%s1902 + $0x14] sm:$0xf]
        %v1909 = vld [vmem:[%s1902 + $0x18] sm:$0xf]
        %v1910 = vld [vmem:[%s1902 + $0x1c] sm:$0xf]
        %v1919 = vunpack.c.l.b16 %v1903
        %v1920 = vunpack.c.l.b16 %v1904
        %v1921 = vunpack.c.l.b16 %v1905
        %v1922 = vunpack.c.l.b16 %v1906
        %v1923 = vunpack.c.l.b16 %v1907
        %v1924 = vunpack.c.l.b16 %v1908
        %v1925 = vunpack.c.l.b16 %v1909
        %v1926 = vunpack.c.l.b16 %v1910
        %v1927 = vpack.c.b16 %v1920, %v1919
        %v1928 = vpack.c.b16 %v1922, %v1921
        %v1929 = vpack.c.b16 %v1924, %v1923
        %v1930 = vpack.c.b16 %v1926, %v1925
        %v1936 = vsel %vm1611, %v1894, 0
        %v1939 = vsel %vm1611, %v1895, 0
        %v1942 = vsel %vm1611, %v1896, 0
        %v1945 = vsel %vm1611, %v1897, 0
        %v1948 = vsel %vm1611, %v1898, 0
        %v1951 = vsel %vm1611, %v1899, 0
        %v1954 = vsel %vm1611, %v1900, 0
        %v1957 = vsel %vm1611, %v1901, 0
        %1959 = vmatprep.subr.bf16.mxu0 0
        %1960 = vmatpush1.bf16.msra.mxu0 %v1927
        %1961 = vmatprep.subr.bf16.mxu0 0
        %1962 = vmatpush1.bf16.msra.mxu0 %v1928
        %1963 = vmatprep.subr.bf16.mxu0 0
        %1964 = vmatpush1.bf16.msra.mxu0 %v1929
        %1965 = vmatprep.subr.bf16.mxu0 0
        %1966 = vmatpush1.bf16.msra.mxu0 %v1930
        %1967 = vmatprep.subr.bf16.mxu0 0
        %1968 = vmatpush1.bf16.msra.mxu0 0
        %1969 = vmatprep.subr.bf16.mxu0 0
        %1970 = vmatpush1.bf16.msra.mxu0 0
        %1971 = vmatprep.subr.bf16.mxu0 0
        %1972 = vmatpush1.bf16.msra.mxu0 0
        %1973 = vmatprep.subr.bf16.mxu0 0
        %1974 = vmatpush1.bf16.msra.mxu0 0
        %1975 = vmatprep.subr.bf16.mxu0 0
        %1976 = vmatpush1.bf16.msra.mxu0 0
        %1977 = vmatprep.subr.bf16.mxu0 0
        %1978 = vmatpush1.bf16.msra.mxu0 0
        %1979 = vmatprep.subr.bf16.mxu0 0
        %1980 = vmatpush1.bf16.msra.mxu0 0
        %1981 = vmatprep.subr.bf16.mxu0 0
        %1982 = vmatpush1.bf16.msra.mxu0 0
        %1983 = vmatprep.subr.bf16.mxu0 0
        %1984 = vmatpush1.bf16.msra.mxu0 0
        %1985 = vmatprep.subr.bf16.mxu0 0
        %1986 = vmatpush1.bf16.msra.mxu0 0
        %1987 = vmatprep.subr.bf16.mxu0 0
        %1988 = vmatpush1.bf16.msra.mxu0 0
        %1989 = vmatprep.subr.bf16.mxu0 0
        %1990 = vmatpush1.bf16.msra.mxu0 0
        %1991 = vmatprep.mubr.bf16.mxu0 0
        %1992 = vmatmul.mubr.bf16.gmra.mrb[0].mxu0 %v1936
        %v1993 = vpop.f32.mrb[0].mxu0
        %v1994 = vadd.f32 0.0, %v1993
        %v1995 = vpop.f32.mrb[0].mxu0
        %v1996 = vpop.f32.mrb[0].mxu0
        %v1997 = vadd.f32 0.0, %v1996
        %v1998 = vpop.f32.mrb[0].mxu0
        %1999 = vmatprep.mubr.bf16.mxu0 0
        %2000 = vmatmul.mubr.bf16.gmra.mrb[0].mxu0 %v1939
        %v2001 = vpop.f32.mrb[0].mxu0
        %v2002 = vadd.f32 0.0, %v2001
        %v2003 = vpop.f32.mrb[0].mxu0
        %v2004 = vpop.f32.mrb[0].mxu0
        %v2005 = vadd.f32 0.0, %v2004
        %v2006 = vpop.f32.mrb[0].mxu0
        %2007 = vmatprep.mubr.bf16.mxu0 0
        %2008 = vmatmul.mubr.bf16.gmra.mrb[0].mxu0 %v1942
        %v2009 = vpop.f32.mrb[0].mxu0
        %v2010 = vadd.f32 0.0, %v2009
        %v2011 = vpop.f32.mrb[0].mxu0
        %v2012 = vpop.f32.mrb[0].mxu0
        %v2013 = vadd.f32 0.0, %v2012
        %v2014 = vpop.f32.mrb[0].mxu0
        %2015 = vmatprep.mubr.bf16.mxu0 0
        %2016 = vmatmul.mubr.bf16.gmra.mrb[0].mxu0 %v1945
        %v2017 = vpop.f32.mrb[0].mxu0
        %v2018 = vadd.f32 0.0, %v2017
        %v2019 = vpop.f32.mrb[0].mxu0
        %v2020 = vpop.f32.mrb[0].mxu0
        %v2021 = vadd.f32 0.0, %v2020
        %v2022 = vpop.f32.mrb[0].mxu0
        %2023 = vmatprep.mubr.bf16.mxu0 0
        %2024 = vmatmul.mubr.bf16.gmra.mrb[0].mxu0 %v1948
        %v2025 = vpop.f32.mrb[0].mxu0
        %v2026 = vadd.f32 0.0, %v2025
        %v2027 = vpop.f32.mrb[0].mxu0
        %v2028 = vpop.f32.mrb[0].mxu0
        %v2029 = vadd.f32 0.0, %v2028
        %v2030 = vpop.f32.mrb[0].mxu0
        %2031 = vmatprep.mubr.bf16.mxu0 0
        %2032 = vmatmul.mubr.bf16.gmra.mrb[0].mxu0 %v1951
        %v2033 = vpop.f32.mrb[0].mxu0
        %v2034 = vadd.f32 0.0, %v2033
        %v2035 = vpop.f32.mrb[0].mxu0
        %v2036 = vpop.f32.mrb[0].mxu0
        %v2037 = vadd.f32 0.0, %v2036
        %v2038 = vpop.f32.mrb[0].mxu0
        %2039 = vmatprep.mubr.bf16.mxu0 0
        %2040 = vmatmul.mubr.bf16.gmra.mrb[0].mxu0 %v1954
        %v2041 = vpop.f32.mrb[0].mxu0
        %v2042 = vadd.f32 0.0, %v2041
        %v2043 = vpop.f32.mrb[0].mxu0
        %v2044 = vpop.f32.mrb[0].mxu0
        %v2045 = vadd.f32 0.0, %v2044
        %v2046 = vpop.f32.mrb[0].mxu0
        %2047 = vmatprep.mubr.bf16.mxu0 0
        %2048 = vmatmul.mubr.bf16.gmra.mrb[0].mxu0 %v1957
        %v2049 = vpop.f32.mrb[0].mxu0
        %v2050 = vadd.f32 0.0, %v2049
        %v2051 = vpop.f32.mrb[0].mxu0
        %v2052 = vpop.f32.mrb[0].mxu0
        %v2053 = vadd.f32 0.0, %v2052
        %v2054 = vpop.f32.mrb[0].mxu0
        %2055 = vdwg.mxu0
        %v2056 = vadd.f32 %v1816, %v1994
        %v2057 = vadd.f32 %v1819, %v1997
        %v2058 = vadd.f32 %v1824, %v2002
        %v2059 = vadd.f32 %v1827, %v2005
        %v2060 = vadd.f32 %v1832, %v2010
        %v2061 = vadd.f32 %v1835, %v2013
        %v2062 = vadd.f32 %v1840, %v2018
        %v2063 = vadd.f32 %v1843, %v2021
        %v2064 = vadd.f32 %v1848, %v2026
        %v2065 = vadd.f32 %v1851, %v2029
        %v2066 = vadd.f32 %v1856, %v2034
        %v2067 = vadd.f32 %v1859, %v2037
        %v2068 = vadd.f32 %v1864, %v2042
        %v2069 = vadd.f32 %v1867, %v2045
        %v2070 = vadd.f32 %v1872, %v2050
        %v2071 = vadd.f32 %v1875, %v2053
        %v2072 = vld [vmem:[%s236] sm:$0xff]
        %v2073 = vld [vmem:[%s236 + $0x10] sm:$0xff]
        %v2074 = vld [vmem:[%s236 + $0x20] sm:$0xff]
        %v2075 = vld [vmem:[%s236 + $0x30] sm:$0xff]
        %v2076 = vld [vmem:[%s236 + $0x40] sm:$0xff]
        %v2077 = vld [vmem:[%s236 + $0x50] sm:$0xff]
        %v2078 = vld [vmem:[%s236 + $0x60] sm:$0xff]
        %v2079 = vld [vmem:[%s236 + $0x70] sm:$0xff]
        %v2080 = vld [vmem:[%s236 + $0x90] sm:$0xff]
        %v2081 = vld [vmem:[%s236 + $0xa0] sm:$0xff]
        %v2082 = vld [vmem:[%s236 + $0xb0] sm:$0xff]
        %v2083 = vld [vmem:[%s236 + $0xc0] sm:$0xff]
        %v2084 = vld [vmem:[%s236 + $0xd0] sm:$0xff]
        %v2085 = vld [vmem:[%s236 + $0xe0] sm:$0xff]
        %v2086 = vld [vmem:[%s236 + $0xf0] sm:$0xff]
        %v2087 = vld [vmem:[%s236 + $0x100] sm:$0xff]
        %v2088 = vpack.c.bf16 %v2073, %v2072
        %v2089 = vpack.c.bf16 %v2075, %v2074
        %v2090 = vpack.c.bf16 %v2077, %v2076
        %v2091 = vpack.c.bf16 %v2079, %v2078
        %v2092 = vpack.c.bf16 %v2081, %v2080
        %v2093 = vpack.c.bf16 %v2083, %v2082
        %v2094 = vpack.c.bf16 %v2085, %v2084
        %v2095 = vpack.c.bf16 %v2087, %v2086
        %s2096 = scalar_lea.vmem %s241, 256
        %v2097 = vld [vmem:[%s2096] sm:$0xf]
        %v2098 = vld [vmem:[%s2096 + $0x4] sm:$0xf]
        %v2099 = vld [vmem:[%s2096 + $0x8] sm:$0xf]
        %v2100 = vld [vmem:[%s2096 + $0xc] sm:$0xf]
        %v2101 = vld [vmem:[%s2096 + $0x10] sm:$0xf]
        %v2102 = vld [vmem:[%s2096 + $0x14] sm:$0xf]
        %v2103 = vld [vmem:[%s2096 + $0x18] sm:$0xf]
        %v2104 = vld [vmem:[%s2096 + $0x1c] sm:$0xf]
        %v2113 = vunpack.c.l.b16 %v2097
        %v2114 = vunpack.c.l.b16 %v2098
        %v2115 = vunpack.c.l.b16 %v2099
        %v2116 = vunpack.c.l.b16 %v2100
        %v2117 = vunpack.c.l.b16 %v2101
        %v2118 = vunpack.c.l.b16 %v2102
        %v2119 = vunpack.c.l.b16 %v2103
        %v2120 = vunpack.c.l.b16 %v2104
        %v2121 = vpack.c.b16 %v2114, %v2113
        %v2122 = vpack.c.b16 %v2116, %v2115
        %v2123 = vpack.c.b16 %v2118, %v2117
        %v2124 = vpack.c.b16 %v2120, %v2119
        %v2130 = vsel %vm1611, %v2088, 0
        %v2133 = vsel %vm1611, %v2089, 0
        %v2136 = vsel %vm1611, %v2090, 0
        %v2139 = vsel %vm1611, %v2091, 0
        %v2142 = vsel %vm1611, %v2092, 0
        %v2145 = vsel %vm1611, %v2093, 0
        %v2148 = vsel %vm1611, %v2094, 0
        %v2151 = vsel %vm1611, %v2095, 0
        %2153 = vmatprep.subr.bf16.mxu0 0
        %2154 = vmatpush1.bf16.msra.mxu0 %v2121
        %2155 = vmatprep.subr.bf16.mxu0 0
        %2156 = vmatpush1.bf16.msra.mxu0 %v2122
        %2157 = vmatprep.subr.bf16.mxu0 0
        %2158 = vmatpush1.bf16.msra.mxu0 %v2123
        %2159 = vmatprep.subr.bf16.mxu0 0
        %2160 = vmatpush1.bf16.msra.mxu0 %v2124
        %2161 = vmatprep.subr.bf16.mxu0 0
        %2162 = vmatpush1.bf16.msra.mxu0 0
        %2163 = vmatprep.subr.bf16.mxu0 0
        %2164 = vmatpush1.bf16.msra.mxu0 0
        %2165 = vmatprep.subr.bf16.mxu0 0
        %2166 = vmatpush1.bf16.msra.mxu0 0
        %2167 = vmatprep.subr.bf16.mxu0 0
        %2168 = vmatpush1.bf16.msra.mxu0 0
        %2169 = vmatprep.subr.bf16.mxu0 0
        %2170 = vmatpush1.bf16.msra.mxu0 0
        %2171 = vmatprep.subr.bf16.mxu0 0
        %2172 = vmatpush1.bf16.msra.mxu0 0
        %2173 = vmatprep.subr.bf16.mxu0 0
        %2174 = vmatpush1.bf16.msra.mxu0 0
        %2175 = vmatprep.subr.bf16.mxu0 0
        %2176 = vmatpush1.bf16.msra.mxu0 0
        %2177 = vmatprep.subr.bf16.mxu0 0
        %2178 = vmatpush1.bf16.msra.mxu0 0
        %2179 = vmatprep.subr.bf16.mxu0 0
        %2180 = vmatpush1.bf16.msra.mxu0 0
        %2181 = vmatprep.subr.bf16.mxu0 0
        %2182 = vmatpush1.bf16.msra.mxu0 0
        %2183 = vmatprep.subr.bf16.mxu0 0
        %2184 = vmatpush1.bf16.msra.mxu0 0
        %2185 = vmatprep.mubr.bf16.mxu0 0
        %2186 = vmatmul.mubr.bf16.gmra.mrb[0].mxu0 %v2130
        %v2187 = vpop.f32.mrb[0].mxu0
        %v2188 = vadd.f32 0.0, %v2187
        %v2189 = vpop.f32.mrb[0].mxu0
        %v2190 = vpop.f32.mrb[0].mxu0
        %v2191 = vadd.f32 0.0, %v2190
        %v2192 = vpop.f32.mrb[0].mxu0
        %2193 = vmatprep.mubr.bf16.mxu0 0
        %2194 = vmatmul.mubr.bf16.gmra.mrb[0].mxu0 %v2133
        %v2195 = vpop.f32.mrb[0].mxu0
        %v2196 = vadd.f32 0.0, %v2195
        %v2197 = vpop.f32.mrb[0].mxu0
        %v2198 = vpop.f32.mrb[0].mxu0
        %v2199 = vadd.f32 0.0, %v2198
        %v2200 = vpop.f32.mrb[0].mxu0
        %2201 = vmatprep.mubr.bf16.mxu0 0
        %2202 = vmatmul.mubr.bf16.gmra.mrb[0].mxu0 %v2136
        %v2203 = vpop.f32.mrb[0].mxu0
        %v2204 = vadd.f32 0.0, %v2203
        %v2205 = vpop.f32.mrb[0].mxu0
        %v2206 = vpop.f32.mrb[0].mxu0
        %v2207 = vadd.f32 0.0, %v2206
        %v2208 = vpop.f32.mrb[0].mxu0
        %2209 = vmatprep.mubr.bf16.mxu0 0
        %2210 = vmatmul.mubr.bf16.gmra.mrb[0].mxu0 %v2139
        %v2211 = vpop.f32.mrb[0].mxu0
        %v2212 = vadd.f32 0.0, %v2211
        %v2213 = vpop.f32.mrb[0].mxu0
        %v2214 = vpop.f32.mrb[0].mxu0
        %v2215 = vadd.f32 0.0, %v2214
        %v2216 = vpop.f32.mrb[0].mxu0
        %2217 = vmatprep.mubr.bf16.mxu0 0
        %2218 = vmatmul.mubr.bf16.gmra.mrb[0].mxu0 %v2142
        %v2219 = vpop.f32.mrb[0].mxu0
        %v2220 = vadd.f32 0.0, %v2219
        %v2221 = vpop.f32.mrb[0].mxu0
        %v2222 = vpop.f32.mrb[0].mxu0
        %v2223 = vadd.f32 0.0, %v2222
        %v2224 = vpop.f32.mrb[0].mxu0
        %2225 = vmatprep.mubr.bf16.mxu0 0
        %2226 = vmatmul.mubr.bf16.gmra.mrb[0].mxu0 %v2145
        %v2227 = vpop.f32.mrb[0].mxu0
        %v2228 = vadd.f32 0.0, %v2227
        %v2229 = vpop.f32.mrb[0].mxu0
        %v2230 = vpop.f32.mrb[0].mxu0
        %v2231 = vadd.f32 0.0, %v2230
        %v2232 = vpop.f32.mrb[0].mxu0
        %2233 = vmatprep.mubr.bf16.mxu0 0
        %2234 = vmatmul.mubr.bf16.gmra.mrb[0].mxu0 %v2148
        %v2235 = vpop.f32.mrb[0].mxu0
        %v2236 = vadd.f32 0.0, %v2235
        %v2237 = vpop.f32.mrb[0].mxu0
        %v2238 = vpop.f32.mrb[0].mxu0
        %v2239 = vadd.f32 0.0, %v2238
        %v2240 = vpop.f32.mrb[0].mxu0
        %2241 = vmatprep.mubr.bf16.mxu0 0
        %2242 = vmatmul.mubr.bf16.gmra.mrb[0].mxu0 %v2151
        %v2243 = vpop.f32.mrb[0].mxu0
        %v2244 = vadd.f32 0.0, %v2243
        %v2245 = vpop.f32.mrb[0].mxu0
        %v2246 = vpop.f32.mrb[0].mxu0
        %v2247 = vadd.f32 0.0, %v2246
        %v2248 = vpop.f32.mrb[0].mxu0
        %2249 = vdwg.mxu0
        %v2250 = vadd.f32 %v2056, %v2188
        %v2251 = vadd.f32 %v2057, %v2191
        %v2252 = vadd.f32 %v2058, %v2196
        %v2253 = vadd.f32 %v2059, %v2199
        %v2254 = vadd.f32 %v2060, %v2204
        %v2255 = vadd.f32 %v2061, %v2207
        %v2256 = vadd.f32 %v2062, %v2212
        %v2257 = vadd.f32 %v2063, %v2215
        %v2258 = vadd.f32 %v2064, %v2220
        %v2259 = vadd.f32 %v2065, %v2223
        %v2260 = vadd.f32 %v2066, %v2228
        %v2261 = vadd.f32 %v2067, %v2231
        %v2262 = vadd.f32 %v2068, %v2236
        %v2263 = vadd.f32 %v2069, %v2239
        %v2264 = vadd.f32 %v2070, %v2244
        %v2265 = vadd.f32 %v2071, %v2247
        %v2266 = vld [vmem:[%s244] sm:$0x1]
        %v2268 = vlaneseq
        %v2269 = vshrl.u32 %v2268, 7
        %v2270 = vsub.s32 0, %v2269
        %v2271 = vrot.slane %v2266, %v2270
        %v2273 = vadd.f32 %v2250, %v2271
        %v2274 = vadd.f32 %v2251, %v2271
        %v2275 = vadd.f32 %v2252, %v2271
        %v2276 = vadd.f32 %v2253, %v2271
        %v2277 = vadd.f32 %v2254, %v2271
        %v2278 = vadd.f32 %v2255, %v2271
        %v2279 = vadd.f32 %v2256, %v2271
        %v2280 = vadd.f32 %v2257, %v2271
        %v2281 = vadd.f32 %v2258, %v2271
        %v2282 = vadd.f32 %v2259, %v2271
        %v2283 = vadd.f32 %v2260, %v2271
        %v2284 = vadd.f32 %v2261, %v2271
        %v2285 = vadd.f32 %v2262, %v2271
        %v2286 = vadd.f32 %v2263, %v2271
        %v2287 = vadd.f32 %v2264, %v2271
        %v2288 = vadd.f32 %v2265, %v2271
        %v2289 = vmax.f32 %v2273, 0.0
        %v2290 = vmax.f32 %v2274, 0.0
        %v2291 = vmax.f32 %v2275, 0.0
        %v2292 = vmax.f32 %v2276, 0.0
        %v2293 = vmax.f32 %v2277, 0.0
        %v2294 = vmax.f32 %v2278, 0.0
        %v2295 = vmax.f32 %v2279, 0.0
        %v2296 = vmax.f32 %v2280, 0.0
        %v2297 = vmax.f32 %v2281, 0.0
        %v2298 = vmax.f32 %v2282, 0.0
        %v2299 = vmax.f32 %v2283, 0.0
        %v2300 = vmax.f32 %v2284, 0.0
        %v2301 = vmax.f32 %v2285, 0.0
        %v2302 = vmax.f32 %v2286, 0.0
        %v2303 = vmax.f32 %v2287, 0.0
        %v2304 = vmax.f32 %v2288, 0.0
        %v2305 = vpack.c.bf16 %v2290, %v2289
        %v2306 = vpack.c.bf16 %v2292, %v2291
        %v2307 = vpack.c.bf16 %v2294, %v2293
        %v2308 = vpack.c.bf16 %v2296, %v2295
        %v2309 = vpack.c.bf16 %v2298, %v2297
        %v2310 = vpack.c.bf16 %v2300, %v2299
        %v2311 = vpack.c.bf16 %v2302, %v2301
        %v2312 = vpack.c.bf16 %v2304, %v2303
        %v2321 = vunpack.c.l.b16 %v2305
        %v2322 = vunpack.c.h.b16 %v2305
        %v2323 = vunpack.c.l.b16 %v2306
        %v2324 = vunpack.c.h.b16 %v2306
        %v2325 = vunpack.c.l.b16 %v2307
        %v2326 = vunpack.c.h.b16 %v2307
        %v2327 = vunpack.c.l.b16 %v2308
        %v2328 = vunpack.c.h.b16 %v2308
        %v2329 = vunpack.c.l.b16 %v2309
        %v2330 = vunpack.c.h.b16 %v2309
        %v2331 = vunpack.c.l.b16 %v2310
        %v2332 = vunpack.c.h.b16 %v2310
        %v2333 = vunpack.c.l.b16 %v2311
        %v2334 = vunpack.c.h.b16 %v2311
        %v2335 = vunpack.c.l.b16 %v2312
        %v2336 = vunpack.c.h.b16 %v2312
        %v2337 = vpack.c.b16 %v2321, %v2321
        %v2338 = vpack.c.b16 %v2322, %v2322
        %v2339 = vpack.c.b16 %v2323, %v2323
        %v2340 = vpack.c.b16 %v2324, %v2324
        %v2341 = vpack.c.b16 %v2325, %v2325
        %v2342 = vpack.c.b16 %v2326, %v2326
        %v2343 = vpack.c.b16 %v2327, %v2327
        %v2344 = vpack.c.b16 %v2328, %v2328
        %v2345 = vpack.c.b16 %v2329, %v2329
        %v2346 = vpack.c.b16 %v2330, %v2330
        %v2347 = vpack.c.b16 %v2331, %v2331
        %v2348 = vpack.c.b16 %v2332, %v2332
        %v2349 = vpack.c.b16 %v2333, %v2333
        %v2350 = vpack.c.b16 %v2334, %v2334
        %v2351 = vpack.c.b16 %v2335, %v2335
        %v2352 = vpack.c.b16 %v2336, %v2336
        %vm2369 = vcmask 257024
        %2370 = vst.msk [vmem:[%s260] sm:$0xf] %vm2369, %v2337
        %2371 = vst.msk [vmem:[%s260 + $0x4] sm:$0xf] %vm2369, %v2338
        %2372 = vst.msk [vmem:[%s260 + $0x8] sm:$0xf] %vm2369, %v2339
        %2373 = vst.msk [vmem:[%s260 + $0xc] sm:$0xf] %vm2369, %v2340
        %2374 = vst.msk [vmem:[%s260 + $0x10] sm:$0xf] %vm2369, %v2341
        %2375 = vst.msk [vmem:[%s260 + $0x14] sm:$0xf] %vm2369, %v2342
        %2376 = vst.msk [vmem:[%s260 + $0x18] sm:$0xf] %vm2369, %v2343
        %2377 = vst.msk [vmem:[%s260 + $0x1c] sm:$0xf] %vm2369, %v2344
        %2378 = vst.msk [vmem:[%s260 + $0x20] sm:$0xf] %vm2369, %v2345
        %2379 = vst.msk [vmem:[%s260 + $0x24] sm:$0xf] %vm2369, %v2346
        %2380 = vst.msk [vmem:[%s260 + $0x28] sm:$0xf] %vm2369, %v2347
        %2381 = vst.msk [vmem:[%s260 + $0x2c] sm:$0xf] %vm2369, %v2348
        %2382 = vst.msk [vmem:[%s260 + $0x30] sm:$0xf] %vm2369, %v2349
        %2383 = vst.msk [vmem:[%s260 + $0x34] sm:$0xf] %vm2369, %v2350
        %2384 = vst.msk [vmem:[%s260 + $0x38] sm:$0xf] %vm2369, %v2351
        %2385 = vst.msk [vmem:[%s260 + $0x3c] sm:$0xf] %vm2369, %v2352
      $region48: #{deconvnet28_forward.4} parent=31 // pred_fallthru
        _
      %s2386 = smul.u32 16, %s21
      %p2387 = scmp.lt.s32.totalorder %s22, 1
      %s2388 = scalar_select %p2387, %s22, 1
      %p2389 = scmp.lt.s32.totalorder %s23, 1
      %s2390 = scalar_select %p2389, %s23, 1
      %p2391 = scmp.lt.s32.totalorder %s2386, 15
      %s2392 = scalar_select %p2391, %s2386, 15
      %p2393 = scmp.lt.s32.totalorder %s20, 0
      %s2394 = scalar_select %p2393, %s20, 0
      %s2395 = sadd.s32 %s2394, %s2392
      %s2396 = smul.addr %s2390, 16
      %s2397 = sadd.s32 %s2395, %s2396
      %s2398 = smul.addr %s2388, 32
      %s2399 = sadd.s32 %s2397, %s2398
      %s2400 = smul.addr %s2399, 4
      %s2401 = scalar_lea.vmem %s3, %s2400
      // Predicated region
      $region49: #{deconvnet28_forward.4} parent=31 // pred_check
        %p2402 = pneg %p142
      $region50: #{deconvnet28_forward.4} parent=31 // pred_check_branch
        %2404 = sbr.rel (%p2402) target = $region52
      $region51: #{deconvnet28_forward.4} parent=31 // pred_region
        %s2405 = smul.u32 16, %s21
      $region52: #{deconvnet28_forward.4} parent=31 // pred_fallthru
        _
    $region32: #{deconvnet28_forward.4} parent=5 // pred_fallthru
      _
    %p2406 = scmp.le.s32.totalorder 2, %s9
    // Predicated region
    $region53: #{deconvnet28_forward.4} parent=5 // pred_check
      %p2407 = pneg %p2406
    $region54: #{deconvnet28_forward.4} parent=5 // pred_check_branch
      %2409 = sbr.rel (%p2407) target = $region56
    $region55: #{deconvnet28_forward.4} parent=5 // pred_region
      %s2410 = ssub.s32 %s9, 2
      // Predicated region
      $region57: #{deconvnet28_forward.4} parent=55 // pred_check
        %p2411 = pneg %p148
      $region58: #{deconvnet28_forward.4} parent=55 // pred_check_branch
        %2413 = sbr.rel (%p2411) target = $region60
      $region59: #{deconvnet28_forward.4} parent=55 // pred_region
        %s2414 = smul.u32 16, %s25
        %p2415 = scmp.lt.s32.totalorder %s26, 1
        %s2416 = scalar_select %p2415, %s26, 1
        %p2417 = scmp.lt.s32.totalorder %s27, 1
        %s2418 = scalar_select %p2417, %s27, 1
        %p2419 = scmp.lt.s32.totalorder %s2414, 15
        %s2420 = scalar_select %p2419, %s2414, 15
        %p2421 = scmp.lt.s32.totalorder %s24, 0
        %s2422 = scalar_select %p2421, %s24, 0
        %s2423 = sadd.s32 %s2422, %s2420
        %s2424 = smul.addr %s2418, 16
        %s2425 = sadd.s32 %s2423, %s2424
        %s2426 = smul.addr %s2416, 32
        %s2427 = sadd.s32 %s2425, %s2426
        %s2428 = smul.addr %s2427, 4
        %s2429 = scalar_lea.vmem %s3, %s2428
      $region60: #{deconvnet28_forward.4} parent=55 // pred_fallthru
        _
    $region56: #{deconvnet28_forward.4} parent=5 // pred_fallthru
      _
  $region6: #{deconvnet28_forward.4} parent=0 // loop_footer
    %s13 = sadd.s32 1, %s9
  $region7: #{deconvnet28_forward.4} parent=0 // loop_footer_branch
    %8 = sbr.rel target = $region3
  $region8: #{deconvnet28_forward.4} parent=0 // loop_exit
    _

// kernel: deconvnet28_forward.5
$region0: #{deconvnet28_forward.5}
  #allocation0 [shape = 'u32[]', space=smem, size = 0x4, offset = 0x4, fixed_abs, tag = 'smem constant byte address 0x4 - core index']
  #allocation1 [shape = 'u32[144,128]{1,0:T(1,128)}', space=vmem, size = 0x12000, scoped, tag = 'internal scratch']
  #allocation2 [shape = 'f32[1,1]{1,0:T(1,128)S(1)}', space=vmem, size = 0x200, scoped, tag = 'scoped memory for deconvnet28_forward.5']
  %s0 = inlined_call_operand.vmem [shape: bf16[450,32], index: 0, kind: input, shape index: {}]
  %s1 = inlined_call_operand.vmem [shape: bf16[2,2,32,16], index: 1, kind: input, shape index: {}]
  %s2 = inlined_call_operand.vmem [shape: f32[1,16], index: 2, kind: input, shape index: {}]
  %s3 = inlined_call_operand.vmem [shape: f32[1,16], index: 3, kind: input, shape index: {}]
  %s4 = inlined_call_operand.<no memory space> [shape: f32[1,1], index: 4, kind: input, shape index: {}]
  %s5 = inlined_call_operand.vmem [shape: f32[450,4], index: 5, kind: output, shape index: {}]
  %s6 = sld [smem:[#allocation0]]
  $region30: #{deconvnet28_forward.5} parent=0
    _
  %s8 = ssub.s32 1, %s6
  %s9 = scalar_select 0, %s8, %s6
  %v10 = vstv %s4
  %11 = vst [vmem:[#allocation2] sm:$0x1] %v10
  // Predicated region
  $region2: #{deconvnet28_forward.5} parent=0 // pred_check
    _
  $region3: #{deconvnet28_forward.5} parent=0 // pred_check_branch
    %13 = sbr.rel (0) target = $region5
  $region4: #{deconvnet28_forward.5} parent=0 // pred_region
    _
  $region5: #{deconvnet28_forward.5} parent=0 // pred_fallthru
    _
  // Predicated region
  $region6: #{deconvnet28_forward.5} parent=0 // pred_check
    _
  $region7: #{deconvnet28_forward.5} parent=0 // pred_check_branch
    %15 = sbr.rel (0) target = $region9
  $region8: #{deconvnet28_forward.5} parent=0 // pred_region
    _
  $region9: #{deconvnet28_forward.5} parent=0 // pred_fallthru
    _
  // Predicated region
  $region10: #{deconvnet28_forward.5} parent=0 // pred_check
    _
  $region11: #{deconvnet28_forward.5} parent=0 // pred_check_branch
    %17 = sbr.rel (0) target = $region13
  $region12: #{deconvnet28_forward.5} parent=0 // pred_region
    _
  $region13: #{deconvnet28_forward.5} parent=0 // pred_fallthru
    _
  // Predicated region
  $region14: #{deconvnet28_forward.5} parent=0 // pred_check
    _
  $region15: #{deconvnet28_forward.5} parent=0 // pred_check_branch
    %19 = sbr.rel (0) target = $region17
  $region16: #{deconvnet28_forward.5} parent=0 // pred_region
    _
  $region17: #{deconvnet28_forward.5} parent=0 // pred_fallthru
    _
  // Predicated region
  $region18: #{deconvnet28_forward.5} parent=0 // pred_check
    _
  $region19: #{deconvnet28_forward.5} parent=0 // pred_check_branch
    %21 = sbr.rel (0) target = $region21
  $region20: #{deconvnet28_forward.5} parent=0 // pred_region
    _
  $region21: #{deconvnet28_forward.5} parent=0 // pred_fallthru
    _
  %v23 = vld [vmem:[%s0] sm:$0xf]
  %v24 = vld [vmem:[%s0 + $0x4] sm:$0xf]
  %v25 = vld [vmem:[%s0 + $0x8] sm:$0xf]
  %v26 = vld [vmem:[%s0 + $0xc] sm:$0xf]
  %v27 = vld [vmem:[%s0 + $0x10] sm:$0xf]
  %v28 = vld [vmem:[%s0 + $0x14] sm:$0xf]
  %v29 = vld [vmem:[%s0 + $0x18] sm:$0xf]
  %v30 = vld [vmem:[%s0 + $0x1c] sm:$0xf]
  %v31 = vld [vmem:[%s0 + $0x20] sm:$0xf]
  %v32 = vld [vmem:[%s0 + $0x24] sm:$0xf]
  %v33 = vld [vmem:[%s0 + $0x28] sm:$0xf]
  %v34 = vld [vmem:[%s0 + $0x2c] sm:$0xf]
  %v35 = vld [vmem:[%s0 + $0x30] sm:$0xf]
  %v36 = vld [vmem:[%s0 + $0x34] sm:$0xf]
  %v37 = vld [vmem:[%s0 + $0x38] sm:$0xf]
  %v38 = vld [vmem:[%s0 + $0x3c] sm:$0xf]
  %v39 = vld [vmem:[%s0 + $0x40] sm:$0xf]
  %v40 = vld [vmem:[%s0 + $0x44] sm:$0xf]
  %v41 = vld [vmem:[%s0 + $0x48] sm:$0xf]
  %v42 = vld [vmem:[%s0 + $0x4c] sm:$0xf]
  %v43 = vld [vmem:[%s0 + $0x50] sm:$0xf]
  %v44 = vld [vmem:[%s0 + $0x54] sm:$0xf]
  %v45 = vld [vmem:[%s0 + $0x58] sm:$0xf]
  %v46 = vld [vmem:[%s0 + $0x5c] sm:$0xf]
  %v47 = vld [vmem:[%s0 + $0x60] sm:$0xf]
  %v48 = vld [vmem:[%s0 + $0x64] sm:$0xf]
  %v49 = vld [vmem:[%s0 + $0x68] sm:$0xf]
  %v50 = vld [vmem:[%s0 + $0x6c] sm:$0xf]
  %v51 = vld [vmem:[%s0 + $0x70] sm:$0xf]
  %v52 = vld [vmem:[%s0 + $0x74] sm:$0xf]
  %v53 = vld [vmem:[%s0 + $0x78] sm:$0xf]
  %v54 = vld [vmem:[%s0 + $0x7c] sm:$0xf]
  %v55 = vld [vmem:[%s0 + $0x80] sm:$0xf]
  %v56 = vld [vmem:[%s0 + $0x84] sm:$0xf]
  %v57 = vld [vmem:[%s0 + $0x88] sm:$0xf]
  %v58 = vld [vmem:[%s0 + $0x8c] sm:$0xf]
  %v59 = vld [vmem:[%s0 + $0x90] sm:$0xf]
  %v60 = vld [vmem:[%s0 + $0x94] sm:$0xf]
  %v61 = vld [vmem:[%s0 + $0x98] sm:$0xf]
  %v62 = vld [vmem:[%s0 + $0x9c] sm:$0xf]
  %v63 = vld [vmem:[%s0 + $0xa0] sm:$0xf]
  %v64 = vld [vmem:[%s0 + $0xa4] sm:$0xf]
  %v65 = vld [vmem:[%s0 + $0xa8] sm:$0xf]
  %v66 = vld [vmem:[%s0 + $0xac] sm:$0xf]
  %v67 = vld [vmem:[%s0 + $0xb0] sm:$0xf]
  %v68 = vld [vmem:[%s0 + $0xb4] sm:$0xf]
  %v69 = vld [vmem:[%s0 + $0xb8] sm:$0xf]
  %v70 = vld [vmem:[%s0 + $0xbc] sm:$0xf]
  %v71 = vld [vmem:[%s0 + $0xc0] sm:$0xf]
  %v72 = vld [vmem:[%s0 + $0xc4] sm:$0xf]
  %v73 = vld [vmem:[%s0 + $0xc8] sm:$0xf]
  %v74 = vld [vmem:[%s0 + $0xcc] sm:$0xf]
  %v75 = vld [vmem:[%s0 + $0xd0] sm:$0xf]
  %v76 = vld [vmem:[%s0 + $0xd4] sm:$0xf]
  %v77 = vld [vmem:[%s0 + $0xd8] sm:$0xf]
  %v78 = vld [vmem:[%s0 + $0xdc] sm:$0xf]
  %v79 = vld [vmem:[%s0 + $0xe0] sm:$0x1]
  %s80 = scalar_lea.vmem %s1, 48
  %v81 = vld [vmem:[%s80] sm:$0xf]
  %v82 = vld [vmem:[%s80 + $0x4] sm:$0xf]
  %v83 = vld [vmem:[%s80 + $0x8] sm:$0xf]
  %v84 = vld [vmem:[%s80 + $0xc] sm:$0xf]
  %v85 = vld [vmem:[%s2] sm:$0x1]
  %v87 = vlaneseq
  %v88 = vshrl.u32 %v87, 7
  %v89 = vsub.s32 0, %v88
  %v90 = vrot.slane %v85, %v89
  %v149 = vunpack.c.l.b16 %v23
  %v150 = vunpack.c.l.b16 %v24
  %v151 = vunpack.c.l.b16 %v25
  %v152 = vunpack.c.l.b16 %v26
  %v153 = vunpack.c.l.b16 %v27
  %v154 = vunpack.c.l.b16 %v28
  %v155 = vunpack.c.l.b16 %v29
  %v156 = vunpack.c.l.b16 %v30
  %v157 = vunpack.c.l.b16 %v31
  %v158 = vunpack.c.l.b16 %v32
  %v159 = vunpack.c.l.b16 %v33
  %v160 = vunpack.c.l.b16 %v34
  %v161 = vunpack.c.l.b16 %v35
  %v162 = vunpack.c.l.b16 %v36
  %v163 = vunpack.c.l.b16 %v37
  %v164 = vunpack.c.l.b16 %v38
  %v165 = vunpack.c.l.b16 %v39
  %v166 = vunpack.c.l.b16 %v40
  %v167 = vunpack.c.l.b16 %v41
  %v168 = vunpack.c.l.b16 %v42
  %v169 = vunpack.c.l.b16 %v43
  %v170 = vunpack.c.l.b16 %v44
  %v171 = vunpack.c.l.b16 %v45
  %v172 = vunpack.c.l.b16 %v46
  %v173 = vunpack.c.l.b16 %v47
  %v174 = vunpack.c.l.b16 %v48
  %v175 = vunpack.c.l.b16 %v49
  %v176 = vunpack.c.l.b16 %v50
  %v177 = vunpack.c.l.b16 %v51
  %v178 = vunpack.c.l.b16 %v52
  %v179 = vunpack.c.l.b16 %v53
  %v180 = vunpack.c.l.b16 %v54
  %v181 = vunpack.c.l.b16 %v55
  %v182 = vunpack.c.l.b16 %v56
  %v183 = vunpack.c.l.b16 %v57
  %v184 = vunpack.c.l.b16 %v58
  %v185 = vunpack.c.l.b16 %v59
  %v186 = vunpack.c.l.b16 %v60
  %v187 = vunpack.c.l.b16 %v61
  %v188 = vunpack.c.l.b16 %v62
  %v189 = vunpack.c.l.b16 %v63
  %v190 = vunpack.c.l.b16 %v64
  %v191 = vunpack.c.l.b16 %v65
  %v192 = vunpack.c.l.b16 %v66
  %v193 = vunpack.c.l.b16 %v67
  %v194 = vunpack.c.l.b16 %v68
  %v195 = vunpack.c.l.b16 %v69
  %v196 = vunpack.c.l.b16 %v70
  %v197 = vunpack.c.l.b16 %v71
  %v198 = vunpack.c.l.b16 %v72
  %v199 = vunpack.c.l.b16 %v73
  %v200 = vunpack.c.l.b16 %v74
  %v201 = vunpack.c.l.b16 %v75
  %v202 = vunpack.c.l.b16 %v76
  %v203 = vunpack.c.l.b16 %v77
  %v204 = vunpack.c.l.b16 %v78
  %v205 = vunpack.c.l.b16 %v79
  %v206 = vpack.c.b16 %v150, %v149
  %v207 = vpack.c.b16 %v152, %v151
  %v208 = vpack.c.b16 %v154, %v153
  %v209 = vpack.c.b16 %v156, %v155
  %v210 = vpack.c.b16 %v158, %v157
  %v211 = vpack.c.b16 %v160, %v159
  %v212 = vpack.c.b16 %v162, %v161
  %v213 = vpack.c.b16 %v164, %v163
  %v214 = vpack.c.b16 %v166, %v165
  %v215 = vpack.c.b16 %v168, %v167
  %v216 = vpack.c.b16 %v170, %v169
  %v217 = vpack.c.b16 %v172, %v171
  %v218 = vpack.c.b16 %v174, %v173
  %v219 = vpack.c.b16 %v176, %v175
  %v220 = vpack.c.b16 %v178, %v177
  %v221 = vpack.c.b16 %v180, %v179
  %v222 = vpack.c.b16 %v182, %v181
  %v223 = vpack.c.b16 %v184, %v183
  %v224 = vpack.c.b16 %v186, %v185
  %v225 = vpack.c.b16 %v188, %v187
  %v226 = vpack.c.b16 %v190, %v189
  %v227 = vpack.c.b16 %v192, %v191
  %v228 = vpack.c.b16 %v194, %v193
  %v229 = vpack.c.b16 %v196, %v195
  %v230 = vpack.c.b16 %v198, %v197
  %v231 = vpack.c.b16 %v200, %v199
  %v232 = vpack.c.b16 %v202, %v201
  %v233 = vpack.c.b16 %v204, %v203
  %v234 = vpack.c.b16 %v205, %v205
  %v239 = vunpack.c.l.b16 %v81
  %v240 = vunpack.c.l.b16 %v82
  %v241 = vunpack.c.l.b16 %v83
  %v242 = vunpack.c.l.b16 %v84
  %v243 = vpack.c.b16 %v240, %v239
  %v244 = vpack.c.b16 %v242, %v241
  %vm247 = vcmask 261120
  %v249 = vsel %vm247, %v206, 0
  %v252 = vsel %vm247, %v207, 0
  %v255 = vsel %vm247, %v208, 0
  %v258 = vsel %vm247, %v209, 0
  %v261 = vsel %vm247, %v210, 0
  %v264 = vsel %vm247, %v211, 0
  %v267 = vsel %vm247, %v212, 0
  %v270 = vsel %vm247, %v213, 0
  %v273 = vsel %vm247, %v214, 0
  %v276 = vsel %vm247, %v215, 0
  %v279 = vsel %vm247, %v216, 0
  %v282 = vsel %vm247, %v217, 0
  %v285 = vsel %vm247, %v218, 0
  %v288 = vsel %vm247, %v219, 0
  %v291 = vsel %vm247, %v220, 0
  %v294 = vsel %vm247, %v221, 0
  %v297 = vsel %vm247, %v222, 0
  %v300 = vsel %vm247, %v223, 0
  %v303 = vsel %vm247, %v224, 0
  %v306 = vsel %vm247, %v225, 0
  %v309 = vsel %vm247, %v226, 0
  %v312 = vsel %vm247, %v227, 0
  %v315 = vsel %vm247, %v228, 0
  %v318 = vsel %vm247, %v229, 0
  %v321 = vsel %vm247, %v230, 0
  %v324 = vsel %vm247, %v231, 0
  %v327 = vsel %vm247, %v232, 0
  %v330 = vsel %vm247, %v233, 0
  %v333 = vsel %vm247, %v234, 0
  %335 = vmatprep.subr.bf16.mxu0 0
  %336 = vmatpush1.bf16.msra.mxu0 %v243
  %337 = vmatprep.subr.bf16.mxu0 0
  %338 = vmatpush1.bf16.msra.mxu0 %v244
  %339 = vmatprep.subr.bf16.mxu0 0
  %340 = vmatpush1.bf16.msra.mxu0 0
  %341 = vmatprep.subr.bf16.mxu0 0
  %342 = vmatpush1.bf16.msra.mxu0 0
  %343 = vmatprep.subr.bf16.mxu0 0
  %344 = vmatpush1.bf16.msra.mxu0 0
  %345 = vmatprep.subr.bf16.mxu0 0
  %346 = vmatpush1.bf16.msra.mxu0 0
  %347 = vmatprep.subr.bf16.mxu0 0
  %348 = vmatpush1.bf16.msra.mxu0 0
  %349 = vmatprep.subr.bf16.mxu0 0
  %350 = vmatpush1.bf16.msra.mxu0 0
  %351 = vmatprep.subr.bf16.mxu0 0
  %352 = vmatpush1.bf16.msra.mxu0 0
  %353 = vmatprep.subr.bf16.mxu0 0
  %354 = vmatpush1.bf16.msra.mxu0 0
  %355 = vmatprep.subr.bf16.mxu0 0
  %356 = vmatpush1.bf16.msra.mxu0 0
  %357 = vmatprep.subr.bf16.mxu0 0
  %358 = vmatpush1.bf16.msra.mxu0 0
  %359 = vmatprep.subr.bf16.mxu0 0
  %360 = vmatpush1.bf16.msra.mxu0 0
  %361 = vmatprep.subr.bf16.mxu0 0
  %362 = vmatpush1.bf16.msra.mxu0 0
  %363 = vmatprep.subr.bf16.mxu0 0
  %364 = vmatpush1.bf16.msra.mxu0 0
  %365 = vmatprep.subr.bf16.mxu0 0
  %366 = vmatpush1.bf16.msra.mxu0 0
  %367 = vmatprep.mubr.bf16.mxu0 0
  %368 = vmatmul.mubr.bf16.gmra.mrb[0].mxu0 %v249
  %v369 = vpop.f32.mrb[0].mxu0
  %v370 = vadd.f32 %v90, %v369
  %v371 = vpop.f32.mrb[0].mxu0
  %v372 = vpop.f32.mrb[0].mxu0
  %v373 = vadd.f32 %v90, %v372
  %v374 = vpop.f32.mrb[0].mxu0
  %375 = vmatprep.mubr.bf16.mxu0 0
  %376 = vmatmul.mubr.bf16.gmra.mrb[0].mxu0 %v252
  %v377 = vpop.f32.mrb[0].mxu0
  %v378 = vadd.f32 %v90, %v377
  %v379 = vpop.f32.mrb[0].mxu0
  %v380 = vpop.f32.mrb[0].mxu0
  %v381 = vadd.f32 %v90, %v380
  %v382 = vpop.f32.mrb[0].mxu0
  %383 = vmatprep.mubr.bf16.mxu0 0
  %384 = vmatmul.mubr.bf16.gmra.mrb[0].mxu0 %v255
  %v385 = vpop.f32.mrb[0].mxu0
  %v386 = vadd.f32 %v90, %v385
  %v387 = vpop.f32.mrb[0].mxu0
  %v388 = vpop.f32.mrb[0].mxu0
  %v389 = vadd.f32 %v90, %v388
  %v390 = vpop.f32.mrb[0].mxu0
  %391 = vmatprep.mubr.bf16.mxu0 0
  %392 = vmatmul.mubr.bf16.gmra.mrb[0].mxu0 %v258
  %v393 = vpop.f32.mrb[0].mxu0
  %v394 = vadd.f32 %v90, %v393
  %v395 = vpop.f32.mrb[0].mxu0
  %v396 = vpop.f32.mrb[0].mxu0
  %v397 = vadd.f32 %v90, %v396
  %v398 = vpop.f32.mrb[0].mxu0
  %399 = vmatprep.mubr.bf16.mxu0 0
  %400 = vmatmul.mubr.bf16.gmra.mrb[0].mxu0 %v261
  %v401 = vpop.f32.mrb[0].mxu0
  %v402 = vadd.f32 %v90, %v401
  %v403 = vpop.f32.mrb[0].mxu0
  %v404 = vpop.f32.mrb[0].mxu0
  %v405 = vadd.f32 %v90, %v404
  %v406 = vpop.f32.mrb[0].mxu0
  %407 = vmatprep.mubr.bf16.mxu0 0
  %408 = vmatmul.mubr.bf16.gmra.mrb[0].mxu0 %v264
  %v409 = vpop.f32.mrb[0].mxu0
  %v410 = vadd.f32 %v90, %v409
  %v411 = vpop.f32.mrb[0].mxu0
  %v412 = vpop.f32.mrb[0].mxu0
  %v413 = vadd.f32 %v90, %v412
  %v414 = vpop.f32.mrb[0].mxu0
  %415 = vmatprep.mubr.bf16.mxu0 0
  %416 = vmatmul.mubr.bf16.gmra.mrb[0].mxu0 %v267
  %v417 = vpop.f32.mrb[0].mxu0
  %v418 = vadd.f32 %v90, %v417
  %v419 = vpop.f32.mrb[0].mxu0
  %v420 = vpop.f32.mrb[0].mxu0
  %v421 = vadd.f32 %v90, %v420
  %v422 = vpop.f32.mrb[0].mxu0
  %423 = vmatprep.mubr.bf16.mxu0 0
  %424 = vmatmul.mubr.bf16.gmra.mrb[0].mxu0 %v270
  %v425 = vpop.f32.mrb[0].mxu0
  %v426 = vadd.f32 %v90, %v425
  %v427 = vpop.f32.mrb[0].mxu0
  %v428 = vpop.f32.mrb[0].mxu0
  %v429 = vadd.f32 %v90, %v428
  %v430 = vpop.f32.mrb[0].mxu0
  %431 = vmatprep.mubr.bf16.mxu0 0
  %432 = vmatmul.mubr.bf16.gmra.mrb[0].mxu0 %v273
  %v433 = vpop.f32.mrb[0].mxu0
  %v434 = vadd.f32 %v90, %v433
  %v435 = vpop.f32.mrb[0].mxu0
  %v436 = vpop.f32.mrb[0].mxu0
  %v437 = vadd.f32 %v90, %v436
  %v438 = vpop.f32.mrb[0].mxu0
  %439 = vmatprep.mubr.bf16.mxu0 0
  %440 = vmatmul.mubr.bf16.gmra.mrb[0].mxu0 %v276
  %v441 = vpop.f32.mrb[0].mxu0
  %v442 = vadd.f32 %v90, %v441
  %v443 = vpop.f32.mrb[0].mxu0
  %v444 = vpop.f32.mrb[0].mxu0
  %v445 = vadd.f32 %v90, %v444
  %v446 = vpop.f32.mrb[0].mxu0
  %447 = vmatprep.mubr.bf16.mxu0 0
  %448 = vmatmul.mubr.bf16.gmra.mrb[0].mxu0 %v279
  %v449 = vpop.f32.mrb[0].mxu0
  %v450 = vadd.f32 %v90, %v449
  %v451 = vpop.f32.mrb[0].mxu0
  %v452 = vpop.f32.mrb[0].mxu0
  %v453 = vadd.f32 %v90, %v452
  %v454 = vpop.f32.mrb[0].mxu0
  %455 = vmatprep.mubr.bf16.mxu0 0
  %456 = vmatmul.mubr.bf16.gmra.mrb[0].mxu0 %v282
  %v457 = vpop.f32.mrb[0].mxu0
  %v458 = vadd.f32 %v90, %v457
  %v459 = vpop.f32.mrb[0].mxu0
  %v460 = vpop.f32.mrb[0].mxu0
  %v461 = vadd.f32 %v90, %v460
  %v462 = vpop.f32.mrb[0].mxu0
  %463 = vmatprep.mubr.bf16.mxu0 0
  %464 = vmatmul.mubr.bf16.gmra.mrb[0].mxu0 %v285
  %v465 = vpop.f32.mrb[0].mxu0
  %v466 = vadd.f32 %v90, %v465
  %v467 = vpop.f32.mrb[0].mxu0
  %v468 = vpop.f32.mrb[0].mxu0
  %v469 = vadd.f32 %v90, %v468
  %v470 = vpop.f32.mrb[0].mxu0
  %471 = vmatprep.mubr.bf16.mxu0 0
  %472 = vmatmul.mubr.bf16.gmra.mrb[0].mxu0 %v288
  %v473 = vpop.f32.mrb[0].mxu0
  %v474 = vadd.f32 %v90, %v473
  %v475 = vpop.f32.mrb[0].mxu0
  %v476 = vpop.f32.mrb[0].mxu0
  %v477 = vadd.f32 %v90, %v476
  %v478 = vpop.f32.mrb[0].mxu0
  %479 = vmatprep.mubr.bf16.mxu0 0
  %480 = vmatmul.mubr.bf16.gmra.mrb[0].mxu0 %v291
  %v481 = vpop.f32.mrb[0].mxu0
  %v482 = vadd.f32 %v90, %v481
  %v483 = vpop.f32.mrb[0].mxu0
  %v484 = vpop.f32.mrb[0].mxu0
  %v485 = vadd.f32 %v90, %v484
  %v486 = vpop.f32.mrb[0].mxu0
  %487 = vmatprep.mubr.bf16.mxu0 0
  %488 = vmatmul.mubr.bf16.gmra.mrb[0].mxu0 %v294
  %v489 = vpop.f32.mrb[0].mxu0
  %v490 = vadd.f32 %v90, %v489
  %v491 = vpop.f32.mrb[0].mxu0
  %v492 = vpop.f32.mrb[0].mxu0
  %v493 = vadd.f32 %v90, %v492
  %v494 = vpop.f32.mrb[0].mxu0
  %495 = vmatprep.mubr.bf16.mxu0 0
  %496 = vmatmul.mubr.bf16.gmra.mrb[0].mxu0 %v297
  %v497 = vpop.f32.mrb[0].mxu0
  %v498 = vadd.f32 %v90, %v497
  %v499 = vpop.f32.mrb[0].mxu0
  %v500 = vpop.f32.mrb[0].mxu0
  %v501 = vadd.f32 %v90, %v500
  %v502 = vpop.f32.mrb[0].mxu0
  %503 = vmatprep.mubr.bf16.mxu0 0
  %504 = vmatmul.mubr.bf16.gmra.mrb[0].mxu0 %v300
  %v505 = vpop.f32.mrb[0].mxu0
  %v506 = vadd.f32 %v90, %v505
  %v507 = vpop.f32.mrb[0].mxu0
  %v508 = vpop.f32.mrb[0].mxu0
  %v509 = vadd.f32 %v90, %v508
  %v510 = vpop.f32.mrb[0].mxu0
  %511 = vmatprep.mubr.bf16.mxu0 0
  %512 = vmatmul.mubr.bf16.gmra.mrb[0].mxu0 %v303
  %v513 = vpop.f32.mrb[0].mxu0
  %v514 = vadd.f32 %v90, %v513
  %v515 = vpop.f32.mrb[0].mxu0
  %v516 = vpop.f32.mrb[0].mxu0
  %v517 = vadd.f32 %v90, %v516
  %v518 = vpop.f32.mrb[0].mxu0
  %519 = vmatprep.mubr.bf16.mxu0 0
  %520 = vmatmul.mubr.bf16.gmra.mrb[0].mxu0 %v306
  %v521 = vpop.f32.mrb[0].mxu0
  %v522 = vadd.f32 %v90, %v521
  %v523 = vpop.f32.mrb[0].mxu0
  %v524 = vpop.f32.mrb[0].mxu0
  %v525 = vadd.f32 %v90, %v524
  %v526 = vpop.f32.mrb[0].mxu0
  %527 = vmatprep.mubr.bf16.mxu0 0
  %528 = vmatmul.mubr.bf16.gmra.mrb[0].mxu0 %v309
  %v529 = vpop.f32.mrb[0].mxu0
  %v530 = vadd.f32 %v90, %v529
  %v531 = vpop.f32.mrb[0].mxu0
  %v532 = vpop.f32.mrb[0].mxu0
  %v533 = vadd.f32 %v90, %v532
  %v534 = vpop.f32.mrb[0].mxu0
  %535 = vmatprep.mubr.bf16.mxu0 0
  %536 = vmatmul.mubr.bf16.gmra.mrb[0].mxu0 %v312
  %v537 = vpop.f32.mrb[0].mxu0
  %v538 = vadd.f32 %v90, %v537
  %v539 = vpop.f32.mrb[0].mxu0
  %v540 = vpop.f32.mrb[0].mxu0
  %v541 = vadd.f32 %v90, %v540
  %v542 = vpop.f32.mrb[0].mxu0
  %543 = vmatprep.mubr.bf16.mxu0 0
  %544 = vmatmul.mubr.bf16.gmra.mrb[0].mxu0 %v315
  %v545 = vpop.f32.mrb[0].mxu0
  %v546 = vadd.f32 %v90, %v545
  %v547 = vpop.f32.mrb[0].mxu0
  %v548 = vpop.f32.mrb[0].mxu0
  %v549 = vadd.f32 %v90, %v548
  %v550 = vpop.f32.mrb[0].mxu0
  %551 = vmatprep.mubr.bf16.mxu0 0
  %552 = vmatmul.mubr.bf16.gmra.mrb[0].mxu0 %v318
  %v553 = vpop.f32.mrb[0].mxu0
  %v554 = vadd.f32 %v90, %v553
  %v555 = vpop.f32.mrb[0].mxu0
  %v556 = vpop.f32.mrb[0].mxu0
  %v557 = vadd.f32 %v90, %v556
  %v558 = vpop.f32.mrb[0].mxu0
  %559 = vmatprep.mubr.bf16.mxu0 0
  %560 = vmatmul.mubr.bf16.gmra.mrb[0].mxu0 %v321
  %v561 = vpop.f32.mrb[0].mxu0
  %v562 = vadd.f32 %v90, %v561
  %v563 = vpop.f32.mrb[0].mxu0
  %v564 = vpop.f32.mrb[0].mxu0
  %v565 = vadd.f32 %v90, %v564
  %v566 = vpop.f32.mrb[0].mxu0
  %567 = vmatprep.mubr.bf16.mxu0 0
  %568 = vmatmul.mubr.bf16.gmra.mrb[0].mxu0 %v324
  %v569 = vpop.f32.mrb[0].mxu0
  %v570 = vadd.f32 %v90, %v569
  %v571 = vpop.f32.mrb[0].mxu0
  %v572 = vpop.f32.mrb[0].mxu0
  %v573 = vadd.f32 %v90, %v572
  %v574 = vpop.f32.mrb[0].mxu0
  %575 = vmatprep.mubr.bf16.mxu0 0
  %576 = vmatmul.mubr.bf16.gmra.mrb[0].mxu0 %v327
  %v577 = vpop.f32.mrb[0].mxu0
  %v578 = vadd.f32 %v90, %v577
  %v579 = vpop.f32.mrb[0].mxu0
  %v580 = vpop.f32.mrb[0].mxu0
  %v581 = vadd.f32 %v90, %v580
  %v582 = vpop.f32.mrb[0].mxu0
  %583 = vmatprep.mubr.bf16.mxu0 0
  %584 = vmatmul.mubr.bf16.gmra.mrb[0].mxu0 %v330
  %v585 = vpop.f32.mrb[0].mxu0
  %v586 = vadd.f32 %v90, %v585
  %v587 = vpop.f32.mrb[0].mxu0
  %v588 = vpop.f32.mrb[0].mxu0
  %v589 = vadd.f32 %v90, %v588
  %v590 = vpop.f32.mrb[0].mxu0
  %591 = vmatprep.mubr.bf16.mxu0 0
  %592 = vmatmul.mubr.bf16.gmra.mrb[0].mxu0 %v333
  %v593 = vpop.f32.mrb[0].mxu0
  %v594 = vadd.f32 %v90, %v593
  %v595 = vpop.f32.mrb[0].mxu0
  %v596 = vpop.f32.mrb[0].mxu0
  %v597 = vpop.f32.mrb[0].mxu0
  %598 = vdwg.mxu0
  %v599 = vmax.f32 %v370, 0.0
  %v600 = vmax.f32 %v373, 0.0
  %v601 = vmax.f32 %v378, 0.0
  %v602 = vmax.f32 %v381, 0.0
  %v603 = vmax.f32 %v386, 0.0
  %v604 = vmax.f32 %v389, 0.0
  %v605 = vmax.f32 %v394, 0.0
  %v606 = vmax.f32 %v397, 0.0
  %v607 = vmax.f32 %v402, 0.0
  %v608 = vmax.f32 %v405, 0.0
  %v609 = vmax.f32 %v410, 0.0
  %v610 = vmax.f32 %v413, 0.0
  %v611 = vmax.f32 %v418, 0.0
  %v612 = vmax.f32 %v421, 0.0
  %v613 = vmax.f32 %v426, 0.0
  %v614 = vmax.f32 %v429, 0.0
  %v615 = vmax.f32 %v434, 0.0
  %v616 = vmax.f32 %v437, 0.0
  %v617 = vmax.f32 %v442, 0.0
  %v618 = vmax.f32 %v445, 0.0
  %v619 = vmax.f32 %v450, 0.0
  %v620 = vmax.f32 %v453, 0.0
  %v621 = vmax.f32 %v458, 0.0
  %v622 = vmax.f32 %v461, 0.0
  %v623 = vmax.f32 %v466, 0.0
  %v624 = vmax.f32 %v469, 0.0
  %v625 = vmax.f32 %v474, 0.0
  %v626 = vmax.f32 %v477, 0.0
  %v627 = vmax.f32 %v482, 0.0
  %v628 = vmax.f32 %v485, 0.0
  %v629 = vmax.f32 %v490, 0.0
  %v630 = vmax.f32 %v493, 0.0
  %v631 = vmax.f32 %v498, 0.0
  %v632 = vmax.f32 %v501, 0.0
  %v633 = vmax.f32 %v506, 0.0
  %v634 = vmax.f32 %v509, 0.0
  %v635 = vmax.f32 %v514, 0.0
  %v636 = vmax.f32 %v517, 0.0
  %v637 = vmax.f32 %v522, 0.0
  %v638 = vmax.f32 %v525, 0.0
  %v639 = vmax.f32 %v530, 0.0
  %v640 = vmax.f32 %v533, 0.0
  %v641 = vmax.f32 %v538, 0.0
  %v642 = vmax.f32 %v541, 0.0
  %v643 = vmax.f32 %v546, 0.0
  %v644 = vmax.f32 %v549, 0.0
  %v645 = vmax.f32 %v554, 0.0
  %v646 = vmax.f32 %v557, 0.0
  %v647 = vmax.f32 %v562, 0.0
  %v648 = vmax.f32 %v565, 0.0
  %v649 = vmax.f32 %v570, 0.0
  %v650 = vmax.f32 %v573, 0.0
  %v651 = vmax.f32 %v578, 0.0
  %v652 = vmax.f32 %v581, 0.0
  %v653 = vmax.f32 %v586, 0.0
  %v654 = vmax.f32 %v589, 0.0
  %v655 = vmax.f32 %v594, 0.0
  %v656 = vld [vmem:[%s3] sm:$0x1]
  %v658 = vlaneseq
  %v659 = vshrl.u32 %v658, 7
  %v660 = vsub.s32 0, %v659
  %v661 = vrot.slane %v656, %v660
  %v663 = vmul.f32 %v599, %v661
  %v664 = vmul.f32 %v600, %v661
  %v665 = vmul.f32 %v601, %v661
  %v666 = vmul.f32 %v602, %v661
  %v667 = vmul.f32 %v603, %v661
  %v668 = vmul.f32 %v604, %v661
  %v669 = vmul.f32 %v605, %v661
  %v670 = vmul.f32 %v606, %v661
  %v671 = vmul.f32 %v607, %v661
  %v672 = vmul.f32 %v608, %v661
  %v673 = vmul.f32 %v609, %v661
  %v674 = vmul.f32 %v610, %v661
  %v675 = vmul.f32 %v611, %v661
  %v676 = vmul.f32 %v612, %v661
  %v677 = vmul.f32 %v613, %v661
  %v678 = vmul.f32 %v614, %v661
  %v679 = vmul.f32 %v615, %v661
  %v680 = vmul.f32 %v616, %v661
  %v681 = vmul.f32 %v617, %v661
  %v682 = vmul.f32 %v618, %v661
  %v683 = vmul.f32 %v619, %v661
  %v684 = vmul.f32 %v620, %v661
  %v685 = vmul.f32 %v621, %v661
  %v686 = vmul.f32 %v622, %v661
  %v687 = vmul.f32 %v623, %v661
  %v688 = vmul.f32 %v624, %v661
  %v689 = vmul.f32 %v625, %v661
  %v690 = vmul.f32 %v626, %v661
  %v691 = vmul.f32 %v627, %v661
  %v692 = vmul.f32 %v628, %v661
  %v693 = vmul.f32 %v629, %v661
  %v694 = vmul.f32 %v630, %v661
  %v695 = vmul.f32 %v631, %v661
  %v696 = vmul.f32 %v632, %v661
  %v697 = vmul.f32 %v633, %v661
  %v698 = vmul.f32 %v634, %v661
  %v699 = vmul.f32 %v635, %v661
  %v700 = vmul.f32 %v636, %v661
  %v701 = vmul.f32 %v637, %v661
  %v702 = vmul.f32 %v638, %v661
  %v703 = vmul.f32 %v639, %v661
  %v704 = vmul.f32 %v640, %v661
  %v705 = vmul.f32 %v641, %v661
  %v706 = vmul.f32 %v642, %v661
  %v707 = vmul.f32 %v643, %v661
  %v708 = vmul.f32 %v644, %v661
  %v709 = vmul.f32 %v645, %v661
  %v710 = vmul.f32 %v646, %v661
  %v711 = vmul.f32 %v647, %v661
  %v712 = vmul.f32 %v648, %v661
  %v713 = vmul.f32 %v649, %v661
  %v714 = vmul.f32 %v650, %v661
  %v715 = vmul.f32 %v651, %v661
  %v716 = vmul.f32 %v652, %v661
  %v717 = vmul.f32 %v653, %v661
  %v718 = vmul.f32 %v654, %v661
  %v719 = vmul.f32 %v655, %v661
  %vm720 = vcmask 130048
  %v721 = vsel %vm720, %v663, 0.0
  %722 = vadd.xlane.f32.xlu0 %v721
  %v723 = vpop.xlane.xlu0 %722
  %v724 = vsel %vm720, %v664, 0.0
  %725 = vadd.xlane.f32.xlu0 %v724
  %v726 = vpop.xlane.xlu0 %725
  %v727 = vsel %vm720, %v665, 0.0
  %728 = vadd.xlane.f32.xlu0 %v727
  %v729 = vpop.xlane.xlu0 %728
  %v730 = vsel %vm720, %v666, 0.0
  %731 = vadd.xlane.f32.xlu0 %v730
  %v732 = vpop.xlane.xlu0 %731
  %v733 = vsel %vm720, %v667, 0.0
  %734 = vadd.xlane.f32.xlu0 %v733
  %v735 = vpop.xlane.xlu0 %734
  %v736 = vsel %vm720, %v668, 0.0
  %737 = vadd.xlane.f32.xlu0 %v736
  %v738 = vpop.xlane.xlu0 %737
  %v739 = vsel %vm720, %v669, 0.0
  %740 = vadd.xlane.f32.xlu0 %v739
  %v741 = vpop.xlane.xlu0 %740
  %v742 = vsel %vm720, %v670, 0.0
  %743 = vadd.xlane.f32.xlu0 %v742
  %v744 = vpop.xlane.xlu0 %743
  %v745 = vsel %vm720, %v671, 0.0
  %746 = vadd.xlane.f32.xlu0 %v745
  %v747 = vpop.xlane.xlu0 %746
  %v748 = vsel %vm720, %v672, 0.0
  %749 = vadd.xlane.f32.xlu0 %v748
  %v750 = vpop.xlane.xlu0 %749
  %v751 = vsel %vm720, %v673, 0.0
  %752 = vadd.xlane.f32.xlu0 %v751
  %v753 = vpop.xlane.xlu0 %752
  %v754 = vsel %vm720, %v674, 0.0
  %755 = vadd.xlane.f32.xlu0 %v754
  %v756 = vpop.xlane.xlu0 %755
  %v757 = vsel %vm720, %v675, 0.0
  %758 = vadd.xlane.f32.xlu0 %v757
  %v759 = vpop.xlane.xlu0 %758
  %v760 = vsel %vm720, %v676, 0.0
  %761 = vadd.xlane.f32.xlu0 %v760
  %v762 = vpop.xlane.xlu0 %761
  %v763 = vsel %vm720, %v677, 0.0
  %764 = vadd.xlane.f32.xlu0 %v763
  %v765 = vpop.xlane.xlu0 %764
  %v766 = vsel %vm720, %v678, 0.0
  %767 = vadd.xlane.f32.xlu0 %v766
  %v768 = vpop.xlane.xlu0 %767
  %v769 = vsel %vm720, %v679, 0.0
  %770 = vadd.xlane.f32.xlu0 %v769
  %v771 = vpop.xlane.xlu0 %770
  %v772 = vsel %vm720, %v680, 0.0
  %773 = vadd.xlane.f32.xlu0 %v772
  %v774 = vpop.xlane.xlu0 %773
  %v775 = vsel %vm720, %v681, 0.0
  %776 = vadd.xlane.f32.xlu0 %v775
  %v777 = vpop.xlane.xlu0 %776
  %v778 = vsel %vm720, %v682, 0.0
  %779 = vadd.xlane.f32.xlu0 %v778
  %v780 = vpop.xlane.xlu0 %779
  %v781 = vsel %vm720, %v683, 0.0
  %782 = vadd.xlane.f32.xlu0 %v781
  %v783 = vpop.xlane.xlu0 %782
  %v784 = vsel %vm720, %v684, 0.0
  %785 = vadd.xlane.f32.xlu0 %v784
  %v786 = vpop.xlane.xlu0 %785
  %v787 = vsel %vm720, %v685, 0.0
  %788 = vadd.xlane.f32.xlu0 %v787
  %v789 = vpop.xlane.xlu0 %788
  %v790 = vsel %vm720, %v686, 0.0
  %791 = vadd.xlane.f32.xlu0 %v790
  %v792 = vpop.xlane.xlu0 %791
  %v793 = vsel %vm720, %v687, 0.0
  %794 = vadd.xlane.f32.xlu0 %v793
  %v795 = vpop.xlane.xlu0 %794
  %v796 = vsel %vm720, %v688, 0.0
  %797 = vadd.xlane.f32.xlu0 %v796
  %v798 = vpop.xlane.xlu0 %797
  %v799 = vsel %vm720, %v689, 0.0
  %800 = vadd.xlane.f32.xlu0 %v799
  %v801 = vpop.xlane.xlu0 %800
  %v802 = vsel %vm720, %v690, 0.0
  %803 = vadd.xlane.f32.xlu0 %v802
  %v804 = vpop.xlane.xlu0 %803
  %v805 = vsel %vm720, %v691, 0.0
  %806 = vadd.xlane.f32.xlu0 %v805
  %v807 = vpop.xlane.xlu0 %806
  %v808 = vsel %vm720, %v692, 0.0
  %809 = vadd.xlane.f32.xlu0 %v808
  %v810 = vpop.xlane.xlu0 %809
  %v811 = vsel %vm720, %v693, 0.0
  %812 = vadd.xlane.f32.xlu0 %v811
  %v813 = vpop.xlane.xlu0 %812
  %v814 = vsel %vm720, %v694, 0.0
  %815 = vadd.xlane.f32.xlu0 %v814
  %v816 = vpop.xlane.xlu0 %815
  %v817 = vsel %vm720, %v695, 0.0
  %818 = vadd.xlane.f32.xlu0 %v817
  %v819 = vpop.xlane.xlu0 %818
  %v820 = vsel %vm720, %v696, 0.0
  %821 = vadd.xlane.f32.xlu0 %v820
  %v822 = vpop.xlane.xlu0 %821
  %v823 = vsel %vm720, %v697, 0.0
  %824 = vadd.xlane.f32.xlu0 %v823
  %v825 = vpop.xlane.xlu0 %824
  %v826 = vsel %vm720, %v698, 0.0
  %827 = vadd.xlane.f32.xlu0 %v826
  %v828 = vpop.xlane.xlu0 %827
  %v829 = vsel %vm720, %v699, 0.0
  %830 = vadd.xlane.f32.xlu0 %v829
  %v831 = vpop.xlane.xlu0 %830
  %v832 = vsel %vm720, %v700, 0.0
  %833 = vadd.xlane.f32.xlu0 %v832
  %v834 = vpop.xlane.xlu0 %833
  %v835 = vsel %vm720, %v701, 0.0
  %836 = vadd.xlane.f32.xlu0 %v835
  %v837 = vpop.xlane.xlu0 %836
  %v838 = vsel %vm720, %v702, 0.0
  %839 = vadd.xlane.f32.xlu0 %v838
  %v840 = vpop.xlane.xlu0 %839
  %v841 = vsel %vm720, %v703, 0.0
  %842 = vadd.xlane.f32.xlu0 %v841
  %v843 = vpop.xlane.xlu0 %842
  %v844 = vsel %vm720, %v704, 0.0
  %845 = vadd.xlane.f32.xlu0 %v844
  %v846 = vpop.xlane.xlu0 %845
  %v847 = vsel %vm720, %v705, 0.0
  %848 = vadd.xlane.f32.xlu0 %v847
  %v849 = vpop.xlane.xlu0 %848
  %v850 = vsel %vm720, %v706, 0.0
  %851 = vadd.xlane.f32.xlu0 %v850
  %v852 = vpop.xlane.xlu0 %851
  %v853 = vsel %vm720, %v707, 0.0
  %854 = vadd.xlane.f32.xlu0 %v853
  %v855 = vpop.xlane.xlu0 %854
  %v856 = vsel %vm720, %v708, 0.0
  %857 = vadd.xlane.f32.xlu0 %v856
  %v858 = vpop.xlane.xlu0 %857
  %v859 = vsel %vm720, %v709, 0.0
  %860 = vadd.xlane.f32.xlu0 %v859
  %v861 = vpop.xlane.xlu0 %860
  %v862 = vsel %vm720, %v710, 0.0
  %863 = vadd.xlane.f32.xlu0 %v862
  %v864 = vpop.xlane.xlu0 %863
  %v865 = vsel %vm720, %v711, 0.0
  %866 = vadd.xlane.f32.xlu0 %v865
  %v867 = vpop.xlane.xlu0 %866
  %v868 = vsel %vm720, %v712, 0.0
  %869 = vadd.xlane.f32.xlu0 %v868
  %v870 = vpop.xlane.xlu0 %869
  %v871 = vsel %vm720, %v713, 0.0
  %872 = vadd.xlane.f32.xlu0 %v871
  %v873 = vpop.xlane.xlu0 %872
  %v874 = vsel %vm720, %v714, 0.0
  %875 = vadd.xlane.f32.xlu0 %v874
  %v876 = vpop.xlane.xlu0 %875
  %v877 = vsel %vm720, %v715, 0.0
  %878 = vadd.xlane.f32.xlu0 %v877
  %v879 = vpop.xlane.xlu0 %878
  %v880 = vsel %vm720, %v716, 0.0
  %881 = vadd.xlane.f32.xlu0 %v880
  %v882 = vpop.xlane.xlu0 %881
  %v883 = vsel %vm720, %v717, 0.0
  %884 = vadd.xlane.f32.xlu0 %v883
  %v885 = vpop.xlane.xlu0 %884
  %v886 = vsel %vm720, %v718, 0.0
  %887 = vadd.xlane.f32.xlu0 %v886
  %v888 = vpop.xlane.xlu0 %887
  %vm889 = vcmask 123904
  %v890 = vsel %vm889, %v719, 0.0
  %891 = vadd.xlane.f32.xlu0 %v890
  %v892 = vpop.xlane.xlu0 %891
  %v893 = vld [vmem:[#allocation2] sm:$0x1]
  %v895 = vlaneseq
  %v896 = vshrl.u32 %v895, 7
  %v897 = vsub.s32 0, %v896
  %v898 = vrot.slane %v893, %v897
  %v900 = vadd.f32 %v723, %v898
  %v901 = vadd.f32 %v726, %v898
  %v902 = vadd.f32 %v729, %v898
  %v903 = vadd.f32 %v732, %v898
  %v904 = vadd.f32 %v735, %v898
  %v905 = vadd.f32 %v738, %v898
  %v906 = vadd.f32 %v741, %v898
  %v907 = vadd.f32 %v744, %v898
  %v908 = vadd.f32 %v747, %v898
  %v909 = vadd.f32 %v750, %v898
  %v910 = vadd.f32 %v753, %v898
  %v911 = vadd.f32 %v756, %v898
  %v912 = vadd.f32 %v759, %v898
  %v913 = vadd.f32 %v762, %v898
  %v914 = vadd.f32 %v765, %v898
  %v915 = vadd.f32 %v768, %v898
  %v916 = vadd.f32 %v771, %v898
  %v917 = vadd.f32 %v774, %v898
  %v918 = vadd.f32 %v777, %v898
  %v919 = vadd.f32 %v780, %v898
  %v920 = vadd.f32 %v783, %v898
  %v921 = vadd.f32 %v786, %v898
  %v922 = vadd.f32 %v789, %v898
  %v923 = vadd.f32 %v792, %v898
  %v924 = vadd.f32 %v795, %v898
  %v925 = vadd.f32 %v798, %v898
  %v926 = vadd.f32 %v801, %v898
  %v927 = vadd.f32 %v804, %v898
  %v928 = vadd.f32 %v807, %v898
  %v929 = vadd.f32 %v810, %v898
  %v930 = vadd.f32 %v813, %v898
  %v931 = vadd.f32 %v816, %v898
  %v932 = vadd.f32 %v819, %v898
  %v933 = vadd.f32 %v822, %v898
  %v934 = vadd.f32 %v825, %v898
  %v935 = vadd.f32 %v828, %v898
  %v936 = vadd.f32 %v831, %v898
  %v937 = vadd.f32 %v834, %v898
  %v938 = vadd.f32 %v837, %v898
  %v939 = vadd.f32 %v840, %v898
  %v940 = vadd.f32 %v843, %v898
  %v941 = vadd.f32 %v846, %v898
  %v942 = vadd.f32 %v849, %v898
  %v943 = vadd.f32 %v852, %v898
  %v944 = vadd.f32 %v855, %v898
  %v945 = vadd.f32 %v858, %v898
  %v946 = vadd.f32 %v861, %v898
  %v947 = vadd.f32 %v864, %v898
  %v948 = vadd.f32 %v867, %v898
  %v949 = vadd.f32 %v870, %v898
  %v950 = vadd.f32 %v873, %v898
  %v951 = vadd.f32 %v876, %v898
  %v952 = vadd.f32 %v879, %v898
  %v953 = vadd.f32 %v882, %v898
  %v954 = vadd.f32 %v885, %v898
  %v955 = vadd.f32 %v888, %v898
  %v956 = vadd.f32 %v892, %v898
  %v957 = vsub.f32 0.0, %v900
  %v958 = vsub.f32 0.0, %v901
  %v959 = vsub.f32 0.0, %v902
  %v960 = vsub.f32 0.0, %v903
  %v961 = vsub.f32 0.0, %v904
  %v962 = vsub.f32 0.0, %v905
  %v963 = vsub.f32 0.0, %v906
  %v964 = vsub.f32 0.0, %v907
  %v965 = vsub.f32 0.0, %v908
  %v966 = vsub.f32 0.0, %v909
  %v967 = vsub.f32 0.0, %v910
  %v968 = vsub.f32 0.0, %v911
  %v969 = vsub.f32 0.0, %v912
  %v970 = vsub.f32 0.0, %v913
  %v971 = vsub.f32 0.0, %v914
  %v972 = vsub.f32 0.0, %v915
  %v973 = vsub.f32 0.0, %v916
  %v974 = vsub.f32 0.0, %v917
  %v975 = vsub.f32 0.0, %v918
  %v976 = vsub.f32 0.0, %v919
  %v977 = vsub.f32 0.0, %v920
  %v978 = vsub.f32 0.0, %v921
  %v979 = vsub.f32 0.0, %v922
  %v980 = vsub.f32 0.0, %v923
  %v981 = vsub.f32 0.0, %v924
  %v982 = vsub.f32 0.0, %v925
  %v983 = vsub.f32 0.0, %v926
  %v984 = vsub.f32 0.0, %v927
  %v985 = vsub.f32 0.0, %v928
  %v986 = vsub.f32 0.0, %v929
  %v987 = vsub.f32 0.0, %v930
  %v988 = vsub.f32 0.0, %v931
  %v989 = vsub.f32 0.0, %v932
  %v990 = vsub.f32 0.0, %v933
  %v991 = vsub.f32 0.0, %v934
  %v992 = vsub.f32 0.0, %v935
  %v993 = vsub.f32 0.0, %v936
  %v994 = vsub.f32 0.0, %v937
  %v995 = vsub.f32 0.0, %v938
  %v996 = vsub.f32 0.0, %v939
  %v997 = vsub.f32 0.0, %v940
  %v998 = vsub.f32 0.0, %v941
  %v999 = vsub.f32 0.0, %v942
  %v1000 = vsub.f32 0.0, %v943
  %v1001 = vsub.f32 0.0, %v944
  %v1002 = vsub.f32 0.0, %v945
  %v1003 = vsub.f32 0.0, %v946
  %v1004 = vsub.f32 0.0, %v947
  %v1005 = vsub.f32 0.0, %v948
  %v1006 = vsub.f32 0.0, %v949
  %v1007 = vsub.f32 0.0, %v950
  %v1008 = vsub.f32 0.0, %v951
  %v1009 = vsub.f32 0.0, %v952
  %v1010 = vsub.f32 0.0, %v953
  %v1011 = vsub.f32 0.0, %v954
  %v1012 = vsub.f32 0.0, %v955
  %v1013 = vsub.f32 0.0, %v956
  %v1014 = vmul.f32 %v957, 1.442695
  %v1015 = vpow.pop %v1014
  %v1016 = vmul.f32 %v958, 1.442695
  %v1017 = vpow.pop %v1016
  %v1018 = vmul.f32 %v959, 1.442695
  %v1019 = vpow.pop %v1018
  %v1020 = vmul.f32 %v960, 1.442695
  %v1021 = vpow.pop %v1020
  %v1022 = vmul.f32 %v961, 1.442695
  %v1023 = vpow.pop %v1022
  %v1024 = vmul.f32 %v962, 1.442695
  %v1025 = vpow.pop %v1024
  %v1026 = vmul.f32 %v963, 1.442695
  %v1027 = vpow.pop %v1026
  %v1028 = vmul.f32 %v964, 1.442695
  %v1029 = vpow.pop %v1028
  %v1030 = vmul.f32 %v965, 1.442695
  %v1031 = vpow.pop %v1030
  %v1032 = vmul.f32 %v966, 1.442695
  %v1033 = vpow.pop %v1032
  %v1034 = vmul.f32 %v967, 1.442695
  %v1035 = vpow.pop %v1034
  %v1036 = vmul.f32 %v968, 1.442695
  %v1037 = vpow.pop %v1036
  %v1038 = vmul.f32 %v969, 1.442695
  %v1039 = vpow.pop %v1038
  %v1040 = vmul.f32 %v970, 1.442695
  %v1041 = vpow.pop %v1040
  %v1042 = vmul.f32 %v971, 1.442695
  %v1043 = vpow.pop %v1042
  %v1044 = vmul.f32 %v972, 1.442695
  %v1045 = vpow.pop %v1044
  %v1046 = vmul.f32 %v973, 1.442695
  %v1047 = vpow.pop %v1046
  %v1048 = vmul.f32 %v974, 1.442695
  %v1049 = vpow.pop %v1048
  %v1050 = vmul.f32 %v975, 1.442695
  %v1051 = vpow.pop %v1050
  %v1052 = vmul.f32 %v976, 1.442695
  %v1053 = vpow.pop %v1052
  %v1054 = vmul.f32 %v977, 1.442695
  %v1055 = vpow.pop %v1054
  %v1056 = vmul.f32 %v978, 1.442695
  %v1057 = vpow.pop %v1056
  %v1058 = vmul.f32 %v979, 1.442695
  %v1059 = vpow.pop %v1058
  %v1060 = vmul.f32 %v980, 1.442695
  %v1061 = vpow.pop %v1060
  %v1062 = vmul.f32 %v981, 1.442695
  %v1063 = vpow.pop %v1062
  %v1064 = vmul.f32 %v982, 1.442695
  %v1065 = vpow.pop %v1064
  %v1066 = vmul.f32 %v983, 1.442695
  %v1067 = vpow.pop %v1066
  %v1068 = vmul.f32 %v984, 1.442695
  %v1069 = vpow.pop %v1068
  %v1070 = vmul.f32 %v985, 1.442695
  %v1071 = vpow.pop %v1070
  %v1072 = vmul.f32 %v986, 1.442695
  %v1073 = vpow.pop %v1072
  %v1074 = vmul.f32 %v987, 1.442695
  %v1075 = vpow.pop %v1074
  %v1076 = vmul.f32 %v988, 1.442695
  %v1077 = vpow.pop %v1076
  %v1078 = vmul.f32 %v989, 1.442695
  %v1079 = vpow.pop %v1078
  %v1080 = vmul.f32 %v990, 1.442695
  %v1081 = vpow.pop %v1080
  %v1082 = vmul.f32 %v991, 1.442695
  %v1083 = vpow.pop %v1082
  %v1084 = vmul.f32 %v992, 1.442695
  %v1085 = vpow.pop %v1084
  %v1086 = vmul.f32 %v993, 1.442695
  %v1087 = vpow.pop %v1086
  %v1088 = vmul.f32 %v994, 1.442695
  %v1089 = vpow.pop %v1088
  %v1090 = vmul.f32 %v995, 1.442695
  %v1091 = vpow.pop %v1090
  %v1092 = vmul.f32 %v996, 1.442695
  %v1093 = vpow.pop %v1092
  %v1094 = vmul.f32 %v997, 1.442695
  %v1095 = vpow.pop %v1094
  %v1096 = vmul.f32 %v998, 1.442695
  %v1097 = vpow.pop %v1096
  %v1098 = vmul.f32 %v999, 1.442695
  %v1099 = vpow.pop %v1098
  %v1100 = vmul.f32 %v1000, 1.442695
  %v1101 = vpow.pop %v1100
  %v1102 = vmul.f32 %v1001, 1.442695
  %v1103 = vpow.pop %v1102
  %v1104 = vmul.f32 %v1002, 1.442695
  %v1105 = vpow.pop %v1104
  %v1106 = vmul.f32 %v1003, 1.442695
  %v1107 = vpow.pop %v1106
  %v1108 = vmul.f32 %v1004, 1.442695
  %v1109 = vpow.pop %v1108
  %v1110 = vmul.f32 %v1005, 1.442695
  %v1111 = vpow.pop %v1110
  %v1112 = vmul.f32 %v1006, 1.442695
  %v1113 = vpow.pop %v1112
  %v1114 = vmul.f32 %v1007, 1.442695
  %v1115 = vpow.pop %v1114
  %v1116 = vmul.f32 %v1008, 1.442695
  %v1117 = vpow.pop %v1116
  %v1118 = vmul.f32 %v1009, 1.442695
  %v1119 = vpow.pop %v1118
  %v1120 = vmul.f32 %v1010, 1.442695
  %v1121 = vpow.pop %v1120
  %v1122 = vmul.f32 %v1011, 1.442695
  %v1123 = vpow.pop %v1122
  %v1124 = vmul.f32 %v1012, 1.442695
  %v1125 = vpow.pop %v1124
  %v1126 = vmul.f32 %v1013, 1.442695
  %v1127 = vpow.pop %v1126
  %v1128 = vadd.f32 %v1015, 1.0
  %v1129 = vadd.f32 %v1017, 1.0
  %v1130 = vadd.f32 %v1019, 1.0
  %v1131 = vadd.f32 %v1021, 1.0
  %v1132 = vadd.f32 %v1023, 1.0
  %v1133 = vadd.f32 %v1025, 1.0
  %v1134 = vadd.f32 %v1027, 1.0
  %v1135 = vadd.f32 %v1029, 1.0
  %v1136 = vadd.f32 %v1031, 1.0
  %v1137 = vadd.f32 %v1033, 1.0
  %v1138 = vadd.f32 %v1035, 1.0
  %v1139 = vadd.f32 %v1037, 1.0
  %v1140 = vadd.f32 %v1039, 1.0
  %v1141 = vadd.f32 %v1041, 1.0
  %v1142 = vadd.f32 %v1043, 1.0
  %v1143 = vadd.f32 %v1045, 1.0
  %v1144 = vadd.f32 %v1047, 1.0
  %v1145 = vadd.f32 %v1049, 1.0
  %v1146 = vadd.f32 %v1051, 1.0
  %v1147 = vadd.f32 %v1053, 1.0
  %v1148 = vadd.f32 %v1055, 1.0
  %v1149 = vadd.f32 %v1057, 1.0
  %v1150 = vadd.f32 %v1059, 1.0
  %v1151 = vadd.f32 %v1061, 1.0
  %v1152 = vadd.f32 %v1063, 1.0
  %v1153 = vadd.f32 %v1065, 1.0
  %v1154 = vadd.f32 %v1067, 1.0
  %v1155 = vadd.f32 %v1069, 1.0
  %v1156 = vadd.f32 %v1071, 1.0
  %v1157 = vadd.f32 %v1073, 1.0
  %v1158 = vadd.f32 %v1075, 1.0
  %v1159 = vadd.f32 %v1077, 1.0
  %v1160 = vadd.f32 %v1079, 1.0
  %v1161 = vadd.f32 %v1081, 1.0
  %v1162 = vadd.f32 %v1083, 1.0
  %v1163 = vadd.f32 %v1085, 1.0
  %v1164 = vadd.f32 %v1087, 1.0
  %v1165 = vadd.f32 %v1089, 1.0
  %v1166 = vadd.f32 %v1091, 1.0
  %v1167 = vadd.f32 %v1093, 1.0
  %v1168 = vadd.f32 %v1095, 1.0
  %v1169 = vadd.f32 %v1097, 1.0
  %v1170 = vadd.f32 %v1099, 1.0
  %v1171 = vadd.f32 %v1101, 1.0
  %v1172 = vadd.f32 %v1103, 1.0
  %v1173 = vadd.f32 %v1105, 1.0
  %v1174 = vadd.f32 %v1107, 1.0
  %v1175 = vadd.f32 %v1109, 1.0
  %v1176 = vadd.f32 %v1111, 1.0
  %v1177 = vadd.f32 %v1113, 1.0
  %v1178 = vadd.f32 %v1115, 1.0
  %v1179 = vadd.f32 %v1117, 1.0
  %v1180 = vadd.f32 %v1119, 1.0
  %v1181 = vadd.f32 %v1121, 1.0
  %v1182 = vadd.f32 %v1123, 1.0
  %v1183 = vadd.f32 %v1125, 1.0
  %v1184 = vadd.f32 %v1127, 1.0
  %v1185 = vrcp.pop %v1128
  %v1186 = vmul.f32 1.0, %v1185
  %v1187 = vrcp.pop %v1129
  %v1188 = vmul.f32 1.0, %v1187
  %v1189 = vrcp.pop %v1130
  %v1190 = vmul.f32 1.0, %v1189
  %v1191 = vrcp.pop %v1131
  %v1192 = vmul.f32 1.0, %v1191
  %v1193 = vrcp.pop %v1132
  %v1194 = vmul.f32 1.0, %v1193
  %v1195 = vrcp.pop %v1133
  %v1196 = vmul.f32 1.0, %v1195
  %v1197 = vrcp.pop %v1134
  %v1198 = vmul.f32 1.0, %v1197
  %v1199 = vrcp.pop %v1135
  %v1200 = vmul.f32 1.0, %v1199
  %v1201 = vrcp.pop %v1136
  %v1202 = vmul.f32 1.0, %v1201
  %v1203 = vrcp.pop %v1137
  %v1204 = vmul.f32 1.0, %v1203
  %v1205 = vrcp.pop %v1138
  %v1206 = vmul.f32 1.0, %v1205
  %v1207 = vrcp.pop %v1139
  %v1208 = vmul.f32 1.0, %v1207
  %v1209 = vrcp.pop %v1140
  %v1210 = vmul.f32 1.0, %v1209
  %v1211 = vrcp.pop %v1141
  %v1212 = vmul.f32 1.0, %v1211
  %v1213 = vrcp.pop %v1142
  %v1214 = vmul.f32 1.0, %v1213
  %v1215 = vrcp.pop %v1143
  %v1216 = vmul.f32 1.0, %v1215
  %v1217 = vrcp.pop %v1144
  %v1218 = vmul.f32 1.0, %v1217
  %v1219 = vrcp.pop %v1145
  %v1220 = vmul.f32 1.0, %v1219
  %v1221 = vrcp.pop %v1146
  %v1222 = vmul.f32 1.0, %v1221
  %v1223 = vrcp.pop %v1147
  %v1224 = vmul.f32 1.0, %v1223
  %v1225 = vrcp.pop %v1148
  %v1226 = vmul.f32 1.0, %v1225
  %v1227 = vrcp.pop %v1149
  %v1228 = vmul.f32 1.0, %v1227
  %v1229 = vrcp.pop %v1150
  %v1230 = vmul.f32 1.0, %v1229
  %v1231 = vrcp.pop %v1151
  %v1232 = vmul.f32 1.0, %v1231
  %v1233 = vrcp.pop %v1152
  %v1234 = vmul.f32 1.0, %v1233
  %v1235 = vrcp.pop %v1153
  %v1236 = vmul.f32 1.0, %v1235
  %v1237 = vrcp.pop %v1154
  %v1238 = vmul.f32 1.0, %v1237
  %v1239 = vrcp.pop %v1155
  %v1240 = vmul.f32 1.0, %v1239
  %v1241 = vrcp.pop %v1156
  %v1242 = vmul.f32 1.0, %v1241
  %v1243 = vrcp.pop %v1157
  %v1244 = vmul.f32 1.0, %v1243
  %v1245 = vrcp.pop %v1158
  %v1246 = vmul.f32 1.0, %v1245
  %v1247 = vrcp.pop %v1159
  %v1248 = vmul.f32 1.0, %v1247
  %v1249 = vrcp.pop %v1160
  %v1250 = vmul.f32 1.0, %v1249
  %v1251 = vrcp.pop %v1161
  %v1252 = vmul.f32 1.0, %v1251
  %v1253 = vrcp.pop %v1162
  %v1254 = vmul.f32 1.0, %v1253
  %v1255 = vrcp.pop %v1163
  %v1256 = vmul.f32 1.0, %v1255
  %v1257 = vrcp.pop %v1164
  %v1258 = vmul.f32 1.0, %v1257
  %v1259 = vrcp.pop %v1165
  %v1260 = vmul.f32 1.0, %v1259
  %v1261 = vrcp.pop %v1166
  %v1262 = vmul.f32 1.0, %v1261
  %v1263 = vrcp.pop %v1167
  %v1264 = vmul.f32 1.0, %v1263
  %v1265 = vrcp.pop %v1168
  %v1266 = vmul.f32 1.0, %v1265
  %v1267 = vrcp.pop %v1169
  %v1268 = vmul.f32 1.0, %v1267
  %v1269 = vrcp.pop %v1170
  %v1270 = vmul.f32 1.0, %v1269
  %v1271 = vrcp.pop %v1171
  %v1272 = vmul.f32 1.0, %v1271
  %v1273 = vrcp.pop %v1172
  %v1274 = vmul.f32 1.0, %v1273
  %v1275 = vrcp.pop %v1173
  %v1276 = vmul.f32 1.0, %v1275
  %v1277 = vrcp.pop %v1174
  %v1278 = vmul.f32 1.0, %v1277
  %v1279 = vrcp.pop %v1175
  %v1280 = vmul.f32 1.0, %v1279
  %v1281 = vrcp.pop %v1176
  %v1282 = vmul.f32 1.0, %v1281
  %v1283 = vrcp.pop %v1177
  %v1284 = vmul.f32 1.0, %v1283
  %v1285 = vrcp.pop %v1178
  %v1286 = vmul.f32 1.0, %v1285
  %v1287 = vrcp.pop %v1179
  %v1288 = vmul.f32 1.0, %v1287
  %v1289 = vrcp.pop %v1180
  %v1290 = vmul.f32 1.0, %v1289
  %v1291 = vrcp.pop %v1181
  %v1292 = vmul.f32 1.0, %v1291
  %v1293 = vrcp.pop %v1182
  %v1294 = vmul.f32 1.0, %v1293
  %v1295 = vrcp.pop %v1183
  %v1296 = vmul.f32 1.0, %v1295
  %v1297 = vrcp.pop %v1184
  %v1298 = vmul.f32 1.0, %v1297
  %vm1299 = vcmask 7168
  %1300 = vst.msk [vmem:[%s5] sm:$0xff] %vm1299, %v1186
  %1301 = vst.msk [vmem:[%s5 + $0x8] sm:$0xff] %vm1299, %v1188
  %1302 = vst.msk [vmem:[%s5 + $0x10] sm:$0xff] %vm1299, %v1190
  %1303 = vst.msk [vmem:[%s5 + $0x18] sm:$0xff] %vm1299, %v1192
  %1304 = vst.msk [vmem:[%s5 + $0x20] sm:$0xff] %vm1299, %v1194
  %1305 = vst.msk [vmem:[%s5 + $0x28] sm:$0xff] %vm1299, %v1196
  %1306 = vst.msk [vmem:[%s5 + $0x30] sm:$0xff] %vm1299, %v1198
  %1307 = vst.msk [vmem:[%s5 + $0x38] sm:$0xff] %vm1299, %v1200
  %1308 = vst.msk [vmem:[%s5 + $0x40] sm:$0xff] %vm1299, %v1202
  %1309 = vst.msk [vmem:[%s5 + $0x48] sm:$0xff] %vm1299, %v1204
  %1310 = vst.msk [vmem:[%s5 + $0x50] sm:$0xff] %vm1299, %v1206
  %1311 = vst.msk [vmem:[%s5 + $0x58] sm:$0xff] %vm1299, %v1208
  %1312 = vst.msk [vmem:[%s5 + $0x60] sm:$0xff] %vm1299, %v1210
  %1313 = vst.msk [vmem:[%s5 + $0x68] sm:$0xff] %vm1299, %v1212
  %1314 = vst.msk [vmem:[%s5 + $0x70] sm:$0xff] %vm1299, %v1214
  %1315 = vst.msk [vmem:[%s5 + $0x78] sm:$0xff] %vm1299, %v1216
  %1316 = vst.msk [vmem:[%s5 + $0x80] sm:$0xff] %vm1299, %v1218
  %1317 = vst.msk [vmem:[%s5 + $0x88] sm:$0xff] %vm1299, %v1220
  %1318 = vst.msk [vmem:[%s5 + $0x90] sm:$0xff] %vm1299, %v1222
  %1319 = vst.msk [vmem:[%s5 + $0x98] sm:$0xff] %vm1299, %v1224
  %1320 = vst.msk [vmem:[%s5 + $0xa0] sm:$0xff] %vm1299, %v1226
  %1321 = vst.msk [vmem:[%s5 + $0xa8] sm:$0xff] %vm1299, %v1228
  %1322 = vst.msk [vmem:[%s5 + $0xb0] sm:$0xff] %vm1299, %v1230
  %1323 = vst.msk [vmem:[%s5 + $0xb8] sm:$0xff] %vm1299, %v1232
  %1324 = vst.msk [vmem:[%s5 + $0xc0] sm:$0xff] %vm1299, %v1234
  %1325 = vst.msk [vmem:[%s5 + $0xc8] sm:$0xff] %vm1299, %v1236
  %1326 = vst.msk [vmem:[%s5 + $0xd0] sm:$0xff] %vm1299, %v1238
  %1327 = vst.msk [vmem:[%s5 + $0xd8] sm:$0xff] %vm1299, %v1240
  %1328 = vst.msk [vmem:[%s5 + $0xe0] sm:$0xff] %vm1299, %v1242
  %1329 = vst.msk [vmem:[%s5 + $0xe8] sm:$0xff] %vm1299, %v1244
  %1330 = vst.msk [vmem:[%s5 + $0xf0] sm:$0xff] %vm1299, %v1246
  %1331 = vst.msk [vmem:[%s5 + $0xf8] sm:$0xff] %vm1299, %v1248
  %1332 = vst.msk [vmem:[%s5 + $0x100] sm:$0xff] %vm1299, %v1250
  %1333 = vst.msk [vmem:[%s5 + $0x108] sm:$0xff] %vm1299, %v1252
  %1334 = vst.msk [vmem:[%s5 + $0x110] sm:$0xff] %vm1299, %v1254
  %1335 = vst.msk [vmem:[%s5 + $0x118] sm:$0xff] %vm1299, %v1256
  %1336 = vst.msk [vmem:[%s5 + $0x120] sm:$0xff] %vm1299, %v1258
  %1337 = vst.msk [vmem:[%s5 + $0x128] sm:$0xff] %vm1299, %v1260
  %1338 = vst.msk [vmem:[%s5 + $0x130] sm:$0xff] %vm1299, %v1262
  %1339 = vst.msk [vmem:[%s5 + $0x138] sm:$0xff] %vm1299, %v1264
  %1340 = vst.msk [vmem:[%s5 + $0x140] sm:$0xff] %vm1299, %v1266
  %1341 = vst.msk [vmem:[%s5 + $0x148] sm:$0xff] %vm1299, %v1268
  %1342 = vst.msk [vmem:[%s5 + $0x150] sm:$0xff] %vm1299, %v1270
  %1343 = vst.msk [vmem:[%s5 + $0x158] sm:$0xff] %vm1299, %v1272
  %1344 = vst.msk [vmem:[%s5 + $0x160] sm:$0xff] %vm1299, %v1274
  %1345 = vst.msk [vmem:[%s5 + $0x168] sm:$0xff] %vm1299, %v1276
  %1346 = vst.msk [vmem:[%s5 + $0x170] sm:$0xff] %vm1299, %v1278
  %1347 = vst.msk [vmem:[%s5 + $0x178] sm:$0xff] %vm1299, %v1280
  %1348 = vst.msk [vmem:[%s5 + $0x180] sm:$0xff] %vm1299, %v1282
  %1349 = vst.msk [vmem:[%s5 + $0x188] sm:$0xff] %vm1299, %v1284
  %1350 = vst.msk [vmem:[%s5 + $0x190] sm:$0xff] %vm1299, %v1286
  %1351 = vst.msk [vmem:[%s5 + $0x198] sm:$0xff] %vm1299, %v1288
  %1352 = vst.msk [vmem:[%s5 + $0x1a0] sm:$0xff] %vm1299, %v1290
  %1353 = vst.msk [vmem:[%s5 + $0x1a8] sm:$0xff] %vm1299, %v1292
  %1354 = vst.msk [vmem:[%s5 + $0x1b0] sm:$0xff] %vm1299, %v1294
  %1355 = vst.msk [vmem:[%s5 + $0x1b8] sm:$0xff] %vm1299, %v1296
  %vm1356 = vcmask 1024
  %1357 = vst.msk [vmem:[%s5 + $0x1c0] sm:$0x3] %vm1356, %v1298
  %s1358 = scalar_lea.vmem %s1, 32
  %v1359 = vld [vmem:[%s1358] sm:$0xf]
  %v1360 = vld [vmem:[%s1358 + $0x4] sm:$0xf]
  %v1361 = vld [vmem:[%s1358 + $0x8] sm:$0xf]
  %v1362 = vld [vmem:[%s1358 + $0xc] sm:$0xf]
  %v1363 = vld [vmem:[%s2] sm:$0x1]
  %v1365 = vlaneseq
  %v1366 = vshrl.u32 %v1365, 7
  %v1367 = vsub.s32 0, %v1366
  %v1368 = vrot.slane %v1363, %v1367
  %v1374 = vunpack.c.l.b16 %v1359
  %v1375 = vunpack.c.l.b16 %v1360
  %v1376 = vunpack.c.l.b16 %v1361
  %v1377 = vunpack.c.l.b16 %v1362
  %v1378 = vpack.c.b16 %v1375, %v1374
  %v1379 = vpack.c.b16 %v1377, %v1376
  %1382 = vmatprep.subr.bf16.mxu0 0
  %1383 = vmatpush1.bf16.msra.mxu0 %v1378
  %1384 = vmatprep.subr.bf16.mxu0 0
  %1385 = vmatpush1.bf16.msra.mxu0 %v1379
  %1386 = vmatprep.subr.bf16.mxu0 0
  %1387 = vmatpush1.bf16.msra.mxu0 0
  %1388 = vmatprep.subr.bf16.mxu0 0
  %1389 = vmatpush1.bf16.msra.mxu0 0
  %1390 = vmatprep.subr.bf16.mxu0 0
  %1391 = vmatpush1.bf16.msra.mxu0 0
  %1392 = vmatprep.subr.bf16.mxu0 0
  %1393 = vmatpush1.bf16.msra.mxu0 0
  %1394 = vmatprep.subr.bf16.mxu0 0
  %1395 = vmatpush1.bf16.msra.mxu0 0
  %1396 = vmatprep.subr.bf16.mxu0 0
  %1397 = vmatpush1.bf16.msra.mxu0 0
  %1398 = vmatprep.subr.bf16.mxu0 0
  %1399 = vmatpush1.bf16.msra.mxu0 0
  %1400 = vmatprep.subr.bf16.mxu0 0
  %1401 = vmatpush1.bf16.msra.mxu0 0
  %1402 = vmatprep.subr.bf16.mxu0 0
  %1403 = vmatpush1.bf16.msra.mxu0 0
  %1404 = vmatprep.subr.bf16.mxu0 0
  %1405 = vmatpush1.bf16.msra.mxu0 0
  %1406 = vmatprep.subr.bf16.mxu0 0
  %1407 = vmatpush1.bf16.msra.mxu0 0
  %1408 = vmatprep.subr.bf16.mxu0 0
  %1409 = vmatpush1.bf16.msra.mxu0 0
  %1410 = vmatprep.subr.bf16.mxu0 0
  %1411 = vmatpush1.bf16.msra.mxu0 0
  %1412 = vmatprep.subr.bf16.mxu0 0
  %1413 = vmatpush1.bf16.msra.mxu0 0
  %1414 = vmatprep.mubr.bf16.mxu0 0
  %1415 = vmatmul.mubr.bf16.gmra.mrb[0].mxu0 %v249
  %v1416 = vpop.f32.mrb[0].mxu0
  %v1417 = vadd.f32 %v1368, %v1416
  %v1418 = vpop.f32.mrb[0].mxu0
  %v1419 = vpop.f32.mrb[0].mxu0
  %v1420 = vadd.f32 %v1368, %v1419
  %v1421 = vpop.f32.mrb[0].mxu0
  %1422 = vmatprep.mubr.bf16.mxu0 0
  %1423 = vmatmul.mubr.bf16.gmra.mrb[0].mxu0 %v252
  %v1424 = vpop.f32.mrb[0].mxu0
  %v1425 = vadd.f32 %v1368, %v1424
  %v1426 = vpop.f32.mrb[0].mxu0
  %v1427 = vpop.f32.mrb[0].mxu0
  %v1428 = vadd.f32 %v1368, %v1427
  %v1429 = vpop.f32.mrb[0].mxu0
  %1430 = vmatprep.mubr.bf16.mxu0 0
  %1431 = vmatmul.mubr.bf16.gmra.mrb[0].mxu0 %v255
  %v1432 = vpop.f32.mrb[0].mxu0
  %v1433 = vadd.f32 %v1368, %v1432
  %v1434 = vpop.f32.mrb[0].mxu0
  %v1435 = vpop.f32.mrb[0].mxu0
  %v1436 = vadd.f32 %v1368, %v1435
  %v1437 = vpop.f32.mrb[0].mxu0
  %1438 = vmatprep.mubr.bf16.mxu0 0
  %1439 = vmatmul.mubr.bf16.gmra.mrb[0].mxu0 %v258
  %v1440 = vpop.f32.mrb[0].mxu0
  %v1441 = vadd.f32 %v1368, %v1440
  %v1442 = vpop.f32.mrb[0].mxu0
  %v1443 = vpop.f32.mrb[0].mxu0
  %v1444 = vadd.f32 %v1368, %v1443
  %v1445 = vpop.f32.mrb[0].mxu0
  %1446 = vmatprep.mubr.bf16.mxu0 0
  %1447 = vmatmul.mubr.bf16.gmra.mrb[0].mxu0 %v261
  %v1448 = vpop.f32.mrb[0].mxu0
  %v1449 = vadd.f32 %v1368, %v1448
  %v1450 = vpop.f32.mrb[0].mxu0
  %v1451 = vpop.f32.mrb[0].mxu0
  %v1452 = vadd.f32 %v1368, %v1451
  %v1453 = vpop.f32.mrb[0].mxu0
  %1454 = vmatprep.mubr.bf16.mxu0 0
  %1455 = vmatmul.mubr.bf16.gmra.mrb[0].mxu0 %v264
  %v1456 = vpop.f32.mrb[0].mxu0
  %v1457 = vadd.f32 %v1368, %v1456
  %v1458 = vpop.f32.mrb[0].mxu0
  %v1459 = vpop.f32.mrb[0].mxu0
  %v1460 = vadd.f32 %v1368, %v1459
  %v1461 = vpop.f32.mrb[0].mxu0
  %1462 = vmatprep.mubr.bf16.mxu0 0
  %1463 = vmatmul.mubr.bf16.gmra.mrb[0].mxu0 %v267
  %v1464 = vpop.f32.mrb[0].mxu0
  %v1465 = vadd.f32 %v1368, %v1464
  %v1466 = vpop.f32.mrb[0].mxu0
  %v1467 = vpop.f32.mrb[0].mxu0
  %v1468 = vadd.f32 %v1368, %v1467
  %v1469 = vpop.f32.mrb[0].mxu0
  %1470 = vmatprep.mubr.bf16.mxu0 0
  %1471 = vmatmul.mubr.bf16.gmra.mrb[0].mxu0 %v270
  %v1472 = vpop.f32.mrb[0].mxu0
  %v1473 = vadd.f32 %v1368, %v1472
  %v1474 = vpop.f32.mrb[0].mxu0
  %v1475 = vpop.f32.mrb[0].mxu0
  %v1476 = vadd.f32 %v1368, %v1475
  %v1477 = vpop.f32.mrb[0].mxu0
  %1478 = vmatprep.mubr.bf16.mxu0 0
  %1479 = vmatmul.mubr.bf16.gmra.mrb[0].mxu0 %v273
  %v1480 = vpop.f32.mrb[0].mxu0
  %v1481 = vadd.f32 %v1368, %v1480
  %v1482 = vpop.f32.mrb[0].mxu0
  %v1483 = vpop.f32.mrb[0].mxu0
  %v1484 = vadd.f32 %v1368, %v1483
  %v1485 = vpop.f32.mrb[0].mxu0
  %1486 = vmatprep.mubr.bf16.mxu0 0
  %1487 = vmatmul.mubr.bf16.gmra.mrb[0].mxu0 %v276
  %v1488 = vpop.f32.mrb[0].mxu0
  %v1489 = vadd.f32 %v1368, %v1488
  %v1490 = vpop.f32.mrb[0].mxu0
  %v1491 = vpop.f32.mrb[0].mxu0
  %v1492 = vadd.f32 %v1368, %v1491
  %v1493 = vpop.f32.mrb[0].mxu0
  %1494 = vmatprep.mubr.bf16.mxu0 0
  %1495 = vmatmul.mubr.bf16.gmra.mrb[0].mxu0 %v279
  %v1496 = vpop.f32.mrb[0].mxu0
  %v1497 = vadd.f32 %v1368, %v1496
  %v1498 = vpop.f32.mrb[0].mxu0
  %v1499 = vpop.f32.mrb[0].mxu0
  %v1500 = vadd.f32 %v1368, %v1499
  %v1501 = vpop.f32.mrb[0].mxu0
  %1502 = vmatprep.mubr.bf16.mxu0 0
  %1503 = vmatmul.mubr.bf16.gmra.mrb[0].mxu0 %v282
  %v1504 = vpop.f32.mrb[0].mxu0
  %v1505 = vadd.f32 %v1368, %v1504
  %v1506 = vpop.f32.mrb[0].mxu0
  %v1507 = vpop.f32.mrb[0].mxu0
  %v1508 = vadd.f32 %v1368, %v1507
  %v1509 = vpop.f32.mrb[0].mxu0
  %1510 = vmatprep.mubr.bf16.mxu0 0
  %1511 = vmatmul.mubr.bf16.gmra.mrb[0].mxu0 %v285
  %v1512 = vpop.f32.mrb[0].mxu0
  %v1513 = vadd.f32 %v1368, %v1512
  %v1514 = vpop.f32.mrb[0].mxu0
  %v1515 = vpop.f32.mrb[0].mxu0
  %v1516 = vadd.f32 %v1368, %v1515
  %v1517 = vpop.f32.mrb[0].mxu0
  %1518 = vmatprep.mubr.bf16.mxu0 0
  %1519 = vmatmul.mubr.bf16.gmra.mrb[0].mxu0 %v288
  %v1520 = vpop.f32.mrb[0].mxu0
  %v1521 = vadd.f32 %v1368, %v1520
  %v1522 = vpop.f32.mrb[0].mxu0
  %v1523 = vpop.f32.mrb[0].mxu0
  %v1524 = vadd.f32 %v1368, %v1523
  %v1525 = vpop.f32.mrb[0].mxu0
  %1526 = vmatprep.mubr.bf16.mxu0 0
  %1527 = vmatmul.mubr.bf16.gmra.mrb[0].mxu0 %v291
  %v1528 = vpop.f32.mrb[0].mxu0
  %v1529 = vadd.f32 %v1368, %v1528
  %v1530 = vpop.f32.mrb[0].mxu0
  %v1531 = vpop.f32.mrb[0].mxu0
  %v1532 = vadd.f32 %v1368, %v1531
  %v1533 = vpop.f32.mrb[0].mxu0
  %1534 = vmatprep.mubr.bf16.mxu0 0
  %1535 = vmatmul.mubr.bf16.gmra.mrb[0].mxu0 %v294
  %v1536 = vpop.f32.mrb[0].mxu0
  %v1537 = vadd.f32 %v1368, %v1536
  %v1538 = vpop.f32.mrb[0].mxu0
  %v1539 = vpop.f32.mrb[0].mxu0
  %v1540 = vadd.f32 %v1368, %v1539
  %v1541 = vpop.f32.mrb[0].mxu0
  %1542 = vmatprep.mubr.bf16.mxu0 0
  %1543 = vmatmul.mubr.bf16.gmra.mrb[0].mxu0 %v297
  %v1544 = vpop.f32.mrb[0].mxu0
  %v1545 = vadd.f32 %v1368, %v1544
  %v1546 = vpop.f32.mrb[0].mxu0
  %v1547 = vpop.f32.mrb[0].mxu0
  %v1548 = vadd.f32 %v1368, %v1547
  %v1549 = vpop.f32.mrb[0].mxu0
  %1550 = vmatprep.mubr.bf16.mxu0 0
  %1551 = vmatmul.mubr.bf16.gmra.mrb[0].mxu0 %v300
  %v1552 = vpop.f32.mrb[0].mxu0
  %v1553 = vadd.f32 %v1368, %v1552
  %v1554 = vpop.f32.mrb[0].mxu0
  %v1555 = vpop.f32.mrb[0].mxu0
  %v1556 = vadd.f32 %v1368, %v1555
  %v1557 = vpop.f32.mrb[0].mxu0
  %1558 = vmatprep.mubr.bf16.mxu0 0
  %1559 = vmatmul.mubr.bf16.gmra.mrb[0].mxu0 %v303
  %v1560 = vpop.f32.mrb[0].mxu0
  %v1561 = vadd.f32 %v1368, %v1560
  %v1562 = vpop.f32.mrb[0].mxu0
  %v1563 = vpop.f32.mrb[0].mxu0
  %v1564 = vadd.f32 %v1368, %v1563
  %v1565 = vpop.f32.mrb[0].mxu0
  %1566 = vmatprep.mubr.bf16.mxu0 0
  %1567 = vmatmul.mubr.bf16.gmra.mrb[0].mxu0 %v306
  %v1568 = vpop.f32.mrb[0].mxu0
  %v1569 = vadd.f32 %v1368, %v1568
  %v1570 = vpop.f32.mrb[0].mxu0
  %v1571 = vpop.f32.mrb[0].mxu0
  %v1572 = vadd.f32 %v1368, %v1571
  %v1573 = vpop.f32.mrb[0].mxu0
  %1574 = vmatprep.mubr.bf16.mxu0 0
  %1575 = vmatmul.mubr.bf16.gmra.mrb[0].mxu0 %v309
  %v1576 = vpop.f32.mrb[0].mxu0
  %v1577 = vadd.f32 %v1368, %v1576
  %v1578 = vpop.f32.mrb[0].mxu0
  %v1579 = vpop.f32.mrb[0].mxu0
  %v1580 = vadd.f32 %v1368, %v1579
  %v1581 = vpop.f32.mrb[0].mxu0
  %1582 = vmatprep.mubr.bf16.mxu0 0
  %1583 = vmatmul.mubr.bf16.gmra.mrb[0].mxu0 %v312
  %v1584 = vpop.f32.mrb[0].mxu0
  %v1585 = vadd.f32 %v1368, %v1584
  %v1586 = vpop.f32.mrb[0].mxu0
  %v1587 = vpop.f32.mrb[0].mxu0
  %v1588 = vadd.f32 %v1368, %v1587
  %v1589 = vpop.f32.mrb[0].mxu0
  %1590 = vmatprep.mubr.bf16.mxu0 0
  %1591 = vmatmul.mubr.bf16.gmra.mrb[0].mxu0 %v315
  %v1592 = vpop.f32.mrb[0].mxu0
  %v1593 = vadd.f32 %v1368, %v1592
  %v1594 = vpop.f32.mrb[0].mxu0
  %v1595 = vpop.f32.mrb[0].mxu0
  %v1596 = vadd.f32 %v1368, %v1595
  %v1597 = vpop.f32.mrb[0].mxu0
  %1598 = vmatprep.mubr.bf16.mxu0 0
  %1599 = vmatmul.mubr.bf16.gmra.mrb[0].mxu0 %v318
  %v1600 = vpop.f32.mrb[0].mxu0
  %v1601 = vadd.f32 %v1368, %v1600
  %v1602 = vpop.f32.mrb[0].mxu0
  %v1603 = vpop.f32.mrb[0].mxu0
  %v1604 = vadd.f32 %v1368, %v1603
  %v1605 = vpop.f32.mrb[0].mxu0
  %1606 = vmatprep.mubr.bf16.mxu0 0
  %1607 = vmatmul.mubr.bf16.gmra.mrb[0].mxu0 %v321
  %v1608 = vpop.f32.mrb[0].mxu0
  %v1609 = vadd.f32 %v1368, %v1608
  %v1610 = vpop.f32.mrb[0].mxu0
  %v1611 = vpop.f32.mrb[0].mxu0
  %v1612 = vadd.f32 %v1368, %v1611
  %v1613 = vpop.f32.mrb[0].mxu0
  %1614 = vmatprep.mubr.bf16.mxu0 0
  %1615 = vmatmul.mubr.bf16.gmra.mrb[0].mxu0 %v324
  %v1616 = vpop.f32.mrb[0].mxu0
  %v1617 = vadd.f32 %v1368, %v1616
  %v1618 = vpop.f32.mrb[0].mxu0
  %v1619 = vpop.f32.mrb[0].mxu0
  %v1620 = vadd.f32 %v1368, %v1619
  %v1621 = vpop.f32.mrb[0].mxu0
  %1622 = vmatprep.mubr.bf16.mxu0 0
  %1623 = vmatmul.mubr.bf16.gmra.mrb[0].mxu0 %v327
  %v1624 = vpop.f32.mrb[0].mxu0
  %v1625 = vadd.f32 %v1368, %v1624
  %v1626 = vpop.f32.mrb[0].mxu0
  %v1627 = vpop.f32.mrb[0].mxu0
  %v1628 = vadd.f32 %v1368, %v1627
  %v1629 = vpop.f32.mrb[0].mxu0
  %1630 = vmatprep.mubr.bf16.mxu0 0
  %1631 = vmatmul.mubr.bf16.gmra.mrb[0].mxu0 %v330
  %v1632 = vpop.f32.mrb[0].mxu0
  %v1633 = vadd.f32 %v1368, %v1632
  %v1634 = vpop.f32.mrb[0].mxu0
  %v1635 = vpop.f32.mrb[0].mxu0
  %v1636 = vadd.f32 %v1368, %v1635
  %v1637 = vpop.f32.mrb[0].mxu0
  %1638 = vmatprep.mubr.bf16.mxu0 0
  %1639 = vmatmul.mubr.bf16.gmra.mrb[0].mxu0 %v333
  %v1640 = vpop.f32.mrb[0].mxu0
  %v1641 = vadd.f32 %v1368, %v1640
  %v1642 = vpop.f32.mrb[0].mxu0
  %v1643 = vpop.f32.mrb[0].mxu0
  %v1644 = vpop.f32.mrb[0].mxu0
  %1645 = vdwg.mxu0
  %v1646 = vmax.f32 %v1417, 0.0
  %v1647 = vmax.f32 %v1420, 0.0
  %v1648 = vmax.f32 %v1425, 0.0
  %v1649 = vmax.f32 %v1428, 0.0
  %v1650 = vmax.f32 %v1433, 0.0
  %v1651 = vmax.f32 %v1436, 0.0
  %v1652 = vmax.f32 %v1441, 0.0
  %v1653 = vmax.f32 %v1444, 0.0
  %v1654 = vmax.f32 %v1449, 0.0
  %v1655 = vmax.f32 %v1452, 0.0
  %v1656 = vmax.f32 %v1457, 0.0
  %v1657 = vmax.f32 %v1460, 0.0
  %v1658 = vmax.f32 %v1465, 0.0
  %v1659 = vmax.f32 %v1468, 0.0
  %v1660 = vmax.f32 %v1473, 0.0
  %v1661 = vmax.f32 %v1476, 0.0
  %v1662 = vmax.f32 %v1481, 0.0
  %v1663 = vmax.f32 %v1484, 0.0
  %v1664 = vmax.f32 %v1489, 0.0
  %v1665 = vmax.f32 %v1492, 0.0
  %v1666 = vmax.f32 %v1497, 0.0
  %v1667 = vmax.f32 %v1500, 0.0
  %v1668 = vmax.f32 %v1505, 0.0
  %v1669 = vmax.f32 %v1508, 0.0
  %v1670 = vmax.f32 %v1513, 0.0
  %v1671 = vmax.f32 %v1516, 0.0
  %v1672 = vmax.f32 %v1521, 0.0
  %v1673 = vmax.f32 %v1524, 0.0
  %v1674 = vmax.f32 %v1529, 0.0
  %v1675 = vmax.f32 %v1532, 0.0
  %v1676 = vmax.f32 %v1537, 0.0
  %v1677 = vmax.f32 %v1540, 0.0
  %v1678 = vmax.f32 %v1545, 0.0
  %v1679 = vmax.f32 %v1548, 0.0
  %v1680 = vmax.f32 %v1553, 0.0
  %v1681 = vmax.f32 %v1556, 0.0
  %v1682 = vmax.f32 %v1561, 0.0
  %v1683 = vmax.f32 %v1564, 0.0
  %v1684 = vmax.f32 %v1569, 0.0
  %v1685 = vmax.f32 %v1572, 0.0
  %v1686 = vmax.f32 %v1577, 0.0
  %v1687 = vmax.f32 %v1580, 0.0
  %v1688 = vmax.f32 %v1585, 0.0
  %v1689 = vmax.f32 %v1588, 0.0
  %v1690 = vmax.f32 %v1593, 0.0
  %v1691 = vmax.f32 %v1596, 0.0
  %v1692 = vmax.f32 %v1601, 0.0
  %v1693 = vmax.f32 %v1604, 0.0
  %v1694 = vmax.f32 %v1609, 0.0
  %v1695 = vmax.f32 %v1612, 0.0
  %v1696 = vmax.f32 %v1617, 0.0
  %v1697 = vmax.f32 %v1620, 0.0
  %v1698 = vmax.f32 %v1625, 0.0
  %v1699 = vmax.f32 %v1628, 0.0
  %v1700 = vmax.f32 %v1633, 0.0
  %v1701 = vmax.f32 %v1636, 0.0
  %v1702 = vmax.f32 %v1641, 0.0
  %v1703 = vld [vmem:[%s3] sm:$0x1]
  %v1705 = vlaneseq
  %v1706 = vshrl.u32 %v1705, 7
  %v1707 = vsub.s32 0, %v1706
  %v1708 = vrot.slane %v1703, %v1707
  %v1710 = vmul.f32 %v1646, %v1708
  %v1711 = vmul.f32 %v1647, %v1708
  %v1712 = vmul.f32 %v1648, %v1708
  %v1713 = vmul.f32 %v1649, %v1708
  %v1714 = vmul.f32 %v1650, %v1708
  %v1715 = vmul.f32 %v1651, %v1708
  %v1716 = vmul.f32 %v1652, %v1708
  %v1717 = vmul.f32 %v1653, %v1708
  %v1718 = vmul.f32 %v1654, %v1708
  %v1719 = vmul.f32 %v1655, %v1708
  %v1720 = vmul.f32 %v1656, %v1708
  %v1721 = vmul.f32 %v1657, %v1708
  %v1722 = vmul.f32 %v1658, %v1708
  %v1723 = vmul.f32 %v1659, %v1708
  %v1724 = vmul.f32 %v1660, %v1708
  %v1725 = vmul.f32 %v1661, %v1708
  %v1726 = vmul.f32 %v1662, %v1708
  %v1727 = vmul.f32 %v1663, %v1708
  %v1728 = vmul.f32 %v1664, %v1708
  %v1729 = vmul.f32 %v1665, %v1708
  %v1730 = vmul.f32 %v1666, %v1708
  %v1731 = vmul.f32 %v1667, %v1708
  %v1732 = vmul.f32 %v1668, %v1708
  %v1733 = vmul.f32 %v1669, %v1708
  %v1734 = vmul.f32 %v1670, %v1708
  %v1735 = vmul.f32 %v1671, %v1708
  %v1736 = vmul.f32 %v1672, %v1708
  %v1737 = vmul.f32 %v1673, %v1708
  %v1738 = vmul.f32 %v1674, %v1708
  %v1739 = vmul.f32 %v1675, %v1708
  %v1740 = vmul.f32 %v1676, %v1708
  %v1741 = vmul.f32 %v1677, %v1708
  %v1742 = vmul.f32 %v1678, %v1708
  %v1743 = vmul.f32 %v1679, %v1708
  %v1744 = vmul.f32 %v1680, %v1708
  %v1745 = vmul.f32 %v1681, %v1708
  %v1746 = vmul.f32 %v1682, %v1708
  %v1747 = vmul.f32 %v1683, %v1708
  %v1748 = vmul.f32 %v1684, %v1708
  %v1749 = vmul.f32 %v1685, %v1708
  %v1750 = vmul.f32 %v1686, %v1708
  %v1751 = vmul.f32 %v1687, %v1708
  %v1752 = vmul.f32 %v1688, %v1708
  %v1753 = vmul.f32 %v1689, %v1708
  %v1754 = vmul.f32 %v1690, %v1708
  %v1755 = vmul.f32 %v1691, %v1708
  %v1756 = vmul.f32 %v1692, %v1708
  %v1757 = vmul.f32 %v1693, %v1708
  %v1758 = vmul.f32 %v1694, %v1708
  %v1759 = vmul.f32 %v1695, %v1708
  %v1760 = vmul.f32 %v1696, %v1708
  %v1761 = vmul.f32 %v1697, %v1708
  %v1762 = vmul.f32 %v1698, %v1708
  %v1763 = vmul.f32 %v1699, %v1708
  %v1764 = vmul.f32 %v1700, %v1708
  %v1765 = vmul.f32 %v1701, %v1708
  %v1766 = vmul.f32 %v1702, %v1708
  %v1767 = vsel %vm720, %v1710, 0.0
  %1768 = vadd.xlane.f32.xlu0 %v1767
  %v1769 = vpop.xlane.xlu0 %1768
  %v1770 = vsel %vm720, %v1711, 0.0
  %1771 = vadd.xlane.f32.xlu0 %v1770
  %v1772 = vpop.xlane.xlu0 %1771
  %v1773 = vsel %vm720, %v1712, 0.0
  %1774 = vadd.xlane.f32.xlu0 %v1773
  %v1775 = vpop.xlane.xlu0 %1774
  %v1776 = vsel %vm720, %v1713, 0.0
  %1777 = vadd.xlane.f32.xlu0 %v1776
  %v1778 = vpop.xlane.xlu0 %1777
  %v1779 = vsel %vm720, %v1714, 0.0
  %1780 = vadd.xlane.f32.xlu0 %v1779
  %v1781 = vpop.xlane.xlu0 %1780
  %v1782 = vsel %vm720, %v1715, 0.0
  %1783 = vadd.xlane.f32.xlu0 %v1782
  %v1784 = vpop.xlane.xlu0 %1783
  %v1785 = vsel %vm720, %v1716, 0.0
  %1786 = vadd.xlane.f32.xlu0 %v1785
  %v1787 = vpop.xlane.xlu0 %1786
  %v1788 = vsel %vm720, %v1717, 0.0
  %1789 = vadd.xlane.f32.xlu0 %v1788
  %v1790 = vpop.xlane.xlu0 %1789
  %v1791 = vsel %vm720, %v1718, 0.0
  %1792 = vadd.xlane.f32.xlu0 %v1791
  %v1793 = vpop.xlane.xlu0 %1792
  %v1794 = vsel %vm720, %v1719, 0.0
  %1795 = vadd.xlane.f32.xlu0 %v1794
  %v1796 = vpop.xlane.xlu0 %1795
  %v1797 = vsel %vm720, %v1720, 0.0
  %1798 = vadd.xlane.f32.xlu0 %v1797
  %v1799 = vpop.xlane.xlu0 %1798
  %v1800 = vsel %vm720, %v1721, 0.0
  %1801 = vadd.xlane.f32.xlu0 %v1800
  %v1802 = vpop.xlane.xlu0 %1801
  %v1803 = vsel %vm720, %v1722, 0.0
  %1804 = vadd.xlane.f32.xlu0 %v1803
  %v1805 = vpop.xlane.xlu0 %1804
  %v1806 = vsel %vm720, %v1723, 0.0
  %1807 = vadd.xlane.f32.xlu0 %v1806
  %v1808 = vpop.xlane.xlu0 %1807
  %v1809 = vsel %vm720, %v1724, 0.0
  %1810 = vadd.xlane.f32.xlu0 %v1809
  %v1811 = vpop.xlane.xlu0 %1810
  %v1812 = vsel %vm720, %v1725, 0.0
  %1813 = vadd.xlane.f32.xlu0 %v1812
  %v1814 = vpop.xlane.xlu0 %1813
  %v1815 = vsel %vm720, %v1726, 0.0
  %1816 = vadd.xlane.f32.xlu0 %v1815
  %v1817 = vpop.xlane.xlu0 %1816
  %v1818 = vsel %vm720, %v1727, 0.0
  %1819 = vadd.xlane.f32.xlu0 %v1818
  %v1820 = vpop.xlane.xlu0 %1819
  %v1821 = vsel %vm720, %v1728, 0.0
  %1822 = vadd.xlane.f32.xlu0 %v1821
  %v1823 = vpop.xlane.xlu0 %1822
  %v1824 = vsel %vm720, %v1729, 0.0
  %1825 = vadd.xlane.f32.xlu0 %v1824
  %v1826 = vpop.xlane.xlu0 %1825
  %v1827 = vsel %vm720, %v1730, 0.0
  %1828 = vadd.xlane.f32.xlu0 %v1827
  %v1829 = vpop.xlane.xlu0 %1828
  %v1830 = vsel %vm720, %v1731, 0.0
  %1831 = vadd.xlane.f32.xlu0 %v1830
  %v1832 = vpop.xlane.xlu0 %1831
  %v1833 = vsel %vm720, %v1732, 0.0
  %1834 = vadd.xlane.f32.xlu0 %v1833
  %v1835 = vpop.xlane.xlu0 %1834
  %v1836 = vsel %vm720, %v1733, 0.0
  %1837 = vadd.xlane.f32.xlu0 %v1836
  %v1838 = vpop.xlane.xlu0 %1837
  %v1839 = vsel %vm720, %v1734, 0.0
  %1840 = vadd.xlane.f32.xlu0 %v1839
  %v1841 = vpop.xlane.xlu0 %1840
  %v1842 = vsel %vm720, %v1735, 0.0
  %1843 = vadd.xlane.f32.xlu0 %v1842
  %v1844 = vpop.xlane.xlu0 %1843
  %v1845 = vsel %vm720, %v1736, 0.0
  %1846 = vadd.xlane.f32.xlu0 %v1845
  %v1847 = vpop.xlane.xlu0 %1846
  %v1848 = vsel %vm720, %v1737, 0.0
  %1849 = vadd.xlane.f32.xlu0 %v1848
  %v1850 = vpop.xlane.xlu0 %1849
  %v1851 = vsel %vm720, %v1738, 0.0
  %1852 = vadd.xlane.f32.xlu0 %v1851
  %v1853 = vpop.xlane.xlu0 %1852
  %v1854 = vsel %vm720, %v1739, 0.0
  %1855 = vadd.xlane.f32.xlu0 %v1854
  %v1856 = vpop.xlane.xlu0 %1855
  %v1857 = vsel %vm720, %v1740, 0.0
  %1858 = vadd.xlane.f32.xlu0 %v1857
  %v1859 = vpop.xlane.xlu0 %1858
  %v1860 = vsel %vm720, %v1741, 0.0
  %1861 = vadd.xlane.f32.xlu0 %v1860
  %v1862 = vpop.xlane.xlu0 %1861
  %v1863 = vsel %vm720, %v1742, 0.0
  %1864 = vadd.xlane.f32.xlu0 %v1863
  %v1865 = vpop.xlane.xlu0 %1864
  %v1866 = vsel %vm720, %v1743, 0.0
  %1867 = vadd.xlane.f32.xlu0 %v1866
  %v1868 = vpop.xlane.xlu0 %1867
  %v1869 = vsel %vm720, %v1744, 0.0
  %1870 = vadd.xlane.f32.xlu0 %v1869
  %v1871 = vpop.xlane.xlu0 %1870
  %v1872 = vsel %vm720, %v1745, 0.0
  %1873 = vadd.xlane.f32.xlu0 %v1872
  %v1874 = vpop.xlane.xlu0 %1873
  %v1875 = vsel %vm720, %v1746, 0.0
  %1876 = vadd.xlane.f32.xlu0 %v1875
  %v1877 = vpop.xlane.xlu0 %1876
  %v1878 = vsel %vm720, %v1747, 0.0
  %1879 = vadd.xlane.f32.xlu0 %v1878
  %v1880 = vpop.xlane.xlu0 %1879
  %v1881 = vsel %vm720, %v1748, 0.0
  %1882 = vadd.xlane.f32.xlu0 %v1881
  %v1883 = vpop.xlane.xlu0 %1882
  %v1884 = vsel %vm720, %v1749, 0.0
  %1885 = vadd.xlane.f32.xlu0 %v1884
  %v1886 = vpop.xlane.xlu0 %1885
  %v1887 = vsel %vm720, %v1750, 0.0
  %1888 = vadd.xlane.f32.xlu0 %v1887
  %v1889 = vpop.xlane.xlu0 %1888
  %v1890 = vsel %vm720, %v1751, 0.0
  %1891 = vadd.xlane.f32.xlu0 %v1890
  %v1892 = vpop.xlane.xlu0 %1891
  %v1893 = vsel %vm720, %v1752, 0.0
  %1894 = vadd.xlane.f32.xlu0 %v1893
  %v1895 = vpop.xlane.xlu0 %1894
  %v1896 = vsel %vm720, %v1753, 0.0
  %1897 = vadd.xlane.f32.xlu0 %v1896
  %v1898 = vpop.xlane.xlu0 %1897
  %v1899 = vsel %vm720, %v1754, 0.0
  %1900 = vadd.xlane.f32.xlu0 %v1899
  %v1901 = vpop.xlane.xlu0 %1900
  %v1902 = vsel %vm720, %v1755, 0.0
  %1903 = vadd.xlane.f32.xlu0 %v1902
  %v1904 = vpop.xlane.xlu0 %1903
  %v1905 = vsel %vm720, %v1756, 0.0
  %1906 = vadd.xlane.f32.xlu0 %v1905
  %v1907 = vpop.xlane.xlu0 %1906
  %v1908 = vsel %vm720, %v1757, 0.0
  %1909 = vadd.xlane.f32.xlu0 %v1908
  %v1910 = vpop.xlane.xlu0 %1909
  %v1911 = vsel %vm720, %v1758, 0.0
  %1912 = vadd.xlane.f32.xlu0 %v1911
  %v1913 = vpop.xlane.xlu0 %1912
  %v1914 = vsel %vm720, %v1759, 0.0
  %1915 = vadd.xlane.f32.xlu0 %v1914
  %v1916 = vpop.xlane.xlu0 %1915
  %v1917 = vsel %vm720, %v1760, 0.0
  %1918 = vadd.xlane.f32.xlu0 %v1917
  %v1919 = vpop.xlane.xlu0 %1918
  %v1920 = vsel %vm720, %v1761, 0.0
  %1921 = vadd.xlane.f32.xlu0 %v1920
  %v1922 = vpop.xlane.xlu0 %1921
  %v1923 = vsel %vm720, %v1762, 0.0
  %1924 = vadd.xlane.f32.xlu0 %v1923
  %v1925 = vpop.xlane.xlu0 %1924
  %v1926 = vsel %vm720, %v1763, 0.0
  %1927 = vadd.xlane.f32.xlu0 %v1926
  %v1928 = vpop.xlane.xlu0 %1927
  %v1929 = vsel %vm720, %v1764, 0.0
  %1930 = vadd.xlane.f32.xlu0 %v1929
  %v1931 = vpop.xlane.xlu0 %1930
  %v1932 = vsel %vm720, %v1765, 0.0
  %1933 = vadd.xlane.f32.xlu0 %v1932
  %v1934 = vpop.xlane.xlu0 %1933
  %v1935 = vsel %vm889, %v1766, 0.0
  %1936 = vadd.xlane.f32.xlu0 %v1935
  %v1937 = vpop.xlane.xlu0 %1936
  %v1938 = vld [vmem:[#allocation2] sm:$0x1]
  %v1940 = vlaneseq
  %v1941 = vshrl.u32 %v1940, 7
  %v1942 = vsub.s32 0, %v1941
  %v1943 = vrot.slane %v1938, %v1942
  %v1945 = vadd.f32 %v1769, %v1943
  %v1946 = vadd.f32 %v1772, %v1943
  %v1947 = vadd.f32 %v1775, %v1943
  %v1948 = vadd.f32 %v1778, %v1943
  %v1949 = vadd.f32 %v1781, %v1943
  %v1950 = vadd.f32 %v1784, %v1943
  %v1951 = vadd.f32 %v1787, %v1943
  %v1952 = vadd.f32 %v1790, %v1943
  %v1953 = vadd.f32 %v1793, %v1943
  %v1954 = vadd.f32 %v1796, %v1943
  %v1955 = vadd.f32 %v1799, %v1943
  %v1956 = vadd.f32 %v1802, %v1943
  %v1957 = vadd.f32 %v1805, %v1943
  %v1958 = vadd.f32 %v1808, %v1943
  %v1959 = vadd.f32 %v1811, %v1943
  %v1960 = vadd.f32 %v1814, %v1943
  %v1961 = vadd.f32 %v1817, %v1943
  %v1962 = vadd.f32 %v1820, %v1943
  %v1963 = vadd.f32 %v1823, %v1943
  %v1964 = vadd.f32 %v1826, %v1943
  %v1965 = vadd.f32 %v1829, %v1943
  %v1966 = vadd.f32 %v1832, %v1943
  %v1967 = vadd.f32 %v1835, %v1943
  %v1968 = vadd.f32 %v1838, %v1943
  %v1969 = vadd.f32 %v1841, %v1943
  %v1970 = vadd.f32 %v1844, %v1943
  %v1971 = vadd.f32 %v1847, %v1943
  %v1972 = vadd.f32 %v1850, %v1943
  %v1973 = vadd.f32 %v1853, %v1943
  %v1974 = vadd.f32 %v1856, %v1943
  %v1975 = vadd.f32 %v1859, %v1943
  %v1976 = vadd.f32 %v1862, %v1943
  %v1977 = vadd.f32 %v1865, %v1943
  %v1978 = vadd.f32 %v1868, %v1943
  %v1979 = vadd.f32 %v1871, %v1943
  %v1980 = vadd.f32 %v1874, %v1943
  %v1981 = vadd.f32 %v1877, %v1943
  %v1982 = vadd.f32 %v1880, %v1943
  %v1983 = vadd.f32 %v1883, %v1943
  %v1984 = vadd.f32 %v1886, %v1943
  %v1985 = vadd.f32 %v1889, %v1943
  %v1986 = vadd.f32 %v1892, %v1943
  %v1987 = vadd.f32 %v1895, %v1943
  %v1988 = vadd.f32 %v1898, %v1943
  %v1989 = vadd.f32 %v1901, %v1943
  %v1990 = vadd.f32 %v1904, %v1943
  %v1991 = vadd.f32 %v1907, %v1943
  %v1992 = vadd.f32 %v1910, %v1943
  %v1993 = vadd.f32 %v1913, %v1943
  %v1994 = vadd.f32 %v1916, %v1943
  %v1995 = vadd.f32 %v1919, %v1943
  %v1996 = vadd.f32 %v1922, %v1943
  %v1997 = vadd.f32 %v1925, %v1943
  %v1998 = vadd.f32 %v1928, %v1943
  %v1999 = vadd.f32 %v1931, %v1943
  %v2000 = vadd.f32 %v1934, %v1943
  %v2001 = vadd.f32 %v1937, %v1943
  %v2002 = vsub.f32 0.0, %v1945
  %v2003 = vsub.f32 0.0, %v1946
  %v2004 = vsub.f32 0.0, %v1947
  %v2005 = vsub.f32 0.0, %v1948
  %v2006 = vsub.f32 0.0, %v1949
  %v2007 = vsub.f32 0.0, %v1950
  %v2008 = vsub.f32 0.0, %v1951
  %v2009 = vsub.f32 0.0, %v1952
  %v2010 = vsub.f32 0.0, %v1953
  %v2011 = vsub.f32 0.0, %v1954
  %v2012 = vsub.f32 0.0, %v1955
  %v2013 = vsub.f32 0.0, %v1956
  %v2014 = vsub.f32 0.0, %v1957
  %v2015 = vsub.f32 0.0, %v1958
  %v2016 = vsub.f32 0.0, %v1959
  %v2017 = vsub.f32 0.0, %v1960
  %v2018 = vsub.f32 0.0, %v1961
  %v2019 = vsub.f32 0.0, %v1962
  %v2020 = vsub.f32 0.0, %v1963
  %v2021 = vsub.f32 0.0, %v1964
  %v2022 = vsub.f32 0.0, %v1965
  %v2023 = vsub.f32 0.0, %v1966
  %v2024 = vsub.f32 0.0, %v1967
  %v2025 = vsub.f32 0.0, %v1968
  %v2026 = vsub.f32 0.0, %v1969
  %v2027 = vsub.f32 0.0, %v1970
  %v2028 = vsub.f32 0.0, %v1971
  %v2029 = vsub.f32 0.0, %v1972
  %v2030 = vsub.f32 0.0, %v1973
  %v2031 = vsub.f32 0.0, %v1974
  %v2032 = vsub.f32 0.0, %v1975
  %v2033 = vsub.f32 0.0, %v1976
  %v2034 = vsub.f32 0.0, %v1977
  %v2035 = vsub.f32 0.0, %v1978
  %v2036 = vsub.f32 0.0, %v1979
  %v2037 = vsub.f32 0.0, %v1980
  %v2038 = vsub.f32 0.0, %v1981
  %v2039 = vsub.f32 0.0, %v1982
  %v2040 = vsub.f32 0.0, %v1983
  %v2041 = vsub.f32 0.0, %v1984
  %v2042 = vsub.f32 0.0, %v1985
  %v2043 = vsub.f32 0.0, %v1986
  %v2044 = vsub.f32 0.0, %v1987
  %v2045 = vsub.f32 0.0, %v1988
  %v2046 = vsub.f32 0.0, %v1989
  %v2047 = vsub.f32 0.0, %v1990
  %v2048 = vsub.f32 0.0, %v1991
  %v2049 = vsub.f32 0.0, %v1992
  %v2050 = vsub.f32 0.0, %v1993
  %v2051 = vsub.f32 0.0, %v1994
  %v2052 = vsub.f32 0.0, %v1995
  %v2053 = vsub.f32 0.0, %v1996
  %v2054 = vsub.f32 0.0, %v1997
  %v2055 = vsub.f32 0.0, %v1998
  %v2056 = vsub.f32 0.0, %v1999
  %v2057 = vsub.f32 0.0, %v2000
  %v2058 = vsub.f32 0.0, %v2001
  %v2059 = vmul.f32 %v2002, 1.442695
  %v2060 = vpow.pop %v2059
  %v2061 = vmul.f32 %v2003, 1.442695
  %v2062 = vpow.pop %v2061
  %v2063 = vmul.f32 %v2004, 1.442695
  %v2064 = vpow.pop %v2063
  %v2065 = vmul.f32 %v2005, 1.442695
  %v2066 = vpow.pop %v2065
  %v2067 = vmul.f32 %v2006, 1.442695
  %v2068 = vpow.pop %v2067
  %v2069 = vmul.f32 %v2007, 1.442695
  %v2070 = vpow.pop %v2069
  %v2071 = vmul.f32 %v2008, 1.442695
  %v2072 = vpow.pop %v2071
  %v2073 = vmul.f32 %v2009, 1.442695
  %v2074 = vpow.pop %v2073
  %v2075 = vmul.f32 %v2010, 1.442695
  %v2076 = vpow.pop %v2075
  %v2077 = vmul.f32 %v2011, 1.442695
  %v2078 = vpow.pop %v2077
  %v2079 = vmul.f32 %v2012, 1.442695
  %v2080 = vpow.pop %v2079
  %v2081 = vmul.f32 %v2013, 1.442695
  %v2082 = vpow.pop %v2081
  %v2083 = vmul.f32 %v2014, 1.442695
  %v2084 = vpow.pop %v2083
  %v2085 = vmul.f32 %v2015, 1.442695
  %v2086 = vpow.pop %v2085
  %v2087 = vmul.f32 %v2016, 1.442695
  %v2088 = vpow.pop %v2087
  %v2089 = vmul.f32 %v2017, 1.442695
  %v2090 = vpow.pop %v2089
  %v2091 = vmul.f32 %v2018, 1.442695
  %v2092 = vpow.pop %v2091
  %v2093 = vmul.f32 %v2019, 1.442695
  %v2094 = vpow.pop %v2093
  %v2095 = vmul.f32 %v2020, 1.442695
  %v2096 = vpow.pop %v2095
  %v2097 = vmul.f32 %v2021, 1.442695
  %v2098 = vpow.pop %v2097
  %v2099 = vmul.f32 %v2022, 1.442695
  %v2100 = vpow.pop %v2099
  %v2101 = vmul.f32 %v2023, 1.442695
  %v2102 = vpow.pop %v2101
  %v2103 = vmul.f32 %v2024, 1.442695
  %v2104 = vpow.pop %v2103
  %v2105 = vmul.f32 %v2025, 1.442695
  %v2106 = vpow.pop %v2105
  %v2107 = vmul.f32 %v2026, 1.442695
  %v2108 = vpow.pop %v2107
  %v2109 = vmul.f32 %v2027, 1.442695
  %v2110 = vpow.pop %v2109
  %v2111 = vmul.f32 %v2028, 1.442695
  %v2112 = vpow.pop %v2111
  %v2113 = vmul.f32 %v2029, 1.442695
  %v2114 = vpow.pop %v2113
  %v2115 = vmul.f32 %v2030, 1.442695
  %v2116 = vpow.pop %v2115
  %v2117 = vmul.f32 %v2031, 1.442695
  %v2118 = vpow.pop %v2117
  %v2119 = vmul.f32 %v2032, 1.442695
  %v2120 = vpow.pop %v2119
  %v2121 = vmul.f32 %v2033, 1.442695
  %v2122 = vpow.pop %v2121
  %v2123 = vmul.f32 %v2034, 1.442695
  %v2124 = vpow.pop %v2123
  %v2125 = vmul.f32 %v2035, 1.442695
  %v2126 = vpow.pop %v2125
  %v2127 = vmul.f32 %v2036, 1.442695
  %v2128 = vpow.pop %v2127
  %v2129 = vmul.f32 %v2037, 1.442695
  %v2130 = vpow.pop %v2129
  %v2131 = vmul.f32 %v2038, 1.442695
  %v2132 = vpow.pop %v2131
  %v2133 = vmul.f32 %v2039, 1.442695
  %v2134 = vpow.pop %v2133
  %v2135 = vmul.f32 %v2040, 1.442695
  %v2136 = vpow.pop %v2135
  %v2137 = vmul.f32 %v2041, 1.442695
  %v2138 = vpow.pop %v2137
  %v2139 = vmul.f32 %v2042, 1.442695
  %v2140 = vpow.pop %v2139
  %v2141 = vmul.f32 %v2043, 1.442695
  %v2142 = vpow.pop %v2141
  %v2143 = vmul.f32 %v2044, 1.442695
  %v2144 = vpow.pop %v2143
  %v2145 = vmul.f32 %v2045, 1.442695
  %v2146 = vpow.pop %v2145
  %v2147 = vmul.f32 %v2046, 1.442695
  %v2148 = vpow.pop %v2147
  %v2149 = vmul.f32 %v2047, 1.442695
  %v2150 = vpow.pop %v2149
  %v2151 = vmul.f32 %v2048, 1.442695
  %v2152 = vpow.pop %v2151
  %v2153 = vmul.f32 %v2049, 1.442695
  %v2154 = vpow.pop %v2153
  %v2155 = vmul.f32 %v2050, 1.442695
  %v2156 = vpow.pop %v2155
  %v2157 = vmul.f32 %v2051, 1.442695
  %v2158 = vpow.pop %v2157
  %v2159 = vmul.f32 %v2052, 1.442695
  %v2160 = vpow.pop %v2159
  %v2161 = vmul.f32 %v2053, 1.442695
  %v2162 = vpow.pop %v2161
  %v2163 = vmul.f32 %v2054, 1.442695
  %v2164 = vpow.pop %v2163
  %v2165 = vmul.f32 %v2055, 1.442695
  %v2166 = vpow.pop %v2165
  %v2167 = vmul.f32 %v2056, 1.442695
  %v2168 = vpow.pop %v2167
  %v2169 = vmul.f32 %v2057, 1.442695
  %v2170 = vpow.pop %v2169
  %v2171 = vmul.f32 %v2058, 1.442695
  %v2172 = vpow.pop %v2171
  %v2173 = vadd.f32 %v2060, 1.0
  %v2174 = vadd.f32 %v2062, 1.0
  %v2175 = vadd.f32 %v2064, 1.0
  %v2176 = vadd.f32 %v2066, 1.0
  %v2177 = vadd.f32 %v2068, 1.0
  %v2178 = vadd.f32 %v2070, 1.0
  %v2179 = vadd.f32 %v2072, 1.0
  %v2180 = vadd.f32 %v2074, 1.0
  %v2181 = vadd.f32 %v2076, 1.0
  %v2182 = vadd.f32 %v2078, 1.0
  %v2183 = vadd.f32 %v2080, 1.0
  %v2184 = vadd.f32 %v2082, 1.0
  %v2185 = vadd.f32 %v2084, 1.0
  %v2186 = vadd.f32 %v2086, 1.0
  %v2187 = vadd.f32 %v2088, 1.0
  %v2188 = vadd.f32 %v2090, 1.0
  %v2189 = vadd.f32 %v2092, 1.0
  %v2190 = vadd.f32 %v2094, 1.0
  %v2191 = vadd.f32 %v2096, 1.0
  %v2192 = vadd.f32 %v2098, 1.0
  %v2193 = vadd.f32 %v2100, 1.0
  %v2194 = vadd.f32 %v2102, 1.0
  %v2195 = vadd.f32 %v2104, 1.0
  %v2196 = vadd.f32 %v2106, 1.0
  %v2197 = vadd.f32 %v2108, 1.0
  %v2198 = vadd.f32 %v2110, 1.0
  %v2199 = vadd.f32 %v2112, 1.0
  %v2200 = vadd.f32 %v2114, 1.0
  %v2201 = vadd.f32 %v2116, 1.0
  %v2202 = vadd.f32 %v2118, 1.0
  %v2203 = vadd.f32 %v2120, 1.0
  %v2204 = vadd.f32 %v2122, 1.0
  %v2205 = vadd.f32 %v2124, 1.0
  %v2206 = vadd.f32 %v2126, 1.0
  %v2207 = vadd.f32 %v2128, 1.0
  %v2208 = vadd.f32 %v2130, 1.0
  %v2209 = vadd.f32 %v2132, 1.0
  %v2210 = vadd.f32 %v2134, 1.0
  %v2211 = vadd.f32 %v2136, 1.0
  %v2212 = vadd.f32 %v2138, 1.0
  %v2213 = vadd.f32 %v2140, 1.0
  %v2214 = vadd.f32 %v2142, 1.0
  %v2215 = vadd.f32 %v2144, 1.0
  %v2216 = vadd.f32 %v2146, 1.0
  %v2217 = vadd.f32 %v2148, 1.0
  %v2218 = vadd.f32 %v2150, 1.0
  %v2219 = vadd.f32 %v2152, 1.0
  %v2220 = vadd.f32 %v2154, 1.0
  %v2221 = vadd.f32 %v2156, 1.0
  %v2222 = vadd.f32 %v2158, 1.0
  %v2223 = vadd.f32 %v2160, 1.0
  %v2224 = vadd.f32 %v2162, 1.0
  %v2225 = vadd.f32 %v2164, 1.0
  %v2226 = vadd.f32 %v2166, 1.0
  %v2227 = vadd.f32 %v2168, 1.0
  %v2228 = vadd.f32 %v2170, 1.0
  %v2229 = vadd.f32 %v2172, 1.0
  %v2230 = vrcp.pop %v2173
  %v2231 = vmul.f32 1.0, %v2230
  %v2232 = vrcp.pop %v2174
  %v2233 = vmul.f32 1.0, %v2232
  %v2234 = vrcp.pop %v2175
  %v2235 = vmul.f32 1.0, %v2234
  %v2236 = vrcp.pop %v2176
  %v2237 = vmul.f32 1.0, %v2236
  %v2238 = vrcp.pop %v2177
  %v2239 = vmul.f32 1.0, %v2238
  %v2240 = vrcp.pop %v2178
  %v2241 = vmul.f32 1.0, %v2240
  %v2242 = vrcp.pop %v2179
  %v2243 = vmul.f32 1.0, %v2242
  %v2244 = vrcp.pop %v2180
  %v2245 = vmul.f32 1.0, %v2244
  %v2246 = vrcp.pop %v2181
  %v2247 = vmul.f32 1.0, %v2246
  %v2248 = vrcp.pop %v2182
  %v2249 = vmul.f32 1.0, %v2248
  %v2250 = vrcp.pop %v2183
  %v2251 = vmul.f32 1.0, %v2250
  %v2252 = vrcp.pop %v2184
  %v2253 = vmul.f32 1.0, %v2252
  %v2254 = vrcp.pop %v2185
  %v2255 = vmul.f32 1.0, %v2254
  %v2256 = vrcp.pop %v2186
  %v2257 = vmul.f32 1.0, %v2256
  %v2258 = vrcp.pop %v2187
  %v2259 = vmul.f32 1.0, %v2258
  %v2260 = vrcp.pop %v2188
  %v2261 = vmul.f32 1.0, %v2260
  %v2262 = vrcp.pop %v2189
  %v2263 = vmul.f32 1.0, %v2262
  %v2264 = vrcp.pop %v2190
  %v2265 = vmul.f32 1.0, %v2264
  %v2266 = vrcp.pop %v2191
  %v2267 = vmul.f32 1.0, %v2266
  %v2268 = vrcp.pop %v2192
  %v2269 = vmul.f32 1.0, %v2268
  %v2270 = vrcp.pop %v2193
  %v2271 = vmul.f32 1.0, %v2270
  %v2272 = vrcp.pop %v2194
  %v2273 = vmul.f32 1.0, %v2272
  %v2274 = vrcp.pop %v2195
  %v2275 = vmul.f32 1.0, %v2274
  %v2276 = vrcp.pop %v2196
  %v2277 = vmul.f32 1.0, %v2276
  %v2278 = vrcp.pop %v2197
  %v2279 = vmul.f32 1.0, %v2278
  %v2280 = vrcp.pop %v2198
  %v2281 = vmul.f32 1.0, %v2280
  %v2282 = vrcp.pop %v2199
  %v2283 = vmul.f32 1.0, %v2282
  %v2284 = vrcp.pop %v2200
  %v2285 = vmul.f32 1.0, %v2284
  %v2286 = vrcp.pop %v2201
  %v2287 = vmul.f32 1.0, %v2286
  %v2288 = vrcp.pop %v2202
  %v2289 = vmul.f32 1.0, %v2288
  %v2290 = vrcp.pop %v2203
  %v2291 = vmul.f32 1.0, %v2290
  %v2292 = vrcp.pop %v2204
  %v2293 = vmul.f32 1.0, %v2292
  %v2294 = vrcp.pop %v2205
  %v2295 = vmul.f32 1.0, %v2294
  %v2296 = vrcp.pop %v2206
  %v2297 = vmul.f32 1.0, %v2296
  %v2298 = vrcp.pop %v2207
  %v2299 = vmul.f32 1.0, %v2298
  %v2300 = vrcp.pop %v2208
  %v2301 = vmul.f32 1.0, %v2300
  %v2302 = vrcp.pop %v2209
  %v2303 = vmul.f32 1.0, %v2302
  %v2304 = vrcp.pop %v2210
  %v2305 = vmul.f32 1.0, %v2304
  %v2306 = vrcp.pop %v2211
  %v2307 = vmul.f32 1.0, %v2306
  %v2308 = vrcp.pop %v2212
  %v2309 = vmul.f32 1.0, %v2308
  %v2310 = vrcp.pop %v2213
  %v2311 = vmul.f32 1.0, %v2310
  %v2312 = vrcp.pop %v2214
  %v2313 = vmul.f32 1.0, %v2312
  %v2314 = vrcp.pop %v2215
  %v2315 = vmul.f32 1.0, %v2314
  %v2316 = vrcp.pop %v2216
  %v2317 = vmul.f32 1.0, %v2316
  %v2318 = vrcp.pop %v2217
  %v2319 = vmul.f32 1.0, %v2318
  %v2320 = vrcp.pop %v2218
  %v2321 = vmul.f32 1.0, %v2320
  %v2322 = vrcp.pop %v2219
  %v2323 = vmul.f32 1.0, %v2322
  %v2324 = vrcp.pop %v2220
  %v2325 = vmul.f32 1.0, %v2324
  %v2326 = vrcp.pop %v2221
  %v2327 = vmul.f32 1.0, %v2326
  %v2328 = vrcp.pop %v2222
  %v2329 = vmul.f32 1.0, %v2328
  %v2330 = vrcp.pop %v2223
  %v2331 = vmul.f32 1.0, %v2330
  %v2332 = vrcp.pop %v2224
  %v2333 = vmul.f32 1.0, %v2332
  %v2334 = vrcp.pop %v2225
  %v2335 = vmul.f32 1.0, %v2334
  %v2336 = vrcp.pop %v2226
  %v2337 = vmul.f32 1.0, %v2336
  %v2338 = vrcp.pop %v2227
  %v2339 = vmul.f32 1.0, %v2338
  %v2340 = vrcp.pop %v2228
  %v2341 = vmul.f32 1.0, %v2340
  %v2342 = vrcp.pop %v2229
  %v2343 = vmul.f32 1.0, %v2342
  %2401 = vrot.lane.b32.xlu0 %v2231, 1
  %v2402 = vpop.permute.xlu0 %2401
  %2403 = vrot.lane.b32.xlu0 %v2233, 1
  %v2404 = vpop.permute.xlu0 %2403
  %2405 = vrot.lane.b32.xlu0 %v2235, 1
  %v2406 = vpop.permute.xlu0 %2405
  %2407 = vrot.lane.b32.xlu0 %v2237, 1
  %v2408 = vpop.permute.xlu0 %2407
  %2409 = vrot.lane.b32.xlu0 %v2239, 1
  %v2410 = vpop.permute.xlu0 %2409
  %2411 = vrot.lane.b32.xlu0 %v2241, 1
  %v2412 = vpop.permute.xlu0 %2411
  %2413 = vrot.lane.b32.xlu0 %v2243, 1
  %v2414 = vpop.permute.xlu0 %2413
  %2415 = vrot.lane.b32.xlu0 %v2245, 1
  %v2416 = vpop.permute.xlu0 %2415
  %2417 = vrot.lane.b32.xlu0 %v2247, 1
  %v2418 = vpop.permute.xlu0 %2417
  %2419 = vrot.lane.b32.xlu0 %v2249, 1
  %v2420 = vpop.permute.xlu0 %2419
  %2421 = vrot.lane.b32.xlu0 %v2251, 1
  %v2422 = vpop.permute.xlu0 %2421
  %2423 = vrot.lane.b32.xlu0 %v2253, 1
  %v2424 = vpop.permute.xlu0 %2423
  %2425 = vrot.lane.b32.xlu0 %v2255, 1
  %v2426 = vpop.permute.xlu0 %2425
  %2427 = vrot.lane.b32.xlu0 %v2257, 1
  %v2428 = vpop.permute.xlu0 %2427
  %2429 = vrot.lane.b32.xlu0 %v2259, 1
  %v2430 = vpop.permute.xlu0 %2429
  %2431 = vrot.lane.b32.xlu0 %v2261, 1
  %v2432 = vpop.permute.xlu0 %2431
  %2433 = vrot.lane.b32.xlu0 %v2263, 1
  %v2434 = vpop.permute.xlu0 %2433
  %2435 = vrot.lane.b32.xlu0 %v2265, 1
  %v2436 = vpop.permute.xlu0 %2435
  %2437 = vrot.lane.b32.xlu0 %v2267, 1
  %v2438 = vpop.permute.xlu0 %2437
  %2439 = vrot.lane.b32.xlu0 %v2269, 1
  %v2440 = vpop.permute.xlu0 %2439
  %2441 = vrot.lane.b32.xlu0 %v2271, 1
  %v2442 = vpop.permute.xlu0 %2441
  %2443 = vrot.lane.b32.xlu0 %v2273, 1
  %v2444 = vpop.permute.xlu0 %2443
  %2445 = vrot.lane.b32.xlu0 %v2275, 1
  %v2446 = vpop.permute.xlu0 %2445
  %2447 = vrot.lane.b32.xlu0 %v2277, 1
  %v2448 = vpop.permute.xlu0 %2447
  %2449 = vrot.lane.b32.xlu0 %v2279, 1
  %v2450 = vpop.permute.xlu0 %2449
  %2451 = vrot.lane.b32.xlu0 %v2281, 1
  %v2452 = vpop.permute.xlu0 %2451
  %2453 = vrot.lane.b32.xlu0 %v2283, 1
  %v2454 = vpop.permute.xlu0 %2453
  %2455 = vrot.lane.b32.xlu0 %v2285, 1
  %v2456 = vpop.permute.xlu0 %2455
  %2457 = vrot.lane.b32.xlu0 %v2287, 1
  %v2458 = vpop.permute.xlu0 %2457
  %2459 = vrot.lane.b32.xlu0 %v2289, 1
  %v2460 = vpop.permute.xlu0 %2459
  %2461 = vrot.lane.b32.xlu0 %v2291, 1
  %v2462 = vpop.permute.xlu0 %2461
  %2463 = vrot.lane.b32.xlu0 %v2293, 1
  %v2464 = vpop.permute.xlu0 %2463
  %2465 = vrot.lane.b32.xlu0 %v2295, 1
  %v2466 = vpop.permute.xlu0 %2465
  %2467 = vrot.lane.b32.xlu0 %v2297, 1
  %v2468 = vpop.permute.xlu0 %2467
  %2469 = vrot.lane.b32.xlu0 %v2299, 1
  %v2470 = vpop.permute.xlu0 %2469
  %2471 = vrot.lane.b32.xlu0 %v2301, 1
  %v2472 = vpop.permute.xlu0 %2471
  %2473 = vrot.lane.b32.xlu0 %v2303, 1
  %v2474 = vpop.permute.xlu0 %2473
  %2475 = vrot.lane.b32.xlu0 %v2305, 1
  %v2476 = vpop.permute.xlu0 %2475
  %2477 = vrot.lane.b32.xlu0 %v2307, 1
  %v2478 = vpop.permute.xlu0 %2477
  %2479 = vrot.lane.b32.xlu0 %v2309, 1
  %v2480 = vpop.permute.xlu0 %2479
  %2481 = vrot.lane.b32.xlu0 %v2311, 1
  %v2482 = vpop.permute.xlu0 %2481
  %2483 = vrot.lane.b32.xlu0 %v2313, 1
  %v2484 = vpop.permute.xlu0 %2483
  %2485 = vrot.lane.b32.xlu0 %v2315, 1
  %v2486 = vpop.permute.xlu0 %2485
  %2487 = vrot.lane.b32.xlu0 %v2317, 1
  %v2488 = vpop.permute.xlu0 %2487
  %2489 = vrot.lane.b32.xlu0 %v2319, 1
  %v2490 = vpop.permute.xlu0 %2489
  %2491 = vrot.lane.b32.xlu0 %v2321, 1
  %v2492 = vpop.permute.xlu0 %2491
  %2493 = vrot.lane.b32.xlu0 %v2323, 1
  %v2494 = vpop.permute.xlu0 %2493
  %2495 = vrot.lane.b32.xlu0 %v2325, 1
  %v2496 = vpop.permute.xlu0 %2495
  %2497 = vrot.lane.b32.xlu0 %v2327, 1
  %v2498 = vpop.permute.xlu0 %2497
  %2499 = vrot.lane.b32.xlu0 %v2329, 1
  %v2500 = vpop.permute.xlu0 %2499
  %2501 = vrot.lane.b32.xlu0 %v2331, 1
  %v2502 = vpop.permute.xlu0 %2501
  %2503 = vrot.lane.b32.xlu0 %v2333, 1
  %v2504 = vpop.permute.xlu0 %2503
  %2505 = vrot.lane.b32.xlu0 %v2335, 1
  %v2506 = vpop.permute.xlu0 %2505
  %2507 = vrot.lane.b32.xlu0 %v2337, 1
  %v2508 = vpop.permute.xlu0 %2507
  %2509 = vrot.lane.b32.xlu0 %v2339, 1
  %v2510 = vpop.permute.xlu0 %2509
  %2511 = vrot.lane.b32.xlu0 %v2341, 1
  %v2512 = vpop.permute.xlu0 %2511
  %2513 = vrot.lane.b32.xlu0 %v2343, 1
  %v2514 = vpop.permute.xlu0 %2513
  %vm2572 = vcmask 15368
  %2573 = vst.msk [vmem:[%s5] sm:$0xff] %vm2572, %v2402
  %2574 = vst.msk [vmem:[%s5 + $0x8] sm:$0xff] %vm2572, %v2404
  %2575 = vst.msk [vmem:[%s5 + $0x10] sm:$0xff] %vm2572, %v2406
  %2576 = vst.msk [vmem:[%s5 + $0x18] sm:$0xff] %vm2572, %v2408
  %2577 = vst.msk [vmem:[%s5 + $0x20] sm:$0xff] %vm2572, %v2410
  %2578 = vst.msk [vmem:[%s5 + $0x28] sm:$0xff] %vm2572, %v2412
  %2579 = vst.msk [vmem:[%s5 + $0x30] sm:$0xff] %vm2572, %v2414
  %2580 = vst.msk [vmem:[%s5 + $0x38] sm:$0xff] %vm2572, %v2416
  %2581 = vst.msk [vmem:[%s5 + $0x40] sm:$0xff] %vm2572, %v2418
  %2582 = vst.msk [vmem:[%s5 + $0x48] sm:$0xff] %vm2572, %v2420
  %2583 = vst.msk [vmem:[%s5 + $0x50] sm:$0xff] %vm2572, %v2422
  %2584 = vst.msk [vmem:[%s5 + $0x58] sm:$0xff] %vm2572, %v2424
  %2585 = vst.msk [vmem:[%s5 + $0x60] sm:$0xff] %vm2572, %v2426
  %2586 = vst.msk [vmem:[%s5 + $0x68] sm:$0xff] %vm2572, %v2428
  %2587 = vst.msk [vmem:[%s5 + $0x70] sm:$0xff] %vm2572, %v2430
  %2588 = vst.msk [vmem:[%s5 + $0x78] sm:$0xff] %vm2572, %v2432
  %2589 = vst.msk [vmem:[%s5 + $0x80] sm:$0xff] %vm2572, %v2434
  %2590 = vst.msk [vmem:[%s5 + $0x88] sm:$0xff] %vm2572, %v2436
  %2591 = vst.msk [vmem:[%s5 + $0x90] sm:$0xff] %vm2572, %v2438
  %2592 = vst.msk [vmem:[%s5 + $0x98] sm:$0xff] %vm2572, %v2440
  %2593 = vst.msk [vmem:[%s5 + $0xa0] sm:$0xff] %vm2572, %v2442
  %2594 = vst.msk [vmem:[%s5 + $0xa8] sm:$0xff] %vm2572, %v2444
  %2595 = vst.msk [vmem:[%s5 + $0xb0] sm:$0xff] %vm2572, %v2446
  %2596 = vst.msk [vmem:[%s5 + $0xb8] sm:$0xff] %vm2572, %v2448
  %2597 = vst.msk [vmem:[%s5 + $0xc0] sm:$0xff] %vm2572, %v2450
  %2598 = vst.msk [vmem:[%s5 + $0xc8] sm:$0xff] %vm2572, %v2452
  %2599 = vst.msk [vmem:[%s5 + $0xd0] sm:$0xff] %vm2572, %v2454
  %2600 = vst.msk [vmem:[%s5 + $0xd8] sm:$0xff] %vm2572, %v2456
  %2601 = vst.msk [vmem:[%s5 + $0xe0] sm:$0xff] %vm2572, %v2458
  %2602 = vst.msk [vmem:[%s5 + $0xe8] sm:$0xff] %vm2572, %v2460
  %2603 = vst.msk [vmem:[%s5 + $0xf0] sm:$0xff] %vm2572, %v2462
  %2604 = vst.msk [vmem:[%s5 + $0xf8] sm:$0xff] %vm2572, %v2464
  %2605 = vst.msk [vmem:[%s5 + $0x100] sm:$0xff] %vm2572, %v2466
  %2606 = vst.msk [vmem:[%s5 + $0x108] sm:$0xff] %vm2572, %v2468
  %2607 = vst.msk [vmem:[%s5 + $0x110] sm:$0xff] %vm2572, %v2470
  %2608 = vst.msk [vmem:[%s5 + $0x118] sm:$0xff] %vm2572, %v2472
  %2609 = vst.msk [vmem:[%s5 + $0x120] sm:$0xff] %vm2572, %v2474
  %2610 = vst.msk [vmem:[%s5 + $0x128] sm:$0xff] %vm2572, %v2476
  %2611 = vst.msk [vmem:[%s5 + $0x130] sm:$0xff] %vm2572, %v2478
  %2612 = vst.msk [vmem:[%s5 + $0x138] sm:$0xff] %vm2572, %v2480
  %2613 = vst.msk [vmem:[%s5 + $0x140] sm:$0xff] %vm2572, %v2482
  %2614 = vst.msk [vmem:[%s5 + $0x148] sm:$0xff] %vm2572, %v2484
  %2615 = vst.msk [vmem:[%s5 + $0x150] sm:$0xff] %vm2572, %v2486
  %2616 = vst.msk [vmem:[%s5 + $0x158] sm:$0xff] %vm2572, %v2488
  %2617 = vst.msk [vmem:[%s5 + $0x160] sm:$0xff] %vm2572, %v2490
  %2618 = vst.msk [vmem:[%s5 + $0x168] sm:$0xff] %vm2572, %v2492
  %2619 = vst.msk [vmem:[%s5 + $0x170] sm:$0xff] %vm2572, %v2494
  %2620 = vst.msk [vmem:[%s5 + $0x178] sm:$0xff] %vm2572, %v2496
  %2621 = vst.msk [vmem:[%s5 + $0x180] sm:$0xff] %vm2572, %v2498
  %2622 = vst.msk [vmem:[%s5 + $0x188] sm:$0xff] %vm2572, %v2500
  %2623 = vst.msk [vmem:[%s5 + $0x190] sm:$0xff] %vm2572, %v2502
  %2624 = vst.msk [vmem:[%s5 + $0x198] sm:$0xff] %vm2572, %v2504
  %2625 = vst.msk [vmem:[%s5 + $0x1a0] sm:$0xff] %vm2572, %v2506
  %2626 = vst.msk [vmem:[%s5 + $0x1a8] sm:$0xff] %vm2572, %v2508
  %2627 = vst.msk [vmem:[%s5 + $0x1b0] sm:$0xff] %vm2572, %v2510
  %2628 = vst.msk [vmem:[%s5 + $0x1b8] sm:$0xff] %vm2572, %v2512
  %vm2629 = vcmask 9224
  %2630 = vst.msk [vmem:[%s5 + $0x1c0] sm:$0x3] %vm2629, %v2514
  %s2631 = scalar_lea.vmem %s1, 16
  %v2632 = vld [vmem:[%s2631] sm:$0xf]
  %v2633 = vld [vmem:[%s2631 + $0x4] sm:$0xf]
  %v2634 = vld [vmem:[%s2631 + $0x8] sm:$0xf]
  %v2635 = vld [vmem:[%s2631 + $0xc] sm:$0xf]
  %v2636 = vld [vmem:[%s2] sm:$0x1]
  %v2638 = vlaneseq
  %v2639 = vshrl.u32 %v2638, 7
  %v2640 = vsub.s32 0, %v2639
  %v2641 = vrot.slane %v2636, %v2640
  %v2647 = vunpack.c.l.b16 %v2632
  %v2648 = vunpack.c.l.b16 %v2633
  %v2649 = vunpack.c.l.b16 %v2634
  %v2650 = vunpack.c.l.b16 %v2635
  %v2651 = vpack.c.b16 %v2648, %v2647
  %v2652 = vpack.c.b16 %v2650, %v2649
  %2655 = vmatprep.subr.bf16.mxu0 0
  %2656 = vmatpush1.bf16.msra.mxu0 %v2651
  %2657 = vmatprep.subr.bf16.mxu0 0
  %2658 = vmatpush1.bf16.msra.mxu0 %v2652
  %2659 = vmatprep.subr.bf16.mxu0 0
  %2660 = vmatpush1.bf16.msra.mxu0 0
  %2661 = vmatprep.subr.bf16.mxu0 0
  %2662 = vmatpush1.bf16.msra.mxu0 0
  %2663 = vmatprep.subr.bf16.mxu0 0
  %2664 = vmatpush1.bf16.msra.mxu0 0
  %2665 = vmatprep.subr.bf16.mxu0 0
  %2666 = vmatpush1.bf16.msra.mxu0 0
  %2667 = vmatprep.subr.bf16.mxu0 0
  %2668 = vmatpush1.bf16.msra.mxu0 0
  %2669 = vmatprep.subr.bf16.mxu0 0
  %2670 = vmatpush1.bf16.msra.mxu0 0
  %2671 = vmatprep.subr.bf16.mxu0 0
  %2672 = vmatpush1.bf16.msra.mxu0 0
  %2673 = vmatprep.subr.bf16.mxu0 0
  %2674 = vmatpush1.bf16.msra.mxu0 0
  %2675 = vmatprep.subr.bf16.mxu0 0
  %2676 = vmatpush1.bf16.msra.mxu0 0
  %2677 = vmatprep.subr.bf16.mxu0 0
  %2678 = vmatpush1.bf16.msra.mxu0 0
  %2679 = vmatprep.subr.bf16.mxu0 0
  %2680 = vmatpush1.bf16.msra.mxu0 0
  %2681 = vmatprep.subr.bf16.mxu0 0
  %2682 = vmatpush1.bf16.msra.mxu0 0
  %2683 = vmatprep.subr.bf16.mxu0 0
  %2684 = vmatpush1.bf16.msra.mxu0 0
  %2685 = vmatprep.subr.bf16.mxu0 0
  %2686 = vmatpush1.bf16.msra.mxu0 0
  %2687 = vmatprep.mubr.bf16.mxu0 0
  %2688 = vmatmul.mubr.bf16.gmra.mrb[0].mxu0 %v249
  %v2689 = vpop.f32.mrb[0].mxu0
  %v2690 = vadd.f32 %v2641, %v2689
  %v2691 = vpop.f32.mrb[0].mxu0
  %v2692 = vpop.f32.mrb[0].mxu0
  %v2693 = vadd.f32 %v2641, %v2692
  %v2694 = vpop.f32.mrb[0].mxu0
  %2695 = vmatprep.mubr.bf16.mxu0 0
  %2696 = vmatmul.mubr.bf16.gmra.mrb[0].mxu0 %v252
  %v2697 = vpop.f32.mrb[0].mxu0
  %v2698 = vadd.f32 %v2641, %v2697
  %v2699 = vpop.f32.mrb[0].mxu0
  %v2700 = vpop.f32.mrb[0].mxu0
  %v2701 = vadd.f32 %v2641, %v2700
  %v2702 = vpop.f32.mrb[0].mxu0
  %2703 = vmatprep.mubr.bf16.mxu0 0
  %2704 = vmatmul.mubr.bf16.gmra.mrb[0].mxu0 %v255
  %v2705 = vpop.f32.mrb[0].mxu0
  %v2706 = vadd.f32 %v2641, %v2705
  %v2707 = vpop.f32.mrb[0].mxu0
  %v2708 = vpop.f32.mrb[0].mxu0
  %v2709 = vadd.f32 %v2641, %v2708
  %v2710 = vpop.f32.mrb[0].mxu0
  %2711 = vmatprep.mubr.bf16.mxu0 0
  %2712 = vmatmul.mubr.bf16.gmra.mrb[0].mxu0 %v258
  %v2713 = vpop.f32.mrb[0].mxu0
  %v2714 = vadd.f32 %v2641, %v2713
  %v2715 = vpop.f32.mrb[0].mxu0
  %v2716 = vpop.f32.mrb[0].mxu0
  %v2717 = vadd.f32 %v2641, %v2716
  %v2718 = vpop.f32.mrb[0].mxu0
  %2719 = vmatprep.mubr.bf16.mxu0 0
  %2720 = vmatmul.mubr.bf16.gmra.mrb[0].mxu0 %v261
  %v2721 = vpop.f32.mrb[0].mxu0
  %v2722 = vadd.f32 %v2641, %v2721
  %v2723 = vpop.f32.mrb[0].mxu0
  %v2724 = vpop.f32.mrb[0].mxu0
  %v2725 = vadd.f32 %v2641, %v2724
  %v2726 = vpop.f32.mrb[0].mxu0
  %2727 = vmatprep.mubr.bf16.mxu0 0
  %2728 = vmatmul.mubr.bf16.gmra.mrb[0].mxu0 %v264
  %v2729 = vpop.f32.mrb[0].mxu0
  %v2730 = vadd.f32 %v2641, %v2729
  %v2731 = vpop.f32.mrb[0].mxu0
  %v2732 = vpop.f32.mrb[0].mxu0
  %v2733 = vadd.f32 %v2641, %v2732
  %v2734 = vpop.f32.mrb[0].mxu0
  %2735 = vmatprep.mubr.bf16.mxu0 0
  %2736 = vmatmul.mubr.bf16.gmra.mrb[0].mxu0 %v267
  %v2737 = vpop.f32.mrb[0].mxu0
  %v2738 = vadd.f32 %v2641, %v2737
  %v2739 = vpop.f32.mrb[0].mxu0
  %v2740 = vpop.f32.mrb[0].mxu0
  %v2741 = vadd.f32 %v2641, %v2740
  %v2742 = vpop.f32.mrb[0].mxu0
  %2743 = vmatprep.mubr.bf16.mxu0 0
  %2744 = vmatmul.mubr.bf16.gmra.mrb[0].mxu0 %v270
  %v2745 = vpop.f32.mrb[0].mxu0
  %v2746 = vadd.f32 %v2641, %v2745
  %v2747 = vpop.f32.mrb[0].mxu0
  %v2748 = vpop.f32.mrb[0].mxu0
  %v2749 = vadd.f32 %v2641, %v2748
  %v2750 = vpop.f32.mrb[0].mxu0
  %2751 = vmatprep.mubr.bf16.mxu0 0
  %2752 = vmatmul.mubr.bf16.gmra.mrb[0].mxu0 %v273
  %v2753 = vpop.f32.mrb[0].mxu0
  %v2754 = vadd.f32 %v2641, %v2753
  %v2755 = vpop.f32.mrb[0].mxu0
  %v2756 = vpop.f32.mrb[0].mxu0
  %v2757 = vadd.f32 %v2641, %v2756
  %v2758 = vpop.f32.mrb[0].mxu0
  %2759 = vmatprep.mubr.bf16.mxu0 0
  %2760 = vmatmul.mubr.bf16.gmra.mrb[0].mxu0 %v276
  %v2761 = vpop.f32.mrb[0].mxu0
  %v2762 = vadd.f32 %v2641, %v2761
  %v2763 = vpop.f32.mrb[0].mxu0
  %v2764 = vpop.f32.mrb[0].mxu0
  %v2765 = vadd.f32 %v2641, %v2764
  %v2766 = vpop.f32.mrb[0].mxu0
  %2767 = vmatprep.mubr.bf16.mxu0 0
  %2768 = vmatmul.mubr.bf16.gmra.mrb[0].mxu0 %v279
  %v2769 = vpop.f32.mrb[0].mxu0
  %v2770 = vadd.f32 %v2641, %v2769
  %v2771 = vpop.f32.mrb[0].mxu0
  %v2772 = vpop.f32.mrb[0].mxu0
  %v2773 = vadd.f32 %v2641, %v2772
  %v2774 = vpop.f32.mrb[0].mxu0
  %2775 = vmatprep.mubr.bf16.mxu0 0
  %2776 = vmatmul.mubr.bf16.gmra.mrb[0].mxu0 %v282
  %v2777 = vpop.f32.mrb[0].mxu0
  %v2778 = vadd.f32 %v2641, %v2777
  %v2779 = vpop.f32.mrb[0].mxu0
  %v2780 = vpop.f32.mrb[0].mxu0
  %v2781 = vadd.f32 %v2641, %v2780
  %v2782 = vpop.f32.mrb[0].mxu0
  %2783 = vmatprep.mubr.bf16.mxu0 0
  %2784 = vmatmul.mubr.bf16.gmra.mrb[0].mxu0 %v285
  %v2785 = vpop.f32.mrb[0].mxu0
  %v2786 = vadd.f32 %v2641, %v2785
  %v2787 = vpop.f32.mrb[0].mxu0
  %v2788 = vpop.f32.mrb[0].mxu0
  %v2789 = vadd.f32 %v2641, %v2788
  %v2790 = vpop.f32.mrb[0].mxu0
  %2791 = vmatprep.mubr.bf16.mxu0 0
  %2792 = vmatmul.mubr.bf16.gmra.mrb[0].mxu0 %v288
  %v2793 = vpop.f32.mrb[0].mxu0
  %v2794 = vadd.f32 %v2641, %v2793
  %v2795 = vpop.f32.mrb[0].mxu0
  %v2796 = vpop.f32.mrb[0].mxu0
  %v2797 = vadd.f32 %v2641, %v2796
  %v2798 = vpop.f32.mrb[0].mxu0
  %2799 = vmatprep.mubr.bf16.mxu0 0
  %2800 = vmatmul.mubr.bf16.gmra.mrb[0].mxu0 %v291
  %v2801 = vpop.f32.mrb[0].mxu0
  %v2802 = vadd.f32 %v2641, %v2801
  %v2803 = vpop.f32.mrb[0].mxu0
  %v2804 = vpop.f32.mrb[0].mxu0
  %v2805 = vadd.f32 %v2641, %v2804
  %v2806 = vpop.f32.mrb[0].mxu0
  %2807 = vmatprep.mubr.bf16.mxu0 0
  %2808 = vmatmul.mubr.bf16.gmra.mrb[0].mxu0 %v294
  %v2809 = vpop.f32.mrb[0].mxu0
  %v2810 = vadd.f32 %v2641, %v2809
  %v2811 = vpop.f32.mrb[0].mxu0
  %v2812 = vpop.f32.mrb[0].mxu0
  %v2813 = vadd.f32 %v2641, %v2812
  %v2814 = vpop.f32.mrb[0].mxu0
  %2815 = vmatprep.mubr.bf16.mxu0 0
  %2816 = vmatmul.mubr.bf16.gmra.mrb[0].mxu0 %v297
  %v2817 = vpop.f32.mrb[0].mxu0
  %v2818 = vadd.f32 %v2641, %v2817
  %v2819 = vpop.f32.mrb[0].mxu0
  %v2820 = vpop.f32.mrb[0].mxu0
  %v2821 = vadd.f32 %v2641, %v2820
  %v2822 = vpop.f32.mrb[0].mxu0
  %2823 = vmatprep.mubr.bf16.mxu0 0
  %2824 = vmatmul.mubr.bf16.gmra.mrb[0].mxu0 %v300
  %v2825 = vpop.f32.mrb[0].mxu0
  %v2826 = vadd.f32 %v2641, %v2825
  %v2827 = vpop.f32.mrb[0].mxu0
  %v2828 = vpop.f32.mrb[0].mxu0
  %v2829 = vadd.f32 %v2641, %v2828
  %v2830 = vpop.f32.mrb[0].mxu0
  %2831 = vmatprep.mubr.bf16.mxu0 0
  %2832 = vmatmul.mubr.bf16.gmra.mrb[0].mxu0 %v303
  %v2833 = vpop.f32.mrb[0].mxu0
  %v2834 = vadd.f32 %v2641, %v2833
  %v2835 = vpop.f32.mrb[0].mxu0
  %v2836 = vpop.f32.mrb[0].mxu0
  %v2837 = vadd.f32 %v2641, %v2836
  %v2838 = vpop.f32.mrb[0].mxu0
  %2839 = vmatprep.mubr.bf16.mxu0 0
  %2840 = vmatmul.mubr.bf16.gmra.mrb[0].mxu0 %v306
  %v2841 = vpop.f32.mrb[0].mxu0
  %v2842 = vadd.f32 %v2641, %v2841
  %v2843 = vpop.f32.mrb[0].mxu0
  %v2844 = vpop.f32.mrb[0].mxu0
  %v2845 = vadd.f32 %v2641, %v2844
  %v2846 = vpop.f32.mrb[0].mxu0
  %2847 = vmatprep.mubr.bf16.mxu0 0
  %2848 = vmatmul.mubr.bf16.gmra.mrb[0].mxu0 %v309
  %v2849 = vpop.f32.mrb[0].mxu0
  %v2850 = vadd.f32 %v2641, %v2849
  %v2851 = vpop.f32.mrb[0].mxu0
  %v2852 = vpop.f32.mrb[0].mxu0
  %v2853 = vadd.f32 %v2641, %v2852
  %v2854 = vpop.f32.mrb[0].mxu0
  %2855 = vmatprep.mubr.bf16.mxu0 0
  %2856 = vmatmul.mubr.bf16.gmra.mrb[0].mxu0 %v312
  %v2857 = vpop.f32.mrb[0].mxu0
  %v2858 = vadd.f32 %v2641, %v2857
  %v2859 = vpop.f32.mrb[0].mxu0
  %v2860 = vpop.f32.mrb[0].mxu0
  %v2861 = vadd.f32 %v2641, %v2860
  %v2862 = vpop.f32.mrb[0].mxu0
  %2863 = vmatprep.mubr.bf16.mxu0 0
  %2864 = vmatmul.mubr.bf16.gmra.mrb[0].mxu0 %v315
  %v2865 = vpop.f32.mrb[0].mxu0
  %v2866 = vadd.f32 %v2641, %v2865
  %v2867 = vpop.f32.mrb[0].mxu0
  %v2868 = vpop.f32.mrb[0].mxu0
  %v2869 = vadd.f32 %v2641, %v2868
  %v2870 = vpop.f32.mrb[0].mxu0
  %2871 = vmatprep.mubr.bf16.mxu0 0
  %2872 = vmatmul.mubr.bf16.gmra.mrb[0].mxu0 %v318
  %v2873 = vpop.f32.mrb[0].mxu0
  %v2874 = vadd.f32 %v2641, %v2873
  %v2875 = vpop.f32.mrb[0].mxu0
  %v2876 = vpop.f32.mrb[0].mxu0
  %v2877 = vadd.f32 %v2641, %v2876
  %v2878 = vpop.f32.mrb[0].mxu0
  %2879 = vmatprep.mubr.bf16.mxu0 0
  %2880 = vmatmul.mubr.bf16.gmra.mrb[0].mxu0 %v321
  %v2881 = vpop.f32.mrb[0].mxu0
  %v2882 = vadd.f32 %v2641, %v2881
  %v2883 = vpop.f32.mrb[0].mxu0
  %v2884 = vpop.f32.mrb[0].mxu0
  %v2885 = vadd.f32 %v2641, %v2884
  %v2886 = vpop.f32.mrb[0].mxu0
  %2887 = vmatprep.mubr.bf16.mxu0 0
  %2888 = vmatmul.mubr.bf16.gmra.mrb[0].mxu0 %v324
  %v2889 = vpop.f32.mrb[0].mxu0
  %v2890 = vadd.f32 %v2641, %v2889
  %v2891 = vpop.f32.mrb[0].mxu0
  %v2892 = vpop.f32.mrb[0].mxu0
  %v2893 = vadd.f32 %v2641, %v2892
  %v2894 = vpop.f32.mrb[0].mxu0
  %2895 = vmatprep.mubr.bf16.mxu0 0
  %2896 = vmatmul.mubr.bf16.gmra.mrb[0].mxu0 %v327
  %v2897 = vpop.f32.mrb[0].mxu0
  %v2898 = vadd.f32 %v2641, %v2897
  %v2899 = vpop.f32.mrb[0].mxu0
  %v2900 = vpop.f32.mrb[0].mxu0
  %v2901 = vadd.f32 %v2641, %v2900
  %v2902 = vpop.f32.mrb[0].mxu0
  %2903 = vmatprep.mubr.bf16.mxu0 0
  %2904 = vmatmul.mubr.bf16.gmra.mrb[0].mxu0 %v330
  %v2905 = vpop.f32.mrb[0].mxu0
  %v2906 = vadd.f32 %v2641, %v2905
  %v2907 = vpop.f32.mrb[0].mxu0
  %v2908 = vpop.f32.mrb[0].mxu0
  %v2909 = vadd.f32 %v2641, %v2908
  %v2910 = vpop.f32.mrb[0].mxu0
  %2911 = vmatprep.mubr.bf16.mxu0 0
  %2912 = vmatmul.mubr.bf16.gmra.mrb[0].mxu0 %v333
  %v2913 = vpop.f32.mrb[0].mxu0
  %v2914 = vadd.f32 %v2641, %v2913
  %v2915 = vpop.f32.mrb[0].mxu0
  %v2916 = vpop.f32.mrb[0].mxu0
  %v2917 = vpop.f32.mrb[0].mxu0
  %2918 = vdwg.mxu0
  %v2919 = vmax.f32 %v2690, 0.0
  %v2920 = vmax.f32 %v2693, 0.0
  %v2921 = vmax.f32 %v2698, 0.0
  %v2922 = vmax.f32 %v2701, 0.0
  %v2923 = vmax.f32 %v2706, 0.0
  %v2924 = vmax.f32 %v2709, 0.0
  %v2925 = vmax.f32 %v2714, 0.0
  %v2926 = vmax.f32 %v2717, 0.0
  %v2927 = vmax.f32 %v2722, 0.0
  %v2928 = vmax.f32 %v2725, 0.0
  %v2929 = vmax.f32 %v2730, 0.0
  %v2930 = vmax.f32 %v2733, 0.0
  %v2931 = vmax.f32 %v2738, 0.0
  %v2932 = vmax.f32 %v2741, 0.0
  %v2933 = vmax.f32 %v2746, 0.0
  %v2934 = vmax.f32 %v2749, 0.0
  %v2935 = vmax.f32 %v2754, 0.0
  %v2936 = vmax.f32 %v2757, 0.0
  %v2937 = vmax.f32 %v2762, 0.0
  %v2938 = vmax.f32 %v2765, 0.0
  %v2939 = vmax.f32 %v2770, 0.0
  %v2940 = vmax.f32 %v2773, 0.0
  %v2941 = vmax.f32 %v2778, 0.0
  %v2942 = vmax.f32 %v2781, 0.0
  %v2943 = vmax.f32 %v2786, 0.0
  %v2944 = vmax.f32 %v2789, 0.0
  %v2945 = vmax.f32 %v2794, 0.0
  %v2946 = vmax.f32 %v2797, 0.0
  %v2947 = vmax.f32 %v2802, 0.0
  %v2948 = vmax.f32 %v2805, 0.0
  %v2949 = vmax.f32 %v2810, 0.0
  %v2950 = vmax.f32 %v2813, 0.0
  %v2951 = vmax.f32 %v2818, 0.0
  %v2952 = vmax.f32 %v2821, 0.0
  %v2953 = vmax.f32 %v2826, 0.0
  %v2954 = vmax.f32 %v2829, 0.0
  %v2955 = vmax.f32 %v2834, 0.0
  %v2956 = vmax.f32 %v2837, 0.0
  %v2957 = vmax.f32 %v2842, 0.0
  %v2958 = vmax.f32 %v2845, 0.0
  %v2959 = vmax.f32 %v2850, 0.0
  %v2960 = vmax.f32 %v2853, 0.0
  %v2961 = vmax.f32 %v2858, 0.0
  %v2962 = vmax.f32 %v2861, 0.0
  %v2963 = vmax.f32 %v2866, 0.0
  %v2964 = vmax.f32 %v2869, 0.0
  %v2965 = vmax.f32 %v2874, 0.0
  %v2966 = vmax.f32 %v2877, 0.0
  %v2967 = vmax.f32 %v2882, 0.0
  %v2968 = vmax.f32 %v2885, 0.0
  %v2969 = vmax.f32 %v2890, 0.0
  %v2970 = vmax.f32 %v2893, 0.0
  %v2971 = vmax.f32 %v2898, 0.0
  %v2972 = vmax.f32 %v2901, 0.0
  %v2973 = vmax.f32 %v2906, 0.0
  %v2974 = vmax.f32 %v2909, 0.0
  %v2975 = vmax.f32 %v2914, 0.0
  %v2976 = vld [vmem:[%s3] sm:$0x1]
  %v2978 = vlaneseq
  %v2979 = vshrl.u32 %v2978, 7
  %v2980 = vsub.s32 0, %v2979
  %v2981 = vrot.slane %v2976, %v2980
  %v2983 = vmul.f32 %v2919, %v2981
  %v2984 = vmul.f32 %v2920, %v2981
  %v2985 = vmul.f32 %v2921, %v2981
  %v2986 = vmul.f32 %v2922, %v2981
  %v2987 = vmul.f32 %v2923, %v2981
  %v2988 = vmul.f32 %v2924, %v2981
  %v2989 = vmul.f32 %v2925, %v2981
  %v2990 = vmul.f32 %v2926, %v2981
  %v2991 = vmul.f32 %v2927, %v2981
  %v2992 = vmul.f32 %v2928, %v2981
  %v2993 = vmul.f32 %v2929, %v2981
  %v2994 = vmul.f32 %v2930, %v2981
  %v2995 = vmul.f32 %v2931, %v2981
  %v2996 = vmul.f32 %v2932, %v2981
  %v2997 = vmul.f32 %v2933, %v2981
  %v2998 = vmul.f32 %v2934, %v2981
  %v2999 = vmul.f32 %v2935, %v2981
  %v3000 = vmul.f32 %v2936, %v2981
  %v3001 = vmul.f32 %v2937, %v2981
  %v3002 = vmul.f32 %v2938, %v2981
  %v3003 = vmul.f32 %v2939, %v2981
  %v3004 = vmul.f32 %v2940, %v2981
  %v3005 = vmul.f32 %v2941, %v2981
  %v3006 = vmul.f32 %v2942, %v2981
  %v3007 = vmul.f32 %v2943, %v2981
  %v3008 = vmul.f32 %v2944, %v2981
  %v3009 = vmul.f32 %v2945, %v2981
  %v3010 = vmul.f32 %v2946, %v2981
  %v3011 = vmul.f32 %v2947, %v2981
  %v3012 = vmul.f32 %v2948, %v2981
  %v3013 = vmul.f32 %v2949, %v2981
  %v3014 = vmul.f32 %v2950, %v2981
  %v3015 = vmul.f32 %v2951, %v2981
  %v3016 = vmul.f32 %v2952, %v2981
  %v3017 = vmul.f32 %v2953, %v2981
  %v3018 = vmul.f32 %v2954, %v2981
  %v3019 = vmul.f32 %v2955, %v2981
  %v3020 = vmul.f32 %v2956, %v2981
  %v3021 = vmul.f32 %v2957, %v2981
  %v3022 = vmul.f32 %v2958, %v2981
  %v3023 = vmul.f32 %v2959, %v2981
  %v3024 = vmul.f32 %v2960, %v2981
  %v3025 = vmul.f32 %v2961, %v2981
  %v3026 = vmul.f32 %v2962, %v2981
  %v3027 = vmul.f32 %v2963, %v2981
  %v3028 = vmul.f32 %v2964, %v2981
  %v3029 = vmul.f32 %v2965, %v2981
  %v3030 = vmul.f32 %v2966, %v2981
  %v3031 = vmul.f32 %v2967, %v2981
  %v3032 = vmul.f32 %v2968, %v2981
  %v3033 = vmul.f32 %v2969, %v2981
  %v3034 = vmul.f32 %v2970, %v2981
  %v3035 = vmul.f32 %v2971, %v2981
  %v3036 = vmul.f32 %v2972, %v2981
  %v3037 = vmul.f32 %v2973, %v2981
  %v3038 = vmul.f32 %v2974, %v2981
  %v3039 = vmul.f32 %v2975, %v2981
  %v3040 = vsel %vm720, %v2983, 0.0
  %3041 = vadd.xlane.f32.xlu0 %v3040
  %v3042 = vpop.xlane.xlu0 %3041
  %v3043 = vsel %vm720, %v2984, 0.0
  %3044 = vadd.xlane.f32.xlu0 %v3043
  %v3045 = vpop.xlane.xlu0 %3044
  %v3046 = vsel %vm720, %v2985, 0.0
  %3047 = vadd.xlane.f32.xlu0 %v3046
  %v3048 = vpop.xlane.xlu0 %3047
  %v3049 = vsel %vm720, %v2986, 0.0
  %3050 = vadd.xlane.f32.xlu0 %v3049
  %v3051 = vpop.xlane.xlu0 %3050
  %v3052 = vsel %vm720, %v2987, 0.0
  %3053 = vadd.xlane.f32.xlu0 %v3052
  %v3054 = vpop.xlane.xlu0 %3053
  %v3055 = vsel %vm720, %v2988, 0.0
  %3056 = vadd.xlane.f32.xlu0 %v3055
  %v3057 = vpop.xlane.xlu0 %3056
  %v3058 = vsel %vm720, %v2989, 0.0
  %3059 = vadd.xlane.f32.xlu0 %v3058
  %v3060 = vpop.xlane.xlu0 %3059
  %v3061 = vsel %vm720, %v2990, 0.0
  %3062 = vadd.xlane.f32.xlu0 %v3061
  %v3063 = vpop.xlane.xlu0 %3062
  %v3064 = vsel %vm720, %v2991, 0.0
  %3065 = vadd.xlane.f32.xlu0 %v3064
  %v3066 = vpop.xlane.xlu0 %3065
  %v3067 = vsel %vm720, %v2992, 0.0
  %3068 = vadd.xlane.f32.xlu0 %v3067
  %v3069 = vpop.xlane.xlu0 %3068
  %v3070 = vsel %vm720, %v2993, 0.0
  %3071 = vadd.xlane.f32.xlu0 %v3070
  %v3072 = vpop.xlane.xlu0 %3071
  %v3073 = vsel %vm720, %v2994, 0.0
  %3074 = vadd.xlane.f32.xlu0 %v3073
  %v3075 = vpop.xlane.xlu0 %3074
  %v3076 = vsel %vm720, %v2995, 0.0
  %3077 = vadd.xlane.f32.xlu0 %v3076
  %v3078 = vpop.xlane.xlu0 %3077
  %v3079 = vsel %vm720, %v2996, 0.0
  %3080 = vadd.xlane.f32.xlu0 %v3079
  %v3081 = vpop.xlane.xlu0 %3080
  %v3082 = vsel %vm720, %v2997, 0.0
  %3083 = vadd.xlane.f32.xlu0 %v3082
  %v3084 = vpop.xlane.xlu0 %3083
  %v3085 = vsel %vm720, %v2998, 0.0
  %3086 = vadd.xlane.f32.xlu0 %v3085
  %v3087 = vpop.xlane.xlu0 %3086
  %v3088 = vsel %vm720, %v2999, 0.0
  %3089 = vadd.xlane.f32.xlu0 %v3088
  %v3090 = vpop.xlane.xlu0 %3089
  %v3091 = vsel %vm720, %v3000, 0.0
  %3092 = vadd.xlane.f32.xlu0 %v3091
  %v3093 = vpop.xlane.xlu0 %3092
  %v3094 = vsel %vm720, %v3001, 0.0
  %3095 = vadd.xlane.f32.xlu0 %v3094
  %v3096 = vpop.xlane.xlu0 %3095
  %v3097 = vsel %vm720, %v3002, 0.0
  %3098 = vadd.xlane.f32.xlu0 %v3097
  %v3099 = vpop.xlane.xlu0 %3098
  %v3100 = vsel %vm720, %v3003, 0.0
  %3101 = vadd.xlane.f32.xlu0 %v3100
  %v3102 = vpop.xlane.xlu0 %3101
  %v3103 = vsel %vm720, %v3004, 0.0
  %3104 = vadd.xlane.f32.xlu0 %v3103
  %v3105 = vpop.xlane.xlu0 %3104
  %v3106 = vsel %vm720, %v3005, 0.0
  %3107 = vadd.xlane.f32.xlu0 %v3106
  %v3108 = vpop.xlane.xlu0 %3107
  %v3109 = vsel %vm720, %v3006, 0.0
  %3110 = vadd.xlane.f32.xlu0 %v3109
  %v3111 = vpop.xlane.xlu0 %3110
  %v3112 = vsel %vm720, %v3007, 0.0
  %3113 = vadd.xlane.f32.xlu0 %v3112
  %v3114 = vpop.xlane.xlu0 %3113
  %v3115 = vsel %vm720, %v3008, 0.0
  %3116 = vadd.xlane.f32.xlu0 %v3115
  %v3117 = vpop.xlane.xlu0 %3116
  %v3118 = vsel %vm720, %v3009, 0.0
  %3119 = vadd.xlane.f32.xlu0 %v3118
  %v3120 = vpop.xlane.xlu0 %3119
  %v3121 = vsel %vm720, %v3010, 0.0
  %3122 = vadd.xlane.f32.xlu0 %v3121
  %v3123 = vpop.xlane.xlu0 %3122
  %v3124 = vsel %vm720, %v3011, 0.0
  %3125 = vadd.xlane.f32.xlu0 %v3124
  %v3126 = vpop.xlane.xlu0 %3125
  %v3127 = vsel %vm720, %v3012, 0.0
  %3128 = vadd.xlane.f32.xlu0 %v3127
  %v3129 = vpop.xlane.xlu0 %3128
  %v3130 = vsel %vm720, %v3013, 0.0
  %3131 = vadd.xlane.f32.xlu0 %v3130
  %v3132 = vpop.xlane.xlu0 %3131
  %v3133 = vsel %vm720, %v3014, 0.0
  %3134 = vadd.xlane.f32.xlu0 %v3133
  %v3135 = vpop.xlane.xlu0 %3134
  %v3136 = vsel %vm720, %v3015, 0.0
  %3137 = vadd.xlane.f32.xlu0 %v3136
  %v3138 = vpop.xlane.xlu0 %3137
  %v3139 = vsel %vm720, %v3016, 0.0
  %3140 = vadd.xlane.f32.xlu0 %v3139
  %v3141 = vpop.xlane.xlu0 %3140
  %v3142 = vsel %vm720, %v3017, 0.0
  %3143 = vadd.xlane.f32.xlu0 %v3142
  %v3144 = vpop.xlane.xlu0 %3143
  %v3145 = vsel %vm720, %v3018, 0.0
  %3146 = vadd.xlane.f32.xlu0 %v3145
  %v3147 = vpop.xlane.xlu0 %3146
  %v3148 = vsel %vm720, %v3019, 0.0
  %3149 = vadd.xlane.f32.xlu0 %v3148
  %v3150 = vpop.xlane.xlu0 %3149
  %v3151 = vsel %vm720, %v3020, 0.0
  %3152 = vadd.xlane.f32.xlu0 %v3151
  %v3153 = vpop.xlane.xlu0 %3152
  %v3154 = vsel %vm720, %v3021, 0.0
  %3155 = vadd.xlane.f32.xlu0 %v3154
  %v3156 = vpop.xlane.xlu0 %3155
  %v3157 = vsel %vm720, %v3022, 0.0
  %3158 = vadd.xlane.f32.xlu0 %v3157
  %v3159 = vpop.xlane.xlu0 %3158
  %v3160 = vsel %vm720, %v3023, 0.0
  %3161 = vadd.xlane.f32.xlu0 %v3160
  %v3162 = vpop.xlane.xlu0 %3161
  %v3163 = vsel %vm720, %v3024, 0.0
  %3164 = vadd.xlane.f32.xlu0 %v3163
  %v3165 = vpop.xlane.xlu0 %3164
  %v3166 = vsel %vm720, %v3025, 0.0
  %3167 = vadd.xlane.f32.xlu0 %v3166
  %v3168 = vpop.xlane.xlu0 %3167
  %v3169 = vsel %vm720, %v3026, 0.0
  %3170 = vadd.xlane.f32.xlu0 %v3169
  %v3171 = vpop.xlane.xlu0 %3170
  %v3172 = vsel %vm720, %v3027, 0.0
  %3173 = vadd.xlane.f32.xlu0 %v3172
  %v3174 = vpop.xlane.xlu0 %3173
  %v3175 = vsel %vm720, %v3028, 0.0
  %3176 = vadd.xlane.f32.xlu0 %v3175
  %v3177 = vpop.xlane.xlu0 %3176
  %v3178 = vsel %vm720, %v3029, 0.0
  %3179 = vadd.xlane.f32.xlu0 %v3178
  %v3180 = vpop.xlane.xlu0 %3179
  %v3181 = vsel %vm720, %v3030, 0.0
  %3182 = vadd.xlane.f32.xlu0 %v3181
  %v3183 = vpop.xlane.xlu0 %3182
  %v3184 = vsel %vm720, %v3031, 0.0
  %3185 = vadd.xlane.f32.xlu0 %v3184
  %v3186 = vpop.xlane.xlu0 %3185
  %v3187 = vsel %vm720, %v3032, 0.0
  %3188 = vadd.xlane.f32.xlu0 %v3187
  %v3189 = vpop.xlane.xlu0 %3188
  %v3190 = vsel %vm720, %v3033, 0.0
  %3191 = vadd.xlane.f32.xlu0 %v3190
  %v3192 = vpop.xlane.xlu0 %3191
  %v3193 = vsel %vm720, %v3034, 0.0
  %3194 = vadd.xlane.f32.xlu0 %v3193
  %v3195 = vpop.xlane.xlu0 %3194
  %v3196 = vsel %vm720, %v3035, 0.0
  %3197 = vadd.xlane.f32.xlu0 %v3196
  %v3198 = vpop.xlane.xlu0 %3197
  %v3199 = vsel %vm720, %v3036, 0.0
  %3200 = vadd.xlane.f32.xlu0 %v3199
  %v3201 = vpop.xlane.xlu0 %3200
  %v3202 = vsel %vm720, %v3037, 0.0
  %3203 = vadd.xlane.f32.xlu0 %v3202
  %v3204 = vpop.xlane.xlu0 %3203
  %v3205 = vsel %vm720, %v3038, 0.0
  %3206 = vadd.xlane.f32.xlu0 %v3205
  %v3207 = vpop.xlane.xlu0 %3206
  %v3208 = vsel %vm889, %v3039, 0.0
  %3209 = vadd.xlane.f32.xlu0 %v3208
  %v3210 = vpop.xlane.xlu0 %3209
  %v3211 = vld [vmem:[#allocation2] sm:$0x1]
  %v3213 = vlaneseq
  %v3214 = vshrl.u32 %v3213, 7
  %v3215 = vsub.s32 0, %v3214
  %v3216 = vrot.slane %v3211, %v3215
  %v3218 = vadd.f32 %v3042, %v3216
  %v3219 = vadd.f32 %v3045, %v3216
  %v3220 = vadd.f32 %v3048, %v3216
  %v3221 = vadd.f32 %v3051, %v3216
  %v3222 = vadd.f32 %v3054, %v3216
  %v3223 = vadd.f32 %v3057, %v3216
  %v3224 = vadd.f32 %v3060, %v3216
  %v3225 = vadd.f32 %v3063, %v3216
  %v3226 = vadd.f32 %v3066, %v3216
  %v3227 = vadd.f32 %v3069, %v3216
  %v3228 = vadd.f32 %v3072, %v3216
  %v3229 = vadd.f32 %v3075, %v3216
  %v3230 = vadd.f32 %v3078, %v3216
  %v3231 = vadd.f32 %v3081, %v3216
  %v3232 = vadd.f32 %v3084, %v3216
  %v3233 = vadd.f32 %v3087, %v3216
  %v3234 = vadd.f32 %v3090, %v3216
  %v3235 = vadd.f32 %v3093, %v3216
  %v3236 = vadd.f32 %v3096, %v3216
  %v3237 = vadd.f32 %v3099, %v3216
  %v3238 = vadd.f32 %v3102, %v3216
  %v3239 = vadd.f32 %v3105, %v3216
  %v3240 = vadd.f32 %v3108, %v3216
  %v3241 = vadd.f32 %v3111, %v3216
  %v3242 = vadd.f32 %v3114, %v3216
  %v3243 = vadd.f32 %v3117, %v3216
  %v3244 = vadd.f32 %v3120, %v3216
  %v3245 = vadd.f32 %v3123, %v3216
  %v3246 = vadd.f32 %v3126, %v3216
  %v3247 = vadd.f32 %v3129, %v3216
  %v3248 = vadd.f32 %v3132, %v3216
  %v3249 = vadd.f32 %v3135, %v3216
  %v3250 = vadd.f32 %v3138, %v3216
  %v3251 = vadd.f32 %v3141, %v3216
  %v3252 = vadd.f32 %v3144, %v3216
  %v3253 = vadd.f32 %v3147, %v3216
  %v3254 = vadd.f32 %v3150, %v3216
  %v3255 = vadd.f32 %v3153, %v3216
  %v3256 = vadd.f32 %v3156, %v3216
  %v3257 = vadd.f32 %v3159, %v3216
  %v3258 = vadd.f32 %v3162, %v3216
  %v3259 = vadd.f32 %v3165, %v3216
  %v3260 = vadd.f32 %v3168, %v3216
  %v3261 = vadd.f32 %v3171, %v3216
  %v3262 = vadd.f32 %v3174, %v3216
  %v3263 = vadd.f32 %v3177, %v3216
  %v3264 = vadd.f32 %v3180, %v3216
  %v3265 = vadd.f32 %v3183, %v3216
  %v3266 = vadd.f32 %v3186, %v3216
  %v3267 = vadd.f32 %v3189, %v3216
  %v3268 = vadd.f32 %v3192, %v3216
  %v3269 = vadd.f32 %v3195, %v3216
  %v3270 = vadd.f32 %v3198, %v3216
  %v3271 = vadd.f32 %v3201, %v3216
  %v3272 = vadd.f32 %v3204, %v3216
  %v3273 = vadd.f32 %v3207, %v3216
  %v3274 = vadd.f32 %v3210, %v3216
  %v3275 = vsub.f32 0.0, %v3218
  %v3276 = vsub.f32 0.0, %v3219
  %v3277 = vsub.f32 0.0, %v3220
  %v3278 = vsub.f32 0.0, %v3221
  %v3279 = vsub.f32 0.0, %v3222
  %v3280 = vsub.f32 0.0, %v3223
  %v3281 = vsub.f32 0.0, %v3224
  %v3282 = vsub.f32 0.0, %v3225
  %v3283 = vsub.f32 0.0, %v3226
  %v3284 = vsub.f32 0.0, %v3227
  %v3285 = vsub.f32 0.0, %v3228
  %v3286 = vsub.f32 0.0, %v3229
  %v3287 = vsub.f32 0.0, %v3230
  %v3288 = vsub.f32 0.0, %v3231
  %v3289 = vsub.f32 0.0, %v3232
  %v3290 = vsub.f32 0.0, %v3233
  %v3291 = vsub.f32 0.0, %v3234
  %v3292 = vsub.f32 0.0, %v3235
  %v3293 = vsub.f32 0.0, %v3236
  %v3294 = vsub.f32 0.0, %v3237
  %v3295 = vsub.f32 0.0, %v3238
  %v3296 = vsub.f32 0.0, %v3239
  %v3297 = vsub.f32 0.0, %v3240
  %v3298 = vsub.f32 0.0, %v3241
  %v3299 = vsub.f32 0.0, %v3242
  %v3300 = vsub.f32 0.0, %v3243
  %v3301 = vsub.f32 0.0, %v3244
  %v3302 = vsub.f32 0.0, %v3245
  %v3303 = vsub.f32 0.0, %v3246
  %v3304 = vsub.f32 0.0, %v3247
  %v3305 = vsub.f32 0.0, %v3248
  %v3306 = vsub.f32 0.0, %v3249
  %v3307 = vsub.f32 0.0, %v3250
  %v3308 = vsub.f32 0.0, %v3251
  %v3309 = vsub.f32 0.0, %v3252
  %v3310 = vsub.f32 0.0, %v3253
  %v3311 = vsub.f32 0.0, %v3254
  %v3312 = vsub.f32 0.0, %v3255
  %v3313 = vsub.f32 0.0, %v3256
  %v3314 = vsub.f32 0.0, %v3257
  %v3315 = vsub.f32 0.0, %v3258
  %v3316 = vsub.f32 0.0, %v3259
  %v3317 = vsub.f32 0.0, %v3260
  %v3318 = vsub.f32 0.0, %v3261
  %v3319 = vsub.f32 0.0, %v3262
  %v3320 = vsub.f32 0.0, %v3263
  %v3321 = vsub.f32 0.0, %v3264
  %v3322 = vsub.f32 0.0, %v3265
  %v3323 = vsub.f32 0.0, %v3266
  %v3324 = vsub.f32 0.0, %v3267
  %v3325 = vsub.f32 0.0, %v3268
  %v3326 = vsub.f32 0.0, %v3269
  %v3327 = vsub.f32 0.0, %v3270
  %v3328 = vsub.f32 0.0, %v3271
  %v3329 = vsub.f32 0.0, %v3272
  %v3330 = vsub.f32 0.0, %v3273
  %v3331 = vsub.f32 0.0, %v3274
  %v3332 = vmul.f32 %v3275, 1.442695
  %v3333 = vpow.pop %v3332
  %v3334 = vmul.f32 %v3276, 1.442695
  %v3335 = vpow.pop %v3334
  %v3336 = vmul.f32 %v3277, 1.442695
  %v3337 = vpow.pop %v3336
  %v3338 = vmul.f32 %v3278, 1.442695
  %v3339 = vpow.pop %v3338
  %v3340 = vmul.f32 %v3279, 1.442695
  %v3341 = vpow.pop %v3340
  %v3342 = vmul.f32 %v3280, 1.442695
  %v3343 = vpow.pop %v3342
  %v3344 = vmul.f32 %v3281, 1.442695
  %v3345 = vpow.pop %v3344
  %v3346 = vmul.f32 %v3282, 1.442695
  %v3347 = vpow.pop %v3346
  %v3348 = vmul.f32 %v3283, 1.442695
  %v3349 = vpow.pop %v3348
  %v3350 = vmul.f32 %v3284, 1.442695
  %v3351 = vpow.pop %v3350
  %v3352 = vmul.f32 %v3285, 1.442695
  %v3353 = vpow.pop %v3352
  %v3354 = vmul.f32 %v3286, 1.442695
  %v3355 = vpow.pop %v3354
  %v3356 = vmul.f32 %v3287, 1.442695
  %v3357 = vpow.pop %v3356
  %v3358 = vmul.f32 %v3288, 1.442695
  %v3359 = vpow.pop %v3358
  %v3360 = vmul.f32 %v3289, 1.442695
  %v3361 = vpow.pop %v3360
  %v3362 = vmul.f32 %v3290, 1.442695
  %v3363 = vpow.pop %v3362
  %v3364 = vmul.f32 %v3291, 1.442695
  %v3365 = vpow.pop %v3364
  %v3366 = vmul.f32 %v3292, 1.442695
  %v3367 = vpow.pop %v3366
  %v3368 = vmul.f32 %v3293, 1.442695
  %v3369 = vpow.pop %v3368
  %v3370 = vmul.f32 %v3294, 1.442695
  %v3371 = vpow.pop %v3370
  %v3372 = vmul.f32 %v3295, 1.442695
  %v3373 = vpow.pop %v3372
  %v3374 = vmul.f32 %v3296, 1.442695
  %v3375 = vpow.pop %v3374
  %v3376 = vmul.f32 %v3297, 1.442695
  %v3377 = vpow.pop %v3376
  %v3378 = vmul.f32 %v3298, 1.442695
  %v3379 = vpow.pop %v3378
  %v3380 = vmul.f32 %v3299, 1.442695
  %v3381 = vpow.pop %v3380
  %v3382 = vmul.f32 %v3300, 1.442695
  %v3383 = vpow.pop %v3382
  %v3384 = vmul.f32 %v3301, 1.442695
  %v3385 = vpow.pop %v3384
  %v3386 = vmul.f32 %v3302, 1.442695
  %v3387 = vpow.pop %v3386
  %v3388 = vmul.f32 %v3303, 1.442695
  %v3389 = vpow.pop %v3388
  %v3390 = vmul.f32 %v3304, 1.442695
  %v3391 = vpow.pop %v3390
  %v3392 = vmul.f32 %v3305, 1.442695
  %v3393 = vpow.pop %v3392
  %v3394 = vmul.f32 %v3306, 1.442695
  %v3395 = vpow.pop %v3394
  %v3396 = vmul.f32 %v3307, 1.442695
  %v3397 = vpow.pop %v3396
  %v3398 = vmul.f32 %v3308, 1.442695
  %v3399 = vpow.pop %v3398
  %v3400 = vmul.f32 %v3309, 1.442695
  %v3401 = vpow.pop %v3400
  %v3402 = vmul.f32 %v3310, 1.442695
  %v3403 = vpow.pop %v3402
  %v3404 = vmul.f32 %v3311, 1.442695
  %v3405 = vpow.pop %v3404
  %v3406 = vmul.f32 %v3312, 1.442695
  %v3407 = vpow.pop %v3406
  %v3408 = vmul.f32 %v3313, 1.442695
  %v3409 = vpow.pop %v3408
  %v3410 = vmul.f32 %v3314, 1.442695
  %v3411 = vpow.pop %v3410
  %v3412 = vmul.f32 %v3315, 1.442695
  %v3413 = vpow.pop %v3412
  %v3414 = vmul.f32 %v3316, 1.442695
  %v3415 = vpow.pop %v3414
  %v3416 = vmul.f32 %v3317, 1.442695
  %v3417 = vpow.pop %v3416
  %v3418 = vmul.f32 %v3318, 1.442695
  %v3419 = vpow.pop %v3418
  %v3420 = vmul.f32 %v3319, 1.442695
  %v3421 = vpow.pop %v3420
  %v3422 = vmul.f32 %v3320, 1.442695
  %v3423 = vpow.pop %v3422
  %v3424 = vmul.f32 %v3321, 1.442695
  %v3425 = vpow.pop %v3424
  %v3426 = vmul.f32 %v3322, 1.442695
  %v3427 = vpow.pop %v3426
  %v3428 = vmul.f32 %v3323, 1.442695
  %v3429 = vpow.pop %v3428
  %v3430 = vmul.f32 %v3324, 1.442695
  %v3431 = vpow.pop %v3430
  %v3432 = vmul.f32 %v3325, 1.442695
  %v3433 = vpow.pop %v3432
  %v3434 = vmul.f32 %v3326, 1.442695
  %v3435 = vpow.pop %v3434
  %v3436 = vmul.f32 %v3327, 1.442695
  %v3437 = vpow.pop %v3436
  %v3438 = vmul.f32 %v3328, 1.442695
  %v3439 = vpow.pop %v3438
  %v3440 = vmul.f32 %v3329, 1.442695
  %v3441 = vpow.pop %v3440
  %v3442 = vmul.f32 %v3330, 1.442695
  %v3443 = vpow.pop %v3442
  %v3444 = vmul.f32 %v3331, 1.442695
  %v3445 = vpow.pop %v3444
  %v3446 = vadd.f32 %v3333, 1.0
  %v3447 = vadd.f32 %v3335, 1.0
  %v3448 = vadd.f32 %v3337, 1.0
  %v3449 = vadd.f32 %v3339, 1.0
  %v3450 = vadd.f32 %v3341, 1.0
  %v3451 = vadd.f32 %v3343, 1.0
  %v3452 = vadd.f32 %v3345, 1.0
  %v3453 = vadd.f32 %v3347, 1.0
  %v3454 = vadd.f32 %v3349, 1.0
  %v3455 = vadd.f32 %v3351, 1.0
  %v3456 = vadd.f32 %v3353, 1.0
  %v3457 = vadd.f32 %v3355, 1.0
  %v3458 = vadd.f32 %v3357, 1.0
  %v3459 = vadd.f32 %v3359, 1.0
  %v3460 = vadd.f32 %v3361, 1.0
  %v3461 = vadd.f32 %v3363, 1.0
  %v3462 = vadd.f32 %v3365, 1.0
  %v3463 = vadd.f32 %v3367, 1.0
  %v3464 = vadd.f32 %v3369, 1.0
  %v3465 = vadd.f32 %v3371, 1.0
  %v3466 = vadd.f32 %v3373, 1.0
  %v3467 = vadd.f32 %v3375, 1.0
  %v3468 = vadd.f32 %v3377, 1.0
  %v3469 = vadd.f32 %v3379, 1.0
  %v3470 = vadd.f32 %v3381, 1.0
  %v3471 = vadd.f32 %v3383, 1.0
  %v3472 = vadd.f32 %v3385, 1.0
  %v3473 = vadd.f32 %v3387, 1.0
  %v3474 = vadd.f32 %v3389, 1.0
  %v3475 = vadd.f32 %v3391, 1.0
  %v3476 = vadd.f32 %v3393, 1.0
  %v3477 = vadd.f32 %v3395, 1.0
  %v3478 = vadd.f32 %v3397, 1.0
  %v3479 = vadd.f32 %v3399, 1.0
  %v3480 = vadd.f32 %v3401, 1.0
  %v3481 = vadd.f32 %v3403, 1.0
  %v3482 = vadd.f32 %v3405, 1.0
  %v3483 = vadd.f32 %v3407, 1.0
  %v3484 = vadd.f32 %v3409, 1.0
  %v3485 = vadd.f32 %v3411, 1.0
  %v3486 = vadd.f32 %v3413, 1.0
  %v3487 = vadd.f32 %v3415, 1.0
  %v3488 = vadd.f32 %v3417, 1.0
  %v3489 = vadd.f32 %v3419, 1.0
  %v3490 = vadd.f32 %v3421, 1.0
  %v3491 = vadd.f32 %v3423, 1.0
  %v3492 = vadd.f32 %v3425, 1.0
  %v3493 = vadd.f32 %v3427, 1.0
  %v3494 = vadd.f32 %v3429, 1.0
  %v3495 = vadd.f32 %v3431, 1.0
  %v3496 = vadd.f32 %v3433, 1.0
  %v3497 = vadd.f32 %v3435, 1.0
  %v3498 = vadd.f32 %v3437, 1.0
  %v3499 = vadd.f32 %v3439, 1.0
  %v3500 = vadd.f32 %v3441, 1.0
  %v3501 = vadd.f32 %v3443, 1.0
  %v3502 = vadd.f32 %v3445, 1.0
  %v3503 = vrcp.pop %v3446
  %v3504 = vmul.f32 1.0, %v3503
  %v3505 = vrcp.pop %v3447
  %v3506 = vmul.f32 1.0, %v3505
  %v3507 = vrcp.pop %v3448
  %v3508 = vmul.f32 1.0, %v3507
  %v3509 = vrcp.pop %v3449
  %v3510 = vmul.f32 1.0, %v3509
  %v3511 = vrcp.pop %v3450
  %v3512 = vmul.f32 1.0, %v3511
  %v3513 = vrcp.pop %v3451
  %v3514 = vmul.f32 1.0, %v3513
  %v3515 = vrcp.pop %v3452
  %v3516 = vmul.f32 1.0, %v3515
  %v3517 = vrcp.pop %v3453
  %v3518 = vmul.f32 1.0, %v3517
  %v3519 = vrcp.pop %v3454
  %v3520 = vmul.f32 1.0, %v3519
  %v3521 = vrcp.pop %v3455
  %v3522 = vmul.f32 1.0, %v3521
  %v3523 = vrcp.pop %v3456
  %v3524 = vmul.f32 1.0, %v3523
  %v3525 = vrcp.pop %v3457
  %v3526 = vmul.f32 1.0, %v3525
  %v3527 = vrcp.pop %v3458
  %v3528 = vmul.f32 1.0, %v3527
  %v3529 = vrcp.pop %v3459
  %v3530 = vmul.f32 1.0, %v3529
  %v3531 = vrcp.pop %v3460
  %v3532 = vmul.f32 1.0, %v3531
  %v3533 = vrcp.pop %v3461
  %v3534 = vmul.f32 1.0, %v3533
  %v3535 = vrcp.pop %v3462
  %v3536 = vmul.f32 1.0, %v3535
  %v3537 = vrcp.pop %v3463
  %v3538 = vmul.f32 1.0, %v3537
  %v3539 = vrcp.pop %v3464
  %v3540 = vmul.f32 1.0, %v3539
  %v3541 = vrcp.pop %v3465
  %v3542 = vmul.f32 1.0, %v3541
  %v3543 = vrcp.pop %v3466
  %v3544 = vmul.f32 1.0, %v3543
  %v3545 = vrcp.pop %v3467
  %v3546 = vmul.f32 1.0, %v3545
  %v3547 = vrcp.pop %v3468
  %v3548 = vmul.f32 1.0, %v3547
  %v3549 = vrcp.pop %v3469
  %v3550 = vmul.f32 1.0, %v3549
  %v3551 = vrcp.pop %v3470
  %v3552 = vmul.f32 1.0, %v3551
  %v3553 = vrcp.pop %v3471
  %v3554 = vmul.f32 1.0, %v3553
  %v3555 = vrcp.pop %v3472
  %v3556 = vmul.f32 1.0, %v3555
  %v3557 = vrcp.pop %v3473
  %v3558 = vmul.f32 1.0, %v3557
  %v3559 = vrcp.pop %v3474
  %v3560 = vmul.f32 1.0, %v3559
  %v3561 = vrcp.pop %v3475
  %v3562 = vmul.f32 1.0, %v3561
  %v3563 = vrcp.pop %v3476
  %v3564 = vmul.f32 1.0, %v3563
  %v3565 = vrcp.pop %v3477
  %v3566 = vmul.f32 1.0, %v3565
  %v3567 = vrcp.pop %v3478
  %v3568 = vmul.f32 1.0, %v3567
  %v3569 = vrcp.pop %v3479
  %v3570 = vmul.f32 1.0, %v3569
  %v3571 = vrcp.pop %v3480
  %v3572 = vmul.f32 1.0, %v3571
  %v3573 = vrcp.pop %v3481
  %v3574 = vmul.f32 1.0, %v3573
  %v3575 = vrcp.pop %v3482
  %v3576 = vmul.f32 1.0, %v3575
  %v3577 = vrcp.pop %v3483
  %v3578 = vmul.f32 1.0, %v3577
  %v3579 = vrcp.pop %v3484
  %v3580 = vmul.f32 1.0, %v3579
  %v3581 = vrcp.pop %v3485
  %v3582 = vmul.f32 1.0, %v3581
  %v3583 = vrcp.pop %v3486
  %v3584 = vmul.f32 1.0, %v3583
  %v3585 = vrcp.pop %v3487
  %v3586 = vmul.f32 1.0, %v3585
  %v3587 = vrcp.pop %v3488
  %v3588 = vmul.f32 1.0, %v3587
  %v3589 = vrcp.pop %v3489
  %v3590 = vmul.f32 1.0, %v3589
  %v3591 = vrcp.pop %v3490
  %v3592 = vmul.f32 1.0, %v3591
  %v3593 = vrcp.pop %v3491
  %v3594 = vmul.f32 1.0, %v3593
  %v3595 = vrcp.pop %v3492
  %v3596 = vmul.f32 1.0, %v3595
  %v3597 = vrcp.pop %v3493
  %v3598 = vmul.f32 1.0, %v3597
  %v3599 = vrcp.pop %v3494
  %v3600 = vmul.f32 1.0, %v3599
  %v3601 = vrcp.pop %v3495
  %v3602 = vmul.f32 1.0, %v3601
  %v3603 = vrcp.pop %v3496
  %v3604 = vmul.f32 1.0, %v3603
  %v3605 = vrcp.pop %v3497
  %v3606 = vmul.f32 1.0, %v3605
  %v3607 = vrcp.pop %v3498
  %v3608 = vmul.f32 1.0, %v3607
  %v3609 = vrcp.pop %v3499
  %v3610 = vmul.f32 1.0, %v3609
  %v3611 = vrcp.pop %v3500
  %v3612 = vmul.f32 1.0, %v3611
  %v3613 = vrcp.pop %v3501
  %v3614 = vmul.f32 1.0, %v3613
  %v3615 = vrcp.pop %v3502
  %v3616 = vmul.f32 1.0, %v3615
  %3674 = vrot.lane.b32.xlu0 %v3504, 2
  %v3675 = vpop.permute.xlu0 %3674
  %3676 = vrot.lane.b32.xlu0 %v3506, 2
  %v3677 = vpop.permute.xlu0 %3676
  %3678 = vrot.lane.b32.xlu0 %v3508, 2
  %v3679 = vpop.permute.xlu0 %3678
  %3680 = vrot.lane.b32.xlu0 %v3510, 2
  %v3681 = vpop.permute.xlu0 %3680
  %3682 = vrot.lane.b32.xlu0 %v3512, 2
  %v3683 = vpop.permute.xlu0 %3682
  %3684 = vrot.lane.b32.xlu0 %v3514, 2
  %v3685 = vpop.permute.xlu0 %3684
  %3686 = vrot.lane.b32.xlu0 %v3516, 2
  %v3687 = vpop.permute.xlu0 %3686
  %3688 = vrot.lane.b32.xlu0 %v3518, 2
  %v3689 = vpop.permute.xlu0 %3688
  %3690 = vrot.lane.b32.xlu0 %v3520, 2
  %v3691 = vpop.permute.xlu0 %3690
  %3692 = vrot.lane.b32.xlu0 %v3522, 2
  %v3693 = vpop.permute.xlu0 %3692
  %3694 = vrot.lane.b32.xlu0 %v3524, 2
  %v3695 = vpop.permute.xlu0 %3694
  %3696 = vrot.lane.b32.xlu0 %v3526, 2
  %v3697 = vpop.permute.xlu0 %3696
  %3698 = vrot.lane.b32.xlu0 %v3528, 2
  %v3699 = vpop.permute.xlu0 %3698
  %3700 = vrot.lane.b32.xlu0 %v3530, 2
  %v3701 = vpop.permute.xlu0 %3700
  %3702 = vrot.lane.b32.xlu0 %v3532, 2
  %v3703 = vpop.permute.xlu0 %3702
  %3704 = vrot.lane.b32.xlu0 %v3534, 2
  %v3705 = vpop.permute.xlu0 %3704
  %3706 = vrot.lane.b32.xlu0 %v3536, 2
  %v3707 = vpop.permute.xlu0 %3706
  %3708 = vrot.lane.b32.xlu0 %v3538, 2
  %v3709 = vpop.permute.xlu0 %3708
  %3710 = vrot.lane.b32.xlu0 %v3540, 2
  %v3711 = vpop.permute.xlu0 %3710
  %3712 = vrot.lane.b32.xlu0 %v3542, 2
  %v3713 = vpop.permute.xlu0 %3712
  %3714 = vrot.lane.b32.xlu0 %v3544, 2
  %v3715 = vpop.permute.xlu0 %3714
  %3716 = vrot.lane.b32.xlu0 %v3546, 2
  %v3717 = vpop.permute.xlu0 %3716
  %3718 = vrot.lane.b32.xlu0 %v3548, 2
  %v3719 = vpop.permute.xlu0 %3718
  %3720 = vrot.lane.b32.xlu0 %v3550, 2
  %v3721 = vpop.permute.xlu0 %3720
  %3722 = vrot.lane.b32.xlu0 %v3552, 2
  %v3723 = vpop.permute.xlu0 %3722
  %3724 = vrot.lane.b32.xlu0 %v3554, 2
  %v3725 = vpop.permute.xlu0 %3724
  %3726 = vrot.lane.b32.xlu0 %v3556, 2
  %v3727 = vpop.permute.xlu0 %3726
  %3728 = vrot.lane.b32.xlu0 %v3558, 2
  %v3729 = vpop.permute.xlu0 %3728
  %3730 = vrot.lane.b32.xlu0 %v3560, 2
  %v3731 = vpop.permute.xlu0 %3730
  %3732 = vrot.lane.b32.xlu0 %v3562, 2
  %v3733 = vpop.permute.xlu0 %3732
  %3734 = vrot.lane.b32.xlu0 %v3564, 2
  %v3735 = vpop.permute.xlu0 %3734
  %3736 = vrot.lane.b32.xlu0 %v3566, 2
  %v3737 = vpop.permute.xlu0 %3736
  %3738 = vrot.lane.b32.xlu0 %v3568, 2
  %v3739 = vpop.permute.xlu0 %3738
  %3740 = vrot.lane.b32.xlu0 %v3570, 2
  %v3741 = vpop.permute.xlu0 %3740
  %3742 = vrot.lane.b32.xlu0 %v3572, 2
  %v3743 = vpop.permute.xlu0 %3742
  %3744 = vrot.lane.b32.xlu0 %v3574, 2
  %v3745 = vpop.permute.xlu0 %3744
  %3746 = vrot.lane.b32.xlu0 %v3576, 2
  %v3747 = vpop.permute.xlu0 %3746
  %3748 = vrot.lane.b32.xlu0 %v3578, 2
  %v3749 = vpop.permute.xlu0 %3748
  %3750 = vrot.lane.b32.xlu0 %v3580, 2
  %v3751 = vpop.permute.xlu0 %3750
  %3752 = vrot.lane.b32.xlu0 %v3582, 2
  %v3753 = vpop.permute.xlu0 %3752
  %3754 = vrot.lane.b32.xlu0 %v3584, 2
  %v3755 = vpop.permute.xlu0 %3754
  %3756 = vrot.lane.b32.xlu0 %v3586, 2
  %v3757 = vpop.permute.xlu0 %3756
  %3758 = vrot.lane.b32.xlu0 %v3588, 2
  %v3759 = vpop.permute.xlu0 %3758
  %3760 = vrot.lane.b32.xlu0 %v3590, 2
  %v3761 = vpop.permute.xlu0 %3760
  %3762 = vrot.lane.b32.xlu0 %v3592, 2
  %v3763 = vpop.permute.xlu0 %3762
  %3764 = vrot.lane.b32.xlu0 %v3594, 2
  %v3765 = vpop.permute.xlu0 %3764
  %3766 = vrot.lane.b32.xlu0 %v3596, 2
  %v3767 = vpop.permute.xlu0 %3766
  %3768 = vrot.lane.b32.xlu0 %v3598, 2
  %v3769 = vpop.permute.xlu0 %3768
  %3770 = vrot.lane.b32.xlu0 %v3600, 2
  %v3771 = vpop.permute.xlu0 %3770
  %3772 = vrot.lane.b32.xlu0 %v3602, 2
  %v3773 = vpop.permute.xlu0 %3772
  %3774 = vrot.lane.b32.xlu0 %v3604, 2
  %v3775 = vpop.permute.xlu0 %3774
  %3776 = vrot.lane.b32.xlu0 %v3606, 2
  %v3777 = vpop.permute.xlu0 %3776
  %3778 = vrot.lane.b32.xlu0 %v3608, 2
  %v3779 = vpop.permute.xlu0 %3778
  %3780 = vrot.lane.b32.xlu0 %v3610, 2
  %v3781 = vpop.permute.xlu0 %3780
  %3782 = vrot.lane.b32.xlu0 %v3612, 2
  %v3783 = vpop.permute.xlu0 %3782
  %3784 = vrot.lane.b32.xlu0 %v3614, 2
  %v3785 = vpop.permute.xlu0 %3784
  %3786 = vrot.lane.b32.xlu0 %v3616, 2
  %v3787 = vpop.permute.xlu0 %3786
  %vm3845 = vcmask 23568
  %3846 = vst.msk [vmem:[%s5] sm:$0xff] %vm3845, %v3675
  %3847 = vst.msk [vmem:[%s5 + $0x8] sm:$0xff] %vm3845, %v3677
  %3848 = vst.msk [vmem:[%s5 + $0x10] sm:$0xff] %vm3845, %v3679
  %3849 = vst.msk [vmem:[%s5 + $0x18] sm:$0xff] %vm3845, %v3681
  %3850 = vst.msk [vmem:[%s5 + $0x20] sm:$0xff] %vm3845, %v3683
  %3851 = vst.msk [vmem:[%s5 + $0x28] sm:$0xff] %vm3845, %v3685
  %3852 = vst.msk [vmem:[%s5 + $0x30] sm:$0xff] %vm3845, %v3687
  %3853 = vst.msk [vmem:[%s5 + $0x38] sm:$0xff] %vm3845, %v3689
  %3854 = vst.msk [vmem:[%s5 + $0x40] sm:$0xff] %vm3845, %v3691
  %3855 = vst.msk [vmem:[%s5 + $0x48] sm:$0xff] %vm3845, %v3693
  %3856 = vst.msk [vmem:[%s5 + $0x50] sm:$0xff] %vm3845, %v3695
  %3857 = vst.msk [vmem:[%s5 + $0x58] sm:$0xff] %vm3845, %v3697
  %3858 = vst.msk [vmem:[%s5 + $0x60] sm:$0xff] %vm3845, %v3699
  %3859 = vst.msk [vmem:[%s5 + $0x68] sm:$0xff] %vm3845, %v3701
  %3860 = vst.msk [vmem:[%s5 + $0x70] sm:$0xff] %vm3845, %v3703
  %3861 = vst.msk [vmem:[%s5 + $0x78] sm:$0xff] %vm3845, %v3705
  %3862 = vst.msk [vmem:[%s5 + $0x80] sm:$0xff] %vm3845, %v3707
  %3863 = vst.msk [vmem:[%s5 + $0x88] sm:$0xff] %vm3845, %v3709
  %3864 = vst.msk [vmem:[%s5 + $0x90] sm:$0xff] %vm3845, %v3711
  %3865 = vst.msk [vmem:[%s5 + $0x98] sm:$0xff] %vm3845, %v3713
  %3866 = vst.msk [vmem:[%s5 + $0xa0] sm:$0xff] %vm3845, %v3715
  %3867 = vst.msk [vmem:[%s5 + $0xa8] sm:$0xff] %vm3845, %v3717
  %3868 = vst.msk [vmem:[%s5 + $0xb0] sm:$0xff] %vm3845, %v3719
  %3869 = vst.msk [vmem:[%s5 + $0xb8] sm:$0xff] %vm3845, %v3721
  %3870 = vst.msk [vmem:[%s5 + $0xc0] sm:$0xff] %vm3845, %v3723
  %3871 = vst.msk [vmem:[%s5 + $0xc8] sm:$0xff] %vm3845, %v3725
  %3872 = vst.msk [vmem:[%s5 + $0xd0] sm:$0xff] %vm3845, %v3727
  %3873 = vst.msk [vmem:[%s5 + $0xd8] sm:$0xff] %vm3845, %v3729
  %3874 = vst.msk [vmem:[%s5 + $0xe0] sm:$0xff] %vm3845, %v3731
  %3875 = vst.msk [vmem:[%s5 + $0xe8] sm:$0xff] %vm3845, %v3733
  %3876 = vst.msk [vmem:[%s5 + $0xf0] sm:$0xff] %vm3845, %v3735
  %3877 = vst.msk [vmem:[%s5 + $0xf8] sm:$0xff] %vm3845, %v3737
  %3878 = vst.msk [vmem:[%s5 + $0x100] sm:$0xff] %vm3845, %v3739
  %3879 = vst.msk [vmem:[%s5 + $0x108] sm:$0xff] %vm3845, %v3741
  %3880 = vst.msk [vmem:[%s5 + $0x110] sm:$0xff] %vm3845, %v3743
  %3881 = vst.msk [vmem:[%s5 + $0x118] sm:$0xff] %vm3845, %v3745
  %3882 = vst.msk [vmem:[%s5 + $0x120] sm:$0xff] %vm3845, %v3747
  %3883 = vst.msk [vmem:[%s5 + $0x128] sm:$0xff] %vm3845, %v3749
  %3884 = vst.msk [vmem:[%s5 + $0x130] sm:$0xff] %vm3845, %v3751
  %3885 = vst.msk [vmem:[%s5 + $0x138] sm:$0xff] %vm3845, %v3753
  %3886 = vst.msk [vmem:[%s5 + $0x140] sm:$0xff] %vm3845, %v3755
  %3887 = vst.msk [vmem:[%s5 + $0x148] sm:$0xff] %vm3845, %v3757
  %3888 = vst.msk [vmem:[%s5 + $0x150] sm:$0xff] %vm3845, %v3759
  %3889 = vst.msk [vmem:[%s5 + $0x158] sm:$0xff] %vm3845, %v3761
  %3890 = vst.msk [vmem:[%s5 + $0x160] sm:$0xff] %vm3845, %v3763
  %3891 = vst.msk [vmem:[%s5 + $0x168] sm:$0xff] %vm3845, %v3765
  %3892 = vst.msk [vmem:[%s5 + $0x170] sm:$0xff] %vm3845, %v3767
  %3893 = vst.msk [vmem:[%s5 + $0x178] sm:$0xff] %vm3845, %v3769
  %3894 = vst.msk [vmem:[%s5 + $0x180] sm:$0xff] %vm3845, %v3771
  %3895 = vst.msk [vmem:[%s5 + $0x188] sm:$0xff] %vm3845, %v3773
  %3896 = vst.msk [vmem:[%s5 + $0x190] sm:$0xff] %vm3845, %v3775
  %3897 = vst.msk [vmem:[%s5 + $0x198] sm:$0xff] %vm3845, %v3777
  %3898 = vst.msk [vmem:[%s5 + $0x1a0] sm:$0xff] %vm3845, %v3779
  %3899 = vst.msk [vmem:[%s5 + $0x1a8] sm:$0xff] %vm3845, %v3781
  %3900 = vst.msk [vmem:[%s5 + $0x1b0] sm:$0xff] %vm3845, %v3783
  %3901 = vst.msk [vmem:[%s5 + $0x1b8] sm:$0xff] %vm3845, %v3785
  %vm3902 = vcmask 17424
  %3903 = vst.msk [vmem:[%s5 + $0x1c0] sm:$0x3] %vm3902, %v3787
  %v3904 = vld [vmem:[%s1] sm:$0xf]
  %v3905 = vld [vmem:[%s1 + $0x4] sm:$0xf]
  %v3906 = vld [vmem:[%s1 + $0x8] sm:$0xf]
  %v3907 = vld [vmem:[%s1 + $0xc] sm:$0xf]
  %v3908 = vld [vmem:[%s2] sm:$0x1]
  %v3910 = vlaneseq
  %v3911 = vshrl.u32 %v3910, 7
  %v3912 = vsub.s32 0, %v3911
  %v3913 = vrot.slane %v3908, %v3912
  %v3919 = vunpack.c.l.b16 %v3904
  %v3920 = vunpack.c.l.b16 %v3905
  %v3921 = vunpack.c.l.b16 %v3906
  %v3922 = vunpack.c.l.b16 %v3907
  %v3923 = vpack.c.b16 %v3920, %v3919
  %v3924 = vpack.c.b16 %v3922, %v3921
  %3927 = vmatprep.subr.bf16.mxu0 0
  %3928 = vmatpush1.bf16.msra.mxu0 %v3923
  %3929 = vmatprep.subr.bf16.mxu0 0
  %3930 = vmatpush1.bf16.msra.mxu0 %v3924
  %3931 = vmatprep.subr.bf16.mxu0 0
  %3932 = vmatpush1.bf16.msra.mxu0 0
  %3933 = vmatprep.subr.bf16.mxu0 0
  %3934 = vmatpush1.bf16.msra.mxu0 0
  %3935 = vmatprep.subr.bf16.mxu0 0
  %3936 = vmatpush1.bf16.msra.mxu0 0
  %3937 = vmatprep.subr.bf16.mxu0 0
  %3938 = vmatpush1.bf16.msra.mxu0 0
  %3939 = vmatprep.subr.bf16.mxu0 0
  %3940 = vmatpush1.bf16.msra.mxu0 0
  %3941 = vmatprep.subr.bf16.mxu0 0
  %3942 = vmatpush1.bf16.msra.mxu0 0
  %3943 = vmatprep.subr.bf16.mxu0 0
  %3944 = vmatpush1.bf16.msra.mxu0 0
  %3945 = vmatprep.subr.bf16.mxu0 0
  %3946 = vmatpush1.bf16.msra.mxu0 0
  %3947 = vmatprep.subr.bf16.mxu0 0
  %3948 = vmatpush1.bf16.msra.mxu0 0
  %3949 = vmatprep.subr.bf16.mxu0 0
  %3950 = vmatpush1.bf16.msra.mxu0 0
  %3951 = vmatprep.subr.bf16.mxu0 0
  %3952 = vmatpush1.bf16.msra.mxu0 0
  %3953 = vmatprep.subr.bf16.mxu0 0
  %3954 = vmatpush1.bf16.msra.mxu0 0
  %3955 = vmatprep.subr.bf16.mxu0 0
  %3956 = vmatpush1.bf16.msra.mxu0 0
  %3957 = vmatprep.subr.bf16.mxu0 0
  %3958 = vmatpush1.bf16.msra.mxu0 0
  %3959 = vmatprep.mubr.bf16.mxu0 0
  %3960 = vmatmul.mubr.bf16.gmra.mrb[0].mxu0 %v249
  %v3961 = vpop.f32.mrb[0].mxu0
  %v3962 = vadd.f32 %v3913, %v3961
  %v3963 = vpop.f32.mrb[0].mxu0
  %v3964 = vpop.f32.mrb[0].mxu0
  %v3965 = vadd.f32 %v3913, %v3964
  %v3966 = vpop.f32.mrb[0].mxu0
  %3967 = vmatprep.mubr.bf16.mxu0 0
  %3968 = vmatmul.mubr.bf16.gmra.mrb[0].mxu0 %v252
  %v3969 = vpop.f32.mrb[0].mxu0
  %v3970 = vadd.f32 %v3913, %v3969
  %v3971 = vpop.f32.mrb[0].mxu0
  %v3972 = vpop.f32.mrb[0].mxu0
  %v3973 = vadd.f32 %v3913, %v3972
  %v3974 = vpop.f32.mrb[0].mxu0
  %3975 = vmatprep.mubr.bf16.mxu0 0
  %3976 = vmatmul.mubr.bf16.gmra.mrb[0].mxu0 %v255
  %v3977 = vpop.f32.mrb[0].mxu0
  %v3978 = vadd.f32 %v3913, %v3977
  %v3979 = vpop.f32.mrb[0].mxu0
  %v3980 = vpop.f32.mrb[0].mxu0
  %v3981 = vadd.f32 %v3913, %v3980
  %v3982 = vpop.f32.mrb[0].mxu0
  %3983 = vmatprep.mubr.bf16.mxu0 0
  %3984 = vmatmul.mubr.bf16.gmra.mrb[0].mxu0 %v258
  %v3985 = vpop.f32.mrb[0].mxu0
  %v3986 = vadd.f32 %v3913, %v3985
  %v3987 = vpop.f32.mrb[0].mxu0
  %v3988 = vpop.f32.mrb[0].mxu0
  %v3989 = vadd.f32 %v3913, %v3988
  %v3990 = vpop.f32.mrb[0].mxu0
  %3991 = vmatprep.mubr.bf16.mxu0 0
  %3992 = vmatmul.mubr.bf16.gmra.mrb[0].mxu0 %v261
  %v3993 = vpop.f32.mrb[0].mxu0
  %v3994 = vadd.f32 %v3913, %v3993
  %v3995 = vpop.f32.mrb[0].mxu0
  %v3996 = vpop.f32.mrb[0].mxu0
  %v3997 = vadd.f32 %v3913, %v3996
  %v3998 = vpop.f32.mrb[0].mxu0
  %3999 = vmatprep.mubr.bf16.mxu0 0
  %4000 = vmatmul.mubr.bf16.gmra.mrb[0].mxu0 %v264
  %v4001 = vpop.f32.mrb[0].mxu0
  %v4002 = vadd.f32 %v3913, %v4001
  %v4003 = vpop.f32.mrb[0].mxu0
  %v4004 = vpop.f32.mrb[0].mxu0
  %v4005 = vadd.f32 %v3913, %v4004
  %v4006 = vpop.f32.mrb[0].mxu0
  %4007 = vmatprep.mubr.bf16.mxu0 0
  %4008 = vmatmul.mubr.bf16.gmra.mrb[0].mxu0 %v267
  %v4009 = vpop.f32.mrb[0].mxu0
  %v4010 = vadd.f32 %v3913, %v4009
  %v4011 = vpop.f32.mrb[0].mxu0
  %v4012 = vpop.f32.mrb[0].mxu0
  %v4013 = vadd.f32 %v3913, %v4012
  %v4014 = vpop.f32.mrb[0].mxu0
  %4015 = vmatprep.mubr.bf16.mxu0 0
  %4016 = vmatmul.mubr.bf16.gmra.mrb[0].mxu0 %v270
  %v4017 = vpop.f32.mrb[0].mxu0
  %v4018 = vadd.f32 %v3913, %v4017
  %v4019 = vpop.f32.mrb[0].mxu0
  %v4020 = vpop.f32.mrb[0].mxu0
  %v4021 = vadd.f32 %v3913, %v4020
  %v4022 = vpop.f32.mrb[0].mxu0
  %4023 = vmatprep.mubr.bf16.mxu0 0
  %4024 = vmatmul.mubr.bf16.gmra.mrb[0].mxu0 %v273
  %v4025 = vpop.f32.mrb[0].mxu0
  %v4026 = vadd.f32 %v3913, %v4025
  %v4027 = vpop.f32.mrb[0].mxu0
  %v4028 = vpop.f32.mrb[0].mxu0
  %v4029 = vadd.f32 %v3913, %v4028
  %v4030 = vpop.f32.mrb[0].mxu0
  %4031 = vmatprep.mubr.bf16.mxu0 0
  %4032 = vmatmul.mubr.bf16.gmra.mrb[0].mxu0 %v276
  %v4033 = vpop.f32.mrb[0].mxu0
  %v4034 = vadd.f32 %v3913, %v4033
  %v4035 = vpop.f32.mrb[0].mxu0
  %v4036 = vpop.f32.mrb[0].mxu0
  %v4037 = vadd.f32 %v3913, %v4036
  %v4038 = vpop.f32.mrb[0].mxu0
  %4039 = vmatprep.mubr.bf16.mxu0 0
  %4040 = vmatmul.mubr.bf16.gmra.mrb[0].mxu0 %v279
  %v4041 = vpop.f32.mrb[0].mxu0
  %v4042 = vadd.f32 %v3913, %v4041
  %v4043 = vpop.f32.mrb[0].mxu0
  %v4044 = vpop.f32.mrb[0].mxu0
  %v4045 = vadd.f32 %v3913, %v4044
  %v4046 = vpop.f32.mrb[0].mxu0
  %4047 = vmatprep.mubr.bf16.mxu0 0
  %4048 = vmatmul.mubr.bf16.gmra.mrb[0].mxu0 %v282
  %v4049 = vpop.f32.mrb[0].mxu0
  %v4050 = vadd.f32 %v3913, %v4049
  %v4051 = vpop.f32.mrb[0].mxu0
  %v4052 = vpop.f32.mrb[0].mxu0
  %v4053 = vadd.f32 %v3913, %v4052
  %v4054 = vpop.f32.mrb[0].mxu0
  %4055 = vmatprep.mubr.bf16.mxu0 0
  %4056 = vmatmul.mubr.bf16.gmra.mrb[0].mxu0 %v285
  %v4057 = vpop.f32.mrb[0].mxu0
  %v4058 = vadd.f32 %v3913, %v4057
  %v4059 = vpop.f32.mrb[0].mxu0
  %v4060 = vpop.f32.mrb[0].mxu0
  %v4061 = vadd.f32 %v3913, %v4060
  %v4062 = vpop.f32.mrb[0].mxu0
  %4063 = vmatprep.mubr.bf16.mxu0 0
  %4064 = vmatmul.mubr.bf16.gmra.mrb[0].mxu0 %v288
  %v4065 = vpop.f32.mrb[0].mxu0
  %v4066 = vadd.f32 %v3913, %v4065
  %v4067 = vpop.f32.mrb[0].mxu0
  %v4068 = vpop.f32.mrb[0].mxu0
  %v4069 = vadd.f32 %v3913, %v4068
  %v4070 = vpop.f32.mrb[0].mxu0
  %4071 = vmatprep.mubr.bf16.mxu0 0
  %4072 = vmatmul.mubr.bf16.gmra.mrb[0].mxu0 %v291
  %v4073 = vpop.f32.mrb[0].mxu0
  %v4074 = vadd.f32 %v3913, %v4073
  %v4075 = vpop.f32.mrb[0].mxu0
  %v4076 = vpop.f32.mrb[0].mxu0
  %v4077 = vadd.f32 %v3913, %v4076
  %v4078 = vpop.f32.mrb[0].mxu0
  %4079 = vmatprep.mubr.bf16.mxu0 0
  %4080 = vmatmul.mubr.bf16.gmra.mrb[0].mxu0 %v294
  %v4081 = vpop.f32.mrb[0].mxu0
  %v4082 = vadd.f32 %v3913, %v4081
  %v4083 = vpop.f32.mrb[0].mxu0
  %v4084 = vpop.f32.mrb[0].mxu0
  %v4085 = vadd.f32 %v3913, %v4084
  %v4086 = vpop.f32.mrb[0].mxu0
  %4087 = vmatprep.mubr.bf16.mxu0 0
  %4088 = vmatmul.mubr.bf16.gmra.mrb[0].mxu0 %v297
  %v4089 = vpop.f32.mrb[0].mxu0
  %v4090 = vadd.f32 %v3913, %v4089
  %v4091 = vpop.f32.mrb[0].mxu0
  %v4092 = vpop.f32.mrb[0].mxu0
  %v4093 = vadd.f32 %v3913, %v4092
  %v4094 = vpop.f32.mrb[0].mxu0
  %4095 = vmatprep.mubr.bf16.mxu0 0
  %4096 = vmatmul.mubr.bf16.gmra.mrb[0].mxu0 %v300
  %v4097 = vpop.f32.mrb[0].mxu0
  %v4098 = vadd.f32 %v3913, %v4097
  %v4099 = vpop.f32.mrb[0].mxu0
  %v4100 = vpop.f32.mrb[0].mxu0
  %v4101 = vadd.f32 %v3913, %v4100
  %v4102 = vpop.f32.mrb[0].mxu0
  %4103 = vmatprep.mubr.bf16.mxu0 0
  %4104 = vmatmul.mubr.bf16.gmra.mrb[0].mxu0 %v303
  %v4105 = vpop.f32.mrb[0].mxu0
  %v4106 = vadd.f32 %v3913, %v4105
  %v4107 = vpop.f32.mrb[0].mxu0
  %v4108 = vpop.f32.mrb[0].mxu0
  %v4109 = vadd.f32 %v3913, %v4108
  %v4110 = vpop.f32.mrb[0].mxu0
  %4111 = vmatprep.mubr.bf16.mxu0 0
  %4112 = vmatmul.mubr.bf16.gmra.mrb[0].mxu0 %v306
  %v4113 = vpop.f32.mrb[0].mxu0
  %v4114 = vadd.f32 %v3913, %v4113
  %v4115 = vpop.f32.mrb[0].mxu0
  %v4116 = vpop.f32.mrb[0].mxu0
  %v4117 = vadd.f32 %v3913, %v4116
  %v4118 = vpop.f32.mrb[0].mxu0
  %4119 = vmatprep.mubr.bf16.mxu0 0
  %4120 = vmatmul.mubr.bf16.gmra.mrb[0].mxu0 %v309
  %v4121 = vpop.f32.mrb[0].mxu0
  %v4122 = vadd.f32 %v3913, %v4121
  %v4123 = vpop.f32.mrb[0].mxu0
  %v4124 = vpop.f32.mrb[0].mxu0
  %v4125 = vadd.f32 %v3913, %v4124
  %v4126 = vpop.f32.mrb[0].mxu0
  %4127 = vmatprep.mubr.bf16.mxu0 0
  %4128 = vmatmul.mubr.bf16.gmra.mrb[0].mxu0 %v312
  %v4129 = vpop.f32.mrb[0].mxu0
  %v4130 = vadd.f32 %v3913, %v4129
  %v4131 = vpop.f32.mrb[0].mxu0
  %v4132 = vpop.f32.mrb[0].mxu0
  %v4133 = vadd.f32 %v3913, %v4132
  %v4134 = vpop.f32.mrb[0].mxu0
  %4135 = vmatprep.mubr.bf16.mxu0 0
  %4136 = vmatmul.mubr.bf16.gmra.mrb[0].mxu0 %v315
  %v4137 = vpop.f32.mrb[0].mxu0
  %v4138 = vadd.f32 %v3913, %v4137
  %v4139 = vpop.f32.mrb[0].mxu0
  %v4140 = vpop.f32.mrb[0].mxu0
  %v4141 = vadd.f32 %v3913, %v4140
  %v4142 = vpop.f32.mrb[0].mxu0
  %4143 = vmatprep.mubr.bf16.mxu0 0
  %4144 = vmatmul.mubr.bf16.gmra.mrb[0].mxu0 %v318
  %v4145 = vpop.f32.mrb[0].mxu0
  %v4146 = vadd.f32 %v3913, %v4145
  %v4147 = vpop.f32.mrb[0].mxu0
  %v4148 = vpop.f32.mrb[0].mxu0
  %v4149 = vadd.f32 %v3913, %v4148
  %v4150 = vpop.f32.mrb[0].mxu0
  %4151 = vmatprep.mubr.bf16.mxu0 0
  %4152 = vmatmul.mubr.bf16.gmra.mrb[0].mxu0 %v321
  %v4153 = vpop.f32.mrb[0].mxu0
  %v4154 = vadd.f32 %v3913, %v4153
  %v4155 = vpop.f32.mrb[0].mxu0
  %v4156 = vpop.f32.mrb[0].mxu0
  %v4157 = vadd.f32 %v3913, %v4156
  %v4158 = vpop.f32.mrb[0].mxu0
  %4159 = vmatprep.mubr.bf16.mxu0 0
  %4160 = vmatmul.mubr.bf16.gmra.mrb[0].mxu0 %v324
  %v4161 = vpop.f32.mrb[0].mxu0
  %v4162 = vadd.f32 %v3913, %v4161
  %v4163 = vpop.f32.mrb[0].mxu0
  %v4164 = vpop.f32.mrb[0].mxu0
  %v4165 = vadd.f32 %v3913, %v4164
  %v4166 = vpop.f32.mrb[0].mxu0
  %4167 = vmatprep.mubr.bf16.mxu0 0
  %4168 = vmatmul.mubr.bf16.gmra.mrb[0].mxu0 %v327
  %v4169 = vpop.f32.mrb[0].mxu0
  %v4170 = vadd.f32 %v3913, %v4169
  %v4171 = vpop.f32.mrb[0].mxu0
  %v4172 = vpop.f32.mrb[0].mxu0
  %v4173 = vadd.f32 %v3913, %v4172
  %v4174 = vpop.f32.mrb[0].mxu0
  %4175 = vmatprep.mubr.bf16.mxu0 0
  %4176 = vmatmul.mubr.bf16.gmra.mrb[0].mxu0 %v330
  %v4177 = vpop.f32.mrb[0].mxu0
  %v4178 = vadd.f32 %v3913, %v4177
  %v4179 = vpop.f32.mrb[0].mxu0
  %v4180 = vpop.f32.mrb[0].mxu0
  %v4181 = vadd.f32 %v3913, %v4180
  %v4182 = vpop.f32.mrb[0].mxu0
  %4183 = vmatprep.mubr.bf16.mxu0 0
  %4184 = vmatmul.mubr.bf16.gmra.mrb[0].mxu0 %v333
  %v4185 = vpop.f32.mrb[0].mxu0
  %v4186 = vadd.f32 %v3913, %v4185
  %v4187 = vpop.f32.mrb[0].mxu0
  %v4188 = vpop.f32.mrb[0].mxu0
  %v4189 = vpop.f32.mrb[0].mxu0
  %4190 = vdwg.mxu0
  %v4191 = vmax.f32 %v3962, 0.0
  %v4192 = vmax.f32 %v3965, 0.0
  %v4193 = vmax.f32 %v3970, 0.0
  %v4194 = vmax.f32 %v3973, 0.0
  %v4195 = vmax.f32 %v3978, 0.0
  %v4196 = vmax.f32 %v3981, 0.0
  %v4197 = vmax.f32 %v3986, 0.0
  %v4198 = vmax.f32 %v3989, 0.0
  %v4199 = vmax.f32 %v3994, 0.0
  %v4200 = vmax.f32 %v3997, 0.0
  %v4201 = vmax.f32 %v4002, 0.0
  %v4202 = vmax.f32 %v4005, 0.0
  %v4203 = vmax.f32 %v4010, 0.0
  %v4204 = vmax.f32 %v4013, 0.0
  %v4205 = vmax.f32 %v4018, 0.0
  %v4206 = vmax.f32 %v4021, 0.0
  %v4207 = vmax.f32 %v4026, 0.0
  %v4208 = vmax.f32 %v4029, 0.0
  %v4209 = vmax.f32 %v4034, 0.0
  %v4210 = vmax.f32 %v4037, 0.0
  %v4211 = vmax.f32 %v4042, 0.0
  %v4212 = vmax.f32 %v4045, 0.0
  %v4213 = vmax.f32 %v4050, 0.0
  %v4214 = vmax.f32 %v4053, 0.0
  %v4215 = vmax.f32 %v4058, 0.0
  %v4216 = vmax.f32 %v4061, 0.0
  %v4217 = vmax.f32 %v4066, 0.0
  %v4218 = vmax.f32 %v4069, 0.0
  %v4219 = vmax.f32 %v4074, 0.0
  %v4220 = vmax.f32 %v4077, 0.0
  %v4221 = vmax.f32 %v4082, 0.0
  %v4222 = vmax.f32 %v4085, 0.0
  %v4223 = vmax.f32 %v4090, 0.0
  %v4224 = vmax.f32 %v4093, 0.0
  %v4225 = vmax.f32 %v4098, 0.0
  %v4226 = vmax.f32 %v4101, 0.0
  %v4227 = vmax.f32 %v4106, 0.0
  %v4228 = vmax.f32 %v4109, 0.0
  %v4229 = vmax.f32 %v4114, 0.0
  %v4230 = vmax.f32 %v4117, 0.0
  %v4231 = vmax.f32 %v4122, 0.0
  %v4232 = vmax.f32 %v4125, 0.0
  %v4233 = vmax.f32 %v4130, 0.0
  %v4234 = vmax.f32 %v4133, 0.0
  %v4235 = vmax.f32 %v4138, 0.0
  %v4236 = vmax.f32 %v4141, 0.0
  %v4237 = vmax.f32 %v4146, 0.0
  %v4238 = vmax.f32 %v4149, 0.0
  %v4239 = vmax.f32 %v4154, 0.0
  %v4240 = vmax.f32 %v4157, 0.0
  %v4241 = vmax.f32 %v4162, 0.0
  %v4242 = vmax.f32 %v4165, 0.0
  %v4243 = vmax.f32 %v4170, 0.0
  %v4244 = vmax.f32 %v4173, 0.0
  %v4245 = vmax.f32 %v4178, 0.0
  %v4246 = vmax.f32 %v4181, 0.0
  %v4247 = vmax.f32 %v4186, 0.0
  %v4248 = vld [vmem:[%s3] sm:$0x1]
  %v4250 = vlaneseq
  %v4251 = vshrl.u32 %v4250, 7
  %v4252 = vsub.s32 0, %v4251
  %v4253 = vrot.slane %v4248, %v4252
  %v4255 = vmul.f32 %v4191, %v4253
  %v4256 = vmul.f32 %v4192, %v4253
  %v4257 = vmul.f32 %v4193, %v4253
  %v4258 = vmul.f32 %v4194, %v4253
  %v4259 = vmul.f32 %v4195, %v4253
  %v4260 = vmul.f32 %v4196, %v4253
  %v4261 = vmul.f32 %v4197, %v4253
  %v4262 = vmul.f32 %v4198, %v4253
  %v4263 = vmul.f32 %v4199, %v4253
  %v4264 = vmul.f32 %v4200, %v4253
  %v4265 = vmul.f32 %v4201, %v4253
  %v4266 = vmul.f32 %v4202, %v4253
  %v4267 = vmul.f32 %v4203, %v4253
  %v4268 = vmul.f32 %v4204, %v4253
  %v4269 = vmul.f32 %v4205, %v4253
  %v4270 = vmul.f32 %v4206, %v4253
  %v4271 = vmul.f32 %v4207, %v4253
  %v4272 = vmul.f32 %v4208, %v4253
  %v4273 = vmul.f32 %v4209, %v4253
  %v4274 = vmul.f32 %v4210, %v4253
  %v4275 = vmul.f32 %v4211, %v4253
  %v4276 = vmul.f32 %v4212, %v4253
  %v4277 = vmul.f32 %v4213, %v4253
  %v4278 = vmul.f32 %v4214, %v4253
  %v4279 = vmul.f32 %v4215, %v4253
  %v4280 = vmul.f32 %v4216, %v4253
  %v4281 = vmul.f32 %v4217, %v4253
  %v4282 = vmul.f32 %v4218, %v4253
  %v4283 = vmul.f32 %v4219, %v4253
  %v4284 = vmul.f32 %v4220, %v4253
  %v4285 = vmul.f32 %v4221, %v4253
  %v4286 = vmul.f32 %v4222, %v4253
  %v4287 = vmul.f32 %v4223, %v4253
  %v4288 = vmul.f32 %v4224, %v4253
  %v4289 = vmul.f32 %v4225, %v4253
  %v4290 = vmul.f32 %v4226, %v4253
  %v4291 = vmul.f32 %v4227, %v4253
  %v4292 = vmul.f32 %v4228, %v4253
  %v4293 = vmul.f32 %v4229, %v4253
  %v4294 = vmul.f32 %v4230, %v4253
  %v4295 = vmul.f32 %v4231, %v4253
  %v4296 = vmul.f32 %v4232, %v4253
  %v4297 = vmul.f32 %v4233, %v4253
  %v4298 = vmul.f32 %v4234, %v4253
  %v4299 = vmul.f32 %v4235, %v4253
  %v4300 = vmul.f32 %v4236, %v4253
  %v4301 = vmul.f32 %v4237, %v4253
  %v4302 = vmul.f32 %v4238, %v4253
  %v4303 = vmul.f32 %v4239, %v4253
  %v4304 = vmul.f32 %v4240, %v4253
  %v4305 = vmul.f32 %v4241, %v4253
  %v4306 = vmul.f32 %v4242, %v4253
  %v4307 = vmul.f32 %v4243, %v4253
  %v4308 = vmul.f32 %v4244, %v4253
  %v4309 = vmul.f32 %v4245, %v4253
  %v4310 = vmul.f32 %v4246, %v4253
  %v4311 = vmul.f32 %v4247, %v4253
  %v4312 = vsel %vm720, %v4255, 0.0
  %4313 = vadd.xlane.f32.xlu0 %v4312
  %v4314 = vpop.xlane.xlu0 %4313
  %v4315 = vsel %vm720, %v4256, 0.0
  %4316 = vadd.xlane.f32.xlu0 %v4315
  %v4317 = vpop.xlane.xlu0 %4316
  %v4318 = vsel %vm720, %v4257, 0.0
  %4319 = vadd.xlane.f32.xlu0 %v4318
  %v4320 = vpop.xlane.xlu0 %4319
  %v4321 = vsel %vm720, %v4258, 0.0
  %4322 = vadd.xlane.f32.xlu0 %v4321
  %v4323 = vpop.xlane.xlu0 %4322
  %v4324 = vsel %vm720, %v4259, 0.0
  %4325 = vadd.xlane.f32.xlu0 %v4324
  %v4326 = vpop.xlane.xlu0 %4325
  %v4327 = vsel %vm720, %v4260, 0.0
  %4328 = vadd.xlane.f32.xlu0 %v4327
  %v4329 = vpop.xlane.xlu0 %4328
  %v4330 = vsel %vm720, %v4261, 0.0
  %4331 = vadd.xlane.f32.xlu0 %v4330
  %v4332 = vpop.xlane.xlu0 %4331
  %v4333 = vsel %vm720, %v4262, 0.0
  %4334 = vadd.xlane.f32.xlu0 %v4333
  %v4335 = vpop.xlane.xlu0 %4334
  %v4336 = vsel %vm720, %v4263, 0.0
  %4337 = vadd.xlane.f32.xlu0 %v4336
  %v4338 = vpop.xlane.xlu0 %4337
  %v4339 = vsel %vm720, %v4264, 0.0
  %4340 = vadd.xlane.f32.xlu0 %v4339
  %v4341 = vpop.xlane.xlu0 %4340
  %v4342 = vsel %vm720, %v4265, 0.0
  %4343 = vadd.xlane.f32.xlu0 %v4342
  %v4344 = vpop.xlane.xlu0 %4343
  %v4345 = vsel %vm720, %v4266, 0.0
  %4346 = vadd.xlane.f32.xlu0 %v4345
  %v4347 = vpop.xlane.xlu0 %4346
  %v4348 = vsel %vm720, %v4267, 0.0
  %4349 = vadd.xlane.f32.xlu0 %v4348
  %v4350 = vpop.xlane.xlu0 %4349
  %v4351 = vsel %vm720, %v4268, 0.0
  %4352 = vadd.xlane.f32.xlu0 %v4351
  %v4353 = vpop.xlane.xlu0 %4352
  %v4354 = vsel %vm720, %v4269, 0.0
  %4355 = vadd.xlane.f32.xlu0 %v4354
  %v4356 = vpop.xlane.xlu0 %4355
  %v4357 = vsel %vm720, %v4270, 0.0
  %4358 = vadd.xlane.f32.xlu0 %v4357
  %v4359 = vpop.xlane.xlu0 %4358
  %v4360 = vsel %vm720, %v4271, 0.0
  %4361 = vadd.xlane.f32.xlu0 %v4360
  %v4362 = vpop.xlane.xlu0 %4361
  %v4363 = vsel %vm720, %v4272, 0.0
  %4364 = vadd.xlane.f32.xlu0 %v4363
  %v4365 = vpop.xlane.xlu0 %4364
  %v4366 = vsel %vm720, %v4273, 0.0
  %4367 = vadd.xlane.f32.xlu0 %v4366
  %v4368 = vpop.xlane.xlu0 %4367
  %v4369 = vsel %vm720, %v4274, 0.0
  %4370 = vadd.xlane.f32.xlu0 %v4369
  %v4371 = vpop.xlane.xlu0 %4370
  %v4372 = vsel %vm720, %v4275, 0.0
  %4373 = vadd.xlane.f32.xlu0 %v4372
  %v4374 = vpop.xlane.xlu0 %4373
  %v4375 = vsel %vm720, %v4276, 0.0
  %4376 = vadd.xlane.f32.xlu0 %v4375
  %v4377 = vpop.xlane.xlu0 %4376
  %v4378 = vsel %vm720, %v4277, 0.0
  %4379 = vadd.xlane.f32.xlu0 %v4378
  %v4380 = vpop.xlane.xlu0 %4379
  %v4381 = vsel %vm720, %v4278, 0.0
  %4382 = vadd.xlane.f32.xlu0 %v4381
  %v4383 = vpop.xlane.xlu0 %4382
  %v4384 = vsel %vm720, %v4279, 0.0
  %4385 = vadd.xlane.f32.xlu0 %v4384
  %v4386 = vpop.xlane.xlu0 %4385
  %v4387 = vsel %vm720, %v4280, 0.0
  %4388 = vadd.xlane.f32.xlu0 %v4387
  %v4389 = vpop.xlane.xlu0 %4388
  %v4390 = vsel %vm720, %v4281, 0.0
  %4391 = vadd.xlane.f32.xlu0 %v4390
  %v4392 = vpop.xlane.xlu0 %4391
  %v4393 = vsel %vm720, %v4282, 0.0
  %4394 = vadd.xlane.f32.xlu0 %v4393
  %v4395 = vpop.xlane.xlu0 %4394
  %v4396 = vsel %vm720, %v4283, 0.0
  %4397 = vadd.xlane.f32.xlu0 %v4396
  %v4398 = vpop.xlane.xlu0 %4397
  %v4399 = vsel %vm720, %v4284, 0.0
  %4400 = vadd.xlane.f32.xlu0 %v4399
  %v4401 = vpop.xlane.xlu0 %4400
  %v4402 = vsel %vm720, %v4285, 0.0
  %4403 = vadd.xlane.f32.xlu0 %v4402
  %v4404 = vpop.xlane.xlu0 %4403
  %v4405 = vsel %vm720, %v4286, 0.0
  %4406 = vadd.xlane.f32.xlu0 %v4405
  %v4407 = vpop.xlane.xlu0 %4406
  %v4408 = vsel %vm720, %v4287, 0.0
  %4409 = vadd.xlane.f32.xlu0 %v4408
  %v4410 = vpop.xlane.xlu0 %4409
  %v4411 = vsel %vm720, %v4288, 0.0
  %4412 = vadd.xlane.f32.xlu0 %v4411
  %v4413 = vpop.xlane.xlu0 %4412
  %v4414 = vsel %vm720, %v4289, 0.0
  %4415 = vadd.xlane.f32.xlu0 %v4414
  %v4416 = vpop.xlane.xlu0 %4415
  %v4417 = vsel %vm720, %v4290, 0.0
  %4418 = vadd.xlane.f32.xlu0 %v4417
  %v4419 = vpop.xlane.xlu0 %4418
  %v4420 = vsel %vm720, %v4291, 0.0
  %4421 = vadd.xlane.f32.xlu0 %v4420
  %v4422 = vpop.xlane.xlu0 %4421
  %v4423 = vsel %vm720, %v4292, 0.0
  %4424 = vadd.xlane.f32.xlu0 %v4423
  %v4425 = vpop.xlane.xlu0 %4424
  %v4426 = vsel %vm720, %v4293, 0.0
  %4427 = vadd.xlane.f32.xlu0 %v4426
  %v4428 = vpop.xlane.xlu0 %4427
  %v4429 = vsel %vm720, %v4294, 0.0
  %4430 = vadd.xlane.f32.xlu0 %v4429
  %v4431 = vpop.xlane.xlu0 %4430
  %v4432 = vsel %vm720, %v4295, 0.0
  %4433 = vadd.xlane.f32.xlu0 %v4432
  %v4434 = vpop.xlane.xlu0 %4433
  %v4435 = vsel %vm720, %v4296, 0.0
  %4436 = vadd.xlane.f32.xlu0 %v4435
  %v4437 = vpop.xlane.xlu0 %4436
  %v4438 = vsel %vm720, %v4297, 0.0
  %4439 = vadd.xlane.f32.xlu0 %v4438
  %v4440 = vpop.xlane.xlu0 %4439
  %v4441 = vsel %vm720, %v4298, 0.0
  %4442 = vadd.xlane.f32.xlu0 %v4441
  %v4443 = vpop.xlane.xlu0 %4442
  %v4444 = vsel %vm720, %v4299, 0.0
  %4445 = vadd.xlane.f32.xlu0 %v4444
  %v4446 = vpop.xlane.xlu0 %4445
  %v4447 = vsel %vm720, %v4300, 0.0
  %4448 = vadd.xlane.f32.xlu0 %v4447
  %v4449 = vpop.xlane.xlu0 %4448
  %v4450 = vsel %vm720, %v4301, 0.0
  %4451 = vadd.xlane.f32.xlu0 %v4450
  %v4452 = vpop.xlane.xlu0 %4451
  %v4453 = vsel %vm720, %v4302, 0.0
  %4454 = vadd.xlane.f32.xlu0 %v4453
  %v4455 = vpop.xlane.xlu0 %4454
  %v4456 = vsel %vm720, %v4303, 0.0
  %4457 = vadd.xlane.f32.xlu0 %v4456
  %v4458 = vpop.xlane.xlu0 %4457
  %v4459 = vsel %vm720, %v4304, 0.0
  %4460 = vadd.xlane.f32.xlu0 %v4459
  %v4461 = vpop.xlane.xlu0 %4460
  %v4462 = vsel %vm720, %v4305, 0.0
  %4463 = vadd.xlane.f32.xlu0 %v4462
  %v4464 = vpop.xlane.xlu0 %4463
  %v4465 = vsel %vm720, %v4306, 0.0
  %4466 = vadd.xlane.f32.xlu0 %v4465
  %v4467 = vpop.xlane.xlu0 %4466
  %v4468 = vsel %vm720, %v4307, 0.0
  %4469 = vadd.xlane.f32.xlu0 %v4468
  %v4470 = vpop.xlane.xlu0 %4469
  %v4471 = vsel %vm720, %v4308, 0.0
  %4472 = vadd.xlane.f32.xlu0 %v4471
  %v4473 = vpop.xlane.xlu0 %4472
  %v4474 = vsel %vm720, %v4309, 0.0
  %4475 = vadd.xlane.f32.xlu0 %v4474
  %v4476 = vpop.xlane.xlu0 %4475
  %v4477 = vsel %vm720, %v4310, 0.0
  %4478 = vadd.xlane.f32.xlu0 %v4477
  %v4479 = vpop.xlane.xlu0 %4478
  %v4480 = vsel %vm889, %v4311, 0.0
  %4481 = vadd.xlane.f32.xlu0 %v4480
  %v4482 = vpop.xlane.xlu0 %4481
  %v4483 = vld [vmem:[#allocation2] sm:$0x1]
  %v4485 = vlaneseq
  %v4486 = vshrl.u32 %v4485, 7
  %v4487 = vsub.s32 0, %v4486
  %v4488 = vrot.slane %v4483, %v4487
  %v4490 = vadd.f32 %v4314, %v4488
  %v4491 = vadd.f32 %v4317, %v4488
  %v4492 = vadd.f32 %v4320, %v4488
  %v4493 = vadd.f32 %v4323, %v4488
  %v4494 = vadd.f32 %v4326, %v4488
  %v4495 = vadd.f32 %v4329, %v4488
  %v4496 = vadd.f32 %v4332, %v4488
  %v4497 = vadd.f32 %v4335, %v4488
  %v4498 = vadd.f32 %v4338, %v4488
  %v4499 = vadd.f32 %v4341, %v4488
  %v4500 = vadd.f32 %v4344, %v4488
  %v4501 = vadd.f32 %v4347, %v4488
  %v4502 = vadd.f32 %v4350, %v4488
  %v4503 = vadd.f32 %v4353, %v4488
  %v4504 = vadd.f32 %v4356, %v4488
  %v4505 = vadd.f32 %v4359, %v4488
  %v4506 = vadd.f32 %v4362, %v4488
  %v4507 = vadd.f32 %v4365, %v4488
  %v4508 = vadd.f32 %v4368, %v4488
  %v4509 = vadd.f32 %v4371, %v4488
  %v4510 = vadd.f32 %v4374, %v4488
  %v4511 = vadd.f32 %v4377, %v4488
  %v4512 = vadd.f32 %v4380, %v4488
  %v4513 = vadd.f32 %v4383, %v4488
  %v4514 = vadd.f32 %v4386, %v4488
  %v4515 = vadd.f32 %v4389, %v4488
  %v4516 = vadd.f32 %v4392, %v4488
  %v4517 = vadd.f32 %v4395, %v4488
  %v4518 = vadd.f32 %v4398, %v4488
  %v4519 = vadd.f32 %v4401, %v4488
  %v4520 = vadd.f32 %v4404, %v4488
  %v4521 = vadd.f32 %v4407, %v4488
  %v4522 = vadd.f32 %v4410, %v4488
  %v4523 = vadd.f32 %v4413, %v4488
  %v4524 = vadd.f32 %v4416, %v4488
  %v4525 = vadd.f32 %v4419, %v4488
  %v4526 = vadd.f32 %v4422, %v4488
  %v4527 = vadd.f32 %v4425, %v4488
  %v4528 = vadd.f32 %v4428, %v4488
  %v4529 = vadd.f32 %v4431, %v4488
  %v4530 = vadd.f32 %v4434, %v4488
  %v4531 = vadd.f32 %v4437, %v4488
  %v4532 = vadd.f32 %v4440, %v4488
  %v4533 = vadd.f32 %v4443, %v4488
  %v4534 = vadd.f32 %v4446, %v4488
  %v4535 = vadd.f32 %v4449, %v4488
  %v4536 = vadd.f32 %v4452, %v4488
  %v4537 = vadd.f32 %v4455, %v4488
  %v4538 = vadd.f32 %v4458, %v4488
  %v4539 = vadd.f32 %v4461, %v4488
  %v4540 = vadd.f32 %v4464, %v4488
  %v4541 = vadd.f32 %v4467, %v4488
  %v4542 = vadd.f32 %v4470, %v4488
  %v4543 = vadd.f32 %v4473, %v4488
  %v4544 = vadd.f32 %v4476, %v4488
  %v4545 = vadd.f32 %v4479, %v4488
  %v4546 = vadd.f32 %v4482, %v4488
  %v4547 = vsub.f32 0.0, %v4490
  %v4548 = vsub.f32 0.0, %v4491
  %v4549 = vsub.f32 0.0, %v4492
  %v4550 = vsub.f32 0.0, %v4493
  %v4551 = vsub.f32 0.0, %v4494
  %v4552 = vsub.f32 0.0, %v4495
  %v4553 = vsub.f32 0.0, %v4496
  %v4554 = vsub.f32 0.0, %v4497
  %v4555 = vsub.f32 0.0, %v4498
  %v4556 = vsub.f32 0.0, %v4499
  %v4557 = vsub.f32 0.0, %v4500
  %v4558 = vsub.f32 0.0, %v4501
  %v4559 = vsub.f32 0.0, %v4502
  %v4560 = vsub.f32 0.0, %v4503
  %v4561 = vsub.f32 0.0, %v4504
  %v4562 = vsub.f32 0.0, %v4505
  %v4563 = vsub.f32 0.0, %v4506
  %v4564 = vsub.f32 0.0, %v4507
  %v4565 = vsub.f32 0.0, %v4508
  %v4566 = vsub.f32 0.0, %v4509
  %v4567 = vsub.f32 0.0, %v4510
  %v4568 = vsub.f32 0.0, %v4511
  %v4569 = vsub.f32 0.0, %v4512
  %v4570 = vsub.f32 0.0, %v4513
  %v4571 = vsub.f32 0.0, %v4514
  %v4572 = vsub.f32 0.0, %v4515
  %v4573 = vsub.f32 0.0, %v4516
  %v4574 = vsub.f32 0.0, %v4517
  %v4575 = vsub.f32 0.0, %v4518
  %v4576 = vsub.f32 0.0, %v4519
  %v4577 = vsub.f32 0.0, %v4520
  %v4578 = vsub.f32 0.0, %v4521
  %v4579 = vsub.f32 0.0, %v4522
  %v4580 = vsub.f32 0.0, %v4523
  %v4581 = vsub.f32 0.0, %v4524
  %v4582 = vsub.f32 0.0, %v4525
  %v4583 = vsub.f32 0.0, %v4526
  %v4584 = vsub.f32 0.0, %v4527
  %v4585 = vsub.f32 0.0, %v4528
  %v4586 = vsub.f32 0.0, %v4529
  %v4587 = vsub.f32 0.0, %v4530
  %v4588 = vsub.f32 0.0, %v4531
  %v4589 = vsub.f32 0.0, %v4532
  %v4590 = vsub.f32 0.0, %v4533
  %v4591 = vsub.f32 0.0, %v4534
  %v4592 = vsub.f32 0.0, %v4535
  %v4593 = vsub.f32 0.0, %v4536
  %v4594 = vsub.f32 0.0, %v4537
  %v4595 = vsub.f32 0.0, %v4538
  %v4596 = vsub.f32 0.0, %v4539
  %v4597 = vsub.f32 0.0, %v4540
  %v4598 = vsub.f32 0.0, %v4541
  %v4599 = vsub.f32 0.0, %v4542
  %v4600 = vsub.f32 0.0, %v4543
  %v4601 = vsub.f32 0.0, %v4544
  %v4602 = vsub.f32 0.0, %v4545
  %v4603 = vsub.f32 0.0, %v4546
  %v4604 = vmul.f32 %v4547, 1.442695
  %v4605 = vpow.pop %v4604
  %v4606 = vmul.f32 %v4548, 1.442695
  %v4607 = vpow.pop %v4606
  %v4608 = vmul.f32 %v4549, 1.442695
  %v4609 = vpow.pop %v4608
  %v4610 = vmul.f32 %v4550, 1.442695
  %v4611 = vpow.pop %v4610
  %v4612 = vmul.f32 %v4551, 1.442695
  %v4613 = vpow.pop %v4612
  %v4614 = vmul.f32 %v4552, 1.442695
  %v4615 = vpow.pop %v4614
  %v4616 = vmul.f32 %v4553, 1.442695
  %v4617 = vpow.pop %v4616
  %v4618 = vmul.f32 %v4554, 1.442695
  %v4619 = vpow.pop %v4618
  %v4620 = vmul.f32 %v4555, 1.442695
  %v4621 = vpow.pop %v4620
  %v4622 = vmul.f32 %v4556, 1.442695
  %v4623 = vpow.pop %v4622
  %v4624 = vmul.f32 %v4557, 1.442695
  %v4625 = vpow.pop %v4624
  %v4626 = vmul.f32 %v4558, 1.442695
  %v4627 = vpow.pop %v4626
  %v4628 = vmul.f32 %v4559, 1.442695
  %v4629 = vpow.pop %v4628
  %v4630 = vmul.f32 %v4560, 1.442695
  %v4631 = vpow.pop %v4630
  %v4632 = vmul.f32 %v4561, 1.442695
  %v4633 = vpow.pop %v4632
  %v4634 = vmul.f32 %v4562, 1.442695
  %v4635 = vpow.pop %v4634
  %v4636 = vmul.f32 %v4563, 1.442695
  %v4637 = vpow.pop %v4636
  %v4638 = vmul.f32 %v4564, 1.442695
  %v4639 = vpow.pop %v4638
  %v4640 = vmul.f32 %v4565, 1.442695
  %v4641 = vpow.pop %v4640
  %v4642 = vmul.f32 %v4566, 1.442695
  %v4643 = vpow.pop %v4642
  %v4644 = vmul.f32 %v4567, 1.442695
  %v4645 = vpow.pop %v4644
  %v4646 = vmul.f32 %v4568, 1.442695
  %v4647 = vpow.pop %v4646
  %v4648 = vmul.f32 %v4569, 1.442695
  %v4649 = vpow.pop %v4648
  %v4650 = vmul.f32 %v4570, 1.442695
  %v4651 = vpow.pop %v4650
  %v4652 = vmul.f32 %v4571, 1.442695
  %v4653 = vpow.pop %v4652
  %v4654 = vmul.f32 %v4572, 1.442695
  %v4655 = vpow.pop %v4654
  %v4656 = vmul.f32 %v4573, 1.442695
  %v4657 = vpow.pop %v4656
  %v4658 = vmul.f32 %v4574, 1.442695
  %v4659 = vpow.pop %v4658
  %v4660 = vmul.f32 %v4575, 1.442695
  %v4661 = vpow.pop %v4660
  %v4662 = vmul.f32 %v4576, 1.442695
  %v4663 = vpow.pop %v4662
  %v4664 = vmul.f32 %v4577, 1.442695
  %v4665 = vpow.pop %v4664
  %v4666 = vmul.f32 %v4578, 1.442695
  %v4667 = vpow.pop %v4666
  %v4668 = vmul.f32 %v4579, 1.442695
  %v4669 = vpow.pop %v4668
  %v4670 = vmul.f32 %v4580, 1.442695
  %v4671 = vpow.pop %v4670
  %v4672 = vmul.f32 %v4581, 1.442695
  %v4673 = vpow.pop %v4672
  %v4674 = vmul.f32 %v4582, 1.442695
  %v4675 = vpow.pop %v4674
  %v4676 = vmul.f32 %v4583, 1.442695
  %v4677 = vpow.pop %v4676
  %v4678 = vmul.f32 %v4584, 1.442695
  %v4679 = vpow.pop %v4678
  %v4680 = vmul.f32 %v4585, 1.442695
  %v4681 = vpow.pop %v4680
  %v4682 = vmul.f32 %v4586, 1.442695
  %v4683 = vpow.pop %v4682
  %v4684 = vmul.f32 %v4587, 1.442695
  %v4685 = vpow.pop %v4684
  %v4686 = vmul.f32 %v4588, 1.442695
  %v4687 = vpow.pop %v4686
  %v4688 = vmul.f32 %v4589, 1.442695
  %v4689 = vpow.pop %v4688
  %v4690 = vmul.f32 %v4590, 1.442695
  %v4691 = vpow.pop %v4690
  %v4692 = vmul.f32 %v4591, 1.442695
  %v4693 = vpow.pop %v4692
  %v4694 = vmul.f32 %v4592, 1.442695
  %v4695 = vpow.pop %v4694
  %v4696 = vmul.f32 %v4593, 1.442695
  %v4697 = vpow.pop %v4696
  %v4698 = vmul.f32 %v4594, 1.442695
  %v4699 = vpow.pop %v4698
  %v4700 = vmul.f32 %v4595, 1.442695
  %v4701 = vpow.pop %v4700
  %v4702 = vmul.f32 %v4596, 1.442695
  %v4703 = vpow.pop %v4702
  %v4704 = vmul.f32 %v4597, 1.442695
  %v4705 = vpow.pop %v4704
  %v4706 = vmul.f32 %v4598, 1.442695
  %v4707 = vpow.pop %v4706
  %v4708 = vmul.f32 %v4599, 1.442695
  %v4709 = vpow.pop %v4708
  %v4710 = vmul.f32 %v4600, 1.442695
  %v4711 = vpow.pop %v4710
  %v4712 = vmul.f32 %v4601, 1.442695
  %v4713 = vpow.pop %v4712
  %v4714 = vmul.f32 %v4602, 1.442695
  %v4715 = vpow.pop %v4714
  %v4716 = vmul.f32 %v4603, 1.442695
  %v4717 = vpow.pop %v4716
  %v4718 = vadd.f32 %v4605, 1.0
  %v4719 = vadd.f32 %v4607, 1.0
  %v4720 = vadd.f32 %v4609, 1.0
  %v4721 = vadd.f32 %v4611, 1.0
  %v4722 = vadd.f32 %v4613, 1.0
  %v4723 = vadd.f32 %v4615, 1.0
  %v4724 = vadd.f32 %v4617, 1.0
  %v4725 = vadd.f32 %v4619, 1.0
  %v4726 = vadd.f32 %v4621, 1.0
  %v4727 = vadd.f32 %v4623, 1.0
  %v4728 = vadd.f32 %v4625, 1.0
  %v4729 = vadd.f32 %v4627, 1.0
  %v4730 = vadd.f32 %v4629, 1.0
  %v4731 = vadd.f32 %v4631, 1.0
  %v4732 = vadd.f32 %v4633, 1.0
  %v4733 = vadd.f32 %v4635, 1.0
  %v4734 = vadd.f32 %v4637, 1.0
  %v4735 = vadd.f32 %v4639, 1.0
  %v4736 = vadd.f32 %v4641, 1.0
  %v4737 = vadd.f32 %v4643, 1.0
  %v4738 = vadd.f32 %v4645, 1.0
  %v4739 = vadd.f32 %v4647, 1.0
  %v4740 = vadd.f32 %v4649, 1.0
  %v4741 = vadd.f32 %v4651, 1.0
  %v4742 = vadd.f32 %v4653, 1.0
  %v4743 = vadd.f32 %v4655, 1.0
  %v4744 = vadd.f32 %v4657, 1.0
  %v4745 = vadd.f32 %v4659, 1.0
  %v4746 = vadd.f32 %v4661, 1.0
  %v4747 = vadd.f32 %v4663, 1.0
  %v4748 = vadd.f32 %v4665, 1.0
  %v4749 = vadd.f32 %v4667, 1.0
  %v4750 = vadd.f32 %v4669, 1.0
  %v4751 = vadd.f32 %v4671, 1.0
  %v4752 = vadd.f32 %v4673, 1.0
  %v4753 = vadd.f32 %v4675, 1.0
  %v4754 = vadd.f32 %v4677, 1.0
  %v4755 = vadd.f32 %v4679, 1.0
  %v4756 = vadd.f32 %v4681, 1.0
  %v4757 = vadd.f32 %v4683, 1.0
  %v4758 = vadd.f32 %v4685, 1.0
  %v4759 = vadd.f32 %v4687, 1.0
  %v4760 = vadd.f32 %v4689, 1.0
  %v4761 = vadd.f32 %v4691, 1.0
  %v4762 = vadd.f32 %v4693, 1.0
  %v4763 = vadd.f32 %v4695, 1.0
  %v4764 = vadd.f32 %v4697, 1.0
  %v4765 = vadd.f32 %v4699, 1.0
  %v4766 = vadd.f32 %v4701, 1.0
  %v4767 = vadd.f32 %v4703, 1.0
  %v4768 = vadd.f32 %v4705, 1.0
  %v4769 = vadd.f32 %v4707, 1.0
  %v4770 = vadd.f32 %v4709, 1.0
  %v4771 = vadd.f32 %v4711, 1.0
  %v4772 = vadd.f32 %v4713, 1.0
  %v4773 = vadd.f32 %v4715, 1.0
  %v4774 = vadd.f32 %v4717, 1.0
  %v4775 = vrcp.pop %v4718
  %v4776 = vmul.f32 1.0, %v4775
  %v4777 = vrcp.pop %v4719
  %v4778 = vmul.f32 1.0, %v4777
  %v4779 = vrcp.pop %v4720
  %v4780 = vmul.f32 1.0, %v4779
  %v4781 = vrcp.pop %v4721
  %v4782 = vmul.f32 1.0, %v4781
  %v4783 = vrcp.pop %v4722
  %v4784 = vmul.f32 1.0, %v4783
  %v4785 = vrcp.pop %v4723
  %v4786 = vmul.f32 1.0, %v4785
  %v4787 = vrcp.pop %v4724
  %v4788 = vmul.f32 1.0, %v4787
  %v4789 = vrcp.pop %v4725
  %v4790 = vmul.f32 1.0, %v4789
  %v4791 = vrcp.pop %v4726
  %v4792 = vmul.f32 1.0, %v4791
  %v4793 = vrcp.pop %v4727
  %v4794 = vmul.f32 1.0, %v4793
  %v4795 = vrcp.pop %v4728
  %v4796 = vmul.f32 1.0, %v4795
  %v4797 = vrcp.pop %v4729
  %v4798 = vmul.f32 1.0, %v4797
  %v4799 = vrcp.pop %v4730
  %v4800 = vmul.f32 1.0, %v4799
  %v4801 = vrcp.pop %v4731
  %v4802 = vmul.f32 1.0, %v4801
  %v4803 = vrcp.pop %v4732
  %v4804 = vmul.f32 1.0, %v4803
  %v4805 = vrcp.pop %v4733
  %v4806 = vmul.f32 1.0, %v4805
  %v4807 = vrcp.pop %v4734
  %v4808 = vmul.f32 1.0, %v4807
  %v4809 = vrcp.pop %v4735
  %v4810 = vmul.f32 1.0, %v4809
  %v4811 = vrcp.pop %v4736
  %v4812 = vmul.f32 1.0, %v4811
  %v4813 = vrcp.pop %v4737
  %v4814 = vmul.f32 1.0, %v4813
  %v4815 = vrcp.pop %v4738
  %v4816 = vmul.f32 1.0, %v4815
  %v4817 = vrcp.pop %v4739
  %v4818 = vmul.f32 1.0, %v4817
  %v4819 = vrcp.pop %v4740
  %v4820 = vmul.f32 1.0, %v4819
  %v4821 = vrcp.pop %v4741
  %v4822 = vmul.f32 1.0, %v4821
  %v4823 = vrcp.pop %v4742
  %v4824 = vmul.f32 1.0, %v4823
  %v4825 = vrcp.pop %v4743
  %v4826 = vmul.f32 1.0, %v4825
  %v4827 = vrcp.pop %v4744
  %v4828 = vmul.f32 1.0, %v4827
  %v4829 = vrcp.pop %v4745
  %v4830 = vmul.f32 1.0, %v4829
  %v4831 = vrcp.pop %v4746
  %v4832 = vmul.f32 1.0, %v4831
  %v4833 = vrcp.pop %v4747
  %v4834 = vmul.f32 1.0, %v4833
  %v4835 = vrcp.pop %v4748
  %v4836 = vmul.f32 1.0, %v4835
  %v4837 = vrcp.pop %v4749
  %v4838 = vmul.f32 1.0, %v4837
  %v4839 = vrcp.pop %v4750
  %v4840 = vmul.f32 1.0, %v4839
  %v4841 = vrcp.pop %v4751
  %v4842 = vmul.f32 1.0, %v4841
  %v4843 = vrcp.pop %v4752
  %v4844 = vmul.f32 1.0, %v4843
  %v4845 = vrcp.pop %v4753
  %v4846 = vmul.f32 1.0, %v4845
  %v4847 = vrcp.pop %v4754
  %v4848 = vmul.f32 1.0, %v4847
  %v4849 = vrcp.pop %v4755
  %v4850 = vmul.f32 1.0, %v4849
  %v4851 = vrcp.pop %v4756
  %v4852 = vmul.f32 1.0, %v4851
  %v4853 = vrcp.pop %v4757
  %v4854 = vmul.f32 1.0, %v4853
  %v4855 = vrcp.pop %v4758
  %v4856 = vmul.f32 1.0, %v4855
  %v4857 = vrcp.pop %v4759
  %v4858 = vmul.f32 1.0, %v4857
  %v4859 = vrcp.pop %v4760
  %v4860 = vmul.f32 1.0, %v4859
  %v4861 = vrcp.pop %v4761
  %v4862 = vmul.f32 1.0, %v4861
  %v4863 = vrcp.pop %v4762
  %v4864 = vmul.f32 1.0, %v4863
  %v4865 = vrcp.pop %v4763
  %v4866 = vmul.f32 1.0, %v4865
  %v4867 = vrcp.pop %v4764
  %v4868 = vmul.f32 1.0, %v4867
  %v4869 = vrcp.pop %v4765
  %v4870 = vmul.f32 1.0, %v4869
  %v4871 = vrcp.pop %v4766
  %v4872 = vmul.f32 1.0, %v4871
  %v4873 = vrcp.pop %v4767
  %v4874 = vmul.f32 1.0, %v4873
  %v4875 = vrcp.pop %v4768
  %v4876 = vmul.f32 1.0, %v4875
  %v4877 = vrcp.pop %v4769
  %v4878 = vmul.f32 1.0, %v4877
  %v4879 = vrcp.pop %v4770
  %v4880 = vmul.f32 1.0, %v4879
  %v4881 = vrcp.pop %v4771
  %v4882 = vmul.f32 1.0, %v4881
  %v4883 = vrcp.pop %v4772
  %v4884 = vmul.f32 1.0, %v4883
  %v4885 = vrcp.pop %v4773
  %v4886 = vmul.f32 1.0, %v4885
  %v4887 = vrcp.pop %v4774
  %v4888 = vmul.f32 1.0, %v4887
  %4946 = vrot.lane.b32.xlu0 %v4776, 3
  %v4947 = vpop.permute.xlu0 %4946
  %4948 = vrot.lane.b32.xlu0 %v4778, 3
  %v4949 = vpop.permute.xlu0 %4948
  %4950 = vrot.lane.b32.xlu0 %v4780, 3
  %v4951 = vpop.permute.xlu0 %4950
  %4952 = vrot.lane.b32.xlu0 %v4782, 3
  %v4953 = vpop.permute.xlu0 %4952
  %4954 = vrot.lane.b32.xlu0 %v4784, 3
  %v4955 = vpop.permute.xlu0 %4954
  %4956 = vrot.lane.b32.xlu0 %v4786, 3
  %v4957 = vpop.permute.xlu0 %4956
  %4958 = vrot.lane.b32.xlu0 %v4788, 3
  %v4959 = vpop.permute.xlu0 %4958
  %4960 = vrot.lane.b32.xlu0 %v4790, 3
  %v4961 = vpop.permute.xlu0 %4960
  %4962 = vrot.lane.b32.xlu0 %v4792, 3
  %v4963 = vpop.permute.xlu0 %4962
  %4964 = vrot.lane.b32.xlu0 %v4794, 3
  %v4965 = vpop.permute.xlu0 %4964
  %4966 = vrot.lane.b32.xlu0 %v4796, 3
  %v4967 = vpop.permute.xlu0 %4966
  %4968 = vrot.lane.b32.xlu0 %v4798, 3
  %v4969 = vpop.permute.xlu0 %4968
  %4970 = vrot.lane.b32.xlu0 %v4800, 3
  %v4971 = vpop.permute.xlu0 %4970
  %4972 = vrot.lane.b32.xlu0 %v4802, 3
  %v4973 = vpop.permute.xlu0 %4972
  %4974 = vrot.lane.b32.xlu0 %v4804, 3
  %v4975 = vpop.permute.xlu0 %4974
  %4976 = vrot.lane.b32.xlu0 %v4806, 3
  %v4977 = vpop.permute.xlu0 %4976
  %4978 = vrot.lane.b32.xlu0 %v4808, 3
  %v4979 = vpop.permute.xlu0 %4978
  %4980 = vrot.lane.b32.xlu0 %v4810, 3
  %v4981 = vpop.permute.xlu0 %4980
  %4982 = vrot.lane.b32.xlu0 %v4812, 3
  %v4983 = vpop.permute.xlu0 %4982
  %4984 = vrot.lane.b32.xlu0 %v4814, 3
  %v4985 = vpop.permute.xlu0 %4984
  %4986 = vrot.lane.b32.xlu0 %v4816, 3
  %v4987 = vpop.permute.xlu0 %4986
  %4988 = vrot.lane.b32.xlu0 %v4818, 3
  %v4989 = vpop.permute.xlu0 %4988
  %4990 = vrot.lane.b32.xlu0 %v4820, 3
  %v4991 = vpop.permute.xlu0 %4990
  %4992 = vrot.lane.b32.xlu0 %v4822, 3
  %v4993 = vpop.permute.xlu0 %4992
  %4994 = vrot.lane.b32.xlu0 %v4824, 3
  %v4995 = vpop.permute.xlu0 %4994
  %4996 = vrot.lane.b32.xlu0 %v4826, 3
  %v4997 = vpop.permute.xlu0 %4996
  %4998 = vrot.lane.b32.xlu0 %v4828, 3
  %v4999 = vpop.permute.xlu0 %4998
  %5000 = vrot.lane.b32.xlu0 %v4830, 3
  %v5001 = vpop.permute.xlu0 %5000
  %5002 = vrot.lane.b32.xlu0 %v4832, 3
  %v5003 = vpop.permute.xlu0 %5002
  %5004 = vrot.lane.b32.xlu0 %v4834, 3
  %v5005 = vpop.permute.xlu0 %5004
  %5006 = vrot.lane.b32.xlu0 %v4836, 3
  %v5007 = vpop.permute.xlu0 %5006
  %5008 = vrot.lane.b32.xlu0 %v4838, 3
  %v5009 = vpop.permute.xlu0 %5008
  %5010 = vrot.lane.b32.xlu0 %v4840, 3
  %v5011 = vpop.permute.xlu0 %5010
  %5012 = vrot.lane.b32.xlu0 %v4842, 3
  %v5013 = vpop.permute.xlu0 %5012
  %5014 = vrot.lane.b32.xlu0 %v4844, 3
  %v5015 = vpop.permute.xlu0 %5014
  %5016 = vrot.lane.b32.xlu0 %v4846, 3
  %v5017 = vpop.permute.xlu0 %5016
  %5018 = vrot.lane.b32.xlu0 %v4848, 3
  %v5019 = vpop.permute.xlu0 %5018
  %5020 = vrot.lane.b32.xlu0 %v4850, 3
  %v5021 = vpop.permute.xlu0 %5020
  %5022 = vrot.lane.b32.xlu0 %v4852, 3
  %v5023 = vpop.permute.xlu0 %5022
  %5024 = vrot.lane.b32.xlu0 %v4854, 3
  %v5025 = vpop.permute.xlu0 %5024
  %5026 = vrot.lane.b32.xlu0 %v4856, 3
  %v5027 = vpop.permute.xlu0 %5026
  %5028 = vrot.lane.b32.xlu0 %v4858, 3
  %v5029 = vpop.permute.xlu0 %5028
  %5030 = vrot.lane.b32.xlu0 %v4860, 3
  %v5031 = vpop.permute.xlu0 %5030
  %5032 = vrot.lane.b32.xlu0 %v4862, 3
  %v5033 = vpop.permute.xlu0 %5032
  %5034 = vrot.lane.b32.xlu0 %v4864, 3
  %v5035 = vpop.permute.xlu0 %5034
  %5036 = vrot.lane.b32.xlu0 %v4866, 3
  %v5037 = vpop.permute.xlu0 %5036
  %5038 = vrot.lane.b32.xlu0 %v4868, 3
  %v5039 = vpop.permute.xlu0 %5038
  %5040 = vrot.lane.b32.xlu0 %v4870, 3
  %v5041 = vpop.permute.xlu0 %5040
  %5042 = vrot.lane.b32.xlu0 %v4872, 3
  %v5043 = vpop.permute.xlu0 %5042
  %5044 = vrot.lane.b32.xlu0 %v4874, 3
  %v5045 = vpop.permute.xlu0 %5044
  %5046 = vrot.lane.b32.xlu0 %v4876, 3
  %v5047 = vpop.permute.xlu0 %5046
  %5048 = vrot.lane.b32.xlu0 %v4878, 3
  %v5049 = vpop.permute.xlu0 %5048
  %5050 = vrot.lane.b32.xlu0 %v4880, 3
  %v5051 = vpop.permute.xlu0 %5050
  %5052 = vrot.lane.b32.xlu0 %v4882, 3
  %v5053 = vpop.permute.xlu0 %5052
  %5054 = vrot.lane.b32.xlu0 %v4884, 3
  %v5055 = vpop.permute.xlu0 %5054
  %5056 = vrot.lane.b32.xlu0 %v4886, 3
  %v5057 = vpop.permute.xlu0 %5056
  %5058 = vrot.lane.b32.xlu0 %v4888, 3
  %v5059 = vpop.permute.xlu0 %5058
  %vm5117 = vcmask 31768
  %5118 = vst.msk [vmem:[%s5] sm:$0xff] %vm5117, %v4947
  %5119 = vst.msk [vmem:[%s5 + $0x8] sm:$0xff] %vm5117, %v4949
  %5120 = vst.msk [vmem:[%s5 + $0x10] sm:$0xff] %vm5117, %v4951
  %5121 = vst.msk [vmem:[%s5 + $0x18] sm:$0xff] %vm5117, %v4953
  %5122 = vst.msk [vmem:[%s5 + $0x20] sm:$0xff] %vm5117, %v4955
  %5123 = vst.msk [vmem:[%s5 + $0x28] sm:$0xff] %vm5117, %v4957
  %5124 = vst.msk [vmem:[%s5 + $0x30] sm:$0xff] %vm5117, %v4959
  %5125 = vst.msk [vmem:[%s5 + $0x38] sm:$0xff] %vm5117, %v4961
  %5126 = vst.msk [vmem:[%s5 + $0x40] sm:$0xff] %vm5117, %v4963
  %5127 = vst.msk [vmem:[%s5 + $0x48] sm:$0xff] %vm5117, %v4965
  %5128 = vst.msk [vmem:[%s5 + $0x50] sm:$0xff] %vm5117, %v4967
  %5129 = vst.msk [vmem:[%s5 + $0x58] sm:$0xff] %vm5117, %v4969
  %5130 = vst.msk [vmem:[%s5 + $0x60] sm:$0xff] %vm5117, %v4971
  %5131 = vst.msk [vmem:[%s5 + $0x68] sm:$0xff] %vm5117, %v4973
  %5132 = vst.msk [vmem:[%s5 + $0x70] sm:$0xff] %vm5117, %v4975
  %5133 = vst.msk [vmem:[%s5 + $0x78] sm:$0xff] %vm5117, %v4977
  %5134 = vst.msk [vmem:[%s5 + $0x80] sm:$0xff] %vm5117, %v4979
  %5135 = vst.msk [vmem:[%s5 + $0x88] sm:$0xff] %vm5117, %v4981
  %5136 = vst.msk [vmem:[%s5 + $0x90] sm:$0xff] %vm5117, %v4983
  %5137 = vst.msk [vmem:[%s5 + $0x98] sm:$0xff] %vm5117, %v4985
  %5138 = vst.msk [vmem:[%s5 + $0xa0] sm:$0xff] %vm5117, %v4987
  %5139 = vst.msk [vmem:[%s5 + $0xa8] sm:$0xff] %vm5117, %v4989
  %5140 = vst.msk [vmem:[%s5 + $0xb0] sm:$0xff] %vm5117, %v4991
  %5141 = vst.msk [vmem:[%s5 + $0xb8] sm:$0xff] %vm5117, %v4993
  %5142 = vst.msk [vmem:[%s5 + $0xc0] sm:$0xff] %vm5117, %v4995
  %5143 = vst.msk [vmem:[%s5 + $0xc8] sm:$0xff] %vm5117, %v4997
  %5144 = vst.msk [vmem:[%s5 + $0xd0] sm:$0xff] %vm5117, %v4999
  %5145 = vst.msk [vmem:[%s5 + $0xd8] sm:$0xff] %vm5117, %v5001
  %5146 = vst.msk [vmem:[%s5 + $0xe0] sm:$0xff] %vm5117, %v5003
  %5147 = vst.msk [vmem:[%s5 + $0xe8] sm:$0xff] %vm5117, %v5005
  %5148 = vst.msk [vmem:[%s5 + $0xf0] sm:$0xff] %vm5117, %v5007
  %5149 = vst.msk [vmem:[%s5 + $0xf8] sm:$0xff] %vm5117, %v5009
  %5150 = vst.msk [vmem:[%s5 + $0x100] sm:$0xff] %vm5117, %v5011
  %5151 = vst.msk [vmem:[%s5 + $0x108] sm:$0xff] %vm5117, %v5013
  %5152 = vst.msk [vmem:[%s5 + $0x110] sm:$0xff] %vm5117, %v5015
  %5153 = vst.msk [vmem:[%s5 + $0x118] sm:$0xff] %vm5117, %v5017
  %5154 = vst.msk [vmem:[%s5 + $0x120] sm:$0xff] %vm5117, %v5019
  %5155 = vst.msk [vmem:[%s5 + $0x128] sm:$0xff] %vm5117, %v5021
  %5156 = vst.msk [vmem:[%s5 + $0x130] sm:$0xff] %vm5117, %v5023
  %5157 = vst.msk [vmem:[%s5 + $0x138] sm:$0xff] %vm5117, %v5025
  %5158 = vst.msk [vmem:[%s5 + $0x140] sm:$0xff] %vm5117, %v5027
  %5159 = vst.msk [vmem:[%s5 + $0x148] sm:$0xff] %vm5117, %v5029
  %5160 = vst.msk [vmem:[%s5 + $0x150] sm:$0xff] %vm5117, %v5031
  %5161 = vst.msk [vmem:[%s5 + $0x158] sm:$0xff] %vm5117, %v5033
  %5162 = vst.msk [vmem:[%s5 + $0x160] sm:$0xff] %vm5117, %v5035
  %5163 = vst.msk [vmem:[%s5 + $0x168] sm:$0xff] %vm5117, %v5037
  %5164 = vst.msk [vmem:[%s5 + $0x170] sm:$0xff] %vm5117, %v5039
  %5165 = vst.msk [vmem:[%s5 + $0x178] sm:$0xff] %vm5117, %v5041
  %5166 = vst.msk [vmem:[%s5 + $0x180] sm:$0xff] %vm5117, %v5043
  %5167 = vst.msk [vmem:[%s5 + $0x188] sm:$0xff] %vm5117, %v5045
  %5168 = vst.msk [vmem:[%s5 + $0x190] sm:$0xff] %vm5117, %v5047
  %5169 = vst.msk [vmem:[%s5 + $0x198] sm:$0xff] %vm5117, %v5049
  %5170 = vst.msk [vmem:[%s5 + $0x1a0] sm:$0xff] %vm5117, %v5051
  %5171 = vst.msk [vmem:[%s5 + $0x1a8] sm:$0xff] %vm5117, %v5053
  %5172 = vst.msk [vmem:[%s5 + $0x1b0] sm:$0xff] %vm5117, %v5055
  %5173 = vst.msk [vmem:[%s5 + $0x1b8] sm:$0xff] %vm5117, %v5057
  %vm5174 = vcmask 25624
  %5175 = vst.msk [vmem:[%s5 + $0x1c0] sm:$0x3] %vm5174, %v5059
  // Predicated region
  $region22: #{deconvnet28_forward.5} parent=0 // pred_check
    _
  $region23: #{deconvnet28_forward.5} parent=0 // pred_check_branch
    %5177 = sbr.rel (0) target = $region25
  $region24: #{deconvnet28_forward.5} parent=0 // pred_region
    _
  $region25: #{deconvnet28_forward.5} parent=0 // pred_fallthru
    _
  // Predicated region
  $region26: #{deconvnet28_forward.5} parent=0 // pred_check
    _
  $region27: #{deconvnet28_forward.5} parent=0 // pred_check_branch
    %5179 = sbr.rel (0) target = $region29
  $region28: #{deconvnet28_forward.5} parent=0 // pred_region
    _
  $region29: #{deconvnet28_forward.5} parent=0 // pred_fallthru
    _

</llo_original>
